<compile_context>
chip_gen: v7x
topology: tpu7x:2x2x1
jax: 0.10.0
libtpu: 0.0.40
codegen_flags: <defaults>
</compile_context>

<pallas_src>
import functools
import numpy as np
import jax
import jax.numpy as jnp
from jax import lax
from jax.experimental import pallas as pl
from jax.experimental.pallas import tpu as pltpu  # noqa: F401  (TPU backend)

HEADS = 4
LN_EPS = 1e-6


def _gelu(x):
    # tanh-approx GELU (EUP-friendly); used identically in kernel and reference.
    return 0.5 * x * (1.0 + jnp.tanh(0.7978845608028654 * (x + 0.044715 * x * x * x)))


# ---------------------------------------------------------------------------
# Pallas kernel: full encoder forward (all batches, all layers) in one call.
# ---------------------------------------------------------------------------
def encoder_kernel(emb_ref, q0_ref, mask_ref,
                   w_attn_ref, b_attn_ref, ln_g_ref, ln_b_ref,
                   w1_ref, b1_ref, w2_ref, b2_ref,
                   out_ref, *, heads, layers):
    B, L_emb, H = emb_ref.shape
    L_q = q0_ref.shape[1]
    dh = H // heads
    scale = 1.0 / float(np.sqrt(dh))

    def layernorm(x, gamma, beta):
        u = jnp.mean(x, axis=-1, keepdims=True)
        xc = x - u
        var = jnp.mean(xc * xc, axis=-1, keepdims=True)
        # rsqrt lowers to the EUP (own VLIW slot) instead of a VALU divide/sqrt.
        return gamma * (xc * lax.rsqrt(var + LN_EPS)) + beta

    # Static unroll over batch (B=2) and layers (2): no grid, no launch overhead.
    for b in range(B):
        emb_b = emb_ref[b]                       # (L_emb, H)
        query = q0_ref[b]                        # (L_q, H)
        mask2d = mask_ref[b:b + 1, :]            # (1, L_kv) additive mask

        for l in range(layers):
            # K/V input: concat along the sublane (sequence) axis, in VMEM.
            kv = jnp.concatenate([emb_b, query], axis=0)     # (L_kv, H)

            wq = w_attn_ref[l, 0]
            wk = w_attn_ref[l, 1]
            wv = w_attn_ref[l, 2]
            wo = w_attn_ref[l, 3]

            Q = jnp.dot(query, wq, preferred_element_type=jnp.float32) + b_attn_ref[l, 0:1, :]
            K = jnp.dot(kv,    wk, preferred_element_type=jnp.float32) + b_attn_ref[l, 1:2, :]
            V = jnp.dot(kv,    wv, preferred_element_type=jnp.float32) + b_attn_ref[l, 2:3, :]

            # Per-head attention; the output projection is folded into the head
            # loop so no lane-axis concatenate of head outputs is needed.
            attn = None
            for h in range(heads):
                lo, hi = h * dh, (h + 1) * dh
                Qh = Q[:, lo:hi]                 # (L_q, dh)
                Kh = K[:, lo:hi]                 # (L_kv, dh)
                Vh = V[:, lo:hi]                 # (L_kv, dh)
                s = lax.dot_general(
                    Qh, Kh, dimension_numbers=(((1,), (1,)), ((), ())),
                    preferred_element_type=jnp.float32) * scale + mask2d
                m = jnp.max(s, axis=-1, keepdims=True)
                e = jnp.exp(s - m)
                p = e * pl.reciprocal(jnp.sum(e, axis=-1, keepdims=True), approx=True)
                ho = jnp.dot(p, Vh, preferred_element_type=jnp.float32)        # (L_q, dh)
                contrib = jnp.dot(ho, wo[lo:hi, :], preferred_element_type=jnp.float32)
                attn = contrib if attn is None else attn + contrib
            attn = attn + b_attn_ref[l, 3:4, :]

            # Post-LayerNorm residual structure (layernorm_positioning == "post").
            inter = layernorm(attn + query, ln_g_ref[l, 0:1, :], ln_b_ref[l, 0:1, :])
            ffh = _gelu(jnp.dot(inter, w1_ref[l], preferred_element_type=jnp.float32)
                        + b1_ref[l])
            ff = jnp.dot(ffh, w2_ref[l], preferred_element_type=jnp.float32) + b2_ref[l]
            query = layernorm(ff + inter, ln_g_ref[l, 1:2, :], ln_b_ref[l, 1:2, :])

        out_ref[b] = query


# ---------------------------------------------------------------------------
# Wrapper: stack parameters and launch a single grid=() pallas_call.
# ---------------------------------------------------------------------------
def _stack_params(params_list):
    w_attn = jnp.stack(
        [jnp.stack([p["wq"], p["wk"], p["wv"], p["wo"]], axis=0) for p in params_list],
        axis=0)                                                        # (Lyr, 4, H, H)
    b_attn = jnp.stack(
        [jnp.concatenate([p["bq"], p["bk"], p["bv"], p["bo"]], axis=0) for p in params_list],
        axis=0)                                                        # (Lyr, 4, H)
    ln_g = jnp.stack(
        [jnp.concatenate([p["g1"], p["g2"]], axis=0) for p in params_list], axis=0)  # (Lyr,2,H)
    ln_b = jnp.stack(
        [jnp.concatenate([p["be1"], p["be2"]], axis=0) for p in params_list], axis=0)
    w1 = jnp.stack([p["w1"] for p in params_list], axis=0)             # (Lyr, H, F)
    b1 = jnp.stack([p["b1"] for p in params_list], axis=0)             # (Lyr, 1, F)
    w2 = jnp.stack([p["w2"] for p in params_list], axis=0)             # (Lyr, F, H)
    b2 = jnp.stack([p["b2"] for p in params_list], axis=0)             # (Lyr, 1, H)
    return w_attn, b_attn, ln_g, ln_b, w1, b1, w2, b2


def transformer_encoder_resampler(emb, author_emb, seg, params_list):
    B, L_emb, H = emb.shape
    L_q = author_emb.shape[1]
    layers = len(params_list)

    # fully_visible mask: -10000 on emb keys where seg == 0; query keys visible.
    key_mask = jnp.concatenate(
        [(1.0 - (seg > 0).astype(jnp.float32)) * -10000.0,
         jnp.zeros((B, L_q), jnp.float32)],
        axis=-1)                                                       # (B, L_kv)

    stacked = _stack_params(params_list)
    kernel = functools.partial(encoder_kernel, heads=HEADS, layers=layers)

    # grid=() — everything (activations + weights, <100 KiB total) lives in VMEM
    # for the whole fused forward; no per-batch / per-layer launch overhead.
    return pl.pallas_call(
        kernel,
        out_shape=jax.ShapeDtypeStruct((B, L_q, H), jnp.float32),
    )(emb, author_emb, key_mask, *stacked)


# ---------------------------------------------------------------------------
# Pure-JAX reference for correctness checking.
# ---------------------------------------------------------------------------
def _layernorm_ref(x, gamma, beta, eps=LN_EPS):
    u = jnp.mean(x, axis=-1, keepdims=True)
    s = jnp.mean((x - u) ** 2, axis=-1, keepdims=True)
    return gamma * ((x - u) / jnp.sqrt(s + eps)) + beta


def _ref_layer(kv, q, key_mask, p):
    B, L_kv, H = kv.shape
    L_q = q.shape[1]
    dh = H // HEADS
    Q = q @ p["wq"] + p["bq"]
    K = kv @ p["wk"] + p["bk"]
    V = kv @ p["wv"] + p["bv"]
    Qh = Q.reshape(B, L_q, HEADS, dh).transpose(0, 2, 1, 3)
    Kh = K.reshape(B, L_kv, HEADS, dh).transpose(0, 2, 1, 3)
    Vh = V.reshape(B, L_kv, HEADS, dh).transpose(0, 2, 1, 3)
    scores = jnp.einsum("bhqd,bhkd->bhqk", Qh, Kh) / jnp.sqrt(jnp.float32(dh))
    scores = scores + key_mask[:, None, :, :]
    probs = jax.nn.softmax(scores, axis=-1)
    ctx = jnp.einsum("bhqk,bhkd->bhqd", probs, Vh).transpose(0, 2, 1, 3).reshape(B, L_q, H)
    attn_out = ctx @ p["wo"] + p["bo"]
    inter = _layernorm_ref(attn_out + q, p["g1"], p["be1"])
    ff = _gelu(inter @ p["w1"] + p["b1"]) @ p["w2"] + p["b2"]
    return _layernorm_ref(ff + inter, p["g2"], p["be2"])


def _ref_encoder(emb, author_emb, seg, params_list):
    B, L_emb, H = emb.shape
    L_q = author_emb.shape[1]
    key_mask = jnp.concatenate(
        [(1.0 - (seg > 0).astype(jnp.float32)) * -10000.0,
         jnp.zeros((B, L_q), jnp.float32)], axis=-1)[:, None, :]
    query = author_emb
    for i, p in enumerate(params_list):
        kv = jnp.concatenate([emb, author_emb if i == 0 else query], axis=1)
        query = _ref_layer(kv, query, key_mask, p)
    return query


def init_layer_params(key, H, F):
    ks = jax.random.split(key, 6)
    w = lambda k, shape: (0.02 * jax.random.normal(k, shape)).astype(jnp.float32)
    z = lambda shape: jnp.zeros(shape, jnp.float32)
    o = lambda shape: jnp.ones(shape, jnp.float32)
    return dict(
        wq=w(ks[0], (H, H)), bq=z((1, H)),
        wk=w(ks[1], (H, H)), bk=z((1, H)),
        wv=w(ks[2], (H, H)), bv=z((1, H)),
        wo=w(ks[3], (H, H)), bo=z((1, H)),
        g1=o((1, H)), be1=z((1, H)),
        g2=o((1, H)), be2=z((1, H)),
        w1=w(ks[4], (H, F)), b1=z((1, F)),
        w2=w(ks[5], (F, H)), b2=z((1, H)),
    )


if __name__ == "__main__":
    B, L_EMB, L_AUTH, H, F = 2, 8, 8, 32, 64
    LAYERS = 2

    key = jax.random.PRNGKey(0)
    k_emb, k_auth, k_par = jax.random.split(key, 3)
    emb = jax.random.normal(k_emb, (B, L_EMB, H), jnp.float32)
    author_emb = jax.random.normal(k_auth, (B, L_AUTH, H), jnp.float32)
    seg = jnp.array([[1, 1, 1, 1, 1, 1, 0, 0],
                     [1, 1, 1, 2, 0, 0, 0, 0]], dtype=jnp.int32)

    params_list = [init_layer_params(k, H, F) for k in jax.random.split(k_par, LAYERS)]

    out = transformer_encoder_resampler(emb, author_emb, seg, params_list)
    out = jax.block_until_ready(out)

    ref = _ref_encoder(emb, author_emb, seg, params_list)
    np.testing.assert_allclose(np.asarray(out), np.asarray(ref), atol=1e-2, rtol=1e-2)

    print("KERNEL_OK")
</pallas_src>

<mosaic_0001>
module attributes {stable_mosaic.version = 11 : i64} {
  func.func @encoder_kernel(%arg0: memref<2x8x32xf32, #tpu.memory_space<vmem>>, %arg1: memref<2x8x32xf32, #tpu.memory_space<vmem>>, %arg2: memref<2x16xf32, #tpu.memory_space<vmem>>, %arg3: memref<2x4x32x32xf32, #tpu.memory_space<vmem>>, %arg4: memref<2x4x32xf32, #tpu.memory_space<vmem>>, %arg5: memref<2x2x32xf32, #tpu.memory_space<vmem>>, %arg6: memref<2x2x32xf32, #tpu.memory_space<vmem>>, %arg7: memref<2x32x64xf32, #tpu.memory_space<vmem>>, %arg8: memref<2x1x64xf32, #tpu.memory_space<vmem>>, %arg9: memref<2x64x32xf32, #tpu.memory_space<vmem>>, %arg10: memref<2x1x32xf32, #tpu.memory_space<vmem>>, %arg11: memref<2x8x32xf32, #tpu.memory_space<vmem>>) attributes {dimension_semantics = [], scalar_prefetch = 0 : i64, scratch_operands = 0 : i64, tpu.core_type = #tpu.core_type<tc>} {
    %c0 = arith.constant 0 : index
    %c0_0 = arith.constant 0 : index
    %c0_1 = arith.constant 0 : index
    %0 = vector.load %arg0[%c0, %c0_0, %c0_1] : memref<2x8x32xf32, #tpu.memory_space<vmem>>, vector<1x8x32xf32>
    %1 = vector.shape_cast %0 : vector<1x8x32xf32> to vector<8x32xf32>
    %c0_2 = arith.constant 0 : index
    %c0_3 = arith.constant 0 : index
    %c0_4 = arith.constant 0 : index
    %2 = vector.load %arg1[%c0_2, %c0_3, %c0_4] : memref<2x8x32xf32, #tpu.memory_space<vmem>>, vector<1x8x32xf32>
    %3 = vector.shape_cast %2 : vector<1x8x32xf32> to vector<8x32xf32>
    %c0_5 = arith.constant 0 : index
    %c0_6 = arith.constant 0 : index
    %4 = vector.load %arg2[%c0_5, %c0_6] : memref<2x16xf32, #tpu.memory_space<vmem>>, vector<1x16xf32>
    %5 = tpu.concatenate %1, %3 in 0 : vector<8x32xf32>, vector<8x32xf32> -> vector<16x32xf32>
    %c0_7 = arith.constant 0 : index
    %c0_8 = arith.constant 0 : index
    %c0_9 = arith.constant 0 : index
    %c0_10 = arith.constant 0 : index
    %6 = vector.load %arg3[%c0_7, %c0_8, %c0_9, %c0_10] : memref<2x4x32x32xf32, #tpu.memory_space<vmem>>, vector<1x1x32x32xf32>
    %7 = vector.shape_cast %6 : vector<1x1x32x32xf32> to vector<32x32xf32>
    %c0_11 = arith.constant 0 : index
    %c1 = arith.constant 1 : index
    %c0_12 = arith.constant 0 : index
    %c0_13 = arith.constant 0 : index
    %8 = vector.load %arg3[%c0_11, %c1, %c0_12, %c0_13] : memref<2x4x32x32xf32, #tpu.memory_space<vmem>>, vector<1x1x32x32xf32>
    %9 = vector.shape_cast %8 : vector<1x1x32x32xf32> to vector<32x32xf32>
    %c0_14 = arith.constant 0 : index
    %c2 = arith.constant 2 : index
    %c0_15 = arith.constant 0 : index
    %c0_16 = arith.constant 0 : index
    %10 = vector.load %arg3[%c0_14, %c2, %c0_15, %c0_16] : memref<2x4x32x32xf32, #tpu.memory_space<vmem>>, vector<1x1x32x32xf32>
    %11 = vector.shape_cast %10 : vector<1x1x32x32xf32> to vector<32x32xf32>
    %c0_17 = arith.constant 0 : index
    %c3 = arith.constant 3 : index
    %c0_18 = arith.constant 0 : index
    %c0_19 = arith.constant 0 : index
    %12 = vector.load %arg3[%c0_17, %c3, %c0_18, %c0_19] : memref<2x4x32x32xf32, #tpu.memory_space<vmem>>, vector<1x1x32x32xf32>
    %13 = vector.shape_cast %12 : vector<1x1x32x32xf32> to vector<32x32xf32>
    %cst = arith.constant dense<0.000000e+00> : vector<8x32xf32>
    %14 = tpu.matmul %3, %7, %cst {dimension_numbers = #tpu.dot_dimension_numbers<[1], [0], [0], [1], [0, 0, 1, 1], [], []>} : vector<8x32xf32>, vector<32x32xf32>, vector<8x32xf32> -> vector<8x32xf32>
    %c0_20 = arith.constant 0 : index
    %c0_21 = arith.constant 0 : index
    %c0_22 = arith.constant 0 : index
    %15 = vector.load %arg4[%c0_20, %c0_21, %c0_22] : memref<2x4x32xf32, #tpu.memory_space<vmem>>, vector<1x1x32xf32>
    %16 = vector.shape_cast %15 : vector<1x1x32xf32> to vector<1x32xf32>
    %17 = vector.broadcast %16 : vector<1x32xf32> to vector<8x32xf32>
    %18 = arith.addf %14, %17 : vector<8x32xf32>
    %cst_23 = arith.constant dense<0.000000e+00> : vector<16x32xf32>
    %19 = tpu.matmul %5, %9, %cst_23 {dimension_numbers = #tpu.dot_dimension_numbers<[1], [0], [0], [1], [0, 0, 1, 1], [], []>} : vector<16x32xf32>, vector<32x32xf32>, vector<16x32xf32> -> vector<16x32xf32>
    %c0_24 = arith.constant 0 : index
    %c1_25 = arith.constant 1 : index
    %c0_26 = arith.constant 0 : index
    %20 = vector.load %arg4[%c0_24, %c1_25, %c0_26] : memref<2x4x32xf32, #tpu.memory_space<vmem>>, vector<1x1x32xf32>
    %21 = vector.shape_cast %20 : vector<1x1x32xf32> to vector<1x32xf32>
    %22 = vector.broadcast %21 : vector<1x32xf32> to vector<16x32xf32>
    %23 = arith.addf %19, %22 : vector<16x32xf32>
    %cst_27 = arith.constant dense<0.000000e+00> : vector<16x32xf32>
    %24 = tpu.matmul %5, %11, %cst_27 {dimension_numbers = #tpu.dot_dimension_numbers<[1], [0], [0], [1], [0, 0, 1, 1], [], []>} : vector<16x32xf32>, vector<32x32xf32>, vector<16x32xf32> -> vector<16x32xf32>
    %c0_28 = arith.constant 0 : index
    %c2_29 = arith.constant 2 : index
    %c0_30 = arith.constant 0 : index
    %25 = vector.load %arg4[%c0_28, %c2_29, %c0_30] : memref<2x4x32xf32, #tpu.memory_space<vmem>>, vector<1x1x32xf32>
    %26 = vector.shape_cast %25 : vector<1x1x32xf32> to vector<1x32xf32>
    %27 = vector.broadcast %26 : vector<1x32xf32> to vector<16x32xf32>
    %28 = arith.addf %24, %27 : vector<16x32xf32>
    %29 = vector.extract_strided_slice %18 {offsets = [0, 0], sizes = [8, 8], strides = [1, 1]} : vector<8x32xf32> to vector<8x8xf32>
    %30 = vector.extract_strided_slice %23 {offsets = [0, 0], sizes = [16, 8], strides = [1, 1]} : vector<16x32xf32> to vector<16x8xf32>
    %31 = vector.extract_strided_slice %28 {offsets = [0, 0], sizes = [16, 8], strides = [1, 1]} : vector<16x32xf32> to vector<16x8xf32>
    %cst_31 = arith.constant dense<0.000000e+00> : vector<8x16xf32>
    %32 = tpu.matmul %29, %30, %cst_31 {dimension_numbers = #tpu.dot_dimension_numbers<[1], [1], [0], [0], [0, 0, 1, 0], [], []>} : vector<8x8xf32>, vector<16x8xf32>, vector<8x16xf32> -> vector<8x16xf32>
    %cst_32 = arith.constant 0.353553385 : f32
    %33 = vector.broadcast %cst_32 : f32 to vector<8x16xf32>
    %34 = arith.mulf %32, %33 : vector<8x16xf32>
    %35 = vector.broadcast %4 : vector<1x16xf32> to vector<8x16xf32>
    %36 = arith.addf %34, %35 : vector<8x16xf32>
    %cst_33 = arith.constant dense<0xFF800000> : vector<8xf32>
    %37 = vector.multi_reduction <maximumf>, %36, %cst_33 [1] : vector<8x16xf32> to vector<8xf32>
    %38 = vector.shape_cast %37 : vector<8xf32> to vector<8x1xf32>
    %39 = vector.broadcast %38 : vector<8x1xf32> to vector<8x16xf32>
    %40 = arith.subf %36, %39 : vector<8x16xf32>
    %41 = math.exp %40 : vector<8x16xf32>
    %cst_34 = arith.constant dense<0.000000e+00> : vector<8xf32>
    %42 = vector.multi_reduction <add>, %41, %cst_34 [1] : vector<8x16xf32> to vector<8xf32>
    %43 = vector.shape_cast %42 : vector<8xf32> to vector<8x1xf32>
    %44 = tpu.reciprocal %43 {approx = true} : vector<8x1xf32> -> vector<8x1xf32>
    %45 = vector.broadcast %44 : vector<8x1xf32> to vector<8x16xf32>
    %46 = arith.mulf %41, %45 : vector<8x16xf32>
    %cst_35 = arith.constant dense<0.000000e+00> : vector<8x8xf32>
    %47 = tpu.matmul %46, %31, %cst_35 {dimension_numbers = #tpu.dot_dimension_numbers<[1], [0], [0], [1], [0, 0, 1, 1], [], []>} : vector<8x16xf32>, vector<16x8xf32>, vector<8x8xf32> -> vector<8x8xf32>
    %48 = vector.extract_strided_slice %13 {offsets = [0, 0], sizes = [8, 32], strides = [1, 1]} : vector<32x32xf32> to vector<8x32xf32>
    %cst_36 = arith.constant dense<0.000000e+00> : vector<8x32xf32>
    %49 = tpu.matmul %47, %48, %cst_36 {dimension_numbers = #tpu.dot_dimension_numbers<[1], [0], [0], [1], [0, 0, 1, 1], [], []>} : vector<8x8xf32>, vector<8x32xf32>, vector<8x32xf32> -> vector<8x32xf32>
    %50 = vector.extract_strided_slice %18 {offsets = [0, 8], sizes = [8, 8], strides = [1, 1]} : vector<8x32xf32> to vector<8x8xf32>
    %51 = vector.extract_strided_slice %23 {offsets = [0, 8], sizes = [16, 8], strides = [1, 1]} : vector<16x32xf32> to vector<16x8xf32>
    %52 = vector.extract_strided_slice %28 {offsets = [0, 8], sizes = [16, 8], strides = [1, 1]} : vector<16x32xf32> to vector<16x8xf32>
    %cst_37 = arith.constant dense<0.000000e+00> : vector<8x16xf32>
    %53 = tpu.matmul %50, %51, %cst_37 {dimension_numbers = #tpu.dot_dimension_numbers<[1], [1], [0], [0], [0, 0, 1, 0], [], []>} : vector<8x8xf32>, vector<16x8xf32>, vector<8x16xf32> -> vector<8x16xf32>
    %cst_38 = arith.constant 0.353553385 : f32
    %54 = vector.broadcast %cst_38 : f32 to vector<8x16xf32>
    %55 = arith.mulf %53, %54 : vector<8x16xf32>
    %56 = vector.broadcast %4 : vector<1x16xf32> to vector<8x16xf32>
    %57 = arith.addf %55, %56 : vector<8x16xf32>
    %cst_39 = arith.constant dense<0xFF800000> : vector<8xf32>
    %58 = vector.multi_reduction <maximumf>, %57, %cst_39 [1] : vector<8x16xf32> to vector<8xf32>
    %59 = vector.shape_cast %58 : vector<8xf32> to vector<8x1xf32>
    %60 = vector.broadcast %59 : vector<8x1xf32> to vector<8x16xf32>
    %61 = arith.subf %57, %60 : vector<8x16xf32>
    %62 = math.exp %61 : vector<8x16xf32>
    %cst_40 = arith.constant dense<0.000000e+00> : vector<8xf32>
    %63 = vector.multi_reduction <add>, %62, %cst_40 [1] : vector<8x16xf32> to vector<8xf32>
    %64 = vector.shape_cast %63 : vector<8xf32> to vector<8x1xf32>
    %65 = tpu.reciprocal %64 {approx = true} : vector<8x1xf32> -> vector<8x1xf32>
    %66 = vector.broadcast %65 : vector<8x1xf32> to vector<8x16xf32>
    %67 = arith.mulf %62, %66 : vector<8x16xf32>
    %cst_41 = arith.constant dense<0.000000e+00> : vector<8x8xf32>
    %68 = tpu.matmul %67, %52, %cst_41 {dimension_numbers = #tpu.dot_dimension_numbers<[1], [0], [0], [1], [0, 0, 1, 1], [], []>} : vector<8x16xf32>, vector<16x8xf32>, vector<8x8xf32> -> vector<8x8xf32>
    %69 = vector.extract_strided_slice %13 {offsets = [8, 0], sizes = [8, 32], strides = [1, 1]} : vector<32x32xf32> to vector<8x32xf32>
    %cst_42 = arith.constant dense<0.000000e+00> : vector<8x32xf32>
    %70 = tpu.matmul %68, %69, %cst_42 {dimension_numbers = #tpu.dot_dimension_numbers<[1], [0], [0], [1], [0, 0, 1, 1], [], []>} : vector<8x8xf32>, vector<8x32xf32>, vector<8x32xf32> -> vector<8x32xf32>
    %71 = arith.addf %49, %70 : vector<8x32xf32>
    %72 = vector.extract_strided_slice %18 {offsets = [0, 16], sizes = [8, 8], strides = [1, 1]} : vector<8x32xf32> to vector<8x8xf32>
    %73 = vector.extract_strided_slice %23 {offsets = [0, 16], sizes = [16, 8], strides = [1, 1]} : vector<16x32xf32> to vector<16x8xf32>
    %74 = vector.extract_strided_slice %28 {offsets = [0, 16], sizes = [16, 8], strides = [1, 1]} : vector<16x32xf32> to vector<16x8xf32>
    %cst_43 = arith.constant dense<0.000000e+00> : vector<8x16xf32>
    %75 = tpu.matmul %72, %73, %cst_43 {dimension_numbers = #tpu.dot_dimension_numbers<[1], [1], [0], [0], [0, 0, 1, 0], [], []>} : vector<8x8xf32>, vector<16x8xf32>, vector<8x16xf32> -> vector<8x16xf32>
    %cst_44 = arith.constant 0.353553385 : f32
    %76 = vector.broadcast %cst_44 : f32 to vector<8x16xf32>
    %77 = arith.mulf %75, %76 : vector<8x16xf32>
    %78 = vector.broadcast %4 : vector<1x16xf32> to vector<8x16xf32>
    %79 = arith.addf %77, %78 : vector<8x16xf32>
    %cst_45 = arith.constant dense<0xFF800000> : vector<8xf32>
    %80 = vector.multi_reduction <maximumf>, %79, %cst_45 [1] : vector<8x16xf32> to vector<8xf32>
    %81 = vector.shape_cast %80 : vector<8xf32> to vector<8x1xf32>
    %82 = vector.broadcast %81 : vector<8x1xf32> to vector<8x16xf32>
    %83 = arith.subf %79, %82 : vector<8x16xf32>
    %84 = math.exp %83 : vector<8x16xf32>
    %cst_46 = arith.constant dense<0.000000e+00> : vector<8xf32>
    %85 = vector.multi_reduction <add>, %84, %cst_46 [1] : vector<8x16xf32> to vector<8xf32>
    %86 = vector.shape_cast %85 : vector<8xf32> to vector<8x1xf32>
    %87 = tpu.reciprocal %86 {approx = true} : vector<8x1xf32> -> vector<8x1xf32>
    %88 = vector.broadcast %87 : vector<8x1xf32> to vector<8x16xf32>
    %89 = arith.mulf %84, %88 : vector<8x16xf32>
    %cst_47 = arith.constant dense<0.000000e+00> : vector<8x8xf32>
    %90 = tpu.matmul %89, %74, %cst_47 {dimension_numbers = #tpu.dot_dimension_numbers<[1], [0], [0], [1], [0, 0, 1, 1], [], []>} : vector<8x16xf32>, vector<16x8xf32>, vector<8x8xf32> -> vector<8x8xf32>
    %91 = vector.extract_strided_slice %13 {offsets = [16, 0], sizes = [8, 32], strides = [1, 1]} : vector<32x32xf32> to vector<8x32xf32>
    %cst_48 = arith.constant dense<0.000000e+00> : vector<8x32xf32>
    %92 = tpu.matmul %90, %91, %cst_48 {dimension_numbers = #tpu.dot_dimension_numbers<[1], [0], [0], [1], [0, 0, 1, 1], [], []>} : vector<8x8xf32>, vector<8x32xf32>, vector<8x32xf32> -> vector<8x32xf32>
    %93 = arith.addf %71, %92 : vector<8x32xf32>
    %94 = vector.extract_strided_slice %18 {offsets = [0, 24], sizes = [8, 8], strides = [1, 1]} : vector<8x32xf32> to vector<8x8xf32>
    %95 = vector.extract_strided_slice %23 {offsets = [0, 24], sizes = [16, 8], strides = [1, 1]} : vector<16x32xf32> to vector<16x8xf32>
    %96 = vector.extract_strided_slice %28 {offsets = [0, 24], sizes = [16, 8], strides = [1, 1]} : vector<16x32xf32> to vector<16x8xf32>
    %cst_49 = arith.constant dense<0.000000e+00> : vector<8x16xf32>
    %97 = tpu.matmul %94, %95, %cst_49 {dimension_numbers = #tpu.dot_dimension_numbers<[1], [1], [0], [0], [0, 0, 1, 0], [], []>} : vector<8x8xf32>, vector<16x8xf32>, vector<8x16xf32> -> vector<8x16xf32>
    %cst_50 = arith.constant 0.353553385 : f32
    %98 = vector.broadcast %cst_50 : f32 to vector<8x16xf32>
    %99 = arith.mulf %97, %98 : vector<8x16xf32>
    %100 = vector.broadcast %4 : vector<1x16xf32> to vector<8x16xf32>
    %101 = arith.addf %99, %100 : vector<8x16xf32>
    %cst_51 = arith.constant dense<0xFF800000> : vector<8xf32>
    %102 = vector.multi_reduction <maximumf>, %101, %cst_51 [1] : vector<8x16xf32> to vector<8xf32>
    %103 = vector.shape_cast %102 : vector<8xf32> to vector<8x1xf32>
    %104 = vector.broadcast %103 : vector<8x1xf32> to vector<8x16xf32>
    %105 = arith.subf %101, %104 : vector<8x16xf32>
    %106 = math.exp %105 : vector<8x16xf32>
    %cst_52 = arith.constant dense<0.000000e+00> : vector<8xf32>
    %107 = vector.multi_reduction <add>, %106, %cst_52 [1] : vector<8x16xf32> to vector<8xf32>
    %108 = vector.shape_cast %107 : vector<8xf32> to vector<8x1xf32>
    %109 = tpu.reciprocal %108 {approx = true} : vector<8x1xf32> -> vector<8x1xf32>
    %110 = vector.broadcast %109 : vector<8x1xf32> to vector<8x16xf32>
    %111 = arith.mulf %106, %110 : vector<8x16xf32>
    %cst_53 = arith.constant dense<0.000000e+00> : vector<8x8xf32>
    %112 = tpu.matmul %111, %96, %cst_53 {dimension_numbers = #tpu.dot_dimension_numbers<[1], [0], [0], [1], [0, 0, 1, 1], [], []>} : vector<8x16xf32>, vector<16x8xf32>, vector<8x8xf32> -> vector<8x8xf32>
    %113 = vector.extract_strided_slice %13 {offsets = [24, 0], sizes = [8, 32], strides = [1, 1]} : vector<32x32xf32> to vector<8x32xf32>
    %cst_54 = arith.constant dense<0.000000e+00> : vector<8x32xf32>
    %114 = tpu.matmul %112, %113, %cst_54 {dimension_numbers = #tpu.dot_dimension_numbers<[1], [0], [0], [1], [0, 0, 1, 1], [], []>} : vector<8x8xf32>, vector<8x32xf32>, vector<8x32xf32> -> vector<8x32xf32>
    %115 = arith.addf %93, %114 : vector<8x32xf32>
    %c0_55 = arith.constant 0 : index
    %c3_56 = arith.constant 3 : index
    %c0_57 = arith.constant 0 : index
    %116 = vector.load %arg4[%c0_55, %c3_56, %c0_57] : memref<2x4x32xf32, #tpu.memory_space<vmem>>, vector<1x1x32xf32>
    %117 = vector.shape_cast %116 : vector<1x1x32xf32> to vector<1x32xf32>
    %118 = vector.broadcast %117 : vector<1x32xf32> to vector<8x32xf32>
    %119 = arith.addf %115, %118 : vector<8x32xf32>
    %120 = arith.addf %119, %3 : vector<8x32xf32>
    %c0_58 = arith.constant 0 : index
    %c0_59 = arith.constant 0 : index
    %c0_60 = arith.constant 0 : index
    %121 = vector.load %arg5[%c0_58, %c0_59, %c0_60] : memref<2x2x32xf32, #tpu.memory_space<vmem>>, vector<1x1x32xf32>
    %122 = vector.shape_cast %121 : vector<1x1x32xf32> to vector<1x32xf32>
    %c0_61 = arith.constant 0 : index
    %c0_62 = arith.constant 0 : index
    %c0_63 = arith.constant 0 : index
    %123 = vector.load %arg6[%c0_61, %c0_62, %c0_63] : memref<2x2x32xf32, #tpu.memory_space<vmem>>, vector<1x1x32xf32>
    %124 = vector.shape_cast %123 : vector<1x1x32xf32> to vector<1x32xf32>
    %cst_64 = arith.constant dense<0.000000e+00> : vector<8xf32>
    %125 = vector.multi_reduction <add>, %120, %cst_64 [1] : vector<8x32xf32> to vector<8xf32>
    %126 = vector.shape_cast %125 : vector<8xf32> to vector<8x1xf32>
    %cst_65 = arith.constant 3.200000e+01 : f32
    %127 = vector.broadcast %cst_65 : f32 to vector<8x1xf32>
    %128 = arith.divf %126, %127 : vector<8x1xf32>
    %129 = vector.broadcast %128 : vector<8x1xf32> to vector<8x32xf32>
    %130 = arith.subf %120, %129 : vector<8x32xf32>
    %131 = arith.mulf %130, %130 : vector<8x32xf32>
    %cst_66 = arith.constant dense<0.000000e+00> : vector<8xf32>
    %132 = vector.multi_reduction <add>, %131, %cst_66 [1] : vector<8x32xf32> to vector<8xf32>
    %133 = vector.shape_cast %132 : vector<8xf32> to vector<8x1xf32>
    %cst_67 = arith.constant 3.200000e+01 : f32
    %134 = vector.broadcast %cst_67 : f32 to vector<8x1xf32>
    %135 = arith.divf %133, %134 : vector<8x1xf32>
    %cst_68 = arith.constant 9.99999997E-7 : f32
    %136 = vector.broadcast %cst_68 : f32 to vector<8x1xf32>
    %137 = arith.addf %135, %136 : vector<8x1xf32>
    %138 = math.rsqrt %137 : vector<8x1xf32>
    %139 = vector.broadcast %138 : vector<8x1xf32> to vector<8x32xf32>
    %140 = arith.mulf %130, %139 : vector<8x32xf32>
    %141 = vector.broadcast %122 : vector<1x32xf32> to vector<8x32xf32>
    %142 = arith.mulf %141, %140 : vector<8x32xf32>
    %143 = vector.broadcast %124 : vector<1x32xf32> to vector<8x32xf32>
    %144 = arith.addf %142, %143 : vector<8x32xf32>
    %c0_69 = arith.constant 0 : index
    %c0_70 = arith.constant 0 : index
    %c0_71 = arith.constant 0 : index
    %145 = vector.load %arg7[%c0_69, %c0_70, %c0_71] : memref<2x32x64xf32, #tpu.memory_space<vmem>>, vector<1x32x64xf32>
    %146 = vector.shape_cast %145 : vector<1x32x64xf32> to vector<32x64xf32>
    %cst_72 = arith.constant dense<0.000000e+00> : vector<8x64xf32>
    %147 = tpu.matmul %144, %146, %cst_72 {dimension_numbers = #tpu.dot_dimension_numbers<[1], [0], [0], [1], [0, 0, 1, 1], [], []>} : vector<8x32xf32>, vector<32x64xf32>, vector<8x64xf32> -> vector<8x64xf32>
    %c0_73 = arith.constant 0 : index
    %c0_74 = arith.constant 0 : index
    %c0_75 = arith.constant 0 : index
    %148 = vector.load %arg8[%c0_73, %c0_74, %c0_75] : memref<2x1x64xf32, #tpu.memory_space<vmem>>, vector<1x1x64xf32>
    %149 = vector.shape_cast %148 : vector<1x1x64xf32> to vector<1x64xf32>
    %150 = vector.broadcast %149 : vector<1x64xf32> to vector<8x64xf32>
    %151 = arith.addf %147, %150 : vector<8x64xf32>
    %cst_76 = arith.constant 5.000000e-01 : f32
    %152 = vector.broadcast %cst_76 : f32 to vector<8x64xf32>
    %153 = arith.mulf %152, %151 : vector<8x64xf32>
    %cst_77 = arith.constant 4.471500e-02 : f32
    %154 = vector.broadcast %cst_77 : f32 to vector<8x64xf32>
    %155 = arith.mulf %154, %151 : vector<8x64xf32>
    %156 = arith.mulf %155, %151 : vector<8x64xf32>
    %157 = arith.mulf %156, %151 : vector<8x64xf32>
    %158 = arith.addf %151, %157 : vector<8x64xf32>
    %cst_78 = arith.constant 0.797884583 : f32
    %159 = vector.broadcast %cst_78 : f32 to vector<8x64xf32>
    %160 = arith.mulf %159, %158 : vector<8x64xf32>
    %161 = math.tanh %160 : vector<8x64xf32>
    %cst_79 = arith.constant 1.000000e+00 : f32
    %162 = vector.broadcast %cst_79 : f32 to vector<8x64xf32>
    %163 = arith.addf %162, %161 : vector<8x64xf32>
    %164 = arith.mulf %153, %163 : vector<8x64xf32>
    %c0_80 = arith.constant 0 : index
    %c0_81 = arith.constant 0 : index
    %c0_82 = arith.constant 0 : index
    %165 = vector.load %arg9[%c0_80, %c0_81, %c0_82] : memref<2x64x32xf32, #tpu.memory_space<vmem>>, vector<1x64x32xf32>
    %166 = vector.shape_cast %165 : vector<1x64x32xf32> to vector<64x32xf32>
    %cst_83 = arith.constant dense<0.000000e+00> : vector<8x32xf32>
    %167 = tpu.matmul %164, %166, %cst_83 {dimension_numbers = #tpu.dot_dimension_numbers<[1], [0], [0], [1], [0, 0, 1, 1], [], []>} : vector<8x64xf32>, vector<64x32xf32>, vector<8x32xf32> -> vector<8x32xf32>
    %c0_84 = arith.constant 0 : index
    %c0_85 = arith.constant 0 : index
    %c0_86 = arith.constant 0 : index
    %168 = vector.load %arg10[%c0_84, %c0_85, %c0_86] : memref<2x1x32xf32, #tpu.memory_space<vmem>>, vector<1x1x32xf32>
    %169 = vector.shape_cast %168 : vector<1x1x32xf32> to vector<1x32xf32>
    %170 = vector.broadcast %169 : vector<1x32xf32> to vector<8x32xf32>
    %171 = arith.addf %167, %170 : vector<8x32xf32>
    %172 = arith.addf %171, %144 : vector<8x32xf32>
    %c0_87 = arith.constant 0 : index
    %c1_88 = arith.constant 1 : index
    %c0_89 = arith.constant 0 : index
    %173 = vector.load %arg5[%c0_87, %c1_88, %c0_89] : memref<2x2x32xf32, #tpu.memory_space<vmem>>, vector<1x1x32xf32>
    %174 = vector.shape_cast %173 : vector<1x1x32xf32> to vector<1x32xf32>
    %c0_90 = arith.constant 0 : index
    %c1_91 = arith.constant 1 : index
    %c0_92 = arith.constant 0 : index
    %175 = vector.load %arg6[%c0_90, %c1_91, %c0_92] : memref<2x2x32xf32, #tpu.memory_space<vmem>>, vector<1x1x32xf32>
    %176 = vector.shape_cast %175 : vector<1x1x32xf32> to vector<1x32xf32>
    %cst_93 = arith.constant dense<0.000000e+00> : vector<8xf32>
    %177 = vector.multi_reduction <add>, %172, %cst_93 [1] : vector<8x32xf32> to vector<8xf32>
    %178 = vector.shape_cast %177 : vector<8xf32> to vector<8x1xf32>
    %cst_94 = arith.constant 3.200000e+01 : f32
    %179 = vector.broadcast %cst_94 : f32 to vector<8x1xf32>
    %180 = arith.divf %178, %179 : vector<8x1xf32>
    %181 = vector.broadcast %180 : vector<8x1xf32> to vector<8x32xf32>
    %182 = arith.subf %172, %181 : vector<8x32xf32>
    %183 = arith.mulf %182, %182 : vector<8x32xf32>
    %cst_95 = arith.constant dense<0.000000e+00> : vector<8xf32>
    %184 = vector.multi_reduction <add>, %183, %cst_95 [1] : vector<8x32xf32> to vector<8xf32>
    %185 = vector.shape_cast %184 : vector<8xf32> to vector<8x1xf32>
    %cst_96 = arith.constant 3.200000e+01 : f32
    %186 = vector.broadcast %cst_96 : f32 to vector<8x1xf32>
    %187 = arith.divf %185, %186 : vector<8x1xf32>
    %cst_97 = arith.constant 9.99999997E-7 : f32
    %188 = vector.broadcast %cst_97 : f32 to vector<8x1xf32>
    %189 = arith.addf %187, %188 : vector<8x1xf32>
    %190 = math.rsqrt %189 : vector<8x1xf32>
    %191 = vector.broadcast %190 : vector<8x1xf32> to vector<8x32xf32>
    %192 = arith.mulf %182, %191 : vector<8x32xf32>
    %193 = vector.broadcast %174 : vector<1x32xf32> to vector<8x32xf32>
    %194 = arith.mulf %193, %192 : vector<8x32xf32>
    %195 = vector.broadcast %176 : vector<1x32xf32> to vector<8x32xf32>
    %196 = arith.addf %194, %195 : vector<8x32xf32>
    %197 = tpu.concatenate %1, %196 in 0 : vector<8x32xf32>, vector<8x32xf32> -> vector<16x32xf32>
    %c1_98 = arith.constant 1 : index
    %c0_99 = arith.constant 0 : index
    %c0_100 = arith.constant 0 : index
    %c0_101 = arith.constant 0 : index
    %198 = vector.load %arg3[%c1_98, %c0_99, %c0_100, %c0_101] : memref<2x4x32x32xf32, #tpu.memory_space<vmem>>, vector<1x1x32x32xf32>
    %199 = vector.shape_cast %198 : vector<1x1x32x32xf32> to vector<32x32xf32>
    %c1_102 = arith.constant 1 : index
    %c1_103 = arith.constant 1 : index
    %c0_104 = arith.constant 0 : index
    %c0_105 = arith.constant 0 : index
    %200 = vector.load %arg3[%c1_102, %c1_103, %c0_104, %c0_105] : memref<2x4x32x32xf32, #tpu.memory_space<vmem>>, vector<1x1x32x32xf32>
    %201 = vector.shape_cast %200 : vector<1x1x32x32xf32> to vector<32x32xf32>
    %c1_106 = arith.constant 1 : index
    %c2_107 = arith.constant 2 : index
    %c0_108 = arith.constant 0 : index
    %c0_109 = arith.constant 0 : index
    %202 = vector.load %arg3[%c1_106, %c2_107, %c0_108, %c0_109] : memref<2x4x32x32xf32, #tpu.memory_space<vmem>>, vector<1x1x32x32xf32>
    %203 = vector.shape_cast %202 : vector<1x1x32x32xf32> to vector<32x32xf32>
    %c1_110 = arith.constant 1 : index
    %c3_111 = arith.constant 3 : index
    %c0_112 = arith.constant 0 : index
    %c0_113 = arith.constant 0 : index
    %204 = vector.load %arg3[%c1_110, %c3_111, %c0_112, %c0_113] : memref<2x4x32x32xf32, #tpu.memory_space<vmem>>, vector<1x1x32x32xf32>
    %205 = vector.shape_cast %204 : vector<1x1x32x32xf32> to vector<32x32xf32>
    %cst_114 = arith.constant dense<0.000000e+00> : vector<8x32xf32>
    %206 = tpu.matmul %196, %199, %cst_114 {dimension_numbers = #tpu.dot_dimension_numbers<[1], [0], [0], [1], [0, 0, 1, 1], [], []>} : vector<8x32xf32>, vector<32x32xf32>, vector<8x32xf32> -> vector<8x32xf32>
    %c1_115 = arith.constant 1 : index
    %c0_116 = arith.constant 0 : index
    %c0_117 = arith.constant 0 : index
    %207 = vector.load %arg4[%c1_115, %c0_116, %c0_117] : memref<2x4x32xf32, #tpu.memory_space<vmem>>, vector<1x1x32xf32>
    %208 = vector.shape_cast %207 : vector<1x1x32xf32> to vector<1x32xf32>
    %209 = vector.broadcast %208 : vector<1x32xf32> to vector<8x32xf32>
    %210 = arith.addf %206, %209 : vector<8x32xf32>
    %cst_118 = arith.constant dense<0.000000e+00> : vector<16x32xf32>
    %211 = tpu.matmul %197, %201, %cst_118 {dimension_numbers = #tpu.dot_dimension_numbers<[1], [0], [0], [1], [0, 0, 1, 1], [], []>} : vector<16x32xf32>, vector<32x32xf32>, vector<16x32xf32> -> vector<16x32xf32>
    %c1_119 = arith.constant 1 : index
    %c1_120 = arith.constant 1 : index
    %c0_121 = arith.constant 0 : index
    %212 = vector.load %arg4[%c1_119, %c1_120, %c0_121] : memref<2x4x32xf32, #tpu.memory_space<vmem>>, vector<1x1x32xf32>
    %213 = vector.shape_cast %212 : vector<1x1x32xf32> to vector<1x32xf32>
    %214 = vector.broadcast %213 : vector<1x32xf32> to vector<16x32xf32>
    %215 = arith.addf %211, %214 : vector<16x32xf32>
    %cst_122 = arith.constant dense<0.000000e+00> : vector<16x32xf32>
    %216 = tpu.matmul %197, %203, %cst_122 {dimension_numbers = #tpu.dot_dimension_numbers<[1], [0], [0], [1], [0, 0, 1, 1], [], []>} : vector<16x32xf32>, vector<32x32xf32>, vector<16x32xf32> -> vector<16x32xf32>
    %c1_123 = arith.constant 1 : index
    %c2_124 = arith.constant 2 : index
    %c0_125 = arith.constant 0 : index
    %217 = vector.load %arg4[%c1_123, %c2_124, %c0_125] : memref<2x4x32xf32, #tpu.memory_space<vmem>>, vector<1x1x32xf32>
    %218 = vector.shape_cast %217 : vector<1x1x32xf32> to vector<1x32xf32>
    %219 = vector.broadcast %218 : vector<1x32xf32> to vector<16x32xf32>
    %220 = arith.addf %216, %219 : vector<16x32xf32>
    %221 = vector.extract_strided_slice %210 {offsets = [0, 0], sizes = [8, 8], strides = [1, 1]} : vector<8x32xf32> to vector<8x8xf32>
    %222 = vector.extract_strided_slice %215 {offsets = [0, 0], sizes = [16, 8], strides = [1, 1]} : vector<16x32xf32> to vector<16x8xf32>
    %223 = vector.extract_strided_slice %220 {offsets = [0, 0], sizes = [16, 8], strides = [1, 1]} : vector<16x32xf32> to vector<16x8xf32>
    %cst_126 = arith.constant dense<0.000000e+00> : vector<8x16xf32>
    %224 = tpu.matmul %221, %222, %cst_126 {dimension_numbers = #tpu.dot_dimension_numbers<[1], [1], [0], [0], [0, 0, 1, 0], [], []>} : vector<8x8xf32>, vector<16x8xf32>, vector<8x16xf32> -> vector<8x16xf32>
    %cst_127 = arith.constant 0.353553385 : f32
    %225 = vector.broadcast %cst_127 : f32 to vector<8x16xf32>
    %226 = arith.mulf %224, %225 : vector<8x16xf32>
    %227 = vector.broadcast %4 : vector<1x16xf32> to vector<8x16xf32>
    %228 = arith.addf %226, %227 : vector<8x16xf32>
    %cst_128 = arith.constant dense<0xFF800000> : vector<8xf32>
    %229 = vector.multi_reduction <maximumf>, %228, %cst_128 [1] : vector<8x16xf32> to vector<8xf32>
    %230 = vector.shape_cast %229 : vector<8xf32> to vector<8x1xf32>
    %231 = vector.broadcast %230 : vector<8x1xf32> to vector<8x16xf32>
    %232 = arith.subf %228, %231 : vector<8x16xf32>
    %233 = math.exp %232 : vector<8x16xf32>
    %cst_129 = arith.constant dense<0.000000e+00> : vector<8xf32>
    %234 = vector.multi_reduction <add>, %233, %cst_129 [1] : vector<8x16xf32> to vector<8xf32>
    %235 = vector.shape_cast %234 : vector<8xf32> to vector<8x1xf32>
    %236 = tpu.reciprocal %235 {approx = true} : vector<8x1xf32> -> vector<8x1xf32>
    %237 = vector.broadcast %236 : vector<8x1xf32> to vector<8x16xf32>
    %238 = arith.mulf %233, %237 : vector<8x16xf32>
    %cst_130 = arith.constant dense<0.000000e+00> : vector<8x8xf32>
    %239 = tpu.matmul %238, %223, %cst_130 {dimension_numbers = #tpu.dot_dimension_numbers<[1], [0], [0], [1], [0, 0, 1, 1], [], []>} : vector<8x16xf32>, vector<16x8xf32>, vector<8x8xf32> -> vector<8x8xf32>
    %240 = vector.extract_strided_slice %205 {offsets = [0, 0], sizes = [8, 32], strides = [1, 1]} : vector<32x32xf32> to vector<8x32xf32>
    %cst_131 = arith.constant dense<0.000000e+00> : vector<8x32xf32>
    %241 = tpu.matmul %239, %240, %cst_131 {dimension_numbers = #tpu.dot_dimension_numbers<[1], [0], [0], [1], [0, 0, 1, 1], [], []>} : vector<8x8xf32>, vector<8x32xf32>, vector<8x32xf32> -> vector<8x32xf32>
    %242 = vector.extract_strided_slice %210 {offsets = [0, 8], sizes = [8, 8], strides = [1, 1]} : vector<8x32xf32> to vector<8x8xf32>
    %243 = vector.extract_strided_slice %215 {offsets = [0, 8], sizes = [16, 8], strides = [1, 1]} : vector<16x32xf32> to vector<16x8xf32>
    %244 = vector.extract_strided_slice %220 {offsets = [0, 8], sizes = [16, 8], strides = [1, 1]} : vector<16x32xf32> to vector<16x8xf32>
    %cst_132 = arith.constant dense<0.000000e+00> : vector<8x16xf32>
    %245 = tpu.matmul %242, %243, %cst_132 {dimension_numbers = #tpu.dot_dimension_numbers<[1], [1], [0], [0], [0, 0, 1, 0], [], []>} : vector<8x8xf32>, vector<16x8xf32>, vector<8x16xf32> -> vector<8x16xf32>
    %cst_133 = arith.constant 0.353553385 : f32
    %246 = vector.broadcast %cst_133 : f32 to vector<8x16xf32>
    %247 = arith.mulf %245, %246 : vector<8x16xf32>
    %248 = vector.broadcast %4 : vector<1x16xf32> to vector<8x16xf32>
    %249 = arith.addf %247, %248 : vector<8x16xf32>
    %cst_134 = arith.constant dense<0xFF800000> : vector<8xf32>
    %250 = vector.multi_reduction <maximumf>, %249, %cst_134 [1] : vector<8x16xf32> to vector<8xf32>
    %251 = vector.shape_cast %250 : vector<8xf32> to vector<8x1xf32>
    %252 = vector.broadcast %251 : vector<8x1xf32> to vector<8x16xf32>
    %253 = arith.subf %249, %252 : vector<8x16xf32>
    %254 = math.exp %253 : vector<8x16xf32>
    %cst_135 = arith.constant dense<0.000000e+00> : vector<8xf32>
    %255 = vector.multi_reduction <add>, %254, %cst_135 [1] : vector<8x16xf32> to vector<8xf32>
    %256 = vector.shape_cast %255 : vector<8xf32> to vector<8x1xf32>
    %257 = tpu.reciprocal %256 {approx = true} : vector<8x1xf32> -> vector<8x1xf32>
    %258 = vector.broadcast %257 : vector<8x1xf32> to vector<8x16xf32>
    %259 = arith.mulf %254, %258 : vector<8x16xf32>
    %cst_136 = arith.constant dense<0.000000e+00> : vector<8x8xf32>
    %260 = tpu.matmul %259, %244, %cst_136 {dimension_numbers = #tpu.dot_dimension_numbers<[1], [0], [0], [1], [0, 0, 1, 1], [], []>} : vector<8x16xf32>, vector<16x8xf32>, vector<8x8xf32> -> vector<8x8xf32>
    %261 = vector.extract_strided_slice %205 {offsets = [8, 0], sizes = [8, 32], strides = [1, 1]} : vector<32x32xf32> to vector<8x32xf32>
    %cst_137 = arith.constant dense<0.000000e+00> : vector<8x32xf32>
    %262 = tpu.matmul %260, %261, %cst_137 {dimension_numbers = #tpu.dot_dimension_numbers<[1], [0], [0], [1], [0, 0, 1, 1], [], []>} : vector<8x8xf32>, vector<8x32xf32>, vector<8x32xf32> -> vector<8x32xf32>
    %263 = arith.addf %241, %262 : vector<8x32xf32>
    %264 = vector.extract_strided_slice %210 {offsets = [0, 16], sizes = [8, 8], strides = [1, 1]} : vector<8x32xf32> to vector<8x8xf32>
    %265 = vector.extract_strided_slice %215 {offsets = [0, 16], sizes = [16, 8], strides = [1, 1]} : vector<16x32xf32> to vector<16x8xf32>
    %266 = vector.extract_strided_slice %220 {offsets = [0, 16], sizes = [16, 8], strides = [1, 1]} : vector<16x32xf32> to vector<16x8xf32>
    %cst_138 = arith.constant dense<0.000000e+00> : vector<8x16xf32>
    %267 = tpu.matmul %264, %265, %cst_138 {dimension_numbers = #tpu.dot_dimension_numbers<[1], [1], [0], [0], [0, 0, 1, 0], [], []>} : vector<8x8xf32>, vector<16x8xf32>, vector<8x16xf32> -> vector<8x16xf32>
    %cst_139 = arith.constant 0.353553385 : f32
    %268 = vector.broadcast %cst_139 : f32 to vector<8x16xf32>
    %269 = arith.mulf %267, %268 : vector<8x16xf32>
    %270 = vector.broadcast %4 : vector<1x16xf32> to vector<8x16xf32>
    %271 = arith.addf %269, %270 : vector<8x16xf32>
    %cst_140 = arith.constant dense<0xFF800000> : vector<8xf32>
    %272 = vector.multi_reduction <maximumf>, %271, %cst_140 [1] : vector<8x16xf32> to vector<8xf32>
    %273 = vector.shape_cast %272 : vector<8xf32> to vector<8x1xf32>
    %274 = vector.broadcast %273 : vector<8x1xf32> to vector<8x16xf32>
    %275 = arith.subf %271, %274 : vector<8x16xf32>
    %276 = math.exp %275 : vector<8x16xf32>
    %cst_141 = arith.constant dense<0.000000e+00> : vector<8xf32>
    %277 = vector.multi_reduction <add>, %276, %cst_141 [1] : vector<8x16xf32> to vector<8xf32>
    %278 = vector.shape_cast %277 : vector<8xf32> to vector<8x1xf32>
    %279 = tpu.reciprocal %278 {approx = true} : vector<8x1xf32> -> vector<8x1xf32>
    %280 = vector.broadcast %279 : vector<8x1xf32> to vector<8x16xf32>
    %281 = arith.mulf %276, %280 : vector<8x16xf32>
    %cst_142 = arith.constant dense<0.000000e+00> : vector<8x8xf32>
    %282 = tpu.matmul %281, %266, %cst_142 {dimension_numbers = #tpu.dot_dimension_numbers<[1], [0], [0], [1], [0, 0, 1, 1], [], []>} : vector<8x16xf32>, vector<16x8xf32>, vector<8x8xf32> -> vector<8x8xf32>
    %283 = vector.extract_strided_slice %205 {offsets = [16, 0], sizes = [8, 32], strides = [1, 1]} : vector<32x32xf32> to vector<8x32xf32>
    %cst_143 = arith.constant dense<0.000000e+00> : vector<8x32xf32>
    %284 = tpu.matmul %282, %283, %cst_143 {dimension_numbers = #tpu.dot_dimension_numbers<[1], [0], [0], [1], [0, 0, 1, 1], [], []>} : vector<8x8xf32>, vector<8x32xf32>, vector<8x32xf32> -> vector<8x32xf32>
    %285 = arith.addf %263, %284 : vector<8x32xf32>
    %286 = vector.extract_strided_slice %210 {offsets = [0, 24], sizes = [8, 8], strides = [1, 1]} : vector<8x32xf32> to vector<8x8xf32>
    %287 = vector.extract_strided_slice %215 {offsets = [0, 24], sizes = [16, 8], strides = [1, 1]} : vector<16x32xf32> to vector<16x8xf32>
    %288 = vector.extract_strided_slice %220 {offsets = [0, 24], sizes = [16, 8], strides = [1, 1]} : vector<16x32xf32> to vector<16x8xf32>
    %cst_144 = arith.constant dense<0.000000e+00> : vector<8x16xf32>
    %289 = tpu.matmul %286, %287, %cst_144 {dimension_numbers = #tpu.dot_dimension_numbers<[1], [1], [0], [0], [0, 0, 1, 0], [], []>} : vector<8x8xf32>, vector<16x8xf32>, vector<8x16xf32> -> vector<8x16xf32>
    %cst_145 = arith.constant 0.353553385 : f32
    %290 = vector.broadcast %cst_145 : f32 to vector<8x16xf32>
    %291 = arith.mulf %289, %290 : vector<8x16xf32>
    %292 = vector.broadcast %4 : vector<1x16xf32> to vector<8x16xf32>
    %293 = arith.addf %291, %292 : vector<8x16xf32>
    %cst_146 = arith.constant dense<0xFF800000> : vector<8xf32>
    %294 = vector.multi_reduction <maximumf>, %293, %cst_146 [1] : vector<8x16xf32> to vector<8xf32>
    %295 = vector.shape_cast %294 : vector<8xf32> to vector<8x1xf32>
    %296 = vector.broadcast %295 : vector<8x1xf32> to vector<8x16xf32>
    %297 = arith.subf %293, %296 : vector<8x16xf32>
    %298 = math.exp %297 : vector<8x16xf32>
    %cst_147 = arith.constant dense<0.000000e+00> : vector<8xf32>
    %299 = vector.multi_reduction <add>, %298, %cst_147 [1] : vector<8x16xf32> to vector<8xf32>
    %300 = vector.shape_cast %299 : vector<8xf32> to vector<8x1xf32>
    %301 = tpu.reciprocal %300 {approx = true} : vector<8x1xf32> -> vector<8x1xf32>
    %302 = vector.broadcast %301 : vector<8x1xf32> to vector<8x16xf32>
    %303 = arith.mulf %298, %302 : vector<8x16xf32>
    %cst_148 = arith.constant dense<0.000000e+00> : vector<8x8xf32>
    %304 = tpu.matmul %303, %288, %cst_148 {dimension_numbers = #tpu.dot_dimension_numbers<[1], [0], [0], [1], [0, 0, 1, 1], [], []>} : vector<8x16xf32>, vector<16x8xf32>, vector<8x8xf32> -> vector<8x8xf32>
    %305 = vector.extract_strided_slice %205 {offsets = [24, 0], sizes = [8, 32], strides = [1, 1]} : vector<32x32xf32> to vector<8x32xf32>
    %cst_149 = arith.constant dense<0.000000e+00> : vector<8x32xf32>
    %306 = tpu.matmul %304, %305, %cst_149 {dimension_numbers = #tpu.dot_dimension_numbers<[1], [0], [0], [1], [0, 0, 1, 1], [], []>} : vector<8x8xf32>, vector<8x32xf32>, vector<8x32xf32> -> vector<8x32xf32>
    %307 = arith.addf %285, %306 : vector<8x32xf32>
    %c1_150 = arith.constant 1 : index
    %c3_151 = arith.constant 3 : index
    %c0_152 = arith.constant 0 : index
    %308 = vector.load %arg4[%c1_150, %c3_151, %c0_152] : memref<2x4x32xf32, #tpu.memory_space<vmem>>, vector<1x1x32xf32>
    %309 = vector.shape_cast %308 : vector<1x1x32xf32> to vector<1x32xf32>
    %310 = vector.broadcast %309 : vector<1x32xf32> to vector<8x32xf32>
    %311 = arith.addf %307, %310 : vector<8x32xf32>
    %312 = arith.addf %311, %196 : vector<8x32xf32>
    %c1_153 = arith.constant 1 : index
    %c0_154 = arith.constant 0 : index
    %c0_155 = arith.constant 0 : index
    %313 = vector.load %arg5[%c1_153, %c0_154, %c0_155] : memref<2x2x32xf32, #tpu.memory_space<vmem>>, vector<1x1x32xf32>
    %314 = vector.shape_cast %313 : vector<1x1x32xf32> to vector<1x32xf32>
    %c1_156 = arith.constant 1 : index
    %c0_157 = arith.constant 0 : index
    %c0_158 = arith.constant 0 : index
    %315 = vector.load %arg6[%c1_156, %c0_157, %c0_158] : memref<2x2x32xf32, #tpu.memory_space<vmem>>, vector<1x1x32xf32>
    %316 = vector.shape_cast %315 : vector<1x1x32xf32> to vector<1x32xf32>
    %cst_159 = arith.constant dense<0.000000e+00> : vector<8xf32>
    %317 = vector.multi_reduction <add>, %312, %cst_159 [1] : vector<8x32xf32> to vector<8xf32>
    %318 = vector.shape_cast %317 : vector<8xf32> to vector<8x1xf32>
    %cst_160 = arith.constant 3.200000e+01 : f32
    %319 = vector.broadcast %cst_160 : f32 to vector<8x1xf32>
    %320 = arith.divf %318, %319 : vector<8x1xf32>
    %321 = vector.broadcast %320 : vector<8x1xf32> to vector<8x32xf32>
    %322 = arith.subf %312, %321 : vector<8x32xf32>
    %323 = arith.mulf %322, %322 : vector<8x32xf32>
    %cst_161 = arith.constant dense<0.000000e+00> : vector<8xf32>
    %324 = vector.multi_reduction <add>, %323, %cst_161 [1] : vector<8x32xf32> to vector<8xf32>
    %325 = vector.shape_cast %324 : vector<8xf32> to vector<8x1xf32>
    %cst_162 = arith.constant 3.200000e+01 : f32
    %326 = vector.broadcast %cst_162 : f32 to vector<8x1xf32>
    %327 = arith.divf %325, %326 : vector<8x1xf32>
    %cst_163 = arith.constant 9.99999997E-7 : f32
    %328 = vector.broadcast %cst_163 : f32 to vector<8x1xf32>
    %329 = arith.addf %327, %328 : vector<8x1xf32>
    %330 = math.rsqrt %329 : vector<8x1xf32>
    %331 = vector.broadcast %330 : vector<8x1xf32> to vector<8x32xf32>
    %332 = arith.mulf %322, %331 : vector<8x32xf32>
    %333 = vector.broadcast %314 : vector<1x32xf32> to vector<8x32xf32>
    %334 = arith.mulf %333, %332 : vector<8x32xf32>
    %335 = vector.broadcast %316 : vector<1x32xf32> to vector<8x32xf32>
    %336 = arith.addf %334, %335 : vector<8x32xf32>
    %c1_164 = arith.constant 1 : index
    %c0_165 = arith.constant 0 : index
    %c0_166 = arith.constant 0 : index
    %337 = vector.load %arg7[%c1_164, %c0_165, %c0_166] : memref<2x32x64xf32, #tpu.memory_space<vmem>>, vector<1x32x64xf32>
    %338 = vector.shape_cast %337 : vector<1x32x64xf32> to vector<32x64xf32>
    %cst_167 = arith.constant dense<0.000000e+00> : vector<8x64xf32>
    %339 = tpu.matmul %336, %338, %cst_167 {dimension_numbers = #tpu.dot_dimension_numbers<[1], [0], [0], [1], [0, 0, 1, 1], [], []>} : vector<8x32xf32>, vector<32x64xf32>, vector<8x64xf32> -> vector<8x64xf32>
    %c1_168 = arith.constant 1 : index
    %c0_169 = arith.constant 0 : index
    %c0_170 = arith.constant 0 : index
    %340 = vector.load %arg8[%c1_168, %c0_169, %c0_170] : memref<2x1x64xf32, #tpu.memory_space<vmem>>, vector<1x1x64xf32>
    %341 = vector.shape_cast %340 : vector<1x1x64xf32> to vector<1x64xf32>
    %342 = vector.broadcast %341 : vector<1x64xf32> to vector<8x64xf32>
    %343 = arith.addf %339, %342 : vector<8x64xf32>
    %cst_171 = arith.constant 5.000000e-01 : f32
    %344 = vector.broadcast %cst_171 : f32 to vector<8x64xf32>
    %345 = arith.mulf %344, %343 : vector<8x64xf32>
    %cst_172 = arith.constant 4.471500e-02 : f32
    %346 = vector.broadcast %cst_172 : f32 to vector<8x64xf32>
    %347 = arith.mulf %346, %343 : vector<8x64xf32>
    %348 = arith.mulf %347, %343 : vector<8x64xf32>
    %349 = arith.mulf %348, %343 : vector<8x64xf32>
    %350 = arith.addf %343, %349 : vector<8x64xf32>
    %cst_173 = arith.constant 0.797884583 : f32
    %351 = vector.broadcast %cst_173 : f32 to vector<8x64xf32>
    %352 = arith.mulf %351, %350 : vector<8x64xf32>
    %353 = math.tanh %352 : vector<8x64xf32>
    %cst_174 = arith.constant 1.000000e+00 : f32
    %354 = vector.broadcast %cst_174 : f32 to vector<8x64xf32>
    %355 = arith.addf %354, %353 : vector<8x64xf32>
    %356 = arith.mulf %345, %355 : vector<8x64xf32>
    %c1_175 = arith.constant 1 : index
    %c0_176 = arith.constant 0 : index
    %c0_177 = arith.constant 0 : index
    %357 = vector.load %arg9[%c1_175, %c0_176, %c0_177] : memref<2x64x32xf32, #tpu.memory_space<vmem>>, vector<1x64x32xf32>
    %358 = vector.shape_cast %357 : vector<1x64x32xf32> to vector<64x32xf32>
    %cst_178 = arith.constant dense<0.000000e+00> : vector<8x32xf32>
    %359 = tpu.matmul %356, %358, %cst_178 {dimension_numbers = #tpu.dot_dimension_numbers<[1], [0], [0], [1], [0, 0, 1, 1], [], []>} : vector<8x64xf32>, vector<64x32xf32>, vector<8x32xf32> -> vector<8x32xf32>
    %c1_179 = arith.constant 1 : index
    %c0_180 = arith.constant 0 : index
    %c0_181 = arith.constant 0 : index
    %360 = vector.load %arg10[%c1_179, %c0_180, %c0_181] : memref<2x1x32xf32, #tpu.memory_space<vmem>>, vector<1x1x32xf32>
    %361 = vector.shape_cast %360 : vector<1x1x32xf32> to vector<1x32xf32>
    %362 = vector.broadcast %361 : vector<1x32xf32> to vector<8x32xf32>
    %363 = arith.addf %359, %362 : vector<8x32xf32>
    %364 = arith.addf %363, %336 : vector<8x32xf32>
    %c1_182 = arith.constant 1 : index
    %c1_183 = arith.constant 1 : index
    %c0_184 = arith.constant 0 : index
    %365 = vector.load %arg5[%c1_182, %c1_183, %c0_184] : memref<2x2x32xf32, #tpu.memory_space<vmem>>, vector<1x1x32xf32>
    %366 = vector.shape_cast %365 : vector<1x1x32xf32> to vector<1x32xf32>
    %c1_185 = arith.constant 1 : index
    %c1_186 = arith.constant 1 : index
    %c0_187 = arith.constant 0 : index
    %367 = vector.load %arg6[%c1_185, %c1_186, %c0_187] : memref<2x2x32xf32, #tpu.memory_space<vmem>>, vector<1x1x32xf32>
    %368 = vector.shape_cast %367 : vector<1x1x32xf32> to vector<1x32xf32>
    %cst_188 = arith.constant dense<0.000000e+00> : vector<8xf32>
    %369 = vector.multi_reduction <add>, %364, %cst_188 [1] : vector<8x32xf32> to vector<8xf32>
    %370 = vector.shape_cast %369 : vector<8xf32> to vector<8x1xf32>
    %cst_189 = arith.constant 3.200000e+01 : f32
    %371 = vector.broadcast %cst_189 : f32 to vector<8x1xf32>
    %372 = arith.divf %370, %371 : vector<8x1xf32>
    %373 = vector.broadcast %372 : vector<8x1xf32> to vector<8x32xf32>
    %374 = arith.subf %364, %373 : vector<8x32xf32>
    %375 = arith.mulf %374, %374 : vector<8x32xf32>
    %cst_190 = arith.constant dense<0.000000e+00> : vector<8xf32>
    %376 = vector.multi_reduction <add>, %375, %cst_190 [1] : vector<8x32xf32> to vector<8xf32>
    %377 = vector.shape_cast %376 : vector<8xf32> to vector<8x1xf32>
    %cst_191 = arith.constant 3.200000e+01 : f32
    %378 = vector.broadcast %cst_191 : f32 to vector<8x1xf32>
    %379 = arith.divf %377, %378 : vector<8x1xf32>
    %cst_192 = arith.constant 9.99999997E-7 : f32
    %380 = vector.broadcast %cst_192 : f32 to vector<8x1xf32>
    %381 = arith.addf %379, %380 : vector<8x1xf32>
    %382 = math.rsqrt %381 : vector<8x1xf32>
    %383 = vector.broadcast %382 : vector<8x1xf32> to vector<8x32xf32>
    %384 = arith.mulf %374, %383 : vector<8x32xf32>
    %385 = vector.broadcast %366 : vector<1x32xf32> to vector<8x32xf32>
    %386 = arith.mulf %385, %384 : vector<8x32xf32>
    %387 = vector.broadcast %368 : vector<1x32xf32> to vector<8x32xf32>
    %388 = arith.addf %386, %387 : vector<8x32xf32>
    %c0_193 = arith.constant 0 : index
    %c0_194 = arith.constant 0 : index
    %c0_195 = arith.constant 0 : index
    %389 = vector.load %arg11[%c0_193, %c0_194, %c0_195] : memref<2x8x32xf32, #tpu.memory_space<vmem>>, vector<1x8x32xf32>
    %390 = vector.shape_cast %389 : vector<1x8x32xf32> to vector<8x32xf32>
    %391 = vector.shape_cast %388 : vector<8x32xf32> to vector<1x8x32xf32>
    tpu.vector_store %arg11[%c0_193, %c0_194, %c0_195], %391 {strides = array<i32>} : memref<2x8x32xf32, #tpu.memory_space<vmem>>, vector<1x8x32xf32>,
    %c1_196 = arith.constant 1 : index
    %c0_197 = arith.constant 0 : index
    %c0_198 = arith.constant 0 : index
    %392 = vector.load %arg0[%c1_196, %c0_197, %c0_198] : memref<2x8x32xf32, #tpu.memory_space<vmem>>, vector<1x8x32xf32>
    %393 = vector.shape_cast %392 : vector<1x8x32xf32> to vector<8x32xf32>
    %c1_199 = arith.constant 1 : index
    %c0_200 = arith.constant 0 : index
    %c0_201 = arith.constant 0 : index
    %394 = vector.load %arg1[%c1_199, %c0_200, %c0_201] : memref<2x8x32xf32, #tpu.memory_space<vmem>>, vector<1x8x32xf32>
    %395 = vector.shape_cast %394 : vector<1x8x32xf32> to vector<8x32xf32>
    %c1_202 = arith.constant 1 : index
    %c0_203 = arith.constant 0 : index
    %396 = vector.load %arg2[%c1_202, %c0_203] : memref<2x16xf32, #tpu.memory_space<vmem>>, vector<1x16xf32>
    %397 = tpu.concatenate %393, %395 in 0 : vector<8x32xf32>, vector<8x32xf32> -> vector<16x32xf32>
    %c0_204 = arith.constant 0 : index
    %c0_205 = arith.constant 0 : index
    %c0_206 = arith.constant 0 : index
    %c0_207 = arith.constant 0 : index
    %398 = vector.load %arg3[%c0_204, %c0_205, %c0_206, %c0_207] : memref<2x4x32x32xf32, #tpu.memory_space<vmem>>, vector<1x1x32x32xf32>
    %399 = vector.shape_cast %398 : vector<1x1x32x32xf32> to vector<32x32xf32>
    %c0_208 = arith.constant 0 : index
    %c1_209 = arith.constant 1 : index
    %c0_210 = arith.constant 0 : index
    %c0_211 = arith.constant 0 : index
    %400 = vector.load %arg3[%c0_208, %c1_209, %c0_210, %c0_211] : memref<2x4x32x32xf32, #tpu.memory_space<vmem>>, vector<1x1x32x32xf32>
    %401 = vector.shape_cast %400 : vector<1x1x32x32xf32> to vector<32x32xf32>
    %c0_212 = arith.constant 0 : index
    %c2_213 = arith.constant 2 : index
    %c0_214 = arith.constant 0 : index
    %c0_215 = arith.constant 0 : index
    %402 = vector.load %arg3[%c0_212, %c2_213, %c0_214, %c0_215] : memref<2x4x32x32xf32, #tpu.memory_space<vmem>>, vector<1x1x32x32xf32>
    %403 = vector.shape_cast %402 : vector<1x1x32x32xf32> to vector<32x32xf32>
    %c0_216 = arith.constant 0 : index
    %c3_217 = arith.constant 3 : index
    %c0_218 = arith.constant 0 : index
    %c0_219 = arith.constant 0 : index
    %404 = vector.load %arg3[%c0_216, %c3_217, %c0_218, %c0_219] : memref<2x4x32x32xf32, #tpu.memory_space<vmem>>, vector<1x1x32x32xf32>
    %405 = vector.shape_cast %404 : vector<1x1x32x32xf32> to vector<32x32xf32>
    %cst_220 = arith.constant dense<0.000000e+00> : vector<8x32xf32>
    %406 = tpu.matmul %395, %399, %cst_220 {dimension_numbers = #tpu.dot_dimension_numbers<[1], [0], [0], [1], [0, 0, 1, 1], [], []>} : vector<8x32xf32>, vector<32x32xf32>, vector<8x32xf32> -> vector<8x32xf32>
    %c0_221 = arith.constant 0 : index
    %c0_222 = arith.constant 0 : index
    %c0_223 = arith.constant 0 : index
    %407 = vector.load %arg4[%c0_221, %c0_222, %c0_223] : memref<2x4x32xf32, #tpu.memory_space<vmem>>, vector<1x1x32xf32>
    %408 = vector.shape_cast %407 : vector<1x1x32xf32> to vector<1x32xf32>
    %409 = vector.broadcast %408 : vector<1x32xf32> to vector<8x32xf32>
    %410 = arith.addf %406, %409 : vector<8x32xf32>
    %cst_224 = arith.constant dense<0.000000e+00> : vector<16x32xf32>
    %411 = tpu.matmul %397, %401, %cst_224 {dimension_numbers = #tpu.dot_dimension_numbers<[1], [0], [0], [1], [0, 0, 1, 1], [], []>} : vector<16x32xf32>, vector<32x32xf32>, vector<16x32xf32> -> vector<16x32xf32>
    %c0_225 = arith.constant 0 : index
    %c1_226 = arith.constant 1 : index
    %c0_227 = arith.constant 0 : index
    %412 = vector.load %arg4[%c0_225, %c1_226, %c0_227] : memref<2x4x32xf32, #tpu.memory_space<vmem>>, vector<1x1x32xf32>
    %413 = vector.shape_cast %412 : vector<1x1x32xf32> to vector<1x32xf32>
    %414 = vector.broadcast %413 : vector<1x32xf32> to vector<16x32xf32>
    %415 = arith.addf %411, %414 : vector<16x32xf32>
    %cst_228 = arith.constant dense<0.000000e+00> : vector<16x32xf32>
    %416 = tpu.matmul %397, %403, %cst_228 {dimension_numbers = #tpu.dot_dimension_numbers<[1], [0], [0], [1], [0, 0, 1, 1], [], []>} : vector<16x32xf32>, vector<32x32xf32>, vector<16x32xf32> -> vector<16x32xf32>
    %c0_229 = arith.constant 0 : index
    %c2_230 = arith.constant 2 : index
    %c0_231 = arith.constant 0 : index
    %417 = vector.load %arg4[%c0_229, %c2_230, %c0_231] : memref<2x4x32xf32, #tpu.memory_space<vmem>>, vector<1x1x32xf32>
    %418 = vector.shape_cast %417 : vector<1x1x32xf32> to vector<1x32xf32>
    %419 = vector.broadcast %418 : vector<1x32xf32> to vector<16x32xf32>
    %420 = arith.addf %416, %419 : vector<16x32xf32>
    %421 = vector.extract_strided_slice %410 {offsets = [0, 0], sizes = [8, 8], strides = [1, 1]} : vector<8x32xf32> to vector<8x8xf32>
    %422 = vector.extract_strided_slice %415 {offsets = [0, 0], sizes = [16, 8], strides = [1, 1]} : vector<16x32xf32> to vector<16x8xf32>
    %423 = vector.extract_strided_slice %420 {offsets = [0, 0], sizes = [16, 8], strides = [1, 1]} : vector<16x32xf32> to vector<16x8xf32>
    %cst_232 = arith.constant dense<0.000000e+00> : vector<8x16xf32>
    %424 = tpu.matmul %421, %422, %cst_232 {dimension_numbers = #tpu.dot_dimension_numbers<[1], [1], [0], [0], [0, 0, 1, 0], [], []>} : vector<8x8xf32>, vector<16x8xf32>, vector<8x16xf32> -> vector<8x16xf32>
    %cst_233 = arith.constant 0.353553385 : f32
    %425 = vector.broadcast %cst_233 : f32 to vector<8x16xf32>
    %426 = arith.mulf %424, %425 : vector<8x16xf32>
    %427 = vector.broadcast %396 : vector<1x16xf32> to vector<8x16xf32>
    %428 = arith.addf %426, %427 : vector<8x16xf32>
    %cst_234 = arith.constant dense<0xFF800000> : vector<8xf32>
    %429 = vector.multi_reduction <maximumf>, %428, %cst_234 [1] : vector<8x16xf32> to vector<8xf32>
    %430 = vector.shape_cast %429 : vector<8xf32> to vector<8x1xf32>
    %431 = vector.broadcast %430 : vector<8x1xf32> to vector<8x16xf32>
    %432 = arith.subf %428, %431 : vector<8x16xf32>
    %433 = math.exp %432 : vector<8x16xf32>
    %cst_235 = arith.constant dense<0.000000e+00> : vector<8xf32>
    %434 = vector.multi_reduction <add>, %433, %cst_235 [1] : vector<8x16xf32> to vector<8xf32>
    %435 = vector.shape_cast %434 : vector<8xf32> to vector<8x1xf32>
    %436 = tpu.reciprocal %435 {approx = true} : vector<8x1xf32> -> vector<8x1xf32>
    %437 = vector.broadcast %436 : vector<8x1xf32> to vector<8x16xf32>
    %438 = arith.mulf %433, %437 : vector<8x16xf32>
    %cst_236 = arith.constant dense<0.000000e+00> : vector<8x8xf32>
    %439 = tpu.matmul %438, %423, %cst_236 {dimension_numbers = #tpu.dot_dimension_numbers<[1], [0], [0], [1], [0, 0, 1, 1], [], []>} : vector<8x16xf32>, vector<16x8xf32>, vector<8x8xf32> -> vector<8x8xf32>
    %440 = vector.extract_strided_slice %405 {offsets = [0, 0], sizes = [8, 32], strides = [1, 1]} : vector<32x32xf32> to vector<8x32xf32>
    %cst_237 = arith.constant dense<0.000000e+00> : vector<8x32xf32>
    %441 = tpu.matmul %439, %440, %cst_237 {dimension_numbers = #tpu.dot_dimension_numbers<[1], [0], [0], [1], [0, 0, 1, 1], [], []>} : vector<8x8xf32>, vector<8x32xf32>, vector<8x32xf32> -> vector<8x32xf32>
    %442 = vector.extract_strided_slice %410 {offsets = [0, 8], sizes = [8, 8], strides = [1, 1]} : vector<8x32xf32> to vector<8x8xf32>
    %443 = vector.extract_strided_slice %415 {offsets = [0, 8], sizes = [16, 8], strides = [1, 1]} : vector<16x32xf32> to vector<16x8xf32>
    %444 = vector.extract_strided_slice %420 {offsets = [0, 8], sizes = [16, 8], strides = [1, 1]} : vector<16x32xf32> to vector<16x8xf32>
    %cst_238 = arith.constant dense<0.000000e+00> : vector<8x16xf32>
    %445 = tpu.matmul %442, %443, %cst_238 {dimension_numbers = #tpu.dot_dimension_numbers<[1], [1], [0], [0], [0, 0, 1, 0], [], []>} : vector<8x8xf32>, vector<16x8xf32>, vector<8x16xf32> -> vector<8x16xf32>
    %cst_239 = arith.constant 0.353553385 : f32
    %446 = vector.broadcast %cst_239 : f32 to vector<8x16xf32>
    %447 = arith.mulf %445, %446 : vector<8x16xf32>
    %448 = vector.broadcast %396 : vector<1x16xf32> to vector<8x16xf32>
    %449 = arith.addf %447, %448 : vector<8x16xf32>
    %cst_240 = arith.constant dense<0xFF800000> : vector<8xf32>
    %450 = vector.multi_reduction <maximumf>, %449, %cst_240 [1] : vector<8x16xf32> to vector<8xf32>
    %451 = vector.shape_cast %450 : vector<8xf32> to vector<8x1xf32>
    %452 = vector.broadcast %451 : vector<8x1xf32> to vector<8x16xf32>
    %453 = arith.subf %449, %452 : vector<8x16xf32>
    %454 = math.exp %453 : vector<8x16xf32>
    %cst_241 = arith.constant dense<0.000000e+00> : vector<8xf32>
    %455 = vector.multi_reduction <add>, %454, %cst_241 [1] : vector<8x16xf32> to vector<8xf32>
    %456 = vector.shape_cast %455 : vector<8xf32> to vector<8x1xf32>
    %457 = tpu.reciprocal %456 {approx = true} : vector<8x1xf32> -> vector<8x1xf32>
    %458 = vector.broadcast %457 : vector<8x1xf32> to vector<8x16xf32>
    %459 = arith.mulf %454, %458 : vector<8x16xf32>
    %cst_242 = arith.constant dense<0.000000e+00> : vector<8x8xf32>
    %460 = tpu.matmul %459, %444, %cst_242 {dimension_numbers = #tpu.dot_dimension_numbers<[1], [0], [0], [1], [0, 0, 1, 1], [], []>} : vector<8x16xf32>, vector<16x8xf32>, vector<8x8xf32> -> vector<8x8xf32>
    %461 = vector.extract_strided_slice %405 {offsets = [8, 0], sizes = [8, 32], strides = [1, 1]} : vector<32x32xf32> to vector<8x32xf32>
    %cst_243 = arith.constant dense<0.000000e+00> : vector<8x32xf32>
    %462 = tpu.matmul %460, %461, %cst_243 {dimension_numbers = #tpu.dot_dimension_numbers<[1], [0], [0], [1], [0, 0, 1, 1], [], []>} : vector<8x8xf32>, vector<8x32xf32>, vector<8x32xf32> -> vector<8x32xf32>
    %463 = arith.addf %441, %462 : vector<8x32xf32>
    %464 = vector.extract_strided_slice %410 {offsets = [0, 16], sizes = [8, 8], strides = [1, 1]} : vector<8x32xf32> to vector<8x8xf32>
    %465 = vector.extract_strided_slice %415 {offsets = [0, 16], sizes = [16, 8], strides = [1, 1]} : vector<16x32xf32> to vector<16x8xf32>
    %466 = vector.extract_strided_slice %420 {offsets = [0, 16], sizes = [16, 8], strides = [1, 1]} : vector<16x32xf32> to vector<16x8xf32>
    %cst_244 = arith.constant dense<0.000000e+00> : vector<8x16xf32>
    %467 = tpu.matmul %464, %465, %cst_244 {dimension_numbers = #tpu.dot_dimension_numbers<[1], [1], [0], [0], [0, 0, 1, 0], [], []>} : vector<8x8xf32>, vector<16x8xf32>, vector<8x16xf32> -> vector<8x16xf32>
    %cst_245 = arith.constant 0.353553385 : f32
    %468 = vector.broadcast %cst_245 : f32 to vector<8x16xf32>
    %469 = arith.mulf %467, %468 : vector<8x16xf32>
    %470 = vector.broadcast %396 : vector<1x16xf32> to vector<8x16xf32>
    %471 = arith.addf %469, %470 : vector<8x16xf32>
    %cst_246 = arith.constant dense<0xFF800000> : vector<8xf32>
    %472 = vector.multi_reduction <maximumf>, %471, %cst_246 [1] : vector<8x16xf32> to vector<8xf32>
    %473 = vector.shape_cast %472 : vector<8xf32> to vector<8x1xf32>
    %474 = vector.broadcast %473 : vector<8x1xf32> to vector<8x16xf32>
    %475 = arith.subf %471, %474 : vector<8x16xf32>
    %476 = math.exp %475 : vector<8x16xf32>
    %cst_247 = arith.constant dense<0.000000e+00> : vector<8xf32>
    %477 = vector.multi_reduction <add>, %476, %cst_247 [1] : vector<8x16xf32> to vector<8xf32>
    %478 = vector.shape_cast %477 : vector<8xf32> to vector<8x1xf32>
    %479 = tpu.reciprocal %478 {approx = true} : vector<8x1xf32> -> vector<8x1xf32>
    %480 = vector.broadcast %479 : vector<8x1xf32> to vector<8x16xf32>
    %481 = arith.mulf %476, %480 : vector<8x16xf32>
    %cst_248 = arith.constant dense<0.000000e+00> : vector<8x8xf32>
    %482 = tpu.matmul %481, %466, %cst_248 {dimension_numbers = #tpu.dot_dimension_numbers<[1], [0], [0], [1], [0, 0, 1, 1], [], []>} : vector<8x16xf32>, vector<16x8xf32>, vector<8x8xf32> -> vector<8x8xf32>
    %483 = vector.extract_strided_slice %405 {offsets = [16, 0], sizes = [8, 32], strides = [1, 1]} : vector<32x32xf32> to vector<8x32xf32>
    %cst_249 = arith.constant dense<0.000000e+00> : vector<8x32xf32>
    %484 = tpu.matmul %482, %483, %cst_249 {dimension_numbers = #tpu.dot_dimension_numbers<[1], [0], [0], [1], [0, 0, 1, 1], [], []>} : vector<8x8xf32>, vector<8x32xf32>, vector<8x32xf32> -> vector<8x32xf32>
    %485 = arith.addf %463, %484 : vector<8x32xf32>
    %486 = vector.extract_strided_slice %410 {offsets = [0, 24], sizes = [8, 8], strides = [1, 1]} : vector<8x32xf32> to vector<8x8xf32>
    %487 = vector.extract_strided_slice %415 {offsets = [0, 24], sizes = [16, 8], strides = [1, 1]} : vector<16x32xf32> to vector<16x8xf32>
    %488 = vector.extract_strided_slice %420 {offsets = [0, 24], sizes = [16, 8], strides = [1, 1]} : vector<16x32xf32> to vector<16x8xf32>
    %cst_250 = arith.constant dense<0.000000e+00> : vector<8x16xf32>
    %489 = tpu.matmul %486, %487, %cst_250 {dimension_numbers = #tpu.dot_dimension_numbers<[1], [1], [0], [0], [0, 0, 1, 0], [], []>} : vector<8x8xf32>, vector<16x8xf32>, vector<8x16xf32> -> vector<8x16xf32>
    %cst_251 = arith.constant 0.353553385 : f32
    %490 = vector.broadcast %cst_251 : f32 to vector<8x16xf32>
    %491 = arith.mulf %489, %490 : vector<8x16xf32>
    %492 = vector.broadcast %396 : vector<1x16xf32> to vector<8x16xf32>
    %493 = arith.addf %491, %492 : vector<8x16xf32>
    %cst_252 = arith.constant dense<0xFF800000> : vector<8xf32>
    %494 = vector.multi_reduction <maximumf>, %493, %cst_252 [1] : vector<8x16xf32> to vector<8xf32>
    %495 = vector.shape_cast %494 : vector<8xf32> to vector<8x1xf32>
    %496 = vector.broadcast %495 : vector<8x1xf32> to vector<8x16xf32>
    %497 = arith.subf %493, %496 : vector<8x16xf32>
    %498 = math.exp %497 : vector<8x16xf32>
    %cst_253 = arith.constant dense<0.000000e+00> : vector<8xf32>
    %499 = vector.multi_reduction <add>, %498, %cst_253 [1] : vector<8x16xf32> to vector<8xf32>
    %500 = vector.shape_cast %499 : vector<8xf32> to vector<8x1xf32>
    %501 = tpu.reciprocal %500 {approx = true} : vector<8x1xf32> -> vector<8x1xf32>
    %502 = vector.broadcast %501 : vector<8x1xf32> to vector<8x16xf32>
    %503 = arith.mulf %498, %502 : vector<8x16xf32>
    %cst_254 = arith.constant dense<0.000000e+00> : vector<8x8xf32>
    %504 = tpu.matmul %503, %488, %cst_254 {dimension_numbers = #tpu.dot_dimension_numbers<[1], [0], [0], [1], [0, 0, 1, 1], [], []>} : vector<8x16xf32>, vector<16x8xf32>, vector<8x8xf32> -> vector<8x8xf32>
    %505 = vector.extract_strided_slice %405 {offsets = [24, 0], sizes = [8, 32], strides = [1, 1]} : vector<32x32xf32> to vector<8x32xf32>
    %cst_255 = arith.constant dense<0.000000e+00> : vector<8x32xf32>
    %506 = tpu.matmul %504, %505, %cst_255 {dimension_numbers = #tpu.dot_dimension_numbers<[1], [0], [0], [1], [0, 0, 1, 1], [], []>} : vector<8x8xf32>, vector<8x32xf32>, vector<8x32xf32> -> vector<8x32xf32>
    %507 = arith.addf %485, %506 : vector<8x32xf32>
    %c0_256 = arith.constant 0 : index
    %c3_257 = arith.constant 3 : index
    %c0_258 = arith.constant 0 : index
    %508 = vector.load %arg4[%c0_256, %c3_257, %c0_258] : memref<2x4x32xf32, #tpu.memory_space<vmem>>, vector<1x1x32xf32>
    %509 = vector.shape_cast %508 : vector<1x1x32xf32> to vector<1x32xf32>
    %510 = vector.broadcast %509 : vector<1x32xf32> to vector<8x32xf32>
    %511 = arith.addf %507, %510 : vector<8x32xf32>
    %512 = arith.addf %511, %395 : vector<8x32xf32>
    %c0_259 = arith.constant 0 : index
    %c0_260 = arith.constant 0 : index
    %c0_261 = arith.constant 0 : index
    %513 = vector.load %arg5[%c0_259, %c0_260, %c0_261] : memref<2x2x32xf32, #tpu.memory_space<vmem>>, vector<1x1x32xf32>
    %514 = vector.shape_cast %513 : vector<1x1x32xf32> to vector<1x32xf32>
    %c0_262 = arith.constant 0 : index
    %c0_263 = arith.constant 0 : index
    %c0_264 = arith.constant 0 : index
    %515 = vector.load %arg6[%c0_262, %c0_263, %c0_264] : memref<2x2x32xf32, #tpu.memory_space<vmem>>, vector<1x1x32xf32>
    %516 = vector.shape_cast %515 : vector<1x1x32xf32> to vector<1x32xf32>
    %cst_265 = arith.constant dense<0.000000e+00> : vector<8xf32>
    %517 = vector.multi_reduction <add>, %512, %cst_265 [1] : vector<8x32xf32> to vector<8xf32>
    %518 = vector.shape_cast %517 : vector<8xf32> to vector<8x1xf32>
    %cst_266 = arith.constant 3.200000e+01 : f32
    %519 = vector.broadcast %cst_266 : f32 to vector<8x1xf32>
    %520 = arith.divf %518, %519 : vector<8x1xf32>
    %521 = vector.broadcast %520 : vector<8x1xf32> to vector<8x32xf32>
    %522 = arith.subf %512, %521 : vector<8x32xf32>
    %523 = arith.mulf %522, %522 : vector<8x32xf32>
    %cst_267 = arith.constant dense<0.000000e+00> : vector<8xf32>
    %524 = vector.multi_reduction <add>, %523, %cst_267 [1] : vector<8x32xf32> to vector<8xf32>
    %525 = vector.shape_cast %524 : vector<8xf32> to vector<8x1xf32>
    %cst_268 = arith.constant 3.200000e+01 : f32
    %526 = vector.broadcast %cst_268 : f32 to vector<8x1xf32>
    %527 = arith.divf %525, %526 : vector<8x1xf32>
    %cst_269 = arith.constant 9.99999997E-7 : f32
    %528 = vector.broadcast %cst_269 : f32 to vector<8x1xf32>
    %529 = arith.addf %527, %528 : vector<8x1xf32>
    %530 = math.rsqrt %529 : vector<8x1xf32>
    %531 = vector.broadcast %530 : vector<8x1xf32> to vector<8x32xf32>
    %532 = arith.mulf %522, %531 : vector<8x32xf32>
    %533 = vector.broadcast %514 : vector<1x32xf32> to vector<8x32xf32>
    %534 = arith.mulf %533, %532 : vector<8x32xf32>
    %535 = vector.broadcast %516 : vector<1x32xf32> to vector<8x32xf32>
    %536 = arith.addf %534, %535 : vector<8x32xf32>
    %c0_270 = arith.constant 0 : index
    %c0_271 = arith.constant 0 : index
    %c0_272 = arith.constant 0 : index
    %537 = vector.load %arg7[%c0_270, %c0_271, %c0_272] : memref<2x32x64xf32, #tpu.memory_space<vmem>>, vector<1x32x64xf32>
    %538 = vector.shape_cast %537 : vector<1x32x64xf32> to vector<32x64xf32>
    %cst_273 = arith.constant dense<0.000000e+00> : vector<8x64xf32>
    %539 = tpu.matmul %536, %538, %cst_273 {dimension_numbers = #tpu.dot_dimension_numbers<[1], [0], [0], [1], [0, 0, 1, 1], [], []>} : vector<8x32xf32>, vector<32x64xf32>, vector<8x64xf32> -> vector<8x64xf32>
    %c0_274 = arith.constant 0 : index
    %c0_275 = arith.constant 0 : index
    %c0_276 = arith.constant 0 : index
    %540 = vector.load %arg8[%c0_274, %c0_275, %c0_276] : memref<2x1x64xf32, #tpu.memory_space<vmem>>, vector<1x1x64xf32>
    %541 = vector.shape_cast %540 : vector<1x1x64xf32> to vector<1x64xf32>
    %542 = vector.broadcast %541 : vector<1x64xf32> to vector<8x64xf32>
    %543 = arith.addf %539, %542 : vector<8x64xf32>
    %cst_277 = arith.constant 5.000000e-01 : f32
    %544 = vector.broadcast %cst_277 : f32 to vector<8x64xf32>
    %545 = arith.mulf %544, %543 : vector<8x64xf32>
    %cst_278 = arith.constant 4.471500e-02 : f32
    %546 = vector.broadcast %cst_278 : f32 to vector<8x64xf32>
    %547 = arith.mulf %546, %543 : vector<8x64xf32>
    %548 = arith.mulf %547, %543 : vector<8x64xf32>
    %549 = arith.mulf %548, %543 : vector<8x64xf32>
    %550 = arith.addf %543, %549 : vector<8x64xf32>
    %cst_279 = arith.constant 0.797884583 : f32
    %551 = vector.broadcast %cst_279 : f32 to vector<8x64xf32>
    %552 = arith.mulf %551, %550 : vector<8x64xf32>
    %553 = math.tanh %552 : vector<8x64xf32>
    %cst_280 = arith.constant 1.000000e+00 : f32
    %554 = vector.broadcast %cst_280 : f32 to vector<8x64xf32>
    %555 = arith.addf %554, %553 : vector<8x64xf32>
    %556 = arith.mulf %545, %555 : vector<8x64xf32>
    %c0_281 = arith.constant 0 : index
    %c0_282 = arith.constant 0 : index
    %c0_283 = arith.constant 0 : index
    %557 = vector.load %arg9[%c0_281, %c0_282, %c0_283] : memref<2x64x32xf32, #tpu.memory_space<vmem>>, vector<1x64x32xf32>
    %558 = vector.shape_cast %557 : vector<1x64x32xf32> to vector<64x32xf32>
    %cst_284 = arith.constant dense<0.000000e+00> : vector<8x32xf32>
    %559 = tpu.matmul %556, %558, %cst_284 {dimension_numbers = #tpu.dot_dimension_numbers<[1], [0], [0], [1], [0, 0, 1, 1], [], []>} : vector<8x64xf32>, vector<64x32xf32>, vector<8x32xf32> -> vector<8x32xf32>
    %c0_285 = arith.constant 0 : index
    %c0_286 = arith.constant 0 : index
    %c0_287 = arith.constant 0 : index
    %560 = vector.load %arg10[%c0_285, %c0_286, %c0_287] : memref<2x1x32xf32, #tpu.memory_space<vmem>>, vector<1x1x32xf32>
    %561 = vector.shape_cast %560 : vector<1x1x32xf32> to vector<1x32xf32>
    %562 = vector.broadcast %561 : vector<1x32xf32> to vector<8x32xf32>
    %563 = arith.addf %559, %562 : vector<8x32xf32>
    %564 = arith.addf %563, %536 : vector<8x32xf32>
    %c0_288 = arith.constant 0 : index
    %c1_289 = arith.constant 1 : index
    %c0_290 = arith.constant 0 : index
    %565 = vector.load %arg5[%c0_288, %c1_289, %c0_290] : memref<2x2x32xf32, #tpu.memory_space<vmem>>, vector<1x1x32xf32>
    %566 = vector.shape_cast %565 : vector<1x1x32xf32> to vector<1x32xf32>
    %c0_291 = arith.constant 0 : index
    %c1_292 = arith.constant 1 : index
    %c0_293 = arith.constant 0 : index
    %567 = vector.load %arg6[%c0_291, %c1_292, %c0_293] : memref<2x2x32xf32, #tpu.memory_space<vmem>>, vector<1x1x32xf32>
    %568 = vector.shape_cast %567 : vector<1x1x32xf32> to vector<1x32xf32>
    %cst_294 = arith.constant dense<0.000000e+00> : vector<8xf32>
    %569 = vector.multi_reduction <add>, %564, %cst_294 [1] : vector<8x32xf32> to vector<8xf32>
    %570 = vector.shape_cast %569 : vector<8xf32> to vector<8x1xf32>
    %cst_295 = arith.constant 3.200000e+01 : f32
    %571 = vector.broadcast %cst_295 : f32 to vector<8x1xf32>
    %572 = arith.divf %570, %571 : vector<8x1xf32>
    %573 = vector.broadcast %572 : vector<8x1xf32> to vector<8x32xf32>
    %574 = arith.subf %564, %573 : vector<8x32xf32>
    %575 = arith.mulf %574, %574 : vector<8x32xf32>
    %cst_296 = arith.constant dense<0.000000e+00> : vector<8xf32>
    %576 = vector.multi_reduction <add>, %575, %cst_296 [1] : vector<8x32xf32> to vector<8xf32>
    %577 = vector.shape_cast %576 : vector<8xf32> to vector<8x1xf32>
    %cst_297 = arith.constant 3.200000e+01 : f32
    %578 = vector.broadcast %cst_297 : f32 to vector<8x1xf32>
    %579 = arith.divf %577, %578 : vector<8x1xf32>
    %cst_298 = arith.constant 9.99999997E-7 : f32
    %580 = vector.broadcast %cst_298 : f32 to vector<8x1xf32>
    %581 = arith.addf %579, %580 : vector<8x1xf32>
    %582 = math.rsqrt %581 : vector<8x1xf32>
    %583 = vector.broadcast %582 : vector<8x1xf32> to vector<8x32xf32>
    %584 = arith.mulf %574, %583 : vector<8x32xf32>
    %585 = vector.broadcast %566 : vector<1x32xf32> to vector<8x32xf32>
    %586 = arith.mulf %585, %584 : vector<8x32xf32>
    %587 = vector.broadcast %568 : vector<1x32xf32> to vector<8x32xf32>
    %588 = arith.addf %586, %587 : vector<8x32xf32>
    %589 = tpu.concatenate %393, %588 in 0 : vector<8x32xf32>, vector<8x32xf32> -> vector<16x32xf32>
    %c1_299 = arith.constant 1 : index
    %c0_300 = arith.constant 0 : index
    %c0_301 = arith.constant 0 : index
    %c0_302 = arith.constant 0 : index
    %590 = vector.load %arg3[%c1_299, %c0_300, %c0_301, %c0_302] : memref<2x4x32x32xf32, #tpu.memory_space<vmem>>, vector<1x1x32x32xf32>
    %591 = vector.shape_cast %590 : vector<1x1x32x32xf32> to vector<32x32xf32>
    %c1_303 = arith.constant 1 : index
    %c1_304 = arith.constant 1 : index
    %c0_305 = arith.constant 0 : index
    %c0_306 = arith.constant 0 : index
    %592 = vector.load %arg3[%c1_303, %c1_304, %c0_305, %c0_306] : memref<2x4x32x32xf32, #tpu.memory_space<vmem>>, vector<1x1x32x32xf32>
    %593 = vector.shape_cast %592 : vector<1x1x32x32xf32> to vector<32x32xf32>
    %c1_307 = arith.constant 1 : index
    %c2_308 = arith.constant 2 : index
    %c0_309 = arith.constant 0 : index
    %c0_310 = arith.constant 0 : index
    %594 = vector.load %arg3[%c1_307, %c2_308, %c0_309, %c0_310] : memref<2x4x32x32xf32, #tpu.memory_space<vmem>>, vector<1x1x32x32xf32>
    %595 = vector.shape_cast %594 : vector<1x1x32x32xf32> to vector<32x32xf32>
    %c1_311 = arith.constant 1 : index
    %c3_312 = arith.constant 3 : index
    %c0_313 = arith.constant 0 : index
    %c0_314 = arith.constant 0 : index
    %596 = vector.load %arg3[%c1_311, %c3_312, %c0_313, %c0_314] : memref<2x4x32x32xf32, #tpu.memory_space<vmem>>, vector<1x1x32x32xf32>
    %597 = vector.shape_cast %596 : vector<1x1x32x32xf32> to vector<32x32xf32>
    %cst_315 = arith.constant dense<0.000000e+00> : vector<8x32xf32>
    %598 = tpu.matmul %588, %591, %cst_315 {dimension_numbers = #tpu.dot_dimension_numbers<[1], [0], [0], [1], [0, 0, 1, 1], [], []>} : vector<8x32xf32>, vector<32x32xf32>, vector<8x32xf32> -> vector<8x32xf32>
    %c1_316 = arith.constant 1 : index
    %c0_317 = arith.constant 0 : index
    %c0_318 = arith.constant 0 : index
    %599 = vector.load %arg4[%c1_316, %c0_317, %c0_318] : memref<2x4x32xf32, #tpu.memory_space<vmem>>, vector<1x1x32xf32>
    %600 = vector.shape_cast %599 : vector<1x1x32xf32> to vector<1x32xf32>
    %601 = vector.broadcast %600 : vector<1x32xf32> to vector<8x32xf32>
    %602 = arith.addf %598, %601 : vector<8x32xf32>
    %cst_319 = arith.constant dense<0.000000e+00> : vector<16x32xf32>
    %603 = tpu.matmul %589, %593, %cst_319 {dimension_numbers = #tpu.dot_dimension_numbers<[1], [0], [0], [1], [0, 0, 1, 1], [], []>} : vector<16x32xf32>, vector<32x32xf32>, vector<16x32xf32> -> vector<16x32xf32>
    %c1_320 = arith.constant 1 : index
    %c1_321 = arith.constant 1 : index
    %c0_322 = arith.constant 0 : index
    %604 = vector.load %arg4[%c1_320, %c1_321, %c0_322] : memref<2x4x32xf32, #tpu.memory_space<vmem>>, vector<1x1x32xf32>
    %605 = vector.shape_cast %604 : vector<1x1x32xf32> to vector<1x32xf32>
    %606 = vector.broadcast %605 : vector<1x32xf32> to vector<16x32xf32>
    %607 = arith.addf %603, %606 : vector<16x32xf32>
    %cst_323 = arith.constant dense<0.000000e+00> : vector<16x32xf32>
    %608 = tpu.matmul %589, %595, %cst_323 {dimension_numbers = #tpu.dot_dimension_numbers<[1], [0], [0], [1], [0, 0, 1, 1], [], []>} : vector<16x32xf32>, vector<32x32xf32>, vector<16x32xf32> -> vector<16x32xf32>
    %c1_324 = arith.constant 1 : index
    %c2_325 = arith.constant 2 : index
    %c0_326 = arith.constant 0 : index
    %609 = vector.load %arg4[%c1_324, %c2_325, %c0_326] : memref<2x4x32xf32, #tpu.memory_space<vmem>>, vector<1x1x32xf32>
    %610 = vector.shape_cast %609 : vector<1x1x32xf32> to vector<1x32xf32>
    %611 = vector.broadcast %610 : vector<1x32xf32> to vector<16x32xf32>
    %612 = arith.addf %608, %611 : vector<16x32xf32>
    %613 = vector.extract_strided_slice %602 {offsets = [0, 0], sizes = [8, 8], strides = [1, 1]} : vector<8x32xf32> to vector<8x8xf32>
    %614 = vector.extract_strided_slice %607 {offsets = [0, 0], sizes = [16, 8], strides = [1, 1]} : vector<16x32xf32> to vector<16x8xf32>
    %615 = vector.extract_strided_slice %612 {offsets = [0, 0], sizes = [16, 8], strides = [1, 1]} : vector<16x32xf32> to vector<16x8xf32>
    %cst_327 = arith.constant dense<0.000000e+00> : vector<8x16xf32>
    %616 = tpu.matmul %613, %614, %cst_327 {dimension_numbers = #tpu.dot_dimension_numbers<[1], [1], [0], [0], [0, 0, 1, 0], [], []>} : vector<8x8xf32>, vector<16x8xf32>, vector<8x16xf32> -> vector<8x16xf32>
    %cst_328 = arith.constant 0.353553385 : f32
    %617 = vector.broadcast %cst_328 : f32 to vector<8x16xf32>
    %618 = arith.mulf %616, %617 : vector<8x16xf32>
    %619 = vector.broadcast %396 : vector<1x16xf32> to vector<8x16xf32>
    %620 = arith.addf %618, %619 : vector<8x16xf32>
    %cst_329 = arith.constant dense<0xFF800000> : vector<8xf32>
    %621 = vector.multi_reduction <maximumf>, %620, %cst_329 [1] : vector<8x16xf32> to vector<8xf32>
    %622 = vector.shape_cast %621 : vector<8xf32> to vector<8x1xf32>
    %623 = vector.broadcast %622 : vector<8x1xf32> to vector<8x16xf32>
    %624 = arith.subf %620, %623 : vector<8x16xf32>
    %625 = math.exp %624 : vector<8x16xf32>
    %cst_330 = arith.constant dense<0.000000e+00> : vector<8xf32>
    %626 = vector.multi_reduction <add>, %625, %cst_330 [1] : vector<8x16xf32> to vector<8xf32>
    %627 = vector.shape_cast %626 : vector<8xf32> to vector<8x1xf32>
    %628 = tpu.reciprocal %627 {approx = true} : vector<8x1xf32> -> vector<8x1xf32>
    %629 = vector.broadcast %628 : vector<8x1xf32> to vector<8x16xf32>
    %630 = arith.mulf %625, %629 : vector<8x16xf32>
    %cst_331 = arith.constant dense<0.000000e+00> : vector<8x8xf32>
    %631 = tpu.matmul %630, %615, %cst_331 {dimension_numbers = #tpu.dot_dimension_numbers<[1], [0], [0], [1], [0, 0, 1, 1], [], []>} : vector<8x16xf32>, vector<16x8xf32>, vector<8x8xf32> -> vector<8x8xf32>
    %632 = vector.extract_strided_slice %597 {offsets = [0, 0], sizes = [8, 32], strides = [1, 1]} : vector<32x32xf32> to vector<8x32xf32>
    %cst_332 = arith.constant dense<0.000000e+00> : vector<8x32xf32>
    %633 = tpu.matmul %631, %632, %cst_332 {dimension_numbers = #tpu.dot_dimension_numbers<[1], [0], [0], [1], [0, 0, 1, 1], [], []>} : vector<8x8xf32>, vector<8x32xf32>, vector<8x32xf32> -> vector<8x32xf32>
    %634 = vector.extract_strided_slice %602 {offsets = [0, 8], sizes = [8, 8], strides = [1, 1]} : vector<8x32xf32> to vector<8x8xf32>
    %635 = vector.extract_strided_slice %607 {offsets = [0, 8], sizes = [16, 8], strides = [1, 1]} : vector<16x32xf32> to vector<16x8xf32>
    %636 = vector.extract_strided_slice %612 {offsets = [0, 8], sizes = [16, 8], strides = [1, 1]} : vector<16x32xf32> to vector<16x8xf32>
    %cst_333 = arith.constant dense<0.000000e+00> : vector<8x16xf32>
    %637 = tpu.matmul %634, %635, %cst_333 {dimension_numbers = #tpu.dot_dimension_numbers<[1], [1], [0], [0], [0, 0, 1, 0], [], []>} : vector<8x8xf32>, vector<16x8xf32>, vector<8x16xf32> -> vector<8x16xf32>
    %cst_334 = arith.constant 0.353553385 : f32
    %638 = vector.broadcast %cst_334 : f32 to vector<8x16xf32>
    %639 = arith.mulf %637, %638 : vector<8x16xf32>
    %640 = vector.broadcast %396 : vector<1x16xf32> to vector<8x16xf32>
    %641 = arith.addf %639, %640 : vector<8x16xf32>
    %cst_335 = arith.constant dense<0xFF800000> : vector<8xf32>
    %642 = vector.multi_reduction <maximumf>, %641, %cst_335 [1] : vector<8x16xf32> to vector<8xf32>
    %643 = vector.shape_cast %642 : vector<8xf32> to vector<8x1xf32>
    %644 = vector.broadcast %643 : vector<8x1xf32> to vector<8x16xf32>
    %645 = arith.subf %641, %644 : vector<8x16xf32>
    %646 = math.exp %645 : vector<8x16xf32>
    %cst_336 = arith.constant dense<0.000000e+00> : vector<8xf32>
    %647 = vector.multi_reduction <add>, %646, %cst_336 [1] : vector<8x16xf32> to vector<8xf32>
    %648 = vector.shape_cast %647 : vector<8xf32> to vector<8x1xf32>
    %649 = tpu.reciprocal %648 {approx = true} : vector<8x1xf32> -> vector<8x1xf32>
    %650 = vector.broadcast %649 : vector<8x1xf32> to vector<8x16xf32>
    %651 = arith.mulf %646, %650 : vector<8x16xf32>
    %cst_337 = arith.constant dense<0.000000e+00> : vector<8x8xf32>
    %652 = tpu.matmul %651, %636, %cst_337 {dimension_numbers = #tpu.dot_dimension_numbers<[1], [0], [0], [1], [0, 0, 1, 1], [], []>} : vector<8x16xf32>, vector<16x8xf32>, vector<8x8xf32> -> vector<8x8xf32>
    %653 = vector.extract_strided_slice %597 {offsets = [8, 0], sizes = [8, 32], strides = [1, 1]} : vector<32x32xf32> to vector<8x32xf32>
    %cst_338 = arith.constant dense<0.000000e+00> : vector<8x32xf32>
    %654 = tpu.matmul %652, %653, %cst_338 {dimension_numbers = #tpu.dot_dimension_numbers<[1], [0], [0], [1], [0, 0, 1, 1], [], []>} : vector<8x8xf32>, vector<8x32xf32>, vector<8x32xf32> -> vector<8x32xf32>
    %655 = arith.addf %633, %654 : vector<8x32xf32>
    %656 = vector.extract_strided_slice %602 {offsets = [0, 16], sizes = [8, 8], strides = [1, 1]} : vector<8x32xf32> to vector<8x8xf32>
    %657 = vector.extract_strided_slice %607 {offsets = [0, 16], sizes = [16, 8], strides = [1, 1]} : vector<16x32xf32> to vector<16x8xf32>
    %658 = vector.extract_strided_slice %612 {offsets = [0, 16], sizes = [16, 8], strides = [1, 1]} : vector<16x32xf32> to vector<16x8xf32>
    %cst_339 = arith.constant dense<0.000000e+00> : vector<8x16xf32>
    %659 = tpu.matmul %656, %657, %cst_339 {dimension_numbers = #tpu.dot_dimension_numbers<[1], [1], [0], [0], [0, 0, 1, 0], [], []>} : vector<8x8xf32>, vector<16x8xf32>, vector<8x16xf32> -> vector<8x16xf32>
    %cst_340 = arith.constant 0.353553385 : f32
    %660 = vector.broadcast %cst_340 : f32 to vector<8x16xf32>
    %661 = arith.mulf %659, %660 : vector<8x16xf32>
    %662 = vector.broadcast %396 : vector<1x16xf32> to vector<8x16xf32>
    %663 = arith.addf %661, %662 : vector<8x16xf32>
    %cst_341 = arith.constant dense<0xFF800000> : vector<8xf32>
    %664 = vector.multi_reduction <maximumf>, %663, %cst_341 [1] : vector<8x16xf32> to vector<8xf32>
    %665 = vector.shape_cast %664 : vector<8xf32> to vector<8x1xf32>
    %666 = vector.broadcast %665 : vector<8x1xf32> to vector<8x16xf32>
    %667 = arith.subf %663, %666 : vector<8x16xf32>
    %668 = math.exp %667 : vector<8x16xf32>
    %cst_342 = arith.constant dense<0.000000e+00> : vector<8xf32>
    %669 = vector.multi_reduction <add>, %668, %cst_342 [1] : vector<8x16xf32> to vector<8xf32>
    %670 = vector.shape_cast %669 : vector<8xf32> to vector<8x1xf32>
    %671 = tpu.reciprocal %670 {approx = true} : vector<8x1xf32> -> vector<8x1xf32>
    %672 = vector.broadcast %671 : vector<8x1xf32> to vector<8x16xf32>
    %673 = arith.mulf %668, %672 : vector<8x16xf32>
    %cst_343 = arith.constant dense<0.000000e+00> : vector<8x8xf32>
    %674 = tpu.matmul %673, %658, %cst_343 {dimension_numbers = #tpu.dot_dimension_numbers<[1], [0], [0], [1], [0, 0, 1, 1], [], []>} : vector<8x16xf32>, vector<16x8xf32>, vector<8x8xf32> -> vector<8x8xf32>
    %675 = vector.extract_strided_slice %597 {offsets = [16, 0], sizes = [8, 32], strides = [1, 1]} : vector<32x32xf32> to vector<8x32xf32>
    %cst_344 = arith.constant dense<0.000000e+00> : vector<8x32xf32>
    %676 = tpu.matmul %674, %675, %cst_344 {dimension_numbers = #tpu.dot_dimension_numbers<[1], [0], [0], [1], [0, 0, 1, 1], [], []>} : vector<8x8xf32>, vector<8x32xf32>, vector<8x32xf32> -> vector<8x32xf32>
    %677 = arith.addf %655, %676 : vector<8x32xf32>
    %678 = vector.extract_strided_slice %602 {offsets = [0, 24], sizes = [8, 8], strides = [1, 1]} : vector<8x32xf32> to vector<8x8xf32>
    %679 = vector.extract_strided_slice %607 {offsets = [0, 24], sizes = [16, 8], strides = [1, 1]} : vector<16x32xf32> to vector<16x8xf32>
    %680 = vector.extract_strided_slice %612 {offsets = [0, 24], sizes = [16, 8], strides = [1, 1]} : vector<16x32xf32> to vector<16x8xf32>
    %cst_345 = arith.constant dense<0.000000e+00> : vector<8x16xf32>
    %681 = tpu.matmul %678, %679, %cst_345 {dimension_numbers = #tpu.dot_dimension_numbers<[1], [1], [0], [0], [0, 0, 1, 0], [], []>} : vector<8x8xf32>, vector<16x8xf32>, vector<8x16xf32> -> vector<8x16xf32>
    %cst_346 = arith.constant 0.353553385 : f32
    %682 = vector.broadcast %cst_346 : f32 to vector<8x16xf32>
    %683 = arith.mulf %681, %682 : vector<8x16xf32>
    %684 = vector.broadcast %396 : vector<1x16xf32> to vector<8x16xf32>
    %685 = arith.addf %683, %684 : vector<8x16xf32>
    %cst_347 = arith.constant dense<0xFF800000> : vector<8xf32>
    %686 = vector.multi_reduction <maximumf>, %685, %cst_347 [1] : vector<8x16xf32> to vector<8xf32>
    %687 = vector.shape_cast %686 : vector<8xf32> to vector<8x1xf32>
    %688 = vector.broadcast %687 : vector<8x1xf32> to vector<8x16xf32>
    %689 = arith.subf %685, %688 : vector<8x16xf32>
    %690 = math.exp %689 : vector<8x16xf32>
    %cst_348 = arith.constant dense<0.000000e+00> : vector<8xf32>
    %691 = vector.multi_reduction <add>, %690, %cst_348 [1] : vector<8x16xf32> to vector<8xf32>
    %692 = vector.shape_cast %691 : vector<8xf32> to vector<8x1xf32>
    %693 = tpu.reciprocal %692 {approx = true} : vector<8x1xf32> -> vector<8x1xf32>
    %694 = vector.broadcast %693 : vector<8x1xf32> to vector<8x16xf32>
    %695 = arith.mulf %690, %694 : vector<8x16xf32>
    %cst_349 = arith.constant dense<0.000000e+00> : vector<8x8xf32>
    %696 = tpu.matmul %695, %680, %cst_349 {dimension_numbers = #tpu.dot_dimension_numbers<[1], [0], [0], [1], [0, 0, 1, 1], [], []>} : vector<8x16xf32>, vector<16x8xf32>, vector<8x8xf32> -> vector<8x8xf32>
    %697 = vector.extract_strided_slice %597 {offsets = [24, 0], sizes = [8, 32], strides = [1, 1]} : vector<32x32xf32> to vector<8x32xf32>
    %cst_350 = arith.constant dense<0.000000e+00> : vector<8x32xf32>
    %698 = tpu.matmul %696, %697, %cst_350 {dimension_numbers = #tpu.dot_dimension_numbers<[1], [0], [0], [1], [0, 0, 1, 1], [], []>} : vector<8x8xf32>, vector<8x32xf32>, vector<8x32xf32> -> vector<8x32xf32>
    %699 = arith.addf %677, %698 : vector<8x32xf32>
    %c1_351 = arith.constant 1 : index
    %c3_352 = arith.constant 3 : index
    %c0_353 = arith.constant 0 : index
    %700 = vector.load %arg4[%c1_351, %c3_352, %c0_353] : memref<2x4x32xf32, #tpu.memory_space<vmem>>, vector<1x1x32xf32>
    %701 = vector.shape_cast %700 : vector<1x1x32xf32> to vector<1x32xf32>
    %702 = vector.broadcast %701 : vector<1x32xf32> to vector<8x32xf32>
    %703 = arith.addf %699, %702 : vector<8x32xf32>
    %704 = arith.addf %703, %588 : vector<8x32xf32>
    %c1_354 = arith.constant 1 : index
    %c0_355 = arith.constant 0 : index
    %c0_356 = arith.constant 0 : index
    %705 = vector.load %arg5[%c1_354, %c0_355, %c0_356] : memref<2x2x32xf32, #tpu.memory_space<vmem>>, vector<1x1x32xf32>
    %706 = vector.shape_cast %705 : vector<1x1x32xf32> to vector<1x32xf32>
    %c1_357 = arith.constant 1 : index
    %c0_358 = arith.constant 0 : index
    %c0_359 = arith.constant 0 : index
    %707 = vector.load %arg6[%c1_357, %c0_358, %c0_359] : memref<2x2x32xf32, #tpu.memory_space<vmem>>, vector<1x1x32xf32>
    %708 = vector.shape_cast %707 : vector<1x1x32xf32> to vector<1x32xf32>
    %cst_360 = arith.constant dense<0.000000e+00> : vector<8xf32>
    %709 = vector.multi_reduction <add>, %704, %cst_360 [1] : vector<8x32xf32> to vector<8xf32>
    %710 = vector.shape_cast %709 : vector<8xf32> to vector<8x1xf32>
    %cst_361 = arith.constant 3.200000e+01 : f32
    %711 = vector.broadcast %cst_361 : f32 to vector<8x1xf32>
    %712 = arith.divf %710, %711 : vector<8x1xf32>
    %713 = vector.broadcast %712 : vector<8x1xf32> to vector<8x32xf32>
    %714 = arith.subf %704, %713 : vector<8x32xf32>
    %715 = arith.mulf %714, %714 : vector<8x32xf32>
    %cst_362 = arith.constant dense<0.000000e+00> : vector<8xf32>
    %716 = vector.multi_reduction <add>, %715, %cst_362 [1] : vector<8x32xf32> to vector<8xf32>
    %717 = vector.shape_cast %716 : vector<8xf32> to vector<8x1xf32>
    %cst_363 = arith.constant 3.200000e+01 : f32
    %718 = vector.broadcast %cst_363 : f32 to vector<8x1xf32>
    %719 = arith.divf %717, %718 : vector<8x1xf32>
    %cst_364 = arith.constant 9.99999997E-7 : f32
    %720 = vector.broadcast %cst_364 : f32 to vector<8x1xf32>
    %721 = arith.addf %719, %720 : vector<8x1xf32>
    %722 = math.rsqrt %721 : vector<8x1xf32>
    %723 = vector.broadcast %722 : vector<8x1xf32> to vector<8x32xf32>
    %724 = arith.mulf %714, %723 : vector<8x32xf32>
    %725 = vector.broadcast %706 : vector<1x32xf32> to vector<8x32xf32>
    %726 = arith.mulf %725, %724 : vector<8x32xf32>
    %727 = vector.broadcast %708 : vector<1x32xf32> to vector<8x32xf32>
    %728 = arith.addf %726, %727 : vector<8x32xf32>
    %c1_365 = arith.constant 1 : index
    %c0_366 = arith.constant 0 : index
    %c0_367 = arith.constant 0 : index
    %729 = vector.load %arg7[%c1_365, %c0_366, %c0_367] : memref<2x32x64xf32, #tpu.memory_space<vmem>>, vector<1x32x64xf32>
    %730 = vector.shape_cast %729 : vector<1x32x64xf32> to vector<32x64xf32>
    %cst_368 = arith.constant dense<0.000000e+00> : vector<8x64xf32>
    %731 = tpu.matmul %728, %730, %cst_368 {dimension_numbers = #tpu.dot_dimension_numbers<[1], [0], [0], [1], [0, 0, 1, 1], [], []>} : vector<8x32xf32>, vector<32x64xf32>, vector<8x64xf32> -> vector<8x64xf32>
    %c1_369 = arith.constant 1 : index
    %c0_370 = arith.constant 0 : index
    %c0_371 = arith.constant 0 : index
    %732 = vector.load %arg8[%c1_369, %c0_370, %c0_371] : memref<2x1x64xf32, #tpu.memory_space<vmem>>, vector<1x1x64xf32>
    %733 = vector.shape_cast %732 : vector<1x1x64xf32> to vector<1x64xf32>
    %734 = vector.broadcast %733 : vector<1x64xf32> to vector<8x64xf32>
    %735 = arith.addf %731, %734 : vector<8x64xf32>
    %cst_372 = arith.constant 5.000000e-01 : f32
    %736 = vector.broadcast %cst_372 : f32 to vector<8x64xf32>
    %737 = arith.mulf %736, %735 : vector<8x64xf32>
    %cst_373 = arith.constant 4.471500e-02 : f32
    %738 = vector.broadcast %cst_373 : f32 to vector<8x64xf32>
    %739 = arith.mulf %738, %735 : vector<8x64xf32>
    %740 = arith.mulf %739, %735 : vector<8x64xf32>
    %741 = arith.mulf %740, %735 : vector<8x64xf32>
    %742 = arith.addf %735, %741 : vector<8x64xf32>
    %cst_374 = arith.constant 0.797884583 : f32
    %743 = vector.broadcast %cst_374 : f32 to vector<8x64xf32>
    %744 = arith.mulf %743, %742 : vector<8x64xf32>
    %745 = math.tanh %744 : vector<8x64xf32>
    %cst_375 = arith.constant 1.000000e+00 : f32
    %746 = vector.broadcast %cst_375 : f32 to vector<8x64xf32>
    %747 = arith.addf %746, %745 : vector<8x64xf32>
    %748 = arith.mulf %737, %747 : vector<8x64xf32>
    %c1_376 = arith.constant 1 : index
    %c0_377 = arith.constant 0 : index
    %c0_378 = arith.constant 0 : index
    %749 = vector.load %arg9[%c1_376, %c0_377, %c0_378] : memref<2x64x32xf32, #tpu.memory_space<vmem>>, vector<1x64x32xf32>
    %750 = vector.shape_cast %749 : vector<1x64x32xf32> to vector<64x32xf32>
    %cst_379 = arith.constant dense<0.000000e+00> : vector<8x32xf32>
    %751 = tpu.matmul %748, %750, %cst_379 {dimension_numbers = #tpu.dot_dimension_numbers<[1], [0], [0], [1], [0, 0, 1, 1], [], []>} : vector<8x64xf32>, vector<64x32xf32>, vector<8x32xf32> -> vector<8x32xf32>
    %c1_380 = arith.constant 1 : index
    %c0_381 = arith.constant 0 : index
    %c0_382 = arith.constant 0 : index
    %752 = vector.load %arg10[%c1_380, %c0_381, %c0_382] : memref<2x1x32xf32, #tpu.memory_space<vmem>>, vector<1x1x32xf32>
    %753 = vector.shape_cast %752 : vector<1x1x32xf32> to vector<1x32xf32>
    %754 = vector.broadcast %753 : vector<1x32xf32> to vector<8x32xf32>
    %755 = arith.addf %751, %754 : vector<8x32xf32>
    %756 = arith.addf %755, %728 : vector<8x32xf32>
    %c1_383 = arith.constant 1 : index
    %c1_384 = arith.constant 1 : index
    %c0_385 = arith.constant 0 : index
    %757 = vector.load %arg5[%c1_383, %c1_384, %c0_385] : memref<2x2x32xf32, #tpu.memory_space<vmem>>, vector<1x1x32xf32>
    %758 = vector.shape_cast %757 : vector<1x1x32xf32> to vector<1x32xf32>
    %c1_386 = arith.constant 1 : index
    %c1_387 = arith.constant 1 : index
    %c0_388 = arith.constant 0 : index
    %759 = vector.load %arg6[%c1_386, %c1_387, %c0_388] : memref<2x2x32xf32, #tpu.memory_space<vmem>>, vector<1x1x32xf32>
    %760 = vector.shape_cast %759 : vector<1x1x32xf32> to vector<1x32xf32>
    %cst_389 = arith.constant dense<0.000000e+00> : vector<8xf32>
    %761 = vector.multi_reduction <add>, %756, %cst_389 [1] : vector<8x32xf32> to vector<8xf32>
    %762 = vector.shape_cast %761 : vector<8xf32> to vector<8x1xf32>
    %cst_390 = arith.constant 3.200000e+01 : f32
    %763 = vector.broadcast %cst_390 : f32 to vector<8x1xf32>
    %764 = arith.divf %762, %763 : vector<8x1xf32>
    %765 = vector.broadcast %764 : vector<8x1xf32> to vector<8x32xf32>
    %766 = arith.subf %756, %765 : vector<8x32xf32>
    %767 = arith.mulf %766, %766 : vector<8x32xf32>
    %cst_391 = arith.constant dense<0.000000e+00> : vector<8xf32>
    %768 = vector.multi_reduction <add>, %767, %cst_391 [1] : vector<8x32xf32> to vector<8xf32>
    %769 = vector.shape_cast %768 : vector<8xf32> to vector<8x1xf32>
    %cst_392 = arith.constant 3.200000e+01 : f32
    %770 = vector.broadcast %cst_392 : f32 to vector<8x1xf32>
    %771 = arith.divf %769, %770 : vector<8x1xf32>
    %cst_393 = arith.constant 9.99999997E-7 : f32
    %772 = vector.broadcast %cst_393 : f32 to vector<8x1xf32>
    %773 = arith.addf %771, %772 : vector<8x1xf32>
    %774 = math.rsqrt %773 : vector<8x1xf32>
    %775 = vector.broadcast %774 : vector<8x1xf32> to vector<8x32xf32>
    %776 = arith.mulf %766, %775 : vector<8x32xf32>
    %777 = vector.broadcast %758 : vector<1x32xf32> to vector<8x32xf32>
    %778 = arith.mulf %777, %776 : vector<8x32xf32>
    %779 = vector.broadcast %760 : vector<1x32xf32> to vector<8x32xf32>
    %780 = arith.addf %778, %779 : vector<8x32xf32>
    %c1_394 = arith.constant 1 : index
    %c0_395 = arith.constant 0 : index
    %c0_396 = arith.constant 0 : index
    %781 = vector.load %arg11[%c1_394, %c0_395, %c0_396] : memref<2x8x32xf32, #tpu.memory_space<vmem>>, vector<1x8x32xf32>
    %782 = vector.shape_cast %781 : vector<1x8x32xf32> to vector<8x32xf32>
    %783 = vector.shape_cast %780 : vector<8x32xf32> to vector<1x8x32xf32>
    tpu.vector_store %arg11[%c1_394, %c0_395, %c0_396], %783 {strides = array<i32>} : memref<2x8x32xf32, #tpu.memory_space<vmem>>, vector<1x8x32xf32>,
    return
  }
}

</mosaic_0001>

<llo_original>
// kernel: tpu_custom_call.1
$region0: #{tpu_custom_call.1}
  #allocation0 [shape = 'u32[]', space=smem, size = 0x4, offset = 0x4, fixed_abs, tag = 'smem constant byte address 0x4 - core index']
  #allocation1 [shape = 'u32[144,128]{1,0:T(1,128)}', space=vmem, size = 0x12000, scoped, tag = 'internal scratch']
  %s0 = inlined_call_operand.vmem [shape: f32[2,8,32], index: 0, kind: input, shape index: {}]
  %s1 = inlined_call_operand.vmem [shape: f32[2,8,32], index: 1, kind: input, shape index: {}]
  %s2 = inlined_call_operand.vmem [shape: f32[2,16], index: 2, kind: input, shape index: {}]
  %s3 = inlined_call_operand.hbm [shape: f32[2,4,32,32], index: 3, kind: input, shape index: {}]
  %s4 = inlined_call_operand.vmem [shape: f32[2,4,32], index: 4, kind: input, shape index: {}]
  %s5 = inlined_call_operand.vmem [shape: f32[2,2,32], index: 5, kind: input, shape index: {}]
  %s6 = inlined_call_operand.vmem [shape: f32[2,2,32], index: 6, kind: input, shape index: {}]
  %s7 = inlined_call_operand.vmem [shape: f32[2,32,64], index: 7, kind: input, shape index: {}]
  %s8 = inlined_call_operand.vmem [shape: f32[2,1,64], index: 8, kind: input, shape index: {}]
  %s9 = inlined_call_operand.vmem [shape: f32[2,64,32], index: 9, kind: input, shape index: {}]
  %s10 = inlined_call_operand.vmem [shape: f32[2,1,32], index: 10, kind: input, shape index: {}]
  %s11 = inlined_call_operand.hbm [shape: f32[2,8,32], index: 11, kind: output, shape index: {}]
  %s12 = sld [smem:[#allocation0]]
  $region58: #{tpu_custom_call.1} parent=0
    _
  %s14 = ssub.s32 1, %s12
  %s15 = scalar_select 0, %s14, %s12
  $region1: #{tpu_custom_call.1} parent=0
    #allocation2 [shape = 'u8[131072]{0}', space=vmem, size = 0x20000, scoped, tag = 'input window, operand 3, single buffered']
    #allocation3 [shape = 's32[1]{0}', space=sflag, size = 0x4, scoped, tag = 'scoped memory for tpu_custom_call.1']
    #allocation4 [shape = 's32[1]{0}', space=sflag, size = 0x4, scoped, tag = 'scoped memory for tpu_custom_call.1']
    #allocation5 [shape = 'u8[8192]{0}', space=vmem, size = 0x2000, scoped, tag = 'output window, operand 0, single buffered']
    %16 = vsyncpa [#allocation3], 0
    %17 = vsyncpa [#allocation4], 0
    // Predicated region
    $region2: #{tpu_custom_call.1} parent=1 // pred_check
      _
    $region3: #{tpu_custom_call.1} parent=1 // pred_check_branch
      %19 = sbr.rel (0) target = $region5
    $region4: #{tpu_custom_call.1} parent=1 // pred_region
      _
    $region5: #{tpu_custom_call.1} parent=1 // pred_fallthru
      _
    // Predicated region
    $region6: #{tpu_custom_call.1} parent=1 // pred_check
      _
    $region7: #{tpu_custom_call.1} parent=1 // pred_check_branch
      %21 = sbr.rel (0) target = $region9
    $region8: #{tpu_custom_call.1} parent=1 // pred_region
      _
    $region9: #{tpu_custom_call.1} parent=1 // pred_fallthru
      _
    // Predicated region
    $region10: #{tpu_custom_call.1} parent=1 // pred_check
      _
    $region11: #{tpu_custom_call.1} parent=1 // pred_check_branch
      %23 = sbr.rel (0) target = $region13
    $region12: #{tpu_custom_call.1} parent=1 // pred_region
      _
    $region13: #{tpu_custom_call.1} parent=1 // pred_fallthru
      _
    // Predicated region
    $region14: #{tpu_custom_call.1} parent=1 // pred_check
      _
    $region15: #{tpu_custom_call.1} parent=1 // pred_check_branch
      %25 = sbr.rel (0) target = $region17
    $region16: #{tpu_custom_call.1} parent=1 // pred_region
      %s27 = ssub.s32 4096, 4096
      %28 = vsyncadd [#allocation3], %s27
      %s29 = sshll.u32 [#allocation2], 4
      %s30 = int_to_ptr.vmem [resolvable:$true] %s29
      %35 = dma.hbm_to_vmem [thread:$0]  %s3, 4096, %s30, [#allocation3], 128, 128, 8
    $region17: #{tpu_custom_call.1} parent=1 // pred_fallthru
      _
    // Predicated region
    $region18: #{tpu_custom_call.1} parent=1 // pred_check
      _
    $region19: #{tpu_custom_call.1} parent=1 // pred_check_branch
      %37 = sbr.rel (0) target = $region21
    $region20: #{tpu_custom_call.1} parent=1 // pred_region
      _
    $region21: #{tpu_custom_call.1} parent=1 // pred_fallthru
      _
    // Predicated region
    $region22: #{tpu_custom_call.1} parent=1 // pred_check
      _
    $region23: #{tpu_custom_call.1} parent=1 // pred_check_branch
      %39 = sbr.rel (0) target = $region25
    $region24: #{tpu_custom_call.1} parent=1 // pred_region
      _
    $region25: #{tpu_custom_call.1} parent=1 // pred_fallthru
      _
    // Predicated region
    $region26: #{tpu_custom_call.1} parent=1 // pred_check
      _
    $region27: #{tpu_custom_call.1} parent=1 // pred_check_branch
      %41 = sbr.rel (0) target = $region29
    $region28: #{tpu_custom_call.1} parent=1 // pred_region
      _
    $region29: #{tpu_custom_call.1} parent=1 // pred_fallthru
      _
    // Predicated region
    $region30: #{tpu_custom_call.1} parent=1 // pred_check
      _
    $region31: #{tpu_custom_call.1} parent=1 // pred_check_branch
      %43 = sbr.rel (0) target = $region33
    $region32: #{tpu_custom_call.1} parent=1 // pred_region
      _
    $region33: #{tpu_custom_call.1} parent=1 // pred_fallthru
      _
    // Predicated region
    $region34: #{tpu_custom_call.1} parent=1 // pred_check
      _
    $region35: #{tpu_custom_call.1} parent=1 // pred_check_branch
      %45 = sbr.rel (0) target = $region37
    $region36: #{tpu_custom_call.1} parent=1 // pred_region
      _
    $region37: #{tpu_custom_call.1} parent=1 // pred_fallthru
      _
    // Predicated region
    $region38: #{tpu_custom_call.1} parent=1 // pred_check
      _
    $region39: #{tpu_custom_call.1} parent=1 // pred_check_branch
      %47 = sbr.rel (0) target = $region41
    $region40: #{tpu_custom_call.1} parent=1 // pred_region
      _
    $region41: #{tpu_custom_call.1} parent=1 // pred_fallthru
      _
    // Predicated region
    $region42: #{tpu_custom_call.1} parent=1 // pred_check
      _
    $region43: #{tpu_custom_call.1} parent=1 // pred_check_branch
      %49 = sbr.rel (0) target = $region45
    $region44: #{tpu_custom_call.1} parent=1 // pred_region
      _
    $region45: #{tpu_custom_call.1} parent=1 // pred_fallthru
      _
    // Predicated region
    $region46: #{tpu_custom_call.1} parent=1 // pred_check
      _
    $region47: #{tpu_custom_call.1} parent=1 // pred_check_branch
      %51 = sbr.rel (0) target = $region49
    $region48: #{tpu_custom_call.1} parent=1 // pred_region
      %52 = dma.done [#allocation3], 4096
    $region49: #{tpu_custom_call.1} parent=1 // pred_fallthru
      _
    %v53 = vld [vmem:[%s0] sm:$0xff]
    %v54 = vld [vmem:[%s1] sm:$0xff]
    %v55 = vld [vmem:[%s2] sm:$0x1]
    %v56 = vld [vmem:[#allocation2] sm:$0xff]
    %v57 = vld [vmem:[#allocation2 + $0x8] sm:$0xff]
    %v58 = vld [vmem:[#allocation2 + $0x10] sm:$0xff]
    %v59 = vld [vmem:[#allocation2 + $0x18] sm:$0xff]
    %s60 = scalar_lea.vmem [#allocation2], 32
    %v61 = vld [vmem:[%s60] sm:$0xff]
    %v62 = vld [vmem:[%s60 + $0x8] sm:$0xff]
    %v63 = vld [vmem:[%s60 + $0x10] sm:$0xff]
    %v64 = vld [vmem:[%s60 + $0x18] sm:$0xff]
    %s65 = scalar_lea.vmem [#allocation2], 64
    %v66 = vld [vmem:[%s65] sm:$0xff]
    %v67 = vld [vmem:[%s65 + $0x8] sm:$0xff]
    %v68 = vld [vmem:[%s65 + $0x10] sm:$0xff]
    %v69 = vld [vmem:[%s65 + $0x18] sm:$0xff]
    %s70 = scalar_lea.vmem [#allocation2], 96
    %v71 = vld [vmem:[%s70] sm:$0xff]
    %v72 = vld [vmem:[%s70 + $0x8] sm:$0xff]
    %v73 = vld [vmem:[%s70 + $0x10] sm:$0xff]
    %v74 = vld [vmem:[%s70 + $0x18] sm:$0xff]
    %v75 = vld [vmem:[%s4] sm:$0x1]
    %v76 = vlaneseq
    %v77 = vshrl.u32 %v76, 7
    %v78 = vsub.s32 0, %v77
    %v79 = vrot.slane %v75, %v78
    %vm80 = vcmask 261120
    %v82 = vsel %vm80, %v54, 0
    %84 = vmatprep.subr.mxu0 0.0
    %85 = vmatpush1.msra.mxu0 %v56
    %86 = vmatprep.subr.mxu0 0.0
    %87 = vmatpush1.msra.mxu0 %v57
    %88 = vmatprep.subr.mxu0 0.0
    %89 = vmatpush1.msra.mxu0 %v58
    %90 = vmatprep.subr.mxu0 0.0
    %91 = vmatpush1.msra.mxu0 %v59
    %92 = vmatprep.subr.mxu0 0.0
    %93 = vmatpush1.msra.mxu0 0.0
    %94 = vmatprep.subr.mxu0 0.0
    %95 = vmatpush1.msra.mxu0 0.0
    %96 = vmatprep.subr.mxu0 0.0
    %97 = vmatpush1.msra.mxu0 0.0
    %98 = vmatprep.subr.mxu0 0.0
    %99 = vmatpush1.msra.mxu0 0.0
    %100 = vmatprep.subr.mxu0 0.0
    %101 = vmatpush1.msra.mxu0 0.0
    %102 = vmatprep.subr.mxu0 0.0
    %103 = vmatpush1.msra.mxu0 0.0
    %104 = vmatprep.subr.mxu0 0.0
    %105 = vmatpush1.msra.mxu0 0.0
    %106 = vmatprep.subr.mxu0 0.0
    %107 = vmatpush1.msra.mxu0 0.0
    %108 = vmatprep.subr.mxu0 0.0
    %109 = vmatpush1.msra.mxu0 0.0
    %110 = vmatprep.subr.mxu0 0.0
    %111 = vmatpush1.msra.mxu0 0.0
    %112 = vmatprep.subr.mxu0 0.0
    %113 = vmatpush1.msra.mxu0 0.0
    %114 = vmatprep.subr.mxu0 0.0
    %115 = vmatpush1.msra.mxu0 0.0
    %116 = vmatprep.subr.mxu0 0.0
    %117 = vmatpush1.msra.mxu0 0.0
    %118 = vmatprep.subr.mxu0 0.0
    %119 = vmatpush1.msra.mxu0 0.0
    %120 = vmatprep.subr.mxu0 0.0
    %121 = vmatpush1.msra.mxu0 0.0
    %122 = vmatprep.subr.mxu0 0.0
    %123 = vmatpush1.msra.mxu0 0.0
    %124 = vmatprep.subr.mxu0 0.0
    %125 = vmatpush1.msra.mxu0 0.0
    %126 = vmatprep.subr.mxu0 0.0
    %127 = vmatpush1.msra.mxu0 0.0
    %128 = vmatprep.subr.mxu0 0.0
    %129 = vmatpush1.msra.mxu0 0.0
    %130 = vmatprep.subr.mxu0 0.0
    %131 = vmatpush1.msra.mxu0 0.0
    %132 = vmatprep.subr.mxu0 0.0
    %133 = vmatpush1.msra.mxu0 0.0
    %134 = vmatprep.subr.mxu0 0.0
    %135 = vmatpush1.msra.mxu0 0.0
    %136 = vmatprep.subr.mxu0 0.0
    %137 = vmatpush1.msra.mxu0 0.0
    %138 = vmatprep.subr.mxu0 0.0
    %139 = vmatpush1.msra.mxu0 0.0
    %140 = vmatprep.subr.mxu0 0.0
    %141 = vmatpush1.msra.mxu0 0.0
    %142 = vmatprep.subr.mxu0 0.0
    %143 = vmatpush1.msra.mxu0 0.0
    %144 = vmatprep.subr.mxu0 0.0
    %145 = vmatpush1.msra.mxu0 0.0
    %146 = vmatprep.subr.mxu0 0.0
    %147 = vmatpush1.msra.mxu0 0.0
    %148 = vmatprep.mubr.f32.mxu0 0.0
    %149 = vmatmul.mubr.f32.gmra.mrb[0].mxu0 %v82
    %v150 = vpop.f32.mrb[0].mxu0
    %v151 = vadd.f32 %v79, %v150
    %v152 = vpop.f32.mrb[0].mxu0
    %153 = vdwg.mxu0
    %v154 = vld [vmem:[%s4 + $0x1] sm:$0x1]
    %v155 = vlaneseq
    %v156 = vshrl.u32 %v155, 7
    %v157 = vsub.s32 0, %v156
    %v158 = vrot.slane %v154, %v157
    %v160 = vsel %vm80, %v53, 0
    %162 = vmatprep.subr.mxu0 0.0
    %163 = vmatpush1.msra.mxu0 %v61
    %164 = vmatprep.subr.mxu0 0.0
    %165 = vmatpush1.msra.mxu0 %v62
    %166 = vmatprep.subr.mxu0 0.0
    %167 = vmatpush1.msra.mxu0 %v63
    %168 = vmatprep.subr.mxu0 0.0
    %169 = vmatpush1.msra.mxu0 %v64
    %170 = vmatprep.subr.mxu0 0.0
    %171 = vmatpush1.msra.mxu0 0.0
    %172 = vmatprep.subr.mxu0 0.0
    %173 = vmatpush1.msra.mxu0 0.0
    %174 = vmatprep.subr.mxu0 0.0
    %175 = vmatpush1.msra.mxu0 0.0
    %176 = vmatprep.subr.mxu0 0.0
    %177 = vmatpush1.msra.mxu0 0.0
    %178 = vmatprep.subr.mxu0 0.0
    %179 = vmatpush1.msra.mxu0 0.0
    %180 = vmatprep.subr.mxu0 0.0
    %181 = vmatpush1.msra.mxu0 0.0
    %182 = vmatprep.subr.mxu0 0.0
    %183 = vmatpush1.msra.mxu0 0.0
    %184 = vmatprep.subr.mxu0 0.0
    %185 = vmatpush1.msra.mxu0 0.0
    %186 = vmatprep.subr.mxu0 0.0
    %187 = vmatpush1.msra.mxu0 0.0
    %188 = vmatprep.subr.mxu0 0.0
    %189 = vmatpush1.msra.mxu0 0.0
    %190 = vmatprep.subr.mxu0 0.0
    %191 = vmatpush1.msra.mxu0 0.0
    %192 = vmatprep.subr.mxu0 0.0
    %193 = vmatpush1.msra.mxu0 0.0
    %194 = vmatprep.subr.mxu0 0.0
    %195 = vmatpush1.msra.mxu0 0.0
    %196 = vmatprep.subr.mxu0 0.0
    %197 = vmatpush1.msra.mxu0 0.0
    %198 = vmatprep.subr.mxu0 0.0
    %199 = vmatpush1.msra.mxu0 0.0
    %200 = vmatprep.subr.mxu0 0.0
    %201 = vmatpush1.msra.mxu0 0.0
    %202 = vmatprep.subr.mxu0 0.0
    %203 = vmatpush1.msra.mxu0 0.0
    %204 = vmatprep.subr.mxu0 0.0
    %205 = vmatpush1.msra.mxu0 0.0
    %206 = vmatprep.subr.mxu0 0.0
    %207 = vmatpush1.msra.mxu0 0.0
    %208 = vmatprep.subr.mxu0 0.0
    %209 = vmatpush1.msra.mxu0 0.0
    %210 = vmatprep.subr.mxu0 0.0
    %211 = vmatpush1.msra.mxu0 0.0
    %212 = vmatprep.subr.mxu0 0.0
    %213 = vmatpush1.msra.mxu0 0.0
    %214 = vmatprep.subr.mxu0 0.0
    %215 = vmatpush1.msra.mxu0 0.0
    %216 = vmatprep.subr.mxu0 0.0
    %217 = vmatpush1.msra.mxu0 0.0
    %218 = vmatprep.subr.mxu0 0.0
    %219 = vmatpush1.msra.mxu0 0.0
    %220 = vmatprep.subr.mxu0 0.0
    %221 = vmatpush1.msra.mxu0 0.0
    %222 = vmatprep.subr.mxu0 0.0
    %223 = vmatpush1.msra.mxu0 0.0
    %224 = vmatprep.subr.mxu0 0.0
    %225 = vmatpush1.msra.mxu0 0.0
    %226 = vmatprep.mubr.f32.mxu0 0.0
    %227 = vmatmul.mubr.f32.gmra.mrb[0].mxu0 %v160
    %v228 = vpop.f32.mrb[0].mxu0
    %v229 = vadd.f32 %v158, %v228
    %v230 = vpop.f32.mrb[0].mxu0
    %231 = vmatprep.mubr.f32.mxu0 0.0
    %232 = vmatmul.mubr.f32.gmra.mrb[0].mxu0 %v82
    %v233 = vpop.f32.mrb[0].mxu0
    %v234 = vadd.f32 %v158, %v233
    %v235 = vpop.f32.mrb[0].mxu0
    %236 = vdwg.mxu0
    %v237 = vld [vmem:[%s4 + $0x2] sm:$0x1]
    %v238 = vlaneseq
    %v239 = vshrl.u32 %v238, 7
    %v240 = vsub.s32 0, %v239
    %v241 = vrot.slane %v237, %v240
    %242 = vmatprep.subr.mxu0 0.0
    %243 = vmatpush1.msra.mxu0 %v66
    %244 = vmatprep.subr.mxu0 0.0
    %245 = vmatpush1.msra.mxu0 %v67
    %246 = vmatprep.subr.mxu0 0.0
    %247 = vmatpush1.msra.mxu0 %v68
    %248 = vmatprep.subr.mxu0 0.0
    %249 = vmatpush1.msra.mxu0 %v69
    %250 = vmatprep.subr.mxu0 0.0
    %251 = vmatpush1.msra.mxu0 0.0
    %252 = vmatprep.subr.mxu0 0.0
    %253 = vmatpush1.msra.mxu0 0.0
    %254 = vmatprep.subr.mxu0 0.0
    %255 = vmatpush1.msra.mxu0 0.0
    %256 = vmatprep.subr.mxu0 0.0
    %257 = vmatpush1.msra.mxu0 0.0
    %258 = vmatprep.subr.mxu0 0.0
    %259 = vmatpush1.msra.mxu0 0.0
    %260 = vmatprep.subr.mxu0 0.0
    %261 = vmatpush1.msra.mxu0 0.0
    %262 = vmatprep.subr.mxu0 0.0
    %263 = vmatpush1.msra.mxu0 0.0
    %264 = vmatprep.subr.mxu0 0.0
    %265 = vmatpush1.msra.mxu0 0.0
    %266 = vmatprep.subr.mxu0 0.0
    %267 = vmatpush1.msra.mxu0 0.0
    %268 = vmatprep.subr.mxu0 0.0
    %269 = vmatpush1.msra.mxu0 0.0
    %270 = vmatprep.subr.mxu0 0.0
    %271 = vmatpush1.msra.mxu0 0.0
    %272 = vmatprep.subr.mxu0 0.0
    %273 = vmatpush1.msra.mxu0 0.0
    %274 = vmatprep.subr.mxu0 0.0
    %275 = vmatpush1.msra.mxu0 0.0
    %276 = vmatprep.subr.mxu0 0.0
    %277 = vmatpush1.msra.mxu0 0.0
    %278 = vmatprep.subr.mxu0 0.0
    %279 = vmatpush1.msra.mxu0 0.0
    %280 = vmatprep.subr.mxu0 0.0
    %281 = vmatpush1.msra.mxu0 0.0
    %282 = vmatprep.subr.mxu0 0.0
    %283 = vmatpush1.msra.mxu0 0.0
    %284 = vmatprep.subr.mxu0 0.0
    %285 = vmatpush1.msra.mxu0 0.0
    %286 = vmatprep.subr.mxu0 0.0
    %287 = vmatpush1.msra.mxu0 0.0
    %288 = vmatprep.subr.mxu0 0.0
    %289 = vmatpush1.msra.mxu0 0.0
    %290 = vmatprep.subr.mxu0 0.0
    %291 = vmatpush1.msra.mxu0 0.0
    %292 = vmatprep.subr.mxu0 0.0
    %293 = vmatpush1.msra.mxu0 0.0
    %294 = vmatprep.subr.mxu0 0.0
    %295 = vmatpush1.msra.mxu0 0.0
    %296 = vmatprep.subr.mxu0 0.0
    %297 = vmatpush1.msra.mxu0 0.0
    %298 = vmatprep.subr.mxu0 0.0
    %299 = vmatpush1.msra.mxu0 0.0
    %300 = vmatprep.subr.mxu0 0.0
    %301 = vmatpush1.msra.mxu0 0.0
    %302 = vmatprep.subr.mxu0 0.0
    %303 = vmatpush1.msra.mxu0 0.0
    %304 = vmatprep.subr.mxu0 0.0
    %305 = vmatpush1.msra.mxu0 0.0
    %306 = vmatprep.mubr.f32.mxu0 0.0
    %307 = vmatmul.mubr.f32.gmra.mrb[0].mxu0 %v160
    %v308 = vpop.f32.mrb[0].mxu0
    %v309 = vadd.f32 %v241, %v308
    %v310 = vpop.f32.mrb[0].mxu0
    %311 = vmatprep.mubr.f32.mxu0 0.0
    %312 = vmatmul.mubr.f32.gmra.mrb[0].mxu0 %v82
    %v313 = vpop.f32.mrb[0].mxu0
    %v314 = vadd.f32 %v241, %v313
    %v315 = vpop.f32.mrb[0].mxu0
    %316 = vdwg.mxu0
    %vm317 = vcmask 64512
    %v319 = vsel %vm317, %v151, 0
    %v322 = vsel %vm317, %v229, 0
    %v325 = vsel %vm317, %v234, 0
    %327 = vmatprep.subr.mxu0 0.0
    %328 = vmatpush1.xpose.msra.mxu0 %v322
    %329 = vmatprep.subr.mxu0 0.0
    %330 = vmatpush1.xpose.msra.mxu0 %v325
    %331 = vmatprep.subr.mxu0 0.0
    %332 = vmatpush1.xpose.msra.mxu0 0.0
    %333 = vmatprep.subr.mxu0 0.0
    %334 = vmatpush1.xpose.msra.mxu0 0.0
    %335 = vmatprep.subr.mxu0 0.0
    %336 = vmatpush1.xpose.msra.mxu0 0.0
    %337 = vmatprep.subr.mxu0 0.0
    %338 = vmatpush1.xpose.msra.mxu0 0.0
    %339 = vmatprep.subr.mxu0 0.0
    %340 = vmatpush1.xpose.msra.mxu0 0.0
    %341 = vmatprep.subr.mxu0 0.0
    %342 = vmatpush1.xpose.msra.mxu0 0.0
    %343 = vmatprep.subr.mxu0 0.0
    %344 = vmatpush1.xpose.msra.mxu0 0.0
    %345 = vmatprep.subr.mxu0 0.0
    %346 = vmatpush1.xpose.msra.mxu0 0.0
    %347 = vmatprep.subr.mxu0 0.0
    %348 = vmatpush1.xpose.msra.mxu0 0.0
    %349 = vmatprep.subr.mxu0 0.0
    %350 = vmatpush1.xpose.msra.mxu0 0.0
    %351 = vmatprep.subr.mxu0 0.0
    %352 = vmatpush1.xpose.msra.mxu0 0.0
    %353 = vmatprep.subr.mxu0 0.0
    %354 = vmatpush1.xpose.msra.mxu0 0.0
    %355 = vmatprep.subr.mxu0 0.0
    %356 = vmatpush1.xpose.msra.mxu0 0.0
    %357 = vmatprep.subr.mxu0 0.0
    %358 = vmatpush1.xpose.msra.mxu0 0.0
    %359 = vmatprep.subr.mxu0 0.0
    %360 = vmatpush1.xpose.msra.mxu0 0.0
    %361 = vmatprep.subr.mxu0 0.0
    %362 = vmatpush1.xpose.msra.mxu0 0.0
    %363 = vmatprep.subr.mxu0 0.0
    %364 = vmatpush1.xpose.msra.mxu0 0.0
    %365 = vmatprep.subr.mxu0 0.0
    %366 = vmatpush1.xpose.msra.mxu0 0.0
    %367 = vmatprep.subr.mxu0 0.0
    %368 = vmatpush1.xpose.msra.mxu0 0.0
    %369 = vmatprep.subr.mxu0 0.0
    %370 = vmatpush1.xpose.msra.mxu0 0.0
    %371 = vmatprep.subr.mxu0 0.0
    %372 = vmatpush1.xpose.msra.mxu0 0.0
    %373 = vmatprep.subr.mxu0 0.0
    %374 = vmatpush1.xpose.msra.mxu0 0.0
    %375 = vmatprep.subr.mxu0 0.0
    %376 = vmatpush1.xpose.msra.mxu0 0.0
    %377 = vmatprep.subr.mxu0 0.0
    %378 = vmatpush1.xpose.msra.mxu0 0.0
    %379 = vmatprep.subr.mxu0 0.0
    %380 = vmatpush1.xpose.msra.mxu0 0.0
    %381 = vmatprep.subr.mxu0 0.0
    %382 = vmatpush1.xpose.msra.mxu0 0.0
    %383 = vmatprep.subr.mxu0 0.0
    %384 = vmatpush1.xpose.msra.mxu0 0.0
    %385 = vmatprep.subr.mxu0 0.0
    %386 = vmatpush1.xpose.msra.mxu0 0.0
    %387 = vmatprep.subr.mxu0 0.0
    %388 = vmatpush1.xpose.msra.mxu0 0.0
    %389 = vmatprep.subr.mxu0 0.0
    %390 = vmatpush1.xpose.msra.mxu0 0.0
    %391 = vmatprep.mubr.f32.mxu0 0.0
    %392 = vmatmul.mubr.f32.gmra.mrb[0].mxu0 %v319
    %v393 = vpop.f32.mrb[0].mxu0
    %v394 = vadd.f32 0.0, %v393
    %v395 = vpop.f32.mrb[0].mxu0
    %396 = vdwg.mxu0
    %v397 = vmul.f32 %v394, 0.35355338
    %v398 = vlaneseq
    %v399 = vshrl.u32 %v398, 7
    %v400 = vsub.s32 0, %v399
    %v401 = vrot.slane %v55, %v400
    %v402 = vadd.f32 %v397, %v401
    %vm403 = vcmask 130048
    %v404 = vsel %vm403, %v402, -inf
    %405 = vmax.xlane.f32.xlu0 %v404
    %v406 = vpop.xlane.xlu0 %405
    %v407 = vsub.f32 %v402, %v406
    %v408 = vmul.f32 %v407, 1.442695
    %v409 = vpow.pop %v408
    %v410 = vsel %vm403, %v409, 0.0
    %411 = vadd.xlane.f32.xlu0 %v410
    %v412 = vpop.xlane.xlu0 %411
    %v413 = vrcp.pop %v412
    %v414 = vmul.f32 %v409, %v413
    %v416 = vsel %vm403, %v414, 0
    %418 = vmatprep.subr.mxu0 0.0
    %419 = vmatpush1.msra.mxu0 %v309
    %420 = vmatprep.subr.mxu0 0.0
    %421 = vmatpush1.msra.mxu0 %v314
    %422 = vmatprep.subr.mxu0 0.0
    %423 = vmatpush1.msra.mxu0 0.0
    %424 = vmatprep.subr.mxu0 0.0
    %425 = vmatpush1.msra.mxu0 0.0
    %426 = vmatprep.subr.mxu0 0.0
    %427 = vmatpush1.msra.mxu0 0.0
    %428 = vmatprep.subr.mxu0 0.0
    %429 = vmatpush1.msra.mxu0 0.0
    %430 = vmatprep.subr.mxu0 0.0
    %431 = vmatpush1.msra.mxu0 0.0
    %432 = vmatprep.subr.mxu0 0.0
    %433 = vmatpush1.msra.mxu0 0.0
    %434 = vmatprep.subr.mxu0 0.0
    %435 = vmatpush1.msra.mxu0 0.0
    %436 = vmatprep.subr.mxu0 0.0
    %437 = vmatpush1.msra.mxu0 0.0
    %438 = vmatprep.subr.mxu0 0.0
    %439 = vmatpush1.msra.mxu0 0.0
    %440 = vmatprep.subr.mxu0 0.0
    %441 = vmatpush1.msra.mxu0 0.0
    %442 = vmatprep.subr.mxu0 0.0
    %443 = vmatpush1.msra.mxu0 0.0
    %444 = vmatprep.subr.mxu0 0.0
    %445 = vmatpush1.msra.mxu0 0.0
    %446 = vmatprep.subr.mxu0 0.0
    %447 = vmatpush1.msra.mxu0 0.0
    %448 = vmatprep.subr.mxu0 0.0
    %449 = vmatpush1.msra.mxu0 0.0
    %450 = vmatprep.subr.mxu0 0.0
    %451 = vmatpush1.msra.mxu0 0.0
    %452 = vmatprep.subr.mxu0 0.0
    %453 = vmatpush1.msra.mxu0 0.0
    %454 = vmatprep.subr.mxu0 0.0
    %455 = vmatpush1.msra.mxu0 0.0
    %456 = vmatprep.subr.mxu0 0.0
    %457 = vmatpush1.msra.mxu0 0.0
    %458 = vmatprep.subr.mxu0 0.0
    %459 = vmatpush1.msra.mxu0 0.0
    %460 = vmatprep.subr.mxu0 0.0
    %461 = vmatpush1.msra.mxu0 0.0
    %462 = vmatprep.subr.mxu0 0.0
    %463 = vmatpush1.msra.mxu0 0.0
    %464 = vmatprep.subr.mxu0 0.0
    %465 = vmatpush1.msra.mxu0 0.0
    %466 = vmatprep.subr.mxu0 0.0
    %467 = vmatpush1.msra.mxu0 0.0
    %468 = vmatprep.subr.mxu0 0.0
    %469 = vmatpush1.msra.mxu0 0.0
    %470 = vmatprep.subr.mxu0 0.0
    %471 = vmatpush1.msra.mxu0 0.0
    %472 = vmatprep.subr.mxu0 0.0
    %473 = vmatpush1.msra.mxu0 0.0
    %474 = vmatprep.subr.mxu0 0.0
    %475 = vmatpush1.msra.mxu0 0.0
    %476 = vmatprep.subr.mxu0 0.0
    %477 = vmatpush1.msra.mxu0 0.0
    %478 = vmatprep.subr.mxu0 0.0
    %479 = vmatpush1.msra.mxu0 0.0
    %480 = vmatprep.subr.mxu0 0.0
    %481 = vmatpush1.msra.mxu0 0.0
    %482 = vmatprep.mubr.f32.mxu0 0.0
    %483 = vmatmul.mubr.f32.gmra.mrb[0].mxu0 %v416
    %v484 = vpop.f32.mrb[0].mxu0
    %v485 = vadd.f32 0.0, %v484
    %v486 = vpop.f32.mrb[0].mxu0
    %487 = vdwg.mxu0
    %488 = vrot.lane.b32.xlu0 %v151, 120
    %v489 = vpop.permute.xlu0 %488
    %490 = vrot.lane.b32.xlu0 %v229, 120
    %v491 = vpop.permute.xlu0 %490
    %492 = vrot.lane.b32.xlu0 %v234, 120
    %v493 = vpop.permute.xlu0 %492
    %v494 = vsel %vm317, %v489, 0
    %v496 = vsel %vm317, %v491, 0
    %v498 = vsel %vm317, %v493, 0
    %500 = vmatprep.subr.mxu0 0.0
    %501 = vmatpush1.xpose.msra.mxu0 %v496
    %502 = vmatprep.subr.mxu0 0.0
    %503 = vmatpush1.xpose.msra.mxu0 %v498
    %504 = vmatprep.subr.mxu0 0.0
    %505 = vmatpush1.xpose.msra.mxu0 0.0
    %506 = vmatprep.subr.mxu0 0.0
    %507 = vmatpush1.xpose.msra.mxu0 0.0
    %508 = vmatprep.subr.mxu0 0.0
    %509 = vmatpush1.xpose.msra.mxu0 0.0
    %510 = vmatprep.subr.mxu0 0.0
    %511 = vmatpush1.xpose.msra.mxu0 0.0
    %512 = vmatprep.subr.mxu0 0.0
    %513 = vmatpush1.xpose.msra.mxu0 0.0
    %514 = vmatprep.subr.mxu0 0.0
    %515 = vmatpush1.xpose.msra.mxu0 0.0
    %516 = vmatprep.subr.mxu0 0.0
    %517 = vmatpush1.xpose.msra.mxu0 0.0
    %518 = vmatprep.subr.mxu0 0.0
    %519 = vmatpush1.xpose.msra.mxu0 0.0
    %520 = vmatprep.subr.mxu0 0.0
    %521 = vmatpush1.xpose.msra.mxu0 0.0
    %522 = vmatprep.subr.mxu0 0.0
    %523 = vmatpush1.xpose.msra.mxu0 0.0
    %524 = vmatprep.subr.mxu0 0.0
    %525 = vmatpush1.xpose.msra.mxu0 0.0
    %526 = vmatprep.subr.mxu0 0.0
    %527 = vmatpush1.xpose.msra.mxu0 0.0
    %528 = vmatprep.subr.mxu0 0.0
    %529 = vmatpush1.xpose.msra.mxu0 0.0
    %530 = vmatprep.subr.mxu0 0.0
    %531 = vmatpush1.xpose.msra.mxu0 0.0
    %532 = vmatprep.subr.mxu0 0.0
    %533 = vmatpush1.xpose.msra.mxu0 0.0
    %534 = vmatprep.subr.mxu0 0.0
    %535 = vmatpush1.xpose.msra.mxu0 0.0
    %536 = vmatprep.subr.mxu0 0.0
    %537 = vmatpush1.xpose.msra.mxu0 0.0
    %538 = vmatprep.subr.mxu0 0.0
    %539 = vmatpush1.xpose.msra.mxu0 0.0
    %540 = vmatprep.subr.mxu0 0.0
    %541 = vmatpush1.xpose.msra.mxu0 0.0
    %542 = vmatprep.subr.mxu0 0.0
    %543 = vmatpush1.xpose.msra.mxu0 0.0
    %544 = vmatprep.subr.mxu0 0.0
    %545 = vmatpush1.xpose.msra.mxu0 0.0
    %546 = vmatprep.subr.mxu0 0.0
    %547 = vmatpush1.xpose.msra.mxu0 0.0
    %548 = vmatprep.subr.mxu0 0.0
    %549 = vmatpush1.xpose.msra.mxu0 0.0
    %550 = vmatprep.subr.mxu0 0.0
    %551 = vmatpush1.xpose.msra.mxu0 0.0
    %552 = vmatprep.subr.mxu0 0.0
    %553 = vmatpush1.xpose.msra.mxu0 0.0
    %554 = vmatprep.subr.mxu0 0.0
    %555 = vmatpush1.xpose.msra.mxu0 0.0
    %556 = vmatprep.subr.mxu0 0.0
    %557 = vmatpush1.xpose.msra.mxu0 0.0
    %558 = vmatprep.subr.mxu0 0.0
    %559 = vmatpush1.xpose.msra.mxu0 0.0
    %560 = vmatprep.subr.mxu0 0.0
    %561 = vmatpush1.xpose.msra.mxu0 0.0
    %562 = vmatprep.subr.mxu0 0.0
    %563 = vmatpush1.xpose.msra.mxu0 0.0
    %564 = vmatprep.mubr.f32.mxu0 0.0
    %565 = vmatmul.mubr.f32.gmra.mrb[0].mxu0 %v494
    %v566 = vpop.f32.mrb[0].mxu0
    %v567 = vadd.f32 0.0, %v566
    %v568 = vpop.f32.mrb[0].mxu0
    %569 = vdwg.mxu0
    %v570 = vmul.f32 %v567, 0.35355338
    %v571 = vadd.f32 %v570, %v401
    %v572 = vsel %vm403, %v571, -inf
    %573 = vmax.xlane.f32.xlu0 %v572
    %v574 = vpop.xlane.xlu0 %573
    %v575 = vsub.f32 %v571, %v574
    %v576 = vmul.f32 %v575, 1.442695
    %v577 = vpow.pop %v576
    %v578 = vsel %vm403, %v577, 0.0
    %579 = vadd.xlane.f32.xlu0 %v578
    %v580 = vpop.xlane.xlu0 %579
    %v581 = vrcp.pop %v580
    %v582 = vmul.f32 %v577, %v581
    %585 = vrot.lane.b32.xlu0 %v309, 120
    %v586 = vpop.permute.xlu0 %585
    %587 = vrot.lane.b32.xlu0 %v314, 120
    %v588 = vpop.permute.xlu0 %587
    %v592 = vsel %vm403, %v582, 0
    %594 = vmatprep.subr.mxu0 0.0
    %595 = vmatpush1.msra.mxu0 %v586
    %596 = vmatprep.subr.mxu0 0.0
    %597 = vmatpush1.msra.mxu0 %v588
    %598 = vmatprep.subr.mxu0 0.0
    %599 = vmatpush1.msra.mxu0 0.0
    %600 = vmatprep.subr.mxu0 0.0
    %601 = vmatpush1.msra.mxu0 0.0
    %602 = vmatprep.subr.mxu0 0.0
    %603 = vmatpush1.msra.mxu0 0.0
    %604 = vmatprep.subr.mxu0 0.0
    %605 = vmatpush1.msra.mxu0 0.0
    %606 = vmatprep.subr.mxu0 0.0
    %607 = vmatpush1.msra.mxu0 0.0
    %608 = vmatprep.subr.mxu0 0.0
    %609 = vmatpush1.msra.mxu0 0.0
    %610 = vmatprep.subr.mxu0 0.0
    %611 = vmatpush1.msra.mxu0 0.0
    %612 = vmatprep.subr.mxu0 0.0
    %613 = vmatpush1.msra.mxu0 0.0
    %614 = vmatprep.subr.mxu0 0.0
    %615 = vmatpush1.msra.mxu0 0.0
    %616 = vmatprep.subr.mxu0 0.0
    %617 = vmatpush1.msra.mxu0 0.0
    %618 = vmatprep.subr.mxu0 0.0
    %619 = vmatpush1.msra.mxu0 0.0
    %620 = vmatprep.subr.mxu0 0.0
    %621 = vmatpush1.msra.mxu0 0.0
    %622 = vmatprep.subr.mxu0 0.0
    %623 = vmatpush1.msra.mxu0 0.0
    %624 = vmatprep.subr.mxu0 0.0
    %625 = vmatpush1.msra.mxu0 0.0
    %626 = vmatprep.subr.mxu0 0.0
    %627 = vmatpush1.msra.mxu0 0.0
    %628 = vmatprep.subr.mxu0 0.0
    %629 = vmatpush1.msra.mxu0 0.0
    %630 = vmatprep.subr.mxu0 0.0
    %631 = vmatpush1.msra.mxu0 0.0
    %632 = vmatprep.subr.mxu0 0.0
    %633 = vmatpush1.msra.mxu0 0.0
    %634 = vmatprep.subr.mxu0 0.0
    %635 = vmatpush1.msra.mxu0 0.0
    %636 = vmatprep.subr.mxu0 0.0
    %637 = vmatpush1.msra.mxu0 0.0
    %638 = vmatprep.subr.mxu0 0.0
    %639 = vmatpush1.msra.mxu0 0.0
    %640 = vmatprep.subr.mxu0 0.0
    %641 = vmatpush1.msra.mxu0 0.0
    %642 = vmatprep.subr.mxu0 0.0
    %643 = vmatpush1.msra.mxu0 0.0
    %644 = vmatprep.subr.mxu0 0.0
    %645 = vmatpush1.msra.mxu0 0.0
    %646 = vmatprep.subr.mxu0 0.0
    %647 = vmatpush1.msra.mxu0 0.0
    %648 = vmatprep.subr.mxu0 0.0
    %649 = vmatpush1.msra.mxu0 0.0
    %650 = vmatprep.subr.mxu0 0.0
    %651 = vmatpush1.msra.mxu0 0.0
    %652 = vmatprep.subr.mxu0 0.0
    %653 = vmatpush1.msra.mxu0 0.0
    %654 = vmatprep.subr.mxu0 0.0
    %655 = vmatpush1.msra.mxu0 0.0
    %656 = vmatprep.subr.mxu0 0.0
    %657 = vmatpush1.msra.mxu0 0.0
    %658 = vmatprep.mubr.f32.mxu0 0.0
    %659 = vmatmul.mubr.f32.gmra.mrb[0].mxu0 %v592
    %v660 = vpop.f32.mrb[0].mxu0
    %v661 = vadd.f32 0.0, %v660
    %v662 = vpop.f32.mrb[0].mxu0
    %663 = vdwg.mxu0
    %v665 = vsel %vm317, %v661, 0
    %667 = vmatprep.subr.mxu0 0.0
    %668 = vmatpush1.msra.mxu0 %v72
    %669 = vmatprep.subr.mxu0 0.0
    %670 = vmatpush1.msra.mxu0 0.0
    %671 = vmatprep.subr.mxu0 0.0
    %672 = vmatpush1.msra.mxu0 0.0
    %673 = vmatprep.subr.mxu0 0.0
    %674 = vmatpush1.msra.mxu0 0.0
    %675 = vmatprep.subr.mxu0 0.0
    %676 = vmatpush1.msra.mxu0 0.0
    %677 = vmatprep.subr.mxu0 0.0
    %678 = vmatpush1.msra.mxu0 0.0
    %679 = vmatprep.subr.mxu0 0.0
    %680 = vmatpush1.msra.mxu0 0.0
    %681 = vmatprep.subr.mxu0 0.0
    %682 = vmatpush1.msra.mxu0 0.0
    %683 = vmatprep.subr.mxu0 0.0
    %684 = vmatpush1.msra.mxu0 0.0
    %685 = vmatprep.subr.mxu0 0.0
    %686 = vmatpush1.msra.mxu0 0.0
    %687 = vmatprep.subr.mxu0 0.0
    %688 = vmatpush1.msra.mxu0 0.0
    %689 = vmatprep.subr.mxu0 0.0
    %690 = vmatpush1.msra.mxu0 0.0
    %691 = vmatprep.subr.mxu0 0.0
    %692 = vmatpush1.msra.mxu0 0.0
    %693 = vmatprep.subr.mxu0 0.0
    %694 = vmatpush1.msra.mxu0 0.0
    %695 = vmatprep.subr.mxu0 0.0
    %696 = vmatpush1.msra.mxu0 0.0
    %697 = vmatprep.subr.mxu0 0.0
    %698 = vmatpush1.msra.mxu0 0.0
    %699 = vmatprep.subr.mxu0 0.0
    %700 = vmatpush1.msra.mxu0 0.0
    %701 = vmatprep.subr.mxu0 0.0
    %702 = vmatpush1.msra.mxu0 0.0
    %703 = vmatprep.subr.mxu0 0.0
    %704 = vmatpush1.msra.mxu0 0.0
    %705 = vmatprep.subr.mxu0 0.0
    %706 = vmatpush1.msra.mxu0 0.0
    %707 = vmatprep.subr.mxu0 0.0
    %708 = vmatpush1.msra.mxu0 0.0
    %709 = vmatprep.subr.mxu0 0.0
    %710 = vmatpush1.msra.mxu0 0.0
    %711 = vmatprep.subr.mxu0 0.0
    %712 = vmatpush1.msra.mxu0 0.0
    %713 = vmatprep.subr.mxu0 0.0
    %714 = vmatpush1.msra.mxu0 0.0
    %715 = vmatprep.subr.mxu0 0.0
    %716 = vmatpush1.msra.mxu0 0.0
    %717 = vmatprep.subr.mxu0 0.0
    %718 = vmatpush1.msra.mxu0 0.0
    %719 = vmatprep.subr.mxu0 0.0
    %720 = vmatpush1.msra.mxu0 0.0
    %721 = vmatprep.subr.mxu0 0.0
    %722 = vmatpush1.msra.mxu0 0.0
    %723 = vmatprep.subr.mxu0 0.0
    %724 = vmatpush1.msra.mxu0 0.0
    %725 = vmatprep.subr.mxu0 0.0
    %726 = vmatpush1.msra.mxu0 0.0
    %727 = vmatprep.subr.mxu0 0.0
    %728 = vmatpush1.msra.mxu0 0.0
    %729 = vmatprep.subr.mxu0 0.0
    %730 = vmatpush1.msra.mxu0 0.0
    %731 = vmatprep.mubr.f32.mxu0 0.0
    %732 = vmatmul.mubr.f32.gmra.mrb[0].mxu0 %v665
    %v733 = vpop.f32.mrb[0].mxu0
    %v734 = vadd.f32 0.0, %v733
    %v735 = vpop.f32.mrb[0].mxu0
    %736 = vdwg.mxu0
    %v738 = vsel %vm317, %v485, 0
    %740 = vmatprep.subr.mxu0 0.0
    %741 = vmatpush1.msra.mxu0 %v71
    %742 = vmatprep.subr.mxu0 0.0
    %743 = vmatpush1.msra.mxu0 0.0
    %744 = vmatprep.subr.mxu0 0.0
    %745 = vmatpush1.msra.mxu0 0.0
    %746 = vmatprep.subr.mxu0 0.0
    %747 = vmatpush1.msra.mxu0 0.0
    %748 = vmatprep.subr.mxu0 0.0
    %749 = vmatpush1.msra.mxu0 0.0
    %750 = vmatprep.subr.mxu0 0.0
    %751 = vmatpush1.msra.mxu0 0.0
    %752 = vmatprep.subr.mxu0 0.0
    %753 = vmatpush1.msra.mxu0 0.0
    %754 = vmatprep.subr.mxu0 0.0
    %755 = vmatpush1.msra.mxu0 0.0
    %756 = vmatprep.subr.mxu0 0.0
    %757 = vmatpush1.msra.mxu0 0.0
    %758 = vmatprep.subr.mxu0 0.0
    %759 = vmatpush1.msra.mxu0 0.0
    %760 = vmatprep.subr.mxu0 0.0
    %761 = vmatpush1.msra.mxu0 0.0
    %762 = vmatprep.subr.mxu0 0.0
    %763 = vmatpush1.msra.mxu0 0.0
    %764 = vmatprep.subr.mxu0 0.0
    %765 = vmatpush1.msra.mxu0 0.0
    %766 = vmatprep.subr.mxu0 0.0
    %767 = vmatpush1.msra.mxu0 0.0
    %768 = vmatprep.subr.mxu0 0.0
    %769 = vmatpush1.msra.mxu0 0.0
    %770 = vmatprep.subr.mxu0 0.0
    %771 = vmatpush1.msra.mxu0 0.0
    %772 = vmatprep.subr.mxu0 0.0
    %773 = vmatpush1.msra.mxu0 0.0
    %774 = vmatprep.subr.mxu0 0.0
    %775 = vmatpush1.msra.mxu0 0.0
    %776 = vmatprep.subr.mxu0 0.0
    %777 = vmatpush1.msra.mxu0 0.0
    %778 = vmatprep.subr.mxu0 0.0
    %779 = vmatpush1.msra.mxu0 0.0
    %780 = vmatprep.subr.mxu0 0.0
    %781 = vmatpush1.msra.mxu0 0.0
    %782 = vmatprep.subr.mxu0 0.0
    %783 = vmatpush1.msra.mxu0 0.0
    %784 = vmatprep.subr.mxu0 0.0
    %785 = vmatpush1.msra.mxu0 0.0
    %786 = vmatprep.subr.mxu0 0.0
    %787 = vmatpush1.msra.mxu0 0.0
    %788 = vmatprep.subr.mxu0 0.0
    %789 = vmatpush1.msra.mxu0 0.0
    %790 = vmatprep.subr.mxu0 0.0
    %791 = vmatpush1.msra.mxu0 0.0
    %792 = vmatprep.subr.mxu0 0.0
    %793 = vmatpush1.msra.mxu0 0.0
    %794 = vmatprep.subr.mxu0 0.0
    %795 = vmatpush1.msra.mxu0 0.0
    %796 = vmatprep.subr.mxu0 0.0
    %797 = vmatpush1.msra.mxu0 0.0
    %798 = vmatprep.subr.mxu0 0.0
    %799 = vmatpush1.msra.mxu0 0.0
    %800 = vmatprep.subr.mxu0 0.0
    %801 = vmatpush1.msra.mxu0 0.0
    %802 = vmatprep.subr.mxu0 0.0
    %803 = vmatpush1.msra.mxu0 0.0
    %804 = vmatprep.mubr.f32.mxu0 0.0
    %805 = vmatmul.mubr.f32.gmra.mrb[0].mxu0 %v738
    %v806 = vpop.f32.mrb[0].mxu0
    %v807 = vadd.f32 %v734, %v806
    %v808 = vpop.f32.mrb[0].mxu0
    %809 = vdwg.mxu0
    %810 = vrot.lane.b32.xlu0 %v151, 112
    %v811 = vpop.permute.xlu0 %810
    %812 = vrot.lane.b32.xlu0 %v229, 112
    %v813 = vpop.permute.xlu0 %812
    %814 = vrot.lane.b32.xlu0 %v234, 112
    %v815 = vpop.permute.xlu0 %814
    %v816 = vsel %vm317, %v811, 0
    %v818 = vsel %vm317, %v813, 0
    %v820 = vsel %vm317, %v815, 0
    %822 = vmatprep.subr.mxu0 0.0
    %823 = vmatpush1.xpose.msra.mxu0 %v818
    %824 = vmatprep.subr.mxu0 0.0
    %825 = vmatpush1.xpose.msra.mxu0 %v820
    %826 = vmatprep.subr.mxu0 0.0
    %827 = vmatpush1.xpose.msra.mxu0 0.0
    %828 = vmatprep.subr.mxu0 0.0
    %829 = vmatpush1.xpose.msra.mxu0 0.0
    %830 = vmatprep.subr.mxu0 0.0
    %831 = vmatpush1.xpose.msra.mxu0 0.0
    %832 = vmatprep.subr.mxu0 0.0
    %833 = vmatpush1.xpose.msra.mxu0 0.0
    %834 = vmatprep.subr.mxu0 0.0
    %835 = vmatpush1.xpose.msra.mxu0 0.0
    %836 = vmatprep.subr.mxu0 0.0
    %837 = vmatpush1.xpose.msra.mxu0 0.0
    %838 = vmatprep.subr.mxu0 0.0
    %839 = vmatpush1.xpose.msra.mxu0 0.0
    %840 = vmatprep.subr.mxu0 0.0
    %841 = vmatpush1.xpose.msra.mxu0 0.0
    %842 = vmatprep.subr.mxu0 0.0
    %843 = vmatpush1.xpose.msra.mxu0 0.0
    %844 = vmatprep.subr.mxu0 0.0
    %845 = vmatpush1.xpose.msra.mxu0 0.0
    %846 = vmatprep.subr.mxu0 0.0
    %847 = vmatpush1.xpose.msra.mxu0 0.0
    %848 = vmatprep.subr.mxu0 0.0
    %849 = vmatpush1.xpose.msra.mxu0 0.0
    %850 = vmatprep.subr.mxu0 0.0
    %851 = vmatpush1.xpose.msra.mxu0 0.0
    %852 = vmatprep.subr.mxu0 0.0
    %853 = vmatpush1.xpose.msra.mxu0 0.0
    %854 = vmatprep.subr.mxu0 0.0
    %855 = vmatpush1.xpose.msra.mxu0 0.0
    %856 = vmatprep.subr.mxu0 0.0
    %857 = vmatpush1.xpose.msra.mxu0 0.0
    %858 = vmatprep.subr.mxu0 0.0
    %859 = vmatpush1.xpose.msra.mxu0 0.0
    %860 = vmatprep.subr.mxu0 0.0
    %861 = vmatpush1.xpose.msra.mxu0 0.0
    %862 = vmatprep.subr.mxu0 0.0
    %863 = vmatpush1.xpose.msra.mxu0 0.0
    %864 = vmatprep.subr.mxu0 0.0
    %865 = vmatpush1.xpose.msra.mxu0 0.0
    %866 = vmatprep.subr.mxu0 0.0
    %867 = vmatpush1.xpose.msra.mxu0 0.0
    %868 = vmatprep.subr.mxu0 0.0
    %869 = vmatpush1.xpose.msra.mxu0 0.0
    %870 = vmatprep.subr.mxu0 0.0
    %871 = vmatpush1.xpose.msra.mxu0 0.0
    %872 = vmatprep.subr.mxu0 0.0
    %873 = vmatpush1.xpose.msra.mxu0 0.0
    %874 = vmatprep.subr.mxu0 0.0
    %875 = vmatpush1.xpose.msra.mxu0 0.0
    %876 = vmatprep.subr.mxu0 0.0
    %877 = vmatpush1.xpose.msra.mxu0 0.0
    %878 = vmatprep.subr.mxu0 0.0
    %879 = vmatpush1.xpose.msra.mxu0 0.0
    %880 = vmatprep.subr.mxu0 0.0
    %881 = vmatpush1.xpose.msra.mxu0 0.0
    %882 = vmatprep.subr.mxu0 0.0
    %883 = vmatpush1.xpose.msra.mxu0 0.0
    %884 = vmatprep.subr.mxu0 0.0
    %885 = vmatpush1.xpose.msra.mxu0 0.0
    %886 = vmatprep.mubr.f32.mxu0 0.0
    %887 = vmatmul.mubr.f32.gmra.mrb[0].mxu0 %v816
    %v888 = vpop.f32.mrb[0].mxu0
    %v889 = vadd.f32 0.0, %v888
    %v890 = vpop.f32.mrb[0].mxu0
    %891 = vdwg.mxu0
    %v892 = vmul.f32 %v889, 0.35355338
    %v893 = vadd.f32 %v892, %v401
    %v894 = vsel %vm403, %v893, -inf
    %895 = vmax.xlane.f32.xlu0 %v894
    %v896 = vpop.xlane.xlu0 %895
    %v897 = vsub.f32 %v893, %v896
    %v898 = vmul.f32 %v897, 1.442695
    %v899 = vpow.pop %v898
    %v900 = vsel %vm403, %v899, 0.0
    %901 = vadd.xlane.f32.xlu0 %v900
    %v902 = vpop.xlane.xlu0 %901
    %v903 = vrcp.pop %v902
    %v904 = vmul.f32 %v899, %v903
    %905 = vrot.lane.b32.xlu0 %v309, 112
    %v906 = vpop.permute.xlu0 %905
    %907 = vrot.lane.b32.xlu0 %v314, 112
    %v908 = vpop.permute.xlu0 %907
    %v912 = vsel %vm403, %v904, 0
    %914 = vmatprep.subr.mxu0 0.0
    %915 = vmatpush1.msra.mxu0 %v906
    %916 = vmatprep.subr.mxu0 0.0
    %917 = vmatpush1.msra.mxu0 %v908
    %918 = vmatprep.subr.mxu0 0.0
    %919 = vmatpush1.msra.mxu0 0.0
    %920 = vmatprep.subr.mxu0 0.0
    %921 = vmatpush1.msra.mxu0 0.0
    %922 = vmatprep.subr.mxu0 0.0
    %923 = vmatpush1.msra.mxu0 0.0
    %924 = vmatprep.subr.mxu0 0.0
    %925 = vmatpush1.msra.mxu0 0.0
    %926 = vmatprep.subr.mxu0 0.0
    %927 = vmatpush1.msra.mxu0 0.0
    %928 = vmatprep.subr.mxu0 0.0
    %929 = vmatpush1.msra.mxu0 0.0
    %930 = vmatprep.subr.mxu0 0.0
    %931 = vmatpush1.msra.mxu0 0.0
    %932 = vmatprep.subr.mxu0 0.0
    %933 = vmatpush1.msra.mxu0 0.0
    %934 = vmatprep.subr.mxu0 0.0
    %935 = vmatpush1.msra.mxu0 0.0
    %936 = vmatprep.subr.mxu0 0.0
    %937 = vmatpush1.msra.mxu0 0.0
    %938 = vmatprep.subr.mxu0 0.0
    %939 = vmatpush1.msra.mxu0 0.0
    %940 = vmatprep.subr.mxu0 0.0
    %941 = vmatpush1.msra.mxu0 0.0
    %942 = vmatprep.subr.mxu0 0.0
    %943 = vmatpush1.msra.mxu0 0.0
    %944 = vmatprep.subr.mxu0 0.0
    %945 = vmatpush1.msra.mxu0 0.0
    %946 = vmatprep.subr.mxu0 0.0
    %947 = vmatpush1.msra.mxu0 0.0
    %948 = vmatprep.subr.mxu0 0.0
    %949 = vmatpush1.msra.mxu0 0.0
    %950 = vmatprep.subr.mxu0 0.0
    %951 = vmatpush1.msra.mxu0 0.0
    %952 = vmatprep.subr.mxu0 0.0
    %953 = vmatpush1.msra.mxu0 0.0
    %954 = vmatprep.subr.mxu0 0.0
    %955 = vmatpush1.msra.mxu0 0.0
    %956 = vmatprep.subr.mxu0 0.0
    %957 = vmatpush1.msra.mxu0 0.0
    %958 = vmatprep.subr.mxu0 0.0
    %959 = vmatpush1.msra.mxu0 0.0
    %960 = vmatprep.subr.mxu0 0.0
    %961 = vmatpush1.msra.mxu0 0.0
    %962 = vmatprep.subr.mxu0 0.0
    %963 = vmatpush1.msra.mxu0 0.0
    %964 = vmatprep.subr.mxu0 0.0
    %965 = vmatpush1.msra.mxu0 0.0
    %966 = vmatprep.subr.mxu0 0.0
    %967 = vmatpush1.msra.mxu0 0.0
    %968 = vmatprep.subr.mxu0 0.0
    %969 = vmatpush1.msra.mxu0 0.0
    %970 = vmatprep.subr.mxu0 0.0
    %971 = vmatpush1.msra.mxu0 0.0
    %972 = vmatprep.subr.mxu0 0.0
    %973 = vmatpush1.msra.mxu0 0.0
    %974 = vmatprep.subr.mxu0 0.0
    %975 = vmatpush1.msra.mxu0 0.0
    %976 = vmatprep.subr.mxu0 0.0
    %977 = vmatpush1.msra.mxu0 0.0
    %978 = vmatprep.mubr.f32.mxu0 0.0
    %979 = vmatmul.mubr.f32.gmra.mrb[0].mxu0 %v912
    %v980 = vpop.f32.mrb[0].mxu0
    %v981 = vadd.f32 0.0, %v980
    %v982 = vpop.f32.mrb[0].mxu0
    %983 = vdwg.mxu0
    %v985 = vsel %vm317, %v981, 0
    %987 = vmatprep.subr.mxu0 0.0
    %988 = vmatpush1.msra.mxu0 %v73
    %989 = vmatprep.subr.mxu0 0.0
    %990 = vmatpush1.msra.mxu0 0.0
    %991 = vmatprep.subr.mxu0 0.0
    %992 = vmatpush1.msra.mxu0 0.0
    %993 = vmatprep.subr.mxu0 0.0
    %994 = vmatpush1.msra.mxu0 0.0
    %995 = vmatprep.subr.mxu0 0.0
    %996 = vmatpush1.msra.mxu0 0.0
    %997 = vmatprep.subr.mxu0 0.0
    %998 = vmatpush1.msra.mxu0 0.0
    %999 = vmatprep.subr.mxu0 0.0
    %1000 = vmatpush1.msra.mxu0 0.0
    %1001 = vmatprep.subr.mxu0 0.0
    %1002 = vmatpush1.msra.mxu0 0.0
    %1003 = vmatprep.subr.mxu0 0.0
    %1004 = vmatpush1.msra.mxu0 0.0
    %1005 = vmatprep.subr.mxu0 0.0
    %1006 = vmatpush1.msra.mxu0 0.0
    %1007 = vmatprep.subr.mxu0 0.0
    %1008 = vmatpush1.msra.mxu0 0.0
    %1009 = vmatprep.subr.mxu0 0.0
    %1010 = vmatpush1.msra.mxu0 0.0
    %1011 = vmatprep.subr.mxu0 0.0
    %1012 = vmatpush1.msra.mxu0 0.0
    %1013 = vmatprep.subr.mxu0 0.0
    %1014 = vmatpush1.msra.mxu0 0.0
    %1015 = vmatprep.subr.mxu0 0.0
    %1016 = vmatpush1.msra.mxu0 0.0
    %1017 = vmatprep.subr.mxu0 0.0
    %1018 = vmatpush1.msra.mxu0 0.0
    %1019 = vmatprep.subr.mxu0 0.0
    %1020 = vmatpush1.msra.mxu0 0.0
    %1021 = vmatprep.subr.mxu0 0.0
    %1022 = vmatpush1.msra.mxu0 0.0
    %1023 = vmatprep.subr.mxu0 0.0
    %1024 = vmatpush1.msra.mxu0 0.0
    %1025 = vmatprep.subr.mxu0 0.0
    %1026 = vmatpush1.msra.mxu0 0.0
    %1027 = vmatprep.subr.mxu0 0.0
    %1028 = vmatpush1.msra.mxu0 0.0
    %1029 = vmatprep.subr.mxu0 0.0
    %1030 = vmatpush1.msra.mxu0 0.0
    %1031 = vmatprep.subr.mxu0 0.0
    %1032 = vmatpush1.msra.mxu0 0.0
    %1033 = vmatprep.subr.mxu0 0.0
    %1034 = vmatpush1.msra.mxu0 0.0
    %1035 = vmatprep.subr.mxu0 0.0
    %1036 = vmatpush1.msra.mxu0 0.0
    %1037 = vmatprep.subr.mxu0 0.0
    %1038 = vmatpush1.msra.mxu0 0.0
    %1039 = vmatprep.subr.mxu0 0.0
    %1040 = vmatpush1.msra.mxu0 0.0
    %1041 = vmatprep.subr.mxu0 0.0
    %1042 = vmatpush1.msra.mxu0 0.0
    %1043 = vmatprep.subr.mxu0 0.0
    %1044 = vmatpush1.msra.mxu0 0.0
    %1045 = vmatprep.subr.mxu0 0.0
    %1046 = vmatpush1.msra.mxu0 0.0
    %1047 = vmatprep.subr.mxu0 0.0
    %1048 = vmatpush1.msra.mxu0 0.0
    %1049 = vmatprep.subr.mxu0 0.0
    %1050 = vmatpush1.msra.mxu0 0.0
    %1051 = vmatprep.mubr.f32.mxu0 0.0
    %1052 = vmatmul.mubr.f32.gmra.mrb[0].mxu0 %v985
    %v1053 = vpop.f32.mrb[0].mxu0
    %v1054 = vadd.f32 0.0, %v1053
    %v1055 = vpop.f32.mrb[0].mxu0
    %1056 = vdwg.mxu0
    %v1057 = vadd.f32 %v807, %v1054
    %1058 = vrot.lane.b32.xlu0 %v151, 104
    %v1059 = vpop.permute.xlu0 %1058
    %1060 = vrot.lane.b32.xlu0 %v229, 104
    %v1061 = vpop.permute.xlu0 %1060
    %1062 = vrot.lane.b32.xlu0 %v234, 104
    %v1063 = vpop.permute.xlu0 %1062
    %v1064 = vsel %vm317, %v1059, 0
    %v1066 = vsel %vm317, %v1061, 0
    %v1068 = vsel %vm317, %v1063, 0
    %1070 = vmatprep.subr.mxu0 0.0
    %1071 = vmatpush1.xpose.msra.mxu0 %v1066
    %1072 = vmatprep.subr.mxu0 0.0
    %1073 = vmatpush1.xpose.msra.mxu0 %v1068
    %1074 = vmatprep.subr.mxu0 0.0
    %1075 = vmatpush1.xpose.msra.mxu0 0.0
    %1076 = vmatprep.subr.mxu0 0.0
    %1077 = vmatpush1.xpose.msra.mxu0 0.0
    %1078 = vmatprep.subr.mxu0 0.0
    %1079 = vmatpush1.xpose.msra.mxu0 0.0
    %1080 = vmatprep.subr.mxu0 0.0
    %1081 = vmatpush1.xpose.msra.mxu0 0.0
    %1082 = vmatprep.subr.mxu0 0.0
    %1083 = vmatpush1.xpose.msra.mxu0 0.0
    %1084 = vmatprep.subr.mxu0 0.0
    %1085 = vmatpush1.xpose.msra.mxu0 0.0
    %1086 = vmatprep.subr.mxu0 0.0
    %1087 = vmatpush1.xpose.msra.mxu0 0.0
    %1088 = vmatprep.subr.mxu0 0.0
    %1089 = vmatpush1.xpose.msra.mxu0 0.0
    %1090 = vmatprep.subr.mxu0 0.0
    %1091 = vmatpush1.xpose.msra.mxu0 0.0
    %1092 = vmatprep.subr.mxu0 0.0
    %1093 = vmatpush1.xpose.msra.mxu0 0.0
    %1094 = vmatprep.subr.mxu0 0.0
    %1095 = vmatpush1.xpose.msra.mxu0 0.0
    %1096 = vmatprep.subr.mxu0 0.0
    %1097 = vmatpush1.xpose.msra.mxu0 0.0
    %1098 = vmatprep.subr.mxu0 0.0
    %1099 = vmatpush1.xpose.msra.mxu0 0.0
    %1100 = vmatprep.subr.mxu0 0.0
    %1101 = vmatpush1.xpose.msra.mxu0 0.0
    %1102 = vmatprep.subr.mxu0 0.0
    %1103 = vmatpush1.xpose.msra.mxu0 0.0
    %1104 = vmatprep.subr.mxu0 0.0
    %1105 = vmatpush1.xpose.msra.mxu0 0.0
    %1106 = vmatprep.subr.mxu0 0.0
    %1107 = vmatpush1.xpose.msra.mxu0 0.0
    %1108 = vmatprep.subr.mxu0 0.0
    %1109 = vmatpush1.xpose.msra.mxu0 0.0
    %1110 = vmatprep.subr.mxu0 0.0
    %1111 = vmatpush1.xpose.msra.mxu0 0.0
    %1112 = vmatprep.subr.mxu0 0.0
    %1113 = vmatpush1.xpose.msra.mxu0 0.0
    %1114 = vmatprep.subr.mxu0 0.0
    %1115 = vmatpush1.xpose.msra.mxu0 0.0
    %1116 = vmatprep.subr.mxu0 0.0
    %1117 = vmatpush1.xpose.msra.mxu0 0.0
    %1118 = vmatprep.subr.mxu0 0.0
    %1119 = vmatpush1.xpose.msra.mxu0 0.0
    %1120 = vmatprep.subr.mxu0 0.0
    %1121 = vmatpush1.xpose.msra.mxu0 0.0
    %1122 = vmatprep.subr.mxu0 0.0
    %1123 = vmatpush1.xpose.msra.mxu0 0.0
    %1124 = vmatprep.subr.mxu0 0.0
    %1125 = vmatpush1.xpose.msra.mxu0 0.0
    %1126 = vmatprep.subr.mxu0 0.0
    %1127 = vmatpush1.xpose.msra.mxu0 0.0
    %1128 = vmatprep.subr.mxu0 0.0
    %1129 = vmatpush1.xpose.msra.mxu0 0.0
    %1130 = vmatprep.subr.mxu0 0.0
    %1131 = vmatpush1.xpose.msra.mxu0 0.0
    %1132 = vmatprep.subr.mxu0 0.0
    %1133 = vmatpush1.xpose.msra.mxu0 0.0
    %1134 = vmatprep.mubr.f32.mxu0 0.0
    %1135 = vmatmul.mubr.f32.gmra.mrb[0].mxu0 %v1064
    %v1136 = vpop.f32.mrb[0].mxu0
    %v1137 = vadd.f32 0.0, %v1136
    %v1138 = vpop.f32.mrb[0].mxu0
    %1139 = vdwg.mxu0
    %v1140 = vmul.f32 %v1137, 0.35355338
    %v1141 = vadd.f32 %v1140, %v401
    %v1142 = vsel %vm403, %v1141, -inf
    %1143 = vmax.xlane.f32.xlu0 %v1142
    %v1144 = vpop.xlane.xlu0 %1143
    %v1145 = vsub.f32 %v1141, %v1144
    %v1146 = vmul.f32 %v1145, 1.442695
    %v1147 = vpow.pop %v1146
    %v1148 = vsel %vm403, %v1147, 0.0
    %1149 = vadd.xlane.f32.xlu0 %v1148
    %v1150 = vpop.xlane.xlu0 %1149
    %v1151 = vrcp.pop %v1150
    %v1152 = vmul.f32 %v1147, %v1151
    %1153 = vrot.lane.b32.xlu0 %v309, 104
    %v1154 = vpop.permute.xlu0 %1153
    %1155 = vrot.lane.b32.xlu0 %v314, 104
    %v1156 = vpop.permute.xlu0 %1155
    %v1160 = vsel %vm403, %v1152, 0
    %1162 = vmatprep.subr.mxu0 0.0
    %1163 = vmatpush1.msra.mxu0 %v1154
    %1164 = vmatprep.subr.mxu0 0.0
    %1165 = vmatpush1.msra.mxu0 %v1156
    %1166 = vmatprep.subr.mxu0 0.0
    %1167 = vmatpush1.msra.mxu0 0.0
    %1168 = vmatprep.subr.mxu0 0.0
    %1169 = vmatpush1.msra.mxu0 0.0
    %1170 = vmatprep.subr.mxu0 0.0
    %1171 = vmatpush1.msra.mxu0 0.0
    %1172 = vmatprep.subr.mxu0 0.0
    %1173 = vmatpush1.msra.mxu0 0.0
    %1174 = vmatprep.subr.mxu0 0.0
    %1175 = vmatpush1.msra.mxu0 0.0
    %1176 = vmatprep.subr.mxu0 0.0
    %1177 = vmatpush1.msra.mxu0 0.0
    %1178 = vmatprep.subr.mxu0 0.0
    %1179 = vmatpush1.msra.mxu0 0.0
    %1180 = vmatprep.subr.mxu0 0.0
    %1181 = vmatpush1.msra.mxu0 0.0
    %1182 = vmatprep.subr.mxu0 0.0
    %1183 = vmatpush1.msra.mxu0 0.0
    %1184 = vmatprep.subr.mxu0 0.0
    %1185 = vmatpush1.msra.mxu0 0.0
    %1186 = vmatprep.subr.mxu0 0.0
    %1187 = vmatpush1.msra.mxu0 0.0
    %1188 = vmatprep.subr.mxu0 0.0
    %1189 = vmatpush1.msra.mxu0 0.0
    %1190 = vmatprep.subr.mxu0 0.0
    %1191 = vmatpush1.msra.mxu0 0.0
    %1192 = vmatprep.subr.mxu0 0.0
    %1193 = vmatpush1.msra.mxu0 0.0
    %1194 = vmatprep.subr.mxu0 0.0
    %1195 = vmatpush1.msra.mxu0 0.0
    %1196 = vmatprep.subr.mxu0 0.0
    %1197 = vmatpush1.msra.mxu0 0.0
    %1198 = vmatprep.subr.mxu0 0.0
    %1199 = vmatpush1.msra.mxu0 0.0
    %1200 = vmatprep.subr.mxu0 0.0
    %1201 = vmatpush1.msra.mxu0 0.0
    %1202 = vmatprep.subr.mxu0 0.0
    %1203 = vmatpush1.msra.mxu0 0.0
    %1204 = vmatprep.subr.mxu0 0.0
    %1205 = vmatpush1.msra.mxu0 0.0
    %1206 = vmatprep.subr.mxu0 0.0
    %1207 = vmatpush1.msra.mxu0 0.0
    %1208 = vmatprep.subr.mxu0 0.0
    %1209 = vmatpush1.msra.mxu0 0.0
    %1210 = vmatprep.subr.mxu0 0.0
    %1211 = vmatpush1.msra.mxu0 0.0
    %1212 = vmatprep.subr.mxu0 0.0
    %1213 = vmatpush1.msra.mxu0 0.0
    %1214 = vmatprep.subr.mxu0 0.0
    %1215 = vmatpush1.msra.mxu0 0.0
    %1216 = vmatprep.subr.mxu0 0.0
    %1217 = vmatpush1.msra.mxu0 0.0
    %1218 = vmatprep.subr.mxu0 0.0
    %1219 = vmatpush1.msra.mxu0 0.0
    %1220 = vmatprep.subr.mxu0 0.0
    %1221 = vmatpush1.msra.mxu0 0.0
    %1222 = vmatprep.subr.mxu0 0.0
    %1223 = vmatpush1.msra.mxu0 0.0
    %1224 = vmatprep.subr.mxu0 0.0
    %1225 = vmatpush1.msra.mxu0 0.0
    %1226 = vmatprep.mubr.f32.mxu0 0.0
    %1227 = vmatmul.mubr.f32.gmra.mrb[0].mxu0 %v1160
    %v1228 = vpop.f32.mrb[0].mxu0
    %v1229 = vadd.f32 0.0, %v1228
    %v1230 = vpop.f32.mrb[0].mxu0
    %1231 = vdwg.mxu0
    %v1233 = vsel %vm317, %v1229, 0
    %1235 = vmatprep.subr.mxu0 0.0
    %1236 = vmatpush1.msra.mxu0 %v74
    %1237 = vmatprep.subr.mxu0 0.0
    %1238 = vmatpush1.msra.mxu0 0.0
    %1239 = vmatprep.subr.mxu0 0.0
    %1240 = vmatpush1.msra.mxu0 0.0
    %1241 = vmatprep.subr.mxu0 0.0
    %1242 = vmatpush1.msra.mxu0 0.0
    %1243 = vmatprep.subr.mxu0 0.0
    %1244 = vmatpush1.msra.mxu0 0.0
    %1245 = vmatprep.subr.mxu0 0.0
    %1246 = vmatpush1.msra.mxu0 0.0
    %1247 = vmatprep.subr.mxu0 0.0
    %1248 = vmatpush1.msra.mxu0 0.0
    %1249 = vmatprep.subr.mxu0 0.0
    %1250 = vmatpush1.msra.mxu0 0.0
    %1251 = vmatprep.subr.mxu0 0.0
    %1252 = vmatpush1.msra.mxu0 0.0
    %1253 = vmatprep.subr.mxu0 0.0
    %1254 = vmatpush1.msra.mxu0 0.0
    %1255 = vmatprep.subr.mxu0 0.0
    %1256 = vmatpush1.msra.mxu0 0.0
    %1257 = vmatprep.subr.mxu0 0.0
    %1258 = vmatpush1.msra.mxu0 0.0
    %1259 = vmatprep.subr.mxu0 0.0
    %1260 = vmatpush1.msra.mxu0 0.0
    %1261 = vmatprep.subr.mxu0 0.0
    %1262 = vmatpush1.msra.mxu0 0.0
    %1263 = vmatprep.subr.mxu0 0.0
    %1264 = vmatpush1.msra.mxu0 0.0
    %1265 = vmatprep.subr.mxu0 0.0
    %1266 = vmatpush1.msra.mxu0 0.0
    %1267 = vmatprep.subr.mxu0 0.0
    %1268 = vmatpush1.msra.mxu0 0.0
    %1269 = vmatprep.subr.mxu0 0.0
    %1270 = vmatpush1.msra.mxu0 0.0
    %1271 = vmatprep.subr.mxu0 0.0
    %1272 = vmatpush1.msra.mxu0 0.0
    %1273 = vmatprep.subr.mxu0 0.0
    %1274 = vmatpush1.msra.mxu0 0.0
    %1275 = vmatprep.subr.mxu0 0.0
    %1276 = vmatpush1.msra.mxu0 0.0
    %1277 = vmatprep.subr.mxu0 0.0
    %1278 = vmatpush1.msra.mxu0 0.0
    %1279 = vmatprep.subr.mxu0 0.0
    %1280 = vmatpush1.msra.mxu0 0.0
    %1281 = vmatprep.subr.mxu0 0.0
    %1282 = vmatpush1.msra.mxu0 0.0
    %1283 = vmatprep.subr.mxu0 0.0
    %1284 = vmatpush1.msra.mxu0 0.0
    %1285 = vmatprep.subr.mxu0 0.0
    %1286 = vmatpush1.msra.mxu0 0.0
    %1287 = vmatprep.subr.mxu0 0.0
    %1288 = vmatpush1.msra.mxu0 0.0
    %1289 = vmatprep.subr.mxu0 0.0
    %1290 = vmatpush1.msra.mxu0 0.0
    %1291 = vmatprep.subr.mxu0 0.0
    %1292 = vmatpush1.msra.mxu0 0.0
    %1293 = vmatprep.subr.mxu0 0.0
    %1294 = vmatpush1.msra.mxu0 0.0
    %1295 = vmatprep.subr.mxu0 0.0
    %1296 = vmatpush1.msra.mxu0 0.0
    %1297 = vmatprep.subr.mxu0 0.0
    %1298 = vmatpush1.msra.mxu0 0.0
    %1299 = vmatprep.mubr.f32.mxu0 0.0
    %1300 = vmatmul.mubr.f32.gmra.mrb[0].mxu0 %v1233
    %v1301 = vpop.f32.mrb[0].mxu0
    %v1302 = vadd.f32 0.0, %v1301
    %v1303 = vpop.f32.mrb[0].mxu0
    %1304 = vdwg.mxu0
    %v1305 = vadd.f32 %v1057, %v1302
    %v1306 = vld [vmem:[%s4 + $0x3] sm:$0x1]
    %v1307 = vlaneseq
    %v1308 = vshrl.u32 %v1307, 7
    %v1309 = vsub.s32 0, %v1308
    %v1310 = vrot.slane %v1306, %v1309
    %v1311 = vadd.f32 %v1305, %v1310
    %v1312 = vadd.f32 %v1311, %v54
    %v1313 = vld [vmem:[%s5] sm:$0x1]
    %v1314 = vld [vmem:[%s6] sm:$0x1]
    %v1315 = vsel %vm80, %v1312, 0.0
    %1316 = vadd.xlane.f32.xlu0 %v1315
    %v1317 = vpop.xlane.xlu0 %1316
    %v1318 = vrcp.pop 32.0
    %v1319 = vmul.f32 %v1317, %v1318
    %v1320 = vsub.f32 %v1312, %v1319
    %v1321 = vmul.f32 %v1320, %v1320
    %v1322 = vsel %vm80, %v1321, 0.0
    %1323 = vadd.xlane.f32.xlu0 %v1322
    %v1324 = vpop.xlane.xlu0 %1323
    %v1325 = vmul.f32 %v1324, %v1318
    %v1326 = vadd.f32 %v1325, 1e-06
    %v1327 = vrsqrt.pop %v1326
    %v1328 = vmul.f32 %v1320, %v1327
    %v1329 = vlaneseq
    %v1330 = vshrl.u32 %v1329, 7
    %v1331 = vsub.s32 0, %v1330
    %v1332 = vrot.slane %v1313, %v1331
    %v1333 = vmul.f32 %v1332, %v1328
    %v1334 = vlaneseq
    %v1335 = vshrl.u32 %v1334, 7
    %v1336 = vsub.s32 0, %v1335
    %v1337 = vrot.slane %v1314, %v1336
    %v1338 = vadd.f32 %v1333, %v1337
    %v1339 = vld [vmem:[%s7] sm:$0xff]
    %v1340 = vld [vmem:[%s7 + $0x8] sm:$0xff]
    %v1341 = vld [vmem:[%s7 + $0x10] sm:$0xff]
    %v1342 = vld [vmem:[%s7 + $0x18] sm:$0xff]
    %v1343 = vld [vmem:[%s8] sm:$0x1]
    %v1345 = vlaneseq
    %v1346 = vshrl.u32 %v1345, 7
    %v1347 = vsub.s32 0, %v1346
    %v1348 = vrot.slane %v1343, %v1347
    %v1351 = vsel %vm80, %v1338, 0
    %1353 = vmatprep.subr.mxu0 0.0
    %1354 = vmatpush1.msra.mxu0 %v1339
    %1355 = vmatprep.subr.mxu0 0.0
    %1356 = vmatpush1.msra.mxu0 %v1340
    %1357 = vmatprep.subr.mxu0 0.0
    %1358 = vmatpush1.msra.mxu0 %v1341
    %1359 = vmatprep.subr.mxu0 0.0
    %1360 = vmatpush1.msra.mxu0 %v1342
    %1361 = vmatprep.subr.mxu0 0.0
    %1362 = vmatpush1.msra.mxu0 0.0
    %1363 = vmatprep.subr.mxu0 0.0
    %1364 = vmatpush1.msra.mxu0 0.0
    %1365 = vmatprep.subr.mxu0 0.0
    %1366 = vmatpush1.msra.mxu0 0.0
    %1367 = vmatprep.subr.mxu0 0.0
    %1368 = vmatpush1.msra.mxu0 0.0
    %1369 = vmatprep.subr.mxu0 0.0
    %1370 = vmatpush1.msra.mxu0 0.0
    %1371 = vmatprep.subr.mxu0 0.0
    %1372 = vmatpush1.msra.mxu0 0.0
    %1373 = vmatprep.subr.mxu0 0.0
    %1374 = vmatpush1.msra.mxu0 0.0
    %1375 = vmatprep.subr.mxu0 0.0
    %1376 = vmatpush1.msra.mxu0 0.0
    %1377 = vmatprep.subr.mxu0 0.0
    %1378 = vmatpush1.msra.mxu0 0.0
    %1379 = vmatprep.subr.mxu0 0.0
    %1380 = vmatpush1.msra.mxu0 0.0
    %1381 = vmatprep.subr.mxu0 0.0
    %1382 = vmatpush1.msra.mxu0 0.0
    %1383 = vmatprep.subr.mxu0 0.0
    %1384 = vmatpush1.msra.mxu0 0.0
    %1385 = vmatprep.subr.mxu0 0.0
    %1386 = vmatpush1.msra.mxu0 0.0
    %1387 = vmatprep.subr.mxu0 0.0
    %1388 = vmatpush1.msra.mxu0 0.0
    %1389 = vmatprep.subr.mxu0 0.0
    %1390 = vmatpush1.msra.mxu0 0.0
    %1391 = vmatprep.subr.mxu0 0.0
    %1392 = vmatpush1.msra.mxu0 0.0
    %1393 = vmatprep.subr.mxu0 0.0
    %1394 = vmatpush1.msra.mxu0 0.0
    %1395 = vmatprep.subr.mxu0 0.0
    %1396 = vmatpush1.msra.mxu0 0.0
    %1397 = vmatprep.subr.mxu0 0.0
    %1398 = vmatpush1.msra.mxu0 0.0
    %1399 = vmatprep.subr.mxu0 0.0
    %1400 = vmatpush1.msra.mxu0 0.0
    %1401 = vmatprep.subr.mxu0 0.0
    %1402 = vmatpush1.msra.mxu0 0.0
    %1403 = vmatprep.subr.mxu0 0.0
    %1404 = vmatpush1.msra.mxu0 0.0
    %1405 = vmatprep.subr.mxu0 0.0
    %1406 = vmatpush1.msra.mxu0 0.0
    %1407 = vmatprep.subr.mxu0 0.0
    %1408 = vmatpush1.msra.mxu0 0.0
    %1409 = vmatprep.subr.mxu0 0.0
    %1410 = vmatpush1.msra.mxu0 0.0
    %1411 = vmatprep.subr.mxu0 0.0
    %1412 = vmatpush1.msra.mxu0 0.0
    %1413 = vmatprep.subr.mxu0 0.0
    %1414 = vmatpush1.msra.mxu0 0.0
    %1415 = vmatprep.subr.mxu0 0.0
    %1416 = vmatpush1.msra.mxu0 0.0
    %1417 = vmatprep.mubr.f32.mxu0 0.0
    %1418 = vmatmul.mubr.f32.gmra.mrb[0].mxu0 %v1351
    %v1419 = vpop.f32.mrb[0].mxu0
    %v1420 = vadd.f32 %v1348, %v1419
    %v1421 = vpop.f32.mrb[0].mxu0
    %1422 = vdwg.mxu0
    %v1423 = vmul.f32 %v1420, 0.5
    %v1424 = vmul.f32 %v1420, 0.044715
    %v1425 = vmul.f32 %v1424, %v1420
    %v1426 = vmul.f32 %v1425, %v1420
    %v1427 = vadd.f32 %v1420, %v1426
    %v1428 = vmul.f32 %v1427, 0.7978846
    %v1429 = vtanh.pop %v1428
    %v1430 = vadd.f32 %v1429, 1.0
    %v1431 = vmul.f32 %v1423, %v1430
    %v1432 = vld [vmem:[%s9] sm:$0xff]
    %v1433 = vld [vmem:[%s9 + $0x8] sm:$0xff]
    %v1434 = vld [vmem:[%s9 + $0x10] sm:$0xff]
    %v1435 = vld [vmem:[%s9 + $0x18] sm:$0xff]
    %v1436 = vld [vmem:[%s9 + $0x20] sm:$0xff]
    %v1437 = vld [vmem:[%s9 + $0x28] sm:$0xff]
    %v1438 = vld [vmem:[%s9 + $0x30] sm:$0xff]
    %v1439 = vld [vmem:[%s9 + $0x38] sm:$0xff]
    %v1440 = vld [vmem:[%s10] sm:$0x1]
    %v1442 = vlaneseq
    %v1443 = vshrl.u32 %v1442, 7
    %v1444 = vsub.s32 0, %v1443
    %v1445 = vrot.slane %v1440, %v1444
    %vm1447 = vcmask 523264
    %v1449 = vsel %vm1447, %v1431, 0
    %1451 = vmatprep.subr.mxu0 0.0
    %1452 = vmatpush1.msra.mxu0 %v1432
    %1453 = vmatprep.subr.mxu0 0.0
    %1454 = vmatpush1.msra.mxu0 %v1433
    %1455 = vmatprep.subr.mxu0 0.0
    %1456 = vmatpush1.msra.mxu0 %v1434
    %1457 = vmatprep.subr.mxu0 0.0
    %1458 = vmatpush1.msra.mxu0 %v1435
    %1459 = vmatprep.subr.mxu0 0.0
    %1460 = vmatpush1.msra.mxu0 %v1436
    %1461 = vmatprep.subr.mxu0 0.0
    %1462 = vmatpush1.msra.mxu0 %v1437
    %1463 = vmatprep.subr.mxu0 0.0
    %1464 = vmatpush1.msra.mxu0 %v1438
    %1465 = vmatprep.subr.mxu0 0.0
    %1466 = vmatpush1.msra.mxu0 %v1439
    %1467 = vmatprep.subr.mxu0 0.0
    %1468 = vmatpush1.msra.mxu0 0.0
    %1469 = vmatprep.subr.mxu0 0.0
    %1470 = vmatpush1.msra.mxu0 0.0
    %1471 = vmatprep.subr.mxu0 0.0
    %1472 = vmatpush1.msra.mxu0 0.0
    %1473 = vmatprep.subr.mxu0 0.0
    %1474 = vmatpush1.msra.mxu0 0.0
    %1475 = vmatprep.subr.mxu0 0.0
    %1476 = vmatpush1.msra.mxu0 0.0
    %1477 = vmatprep.subr.mxu0 0.0
    %1478 = vmatpush1.msra.mxu0 0.0
    %1479 = vmatprep.subr.mxu0 0.0
    %1480 = vmatpush1.msra.mxu0 0.0
    %1481 = vmatprep.subr.mxu0 0.0
    %1482 = vmatpush1.msra.mxu0 0.0
    %1483 = vmatprep.subr.mxu0 0.0
    %1484 = vmatpush1.msra.mxu0 0.0
    %1485 = vmatprep.subr.mxu0 0.0
    %1486 = vmatpush1.msra.mxu0 0.0
    %1487 = vmatprep.subr.mxu0 0.0
    %1488 = vmatpush1.msra.mxu0 0.0
    %1489 = vmatprep.subr.mxu0 0.0
    %1490 = vmatpush1.msra.mxu0 0.0
    %1491 = vmatprep.subr.mxu0 0.0
    %1492 = vmatpush1.msra.mxu0 0.0
    %1493 = vmatprep.subr.mxu0 0.0
    %1494 = vmatpush1.msra.mxu0 0.0
    %1495 = vmatprep.subr.mxu0 0.0
    %1496 = vmatpush1.msra.mxu0 0.0
    %1497 = vmatprep.subr.mxu0 0.0
    %1498 = vmatpush1.msra.mxu0 0.0
    %1499 = vmatprep.subr.mxu0 0.0
    %1500 = vmatpush1.msra.mxu0 0.0
    %1501 = vmatprep.subr.mxu0 0.0
    %1502 = vmatpush1.msra.mxu0 0.0
    %1503 = vmatprep.subr.mxu0 0.0
    %1504 = vmatpush1.msra.mxu0 0.0
    %1505 = vmatprep.subr.mxu0 0.0
    %1506 = vmatpush1.msra.mxu0 0.0
    %1507 = vmatprep.subr.mxu0 0.0
    %1508 = vmatpush1.msra.mxu0 0.0
    %1509 = vmatprep.subr.mxu0 0.0
    %1510 = vmatpush1.msra.mxu0 0.0
    %1511 = vmatprep.subr.mxu0 0.0
    %1512 = vmatpush1.msra.mxu0 0.0
    %1513 = vmatprep.subr.mxu0 0.0
    %1514 = vmatpush1.msra.mxu0 0.0
    %1515 = vmatprep.mubr.f32.mxu0 0.0
    %1516 = vmatmul.mubr.f32.gmra.mrb[0].mxu0 %v1449
    %v1517 = vpop.f32.mrb[0].mxu0
    %v1518 = vadd.f32 %v1445, %v1517
    %v1519 = vpop.f32.mrb[0].mxu0
    %1520 = vdwg.mxu0
    %v1521 = vadd.f32 %v1518, %v1338
    %v1522 = vld [vmem:[%s5 + $0x1] sm:$0x1]
    %v1523 = vld [vmem:[%s6 + $0x1] sm:$0x1]
    %v1524 = vsel %vm80, %v1521, 0.0
    %1525 = vadd.xlane.f32.xlu0 %v1524
    %v1526 = vpop.xlane.xlu0 %1525
    %v1527 = vmul.f32 %v1526, %v1318
    %v1528 = vsub.f32 %v1521, %v1527
    %v1529 = vmul.f32 %v1528, %v1528
    %v1530 = vsel %vm80, %v1529, 0.0
    %1531 = vadd.xlane.f32.xlu0 %v1530
    %v1532 = vpop.xlane.xlu0 %1531
    %v1533 = vmul.f32 %v1532, %v1318
    %v1534 = vadd.f32 %v1533, 1e-06
    %v1535 = vrsqrt.pop %v1534
    %v1536 = vmul.f32 %v1528, %v1535
    %v1537 = vlaneseq
    %v1538 = vshrl.u32 %v1537, 7
    %v1539 = vsub.s32 0, %v1538
    %v1540 = vrot.slane %v1522, %v1539
    %v1541 = vmul.f32 %v1540, %v1536
    %v1542 = vlaneseq
    %v1543 = vshrl.u32 %v1542, 7
    %v1544 = vsub.s32 0, %v1543
    %v1545 = vrot.slane %v1523, %v1544
    %v1546 = vadd.f32 %v1541, %v1545
    %s1547 = scalar_lea.vmem [#allocation2], 128
    %v1548 = vld [vmem:[%s1547] sm:$0xff]
    %v1549 = vld [vmem:[%s1547 + $0x8] sm:$0xff]
    %v1550 = vld [vmem:[%s1547 + $0x10] sm:$0xff]
    %v1551 = vld [vmem:[%s1547 + $0x18] sm:$0xff]
    %s1552 = scalar_lea.vmem [#allocation2], 160
    %v1553 = vld [vmem:[%s1552] sm:$0xff]
    %v1554 = vld [vmem:[%s1552 + $0x8] sm:$0xff]
    %v1555 = vld [vmem:[%s1552 + $0x10] sm:$0xff]
    %v1556 = vld [vmem:[%s1552 + $0x18] sm:$0xff]
    %s1557 = scalar_lea.vmem [#allocation2], 192
    %v1558 = vld [vmem:[%s1557] sm:$0xff]
    %v1559 = vld [vmem:[%s1557 + $0x8] sm:$0xff]
    %v1560 = vld [vmem:[%s1557 + $0x10] sm:$0xff]
    %v1561 = vld [vmem:[%s1557 + $0x18] sm:$0xff]
    %s1562 = scalar_lea.vmem [#allocation2], 224
    %v1563 = vld [vmem:[%s1562] sm:$0xff]
    %v1564 = vld [vmem:[%s1562 + $0x8] sm:$0xff]
    %v1565 = vld [vmem:[%s1562 + $0x10] sm:$0xff]
    %v1566 = vld [vmem:[%s1562 + $0x18] sm:$0xff]
    %s1567 = scalar_lea.vmem %s4, 4
    %v1568 = vld [vmem:[%s1567] sm:$0x1]
    %v1569 = vlaneseq
    %v1570 = vshrl.u32 %v1569, 7
    %v1571 = vsub.s32 0, %v1570
    %v1572 = vrot.slane %v1568, %v1571
    %v1574 = vsel %vm80, %v1546, 0
    %1576 = vmatprep.subr.mxu0 0.0
    %1577 = vmatpush1.msra.mxu0 %v1548
    %1578 = vmatprep.subr.mxu0 0.0
    %1579 = vmatpush1.msra.mxu0 %v1549
    %1580 = vmatprep.subr.mxu0 0.0
    %1581 = vmatpush1.msra.mxu0 %v1550
    %1582 = vmatprep.subr.mxu0 0.0
    %1583 = vmatpush1.msra.mxu0 %v1551
    %1584 = vmatprep.subr.mxu0 0.0
    %1585 = vmatpush1.msra.mxu0 0.0
    %1586 = vmatprep.subr.mxu0 0.0
    %1587 = vmatpush1.msra.mxu0 0.0
    %1588 = vmatprep.subr.mxu0 0.0
    %1589 = vmatpush1.msra.mxu0 0.0
    %1590 = vmatprep.subr.mxu0 0.0
    %1591 = vmatpush1.msra.mxu0 0.0
    %1592 = vmatprep.subr.mxu0 0.0
    %1593 = vmatpush1.msra.mxu0 0.0
    %1594 = vmatprep.subr.mxu0 0.0
    %1595 = vmatpush1.msra.mxu0 0.0
    %1596 = vmatprep.subr.mxu0 0.0
    %1597 = vmatpush1.msra.mxu0 0.0
    %1598 = vmatprep.subr.mxu0 0.0
    %1599 = vmatpush1.msra.mxu0 0.0
    %1600 = vmatprep.subr.mxu0 0.0
    %1601 = vmatpush1.msra.mxu0 0.0
    %1602 = vmatprep.subr.mxu0 0.0
    %1603 = vmatpush1.msra.mxu0 0.0
    %1604 = vmatprep.subr.mxu0 0.0
    %1605 = vmatpush1.msra.mxu0 0.0
    %1606 = vmatprep.subr.mxu0 0.0
    %1607 = vmatpush1.msra.mxu0 0.0
    %1608 = vmatprep.subr.mxu0 0.0
    %1609 = vmatpush1.msra.mxu0 0.0
    %1610 = vmatprep.subr.mxu0 0.0
    %1611 = vmatpush1.msra.mxu0 0.0
    %1612 = vmatprep.subr.mxu0 0.0
    %1613 = vmatpush1.msra.mxu0 0.0
    %1614 = vmatprep.subr.mxu0 0.0
    %1615 = vmatpush1.msra.mxu0 0.0
    %1616 = vmatprep.subr.mxu0 0.0
    %1617 = vmatpush1.msra.mxu0 0.0
    %1618 = vmatprep.subr.mxu0 0.0
    %1619 = vmatpush1.msra.mxu0 0.0
    %1620 = vmatprep.subr.mxu0 0.0
    %1621 = vmatpush1.msra.mxu0 0.0
    %1622 = vmatprep.subr.mxu0 0.0
    %1623 = vmatpush1.msra.mxu0 0.0
    %1624 = vmatprep.subr.mxu0 0.0
    %1625 = vmatpush1.msra.mxu0 0.0
    %1626 = vmatprep.subr.mxu0 0.0
    %1627 = vmatpush1.msra.mxu0 0.0
    %1628 = vmatprep.subr.mxu0 0.0
    %1629 = vmatpush1.msra.mxu0 0.0
    %1630 = vmatprep.subr.mxu0 0.0
    %1631 = vmatpush1.msra.mxu0 0.0
    %1632 = vmatprep.subr.mxu0 0.0
    %1633 = vmatpush1.msra.mxu0 0.0
    %1634 = vmatprep.subr.mxu0 0.0
    %1635 = vmatpush1.msra.mxu0 0.0
    %1636 = vmatprep.subr.mxu0 0.0
    %1637 = vmatpush1.msra.mxu0 0.0
    %1638 = vmatprep.subr.mxu0 0.0
    %1639 = vmatpush1.msra.mxu0 0.0
    %1640 = vmatprep.mubr.f32.mxu0 0.0
    %1641 = vmatmul.mubr.f32.gmra.mrb[0].mxu0 %v1574
    %v1642 = vpop.f32.mrb[0].mxu0
    %v1643 = vadd.f32 %v1572, %v1642
    %v1644 = vpop.f32.mrb[0].mxu0
    %1645 = vdwg.mxu0
    %v1646 = vld [vmem:[%s1567 + $0x1] sm:$0x1]
    %v1647 = vlaneseq
    %v1648 = vshrl.u32 %v1647, 7
    %v1649 = vsub.s32 0, %v1648
    %v1650 = vrot.slane %v1646, %v1649
    %1651 = vmatprep.subr.mxu0 0.0
    %1652 = vmatpush1.msra.mxu0 %v1553
    %1653 = vmatprep.subr.mxu0 0.0
    %1654 = vmatpush1.msra.mxu0 %v1554
    %1655 = vmatprep.subr.mxu0 0.0
    %1656 = vmatpush1.msra.mxu0 %v1555
    %1657 = vmatprep.subr.mxu0 0.0
    %1658 = vmatpush1.msra.mxu0 %v1556
    %1659 = vmatprep.subr.mxu0 0.0
    %1660 = vmatpush1.msra.mxu0 0.0
    %1661 = vmatprep.subr.mxu0 0.0
    %1662 = vmatpush1.msra.mxu0 0.0
    %1663 = vmatprep.subr.mxu0 0.0
    %1664 = vmatpush1.msra.mxu0 0.0
    %1665 = vmatprep.subr.mxu0 0.0
    %1666 = vmatpush1.msra.mxu0 0.0
    %1667 = vmatprep.subr.mxu0 0.0
    %1668 = vmatpush1.msra.mxu0 0.0
    %1669 = vmatprep.subr.mxu0 0.0
    %1670 = vmatpush1.msra.mxu0 0.0
    %1671 = vmatprep.subr.mxu0 0.0
    %1672 = vmatpush1.msra.mxu0 0.0
    %1673 = vmatprep.subr.mxu0 0.0
    %1674 = vmatpush1.msra.mxu0 0.0
    %1675 = vmatprep.subr.mxu0 0.0
    %1676 = vmatpush1.msra.mxu0 0.0
    %1677 = vmatprep.subr.mxu0 0.0
    %1678 = vmatpush1.msra.mxu0 0.0
    %1679 = vmatprep.subr.mxu0 0.0
    %1680 = vmatpush1.msra.mxu0 0.0
    %1681 = vmatprep.subr.mxu0 0.0
    %1682 = vmatpush1.msra.mxu0 0.0
    %1683 = vmatprep.subr.mxu0 0.0
    %1684 = vmatpush1.msra.mxu0 0.0
    %1685 = vmatprep.subr.mxu0 0.0
    %1686 = vmatpush1.msra.mxu0 0.0
    %1687 = vmatprep.subr.mxu0 0.0
    %1688 = vmatpush1.msra.mxu0 0.0
    %1689 = vmatprep.subr.mxu0 0.0
    %1690 = vmatpush1.msra.mxu0 0.0
    %1691 = vmatprep.subr.mxu0 0.0
    %1692 = vmatpush1.msra.mxu0 0.0
    %1693 = vmatprep.subr.mxu0 0.0
    %1694 = vmatpush1.msra.mxu0 0.0
    %1695 = vmatprep.subr.mxu0 0.0
    %1696 = vmatpush1.msra.mxu0 0.0
    %1697 = vmatprep.subr.mxu0 0.0
    %1698 = vmatpush1.msra.mxu0 0.0
    %1699 = vmatprep.subr.mxu0 0.0
    %1700 = vmatpush1.msra.mxu0 0.0
    %1701 = vmatprep.subr.mxu0 0.0
    %1702 = vmatpush1.msra.mxu0 0.0
    %1703 = vmatprep.subr.mxu0 0.0
    %1704 = vmatpush1.msra.mxu0 0.0
    %1705 = vmatprep.subr.mxu0 0.0
    %1706 = vmatpush1.msra.mxu0 0.0
    %1707 = vmatprep.subr.mxu0 0.0
    %1708 = vmatpush1.msra.mxu0 0.0
    %1709 = vmatprep.subr.mxu0 0.0
    %1710 = vmatpush1.msra.mxu0 0.0
    %1711 = vmatprep.subr.mxu0 0.0
    %1712 = vmatpush1.msra.mxu0 0.0
    %1713 = vmatprep.subr.mxu0 0.0
    %1714 = vmatpush1.msra.mxu0 0.0
    %1715 = vmatprep.mubr.f32.mxu0 0.0
    %1716 = vmatmul.mubr.f32.gmra.mrb[0].mxu0 %v160
    %v1717 = vpop.f32.mrb[0].mxu0
    %v1718 = vadd.f32 %v1650, %v1717
    %v1719 = vpop.f32.mrb[0].mxu0
    %1720 = vmatprep.mubr.f32.mxu0 0.0
    %1721 = vmatmul.mubr.f32.gmra.mrb[0].mxu0 %v1574
    %v1722 = vpop.f32.mrb[0].mxu0
    %v1723 = vadd.f32 %v1650, %v1722
    %v1724 = vpop.f32.mrb[0].mxu0
    %1725 = vdwg.mxu0
    %v1726 = vld [vmem:[%s1567 + $0x2] sm:$0x1]
    %v1727 = vlaneseq
    %v1728 = vshrl.u32 %v1727, 7
    %v1729 = vsub.s32 0, %v1728
    %v1730 = vrot.slane %v1726, %v1729
    %1731 = vmatprep.subr.mxu0 0.0
    %1732 = vmatpush1.msra.mxu0 %v1558
    %1733 = vmatprep.subr.mxu0 0.0
    %1734 = vmatpush1.msra.mxu0 %v1559
    %1735 = vmatprep.subr.mxu0 0.0
    %1736 = vmatpush1.msra.mxu0 %v1560
    %1737 = vmatprep.subr.mxu0 0.0
    %1738 = vmatpush1.msra.mxu0 %v1561
    %1739 = vmatprep.subr.mxu0 0.0
    %1740 = vmatpush1.msra.mxu0 0.0
    %1741 = vmatprep.subr.mxu0 0.0
    %1742 = vmatpush1.msra.mxu0 0.0
    %1743 = vmatprep.subr.mxu0 0.0
    %1744 = vmatpush1.msra.mxu0 0.0
    %1745 = vmatprep.subr.mxu0 0.0
    %1746 = vmatpush1.msra.mxu0 0.0
    %1747 = vmatprep.subr.mxu0 0.0
    %1748 = vmatpush1.msra.mxu0 0.0
    %1749 = vmatprep.subr.mxu0 0.0
    %1750 = vmatpush1.msra.mxu0 0.0
    %1751 = vmatprep.subr.mxu0 0.0
    %1752 = vmatpush1.msra.mxu0 0.0
    %1753 = vmatprep.subr.mxu0 0.0
    %1754 = vmatpush1.msra.mxu0 0.0
    %1755 = vmatprep.subr.mxu0 0.0
    %1756 = vmatpush1.msra.mxu0 0.0
    %1757 = vmatprep.subr.mxu0 0.0
    %1758 = vmatpush1.msra.mxu0 0.0
    %1759 = vmatprep.subr.mxu0 0.0
    %1760 = vmatpush1.msra.mxu0 0.0
    %1761 = vmatprep.subr.mxu0 0.0
    %1762 = vmatpush1.msra.mxu0 0.0
    %1763 = vmatprep.subr.mxu0 0.0
    %1764 = vmatpush1.msra.mxu0 0.0
    %1765 = vmatprep.subr.mxu0 0.0
    %1766 = vmatpush1.msra.mxu0 0.0
    %1767 = vmatprep.subr.mxu0 0.0
    %1768 = vmatpush1.msra.mxu0 0.0
    %1769 = vmatprep.subr.mxu0 0.0
    %1770 = vmatpush1.msra.mxu0 0.0
    %1771 = vmatprep.subr.mxu0 0.0
    %1772 = vmatpush1.msra.mxu0 0.0
    %1773 = vmatprep.subr.mxu0 0.0
    %1774 = vmatpush1.msra.mxu0 0.0
    %1775 = vmatprep.subr.mxu0 0.0
    %1776 = vmatpush1.msra.mxu0 0.0
    %1777 = vmatprep.subr.mxu0 0.0
    %1778 = vmatpush1.msra.mxu0 0.0
    %1779 = vmatprep.subr.mxu0 0.0
    %1780 = vmatpush1.msra.mxu0 0.0
    %1781 = vmatprep.subr.mxu0 0.0
    %1782 = vmatpush1.msra.mxu0 0.0
    %1783 = vmatprep.subr.mxu0 0.0
    %1784 = vmatpush1.msra.mxu0 0.0
    %1785 = vmatprep.subr.mxu0 0.0
    %1786 = vmatpush1.msra.mxu0 0.0
    %1787 = vmatprep.subr.mxu0 0.0
    %1788 = vmatpush1.msra.mxu0 0.0
    %1789 = vmatprep.subr.mxu0 0.0
    %1790 = vmatpush1.msra.mxu0 0.0
    %1791 = vmatprep.subr.mxu0 0.0
    %1792 = vmatpush1.msra.mxu0 0.0
    %1793 = vmatprep.subr.mxu0 0.0
    %1794 = vmatpush1.msra.mxu0 0.0
    %1795 = vmatprep.mubr.f32.mxu0 0.0
    %1796 = vmatmul.mubr.f32.gmra.mrb[0].mxu0 %v160
    %v1797 = vpop.f32.mrb[0].mxu0
    %v1798 = vadd.f32 %v1730, %v1797
    %v1799 = vpop.f32.mrb[0].mxu0
    %1800 = vmatprep.mubr.f32.mxu0 0.0
    %1801 = vmatmul.mubr.f32.gmra.mrb[0].mxu0 %v1574
    %v1802 = vpop.f32.mrb[0].mxu0
    %v1803 = vadd.f32 %v1730, %v1802
    %v1804 = vpop.f32.mrb[0].mxu0
    %1805 = vdwg.mxu0
    %v1807 = vsel %vm317, %v1643, 0
    %v1810 = vsel %vm317, %v1718, 0
    %v1813 = vsel %vm317, %v1723, 0
    %1815 = vmatprep.subr.mxu0 0.0
    %1816 = vmatpush1.xpose.msra.mxu0 %v1810
    %1817 = vmatprep.subr.mxu0 0.0
    %1818 = vmatpush1.xpose.msra.mxu0 %v1813
    %1819 = vmatprep.subr.mxu0 0.0
    %1820 = vmatpush1.xpose.msra.mxu0 0.0
    %1821 = vmatprep.subr.mxu0 0.0
    %1822 = vmatpush1.xpose.msra.mxu0 0.0
    %1823 = vmatprep.subr.mxu0 0.0
    %1824 = vmatpush1.xpose.msra.mxu0 0.0
    %1825 = vmatprep.subr.mxu0 0.0
    %1826 = vmatpush1.xpose.msra.mxu0 0.0
    %1827 = vmatprep.subr.mxu0 0.0
    %1828 = vmatpush1.xpose.msra.mxu0 0.0
    %1829 = vmatprep.subr.mxu0 0.0
    %1830 = vmatpush1.xpose.msra.mxu0 0.0
    %1831 = vmatprep.subr.mxu0 0.0
    %1832 = vmatpush1.xpose.msra.mxu0 0.0
    %1833 = vmatprep.subr.mxu0 0.0
    %1834 = vmatpush1.xpose.msra.mxu0 0.0
    %1835 = vmatprep.subr.mxu0 0.0
    %1836 = vmatpush1.xpose.msra.mxu0 0.0
    %1837 = vmatprep.subr.mxu0 0.0
    %1838 = vmatpush1.xpose.msra.mxu0 0.0
    %1839 = vmatprep.subr.mxu0 0.0
    %1840 = vmatpush1.xpose.msra.mxu0 0.0
    %1841 = vmatprep.subr.mxu0 0.0
    %1842 = vmatpush1.xpose.msra.mxu0 0.0
    %1843 = vmatprep.subr.mxu0 0.0
    %1844 = vmatpush1.xpose.msra.mxu0 0.0
    %1845 = vmatprep.subr.mxu0 0.0
    %1846 = vmatpush1.xpose.msra.mxu0 0.0
    %1847 = vmatprep.subr.mxu0 0.0
    %1848 = vmatpush1.xpose.msra.mxu0 0.0
    %1849 = vmatprep.subr.mxu0 0.0
    %1850 = vmatpush1.xpose.msra.mxu0 0.0
    %1851 = vmatprep.subr.mxu0 0.0
    %1852 = vmatpush1.xpose.msra.mxu0 0.0
    %1853 = vmatprep.subr.mxu0 0.0
    %1854 = vmatpush1.xpose.msra.mxu0 0.0
    %1855 = vmatprep.subr.mxu0 0.0
    %1856 = vmatpush1.xpose.msra.mxu0 0.0
    %1857 = vmatprep.subr.mxu0 0.0
    %1858 = vmatpush1.xpose.msra.mxu0 0.0
    %1859 = vmatprep.subr.mxu0 0.0
    %1860 = vmatpush1.xpose.msra.mxu0 0.0
    %1861 = vmatprep.subr.mxu0 0.0
    %1862 = vmatpush1.xpose.msra.mxu0 0.0
    %1863 = vmatprep.subr.mxu0 0.0
    %1864 = vmatpush1.xpose.msra.mxu0 0.0
    %1865 = vmatprep.subr.mxu0 0.0
    %1866 = vmatpush1.xpose.msra.mxu0 0.0
    %1867 = vmatprep.subr.mxu0 0.0
    %1868 = vmatpush1.xpose.msra.mxu0 0.0
    %1869 = vmatprep.subr.mxu0 0.0
    %1870 = vmatpush1.xpose.msra.mxu0 0.0
    %1871 = vmatprep.subr.mxu0 0.0
    %1872 = vmatpush1.xpose.msra.mxu0 0.0
    %1873 = vmatprep.subr.mxu0 0.0
    %1874 = vmatpush1.xpose.msra.mxu0 0.0
    %1875 = vmatprep.subr.mxu0 0.0
    %1876 = vmatpush1.xpose.msra.mxu0 0.0
    %1877 = vmatprep.subr.mxu0 0.0
    %1878 = vmatpush1.xpose.msra.mxu0 0.0
    %1879 = vmatprep.mubr.f32.mxu0 0.0
    %1880 = vmatmul.mubr.f32.gmra.mrb[0].mxu0 %v1807
    %v1881 = vpop.f32.mrb[0].mxu0
    %v1882 = vadd.f32 0.0, %v1881
    %v1883 = vpop.f32.mrb[0].mxu0
    %1884 = vdwg.mxu0
    %v1885 = vmul.f32 %v1882, 0.35355338
    %v1886 = vadd.f32 %v1885, %v401
    %v1887 = vsel %vm403, %v1886, -inf
    %1888 = vmax.xlane.f32.xlu0 %v1887
    %v1889 = vpop.xlane.xlu0 %1888
    %v1890 = vsub.f32 %v1886, %v1889
    %v1891 = vmul.f32 %v1890, 1.442695
    %v1892 = vpow.pop %v1891
    %v1893 = vsel %vm403, %v1892, 0.0
    %1894 = vadd.xlane.f32.xlu0 %v1893
    %v1895 = vpop.xlane.xlu0 %1894
    %v1896 = vrcp.pop %v1895
    %v1897 = vmul.f32 %v1892, %v1896
    %v1899 = vsel %vm403, %v1897, 0
    %1901 = vmatprep.subr.mxu0 0.0
    %1902 = vmatpush1.msra.mxu0 %v1798
    %1903 = vmatprep.subr.mxu0 0.0
    %1904 = vmatpush1.msra.mxu0 %v1803
    %1905 = vmatprep.subr.mxu0 0.0
    %1906 = vmatpush1.msra.mxu0 0.0
    %1907 = vmatprep.subr.mxu0 0.0
    %1908 = vmatpush1.msra.mxu0 0.0
    %1909 = vmatprep.subr.mxu0 0.0
    %1910 = vmatpush1.msra.mxu0 0.0
    %1911 = vmatprep.subr.mxu0 0.0
    %1912 = vmatpush1.msra.mxu0 0.0
    %1913 = vmatprep.subr.mxu0 0.0
    %1914 = vmatpush1.msra.mxu0 0.0
    %1915 = vmatprep.subr.mxu0 0.0
    %1916 = vmatpush1.msra.mxu0 0.0
    %1917 = vmatprep.subr.mxu0 0.0
    %1918 = vmatpush1.msra.mxu0 0.0
    %1919 = vmatprep.subr.mxu0 0.0
    %1920 = vmatpush1.msra.mxu0 0.0
    %1921 = vmatprep.subr.mxu0 0.0
    %1922 = vmatpush1.msra.mxu0 0.0
    %1923 = vmatprep.subr.mxu0 0.0
    %1924 = vmatpush1.msra.mxu0 0.0
    %1925 = vmatprep.subr.mxu0 0.0
    %1926 = vmatpush1.msra.mxu0 0.0
    %1927 = vmatprep.subr.mxu0 0.0
    %1928 = vmatpush1.msra.mxu0 0.0
    %1929 = vmatprep.subr.mxu0 0.0
    %1930 = vmatpush1.msra.mxu0 0.0
    %1931 = vmatprep.subr.mxu0 0.0
    %1932 = vmatpush1.msra.mxu0 0.0
    %1933 = vmatprep.subr.mxu0 0.0
    %1934 = vmatpush1.msra.mxu0 0.0
    %1935 = vmatprep.subr.mxu0 0.0
    %1936 = vmatpush1.msra.mxu0 0.0
    %1937 = vmatprep.subr.mxu0 0.0
    %1938 = vmatpush1.msra.mxu0 0.0
    %1939 = vmatprep.subr.mxu0 0.0
    %1940 = vmatpush1.msra.mxu0 0.0
    %1941 = vmatprep.subr.mxu0 0.0
    %1942 = vmatpush1.msra.mxu0 0.0
    %1943 = vmatprep.subr.mxu0 0.0
    %1944 = vmatpush1.msra.mxu0 0.0
    %1945 = vmatprep.subr.mxu0 0.0
    %1946 = vmatpush1.msra.mxu0 0.0
    %1947 = vmatprep.subr.mxu0 0.0
    %1948 = vmatpush1.msra.mxu0 0.0
    %1949 = vmatprep.subr.mxu0 0.0
    %1950 = vmatpush1.msra.mxu0 0.0
    %1951 = vmatprep.subr.mxu0 0.0
    %1952 = vmatpush1.msra.mxu0 0.0
    %1953 = vmatprep.subr.mxu0 0.0
    %1954 = vmatpush1.msra.mxu0 0.0
    %1955 = vmatprep.subr.mxu0 0.0
    %1956 = vmatpush1.msra.mxu0 0.0
    %1957 = vmatprep.subr.mxu0 0.0
    %1958 = vmatpush1.msra.mxu0 0.0
    %1959 = vmatprep.subr.mxu0 0.0
    %1960 = vmatpush1.msra.mxu0 0.0
    %1961 = vmatprep.subr.mxu0 0.0
    %1962 = vmatpush1.msra.mxu0 0.0
    %1963 = vmatprep.subr.mxu0 0.0
    %1964 = vmatpush1.msra.mxu0 0.0
    %1965 = vmatprep.mubr.f32.mxu0 0.0
    %1966 = vmatmul.mubr.f32.gmra.mrb[0].mxu0 %v1899
    %v1967 = vpop.f32.mrb[0].mxu0
    %v1968 = vadd.f32 0.0, %v1967
    %v1969 = vpop.f32.mrb[0].mxu0
    %1970 = vdwg.mxu0
    %1971 = vrot.lane.b32.xlu0 %v1643, 120
    %v1972 = vpop.permute.xlu0 %1971
    %1973 = vrot.lane.b32.xlu0 %v1718, 120
    %v1974 = vpop.permute.xlu0 %1973
    %1975 = vrot.lane.b32.xlu0 %v1723, 120
    %v1976 = vpop.permute.xlu0 %1975
    %v1977 = vsel %vm317, %v1972, 0
    %v1979 = vsel %vm317, %v1974, 0
    %v1981 = vsel %vm317, %v1976, 0
    %1983 = vmatprep.subr.mxu0 0.0
    %1984 = vmatpush1.xpose.msra.mxu0 %v1979
    %1985 = vmatprep.subr.mxu0 0.0
    %1986 = vmatpush1.xpose.msra.mxu0 %v1981
    %1987 = vmatprep.subr.mxu0 0.0
    %1988 = vmatpush1.xpose.msra.mxu0 0.0
    %1989 = vmatprep.subr.mxu0 0.0
    %1990 = vmatpush1.xpose.msra.mxu0 0.0
    %1991 = vmatprep.subr.mxu0 0.0
    %1992 = vmatpush1.xpose.msra.mxu0 0.0
    %1993 = vmatprep.subr.mxu0 0.0
    %1994 = vmatpush1.xpose.msra.mxu0 0.0
    %1995 = vmatprep.subr.mxu0 0.0
    %1996 = vmatpush1.xpose.msra.mxu0 0.0
    %1997 = vmatprep.subr.mxu0 0.0
    %1998 = vmatpush1.xpose.msra.mxu0 0.0
    %1999 = vmatprep.subr.mxu0 0.0
    %2000 = vmatpush1.xpose.msra.mxu0 0.0
    %2001 = vmatprep.subr.mxu0 0.0
    %2002 = vmatpush1.xpose.msra.mxu0 0.0
    %2003 = vmatprep.subr.mxu0 0.0
    %2004 = vmatpush1.xpose.msra.mxu0 0.0
    %2005 = vmatprep.subr.mxu0 0.0
    %2006 = vmatpush1.xpose.msra.mxu0 0.0
    %2007 = vmatprep.subr.mxu0 0.0
    %2008 = vmatpush1.xpose.msra.mxu0 0.0
    %2009 = vmatprep.subr.mxu0 0.0
    %2010 = vmatpush1.xpose.msra.mxu0 0.0
    %2011 = vmatprep.subr.mxu0 0.0
    %2012 = vmatpush1.xpose.msra.mxu0 0.0
    %2013 = vmatprep.subr.mxu0 0.0
    %2014 = vmatpush1.xpose.msra.mxu0 0.0
    %2015 = vmatprep.subr.mxu0 0.0
    %2016 = vmatpush1.xpose.msra.mxu0 0.0
    %2017 = vmatprep.subr.mxu0 0.0
    %2018 = vmatpush1.xpose.msra.mxu0 0.0
    %2019 = vmatprep.subr.mxu0 0.0
    %2020 = vmatpush1.xpose.msra.mxu0 0.0
    %2021 = vmatprep.subr.mxu0 0.0
    %2022 = vmatpush1.xpose.msra.mxu0 0.0
    %2023 = vmatprep.subr.mxu0 0.0
    %2024 = vmatpush1.xpose.msra.mxu0 0.0
    %2025 = vmatprep.subr.mxu0 0.0
    %2026 = vmatpush1.xpose.msra.mxu0 0.0
    %2027 = vmatprep.subr.mxu0 0.0
    %2028 = vmatpush1.xpose.msra.mxu0 0.0
    %2029 = vmatprep.subr.mxu0 0.0
    %2030 = vmatpush1.xpose.msra.mxu0 0.0
    %2031 = vmatprep.subr.mxu0 0.0
    %2032 = vmatpush1.xpose.msra.mxu0 0.0
    %2033 = vmatprep.subr.mxu0 0.0
    %2034 = vmatpush1.xpose.msra.mxu0 0.0
    %2035 = vmatprep.subr.mxu0 0.0
    %2036 = vmatpush1.xpose.msra.mxu0 0.0
    %2037 = vmatprep.subr.mxu0 0.0
    %2038 = vmatpush1.xpose.msra.mxu0 0.0
    %2039 = vmatprep.subr.mxu0 0.0
    %2040 = vmatpush1.xpose.msra.mxu0 0.0
    %2041 = vmatprep.subr.mxu0 0.0
    %2042 = vmatpush1.xpose.msra.mxu0 0.0
    %2043 = vmatprep.subr.mxu0 0.0
    %2044 = vmatpush1.xpose.msra.mxu0 0.0
    %2045 = vmatprep.subr.mxu0 0.0
    %2046 = vmatpush1.xpose.msra.mxu0 0.0
    %2047 = vmatprep.mubr.f32.mxu0 0.0
    %2048 = vmatmul.mubr.f32.gmra.mrb[0].mxu0 %v1977
    %v2049 = vpop.f32.mrb[0].mxu0
    %v2050 = vadd.f32 0.0, %v2049
    %v2051 = vpop.f32.mrb[0].mxu0
    %2052 = vdwg.mxu0
    %v2053 = vmul.f32 %v2050, 0.35355338
    %v2054 = vadd.f32 %v2053, %v401
    %v2055 = vsel %vm403, %v2054, -inf
    %2056 = vmax.xlane.f32.xlu0 %v2055
    %v2057 = vpop.xlane.xlu0 %2056
    %v2058 = vsub.f32 %v2054, %v2057
    %v2059 = vmul.f32 %v2058, 1.442695
    %v2060 = vpow.pop %v2059
    %v2061 = vsel %vm403, %v2060, 0.0
    %2062 = vadd.xlane.f32.xlu0 %v2061
    %v2063 = vpop.xlane.xlu0 %2062
    %v2064 = vrcp.pop %v2063
    %v2065 = vmul.f32 %v2060, %v2064
    %2068 = vrot.lane.b32.xlu0 %v1798, 120
    %v2069 = vpop.permute.xlu0 %2068
    %2070 = vrot.lane.b32.xlu0 %v1803, 120
    %v2071 = vpop.permute.xlu0 %2070
    %v2075 = vsel %vm403, %v2065, 0
    %2077 = vmatprep.subr.mxu0 0.0
    %2078 = vmatpush1.msra.mxu0 %v2069
    %2079 = vmatprep.subr.mxu0 0.0
    %2080 = vmatpush1.msra.mxu0 %v2071
    %2081 = vmatprep.subr.mxu0 0.0
    %2082 = vmatpush1.msra.mxu0 0.0
    %2083 = vmatprep.subr.mxu0 0.0
    %2084 = vmatpush1.msra.mxu0 0.0
    %2085 = vmatprep.subr.mxu0 0.0
    %2086 = vmatpush1.msra.mxu0 0.0
    %2087 = vmatprep.subr.mxu0 0.0
    %2088 = vmatpush1.msra.mxu0 0.0
    %2089 = vmatprep.subr.mxu0 0.0
    %2090 = vmatpush1.msra.mxu0 0.0
    %2091 = vmatprep.subr.mxu0 0.0
    %2092 = vmatpush1.msra.mxu0 0.0
    %2093 = vmatprep.subr.mxu0 0.0
    %2094 = vmatpush1.msra.mxu0 0.0
    %2095 = vmatprep.subr.mxu0 0.0
    %2096 = vmatpush1.msra.mxu0 0.0
    %2097 = vmatprep.subr.mxu0 0.0
    %2098 = vmatpush1.msra.mxu0 0.0
    %2099 = vmatprep.subr.mxu0 0.0
    %2100 = vmatpush1.msra.mxu0 0.0
    %2101 = vmatprep.subr.mxu0 0.0
    %2102 = vmatpush1.msra.mxu0 0.0
    %2103 = vmatprep.subr.mxu0 0.0
    %2104 = vmatpush1.msra.mxu0 0.0
    %2105 = vmatprep.subr.mxu0 0.0
    %2106 = vmatpush1.msra.mxu0 0.0
    %2107 = vmatprep.subr.mxu0 0.0
    %2108 = vmatpush1.msra.mxu0 0.0
    %2109 = vmatprep.subr.mxu0 0.0
    %2110 = vmatpush1.msra.mxu0 0.0
    %2111 = vmatprep.subr.mxu0 0.0
    %2112 = vmatpush1.msra.mxu0 0.0
    %2113 = vmatprep.subr.mxu0 0.0
    %2114 = vmatpush1.msra.mxu0 0.0
    %2115 = vmatprep.subr.mxu0 0.0
    %2116 = vmatpush1.msra.mxu0 0.0
    %2117 = vmatprep.subr.mxu0 0.0
    %2118 = vmatpush1.msra.mxu0 0.0
    %2119 = vmatprep.subr.mxu0 0.0
    %2120 = vmatpush1.msra.mxu0 0.0
    %2121 = vmatprep.subr.mxu0 0.0
    %2122 = vmatpush1.msra.mxu0 0.0
    %2123 = vmatprep.subr.mxu0 0.0
    %2124 = vmatpush1.msra.mxu0 0.0
    %2125 = vmatprep.subr.mxu0 0.0
    %2126 = vmatpush1.msra.mxu0 0.0
    %2127 = vmatprep.subr.mxu0 0.0
    %2128 = vmatpush1.msra.mxu0 0.0
    %2129 = vmatprep.subr.mxu0 0.0
    %2130 = vmatpush1.msra.mxu0 0.0
    %2131 = vmatprep.subr.mxu0 0.0
    %2132 = vmatpush1.msra.mxu0 0.0
    %2133 = vmatprep.subr.mxu0 0.0
    %2134 = vmatpush1.msra.mxu0 0.0
    %2135 = vmatprep.subr.mxu0 0.0
    %2136 = vmatpush1.msra.mxu0 0.0
    %2137 = vmatprep.subr.mxu0 0.0
    %2138 = vmatpush1.msra.mxu0 0.0
    %2139 = vmatprep.subr.mxu0 0.0
    %2140 = vmatpush1.msra.mxu0 0.0
    %2141 = vmatprep.mubr.f32.mxu0 0.0
    %2142 = vmatmul.mubr.f32.gmra.mrb[0].mxu0 %v2075
    %v2143 = vpop.f32.mrb[0].mxu0
    %v2144 = vadd.f32 0.0, %v2143
    %v2145 = vpop.f32.mrb[0].mxu0
    %2146 = vdwg.mxu0
    %v2148 = vsel %vm317, %v2144, 0
    %2150 = vmatprep.subr.mxu0 0.0
    %2151 = vmatpush1.msra.mxu0 %v1564
    %2152 = vmatprep.subr.mxu0 0.0
    %2153 = vmatpush1.msra.mxu0 0.0
    %2154 = vmatprep.subr.mxu0 0.0
    %2155 = vmatpush1.msra.mxu0 0.0
    %2156 = vmatprep.subr.mxu0 0.0
    %2157 = vmatpush1.msra.mxu0 0.0
    %2158 = vmatprep.subr.mxu0 0.0
    %2159 = vmatpush1.msra.mxu0 0.0
    %2160 = vmatprep.subr.mxu0 0.0
    %2161 = vmatpush1.msra.mxu0 0.0
    %2162 = vmatprep.subr.mxu0 0.0
    %2163 = vmatpush1.msra.mxu0 0.0
    %2164 = vmatprep.subr.mxu0 0.0
    %2165 = vmatpush1.msra.mxu0 0.0
    %2166 = vmatprep.subr.mxu0 0.0
    %2167 = vmatpush1.msra.mxu0 0.0
    %2168 = vmatprep.subr.mxu0 0.0
    %2169 = vmatpush1.msra.mxu0 0.0
    %2170 = vmatprep.subr.mxu0 0.0
    %2171 = vmatpush1.msra.mxu0 0.0
    %2172 = vmatprep.subr.mxu0 0.0
    %2173 = vmatpush1.msra.mxu0 0.0
    %2174 = vmatprep.subr.mxu0 0.0
    %2175 = vmatpush1.msra.mxu0 0.0
    %2176 = vmatprep.subr.mxu0 0.0
    %2177 = vmatpush1.msra.mxu0 0.0
    %2178 = vmatprep.subr.mxu0 0.0
    %2179 = vmatpush1.msra.mxu0 0.0
    %2180 = vmatprep.subr.mxu0 0.0
    %2181 = vmatpush1.msra.mxu0 0.0
    %2182 = vmatprep.subr.mxu0 0.0
    %2183 = vmatpush1.msra.mxu0 0.0
    %2184 = vmatprep.subr.mxu0 0.0
    %2185 = vmatpush1.msra.mxu0 0.0
    %2186 = vmatprep.subr.mxu0 0.0
    %2187 = vmatpush1.msra.mxu0 0.0
    %2188 = vmatprep.subr.mxu0 0.0
    %2189 = vmatpush1.msra.mxu0 0.0
    %2190 = vmatprep.subr.mxu0 0.0
    %2191 = vmatpush1.msra.mxu0 0.0
    %2192 = vmatprep.subr.mxu0 0.0
    %2193 = vmatpush1.msra.mxu0 0.0
    %2194 = vmatprep.subr.mxu0 0.0
    %2195 = vmatpush1.msra.mxu0 0.0
    %2196 = vmatprep.subr.mxu0 0.0
    %2197 = vmatpush1.msra.mxu0 0.0
    %2198 = vmatprep.subr.mxu0 0.0
    %2199 = vmatpush1.msra.mxu0 0.0
    %2200 = vmatprep.subr.mxu0 0.0
    %2201 = vmatpush1.msra.mxu0 0.0
    %2202 = vmatprep.subr.mxu0 0.0
    %2203 = vmatpush1.msra.mxu0 0.0
    %2204 = vmatprep.subr.mxu0 0.0
    %2205 = vmatpush1.msra.mxu0 0.0
    %2206 = vmatprep.subr.mxu0 0.0
    %2207 = vmatpush1.msra.mxu0 0.0
    %2208 = vmatprep.subr.mxu0 0.0
    %2209 = vmatpush1.msra.mxu0 0.0
    %2210 = vmatprep.subr.mxu0 0.0
    %2211 = vmatpush1.msra.mxu0 0.0
    %2212 = vmatprep.subr.mxu0 0.0
    %2213 = vmatpush1.msra.mxu0 0.0
    %2214 = vmatprep.mubr.f32.mxu0 0.0
    %2215 = vmatmul.mubr.f32.gmra.mrb[0].mxu0 %v2148
    %v2216 = vpop.f32.mrb[0].mxu0
    %v2217 = vadd.f32 0.0, %v2216
    %v2218 = vpop.f32.mrb[0].mxu0
    %2219 = vdwg.mxu0
    %v2221 = vsel %vm317, %v1968, 0
    %2223 = vmatprep.subr.mxu0 0.0
    %2224 = vmatpush1.msra.mxu0 %v1563
    %2225 = vmatprep.subr.mxu0 0.0
    %2226 = vmatpush1.msra.mxu0 0.0
    %2227 = vmatprep.subr.mxu0 0.0
    %2228 = vmatpush1.msra.mxu0 0.0
    %2229 = vmatprep.subr.mxu0 0.0
    %2230 = vmatpush1.msra.mxu0 0.0
    %2231 = vmatprep.subr.mxu0 0.0
    %2232 = vmatpush1.msra.mxu0 0.0
    %2233 = vmatprep.subr.mxu0 0.0
    %2234 = vmatpush1.msra.mxu0 0.0
    %2235 = vmatprep.subr.mxu0 0.0
    %2236 = vmatpush1.msra.mxu0 0.0
    %2237 = vmatprep.subr.mxu0 0.0
    %2238 = vmatpush1.msra.mxu0 0.0
    %2239 = vmatprep.subr.mxu0 0.0
    %2240 = vmatpush1.msra.mxu0 0.0
    %2241 = vmatprep.subr.mxu0 0.0
    %2242 = vmatpush1.msra.mxu0 0.0
    %2243 = vmatprep.subr.mxu0 0.0
    %2244 = vmatpush1.msra.mxu0 0.0
    %2245 = vmatprep.subr.mxu0 0.0
    %2246 = vmatpush1.msra.mxu0 0.0
    %2247 = vmatprep.subr.mxu0 0.0
    %2248 = vmatpush1.msra.mxu0 0.0
    %2249 = vmatprep.subr.mxu0 0.0
    %2250 = vmatpush1.msra.mxu0 0.0
    %2251 = vmatprep.subr.mxu0 0.0
    %2252 = vmatpush1.msra.mxu0 0.0
    %2253 = vmatprep.subr.mxu0 0.0
    %2254 = vmatpush1.msra.mxu0 0.0
    %2255 = vmatprep.subr.mxu0 0.0
    %2256 = vmatpush1.msra.mxu0 0.0
    %2257 = vmatprep.subr.mxu0 0.0
    %2258 = vmatpush1.msra.mxu0 0.0
    %2259 = vmatprep.subr.mxu0 0.0
    %2260 = vmatpush1.msra.mxu0 0.0
    %2261 = vmatprep.subr.mxu0 0.0
    %2262 = vmatpush1.msra.mxu0 0.0
    %2263 = vmatprep.subr.mxu0 0.0
    %2264 = vmatpush1.msra.mxu0 0.0
    %2265 = vmatprep.subr.mxu0 0.0
    %2266 = vmatpush1.msra.mxu0 0.0
    %2267 = vmatprep.subr.mxu0 0.0
    %2268 = vmatpush1.msra.mxu0 0.0
    %2269 = vmatprep.subr.mxu0 0.0
    %2270 = vmatpush1.msra.mxu0 0.0
    %2271 = vmatprep.subr.mxu0 0.0
    %2272 = vmatpush1.msra.mxu0 0.0
    %2273 = vmatprep.subr.mxu0 0.0
    %2274 = vmatpush1.msra.mxu0 0.0
    %2275 = vmatprep.subr.mxu0 0.0
    %2276 = vmatpush1.msra.mxu0 0.0
    %2277 = vmatprep.subr.mxu0 0.0
    %2278 = vmatpush1.msra.mxu0 0.0
    %2279 = vmatprep.subr.mxu0 0.0
    %2280 = vmatpush1.msra.mxu0 0.0
    %2281 = vmatprep.subr.mxu0 0.0
    %2282 = vmatpush1.msra.mxu0 0.0
    %2283 = vmatprep.subr.mxu0 0.0
    %2284 = vmatpush1.msra.mxu0 0.0
    %2285 = vmatprep.subr.mxu0 0.0
    %2286 = vmatpush1.msra.mxu0 0.0
    %2287 = vmatprep.mubr.f32.mxu0 0.0
    %2288 = vmatmul.mubr.f32.gmra.mrb[0].mxu0 %v2221
    %v2289 = vpop.f32.mrb[0].mxu0
    %v2290 = vadd.f32 %v2217, %v2289
    %v2291 = vpop.f32.mrb[0].mxu0
    %2292 = vdwg.mxu0
    %2293 = vrot.lane.b32.xlu0 %v1643, 112
    %v2294 = vpop.permute.xlu0 %2293
    %2295 = vrot.lane.b32.xlu0 %v1718, 112
    %v2296 = vpop.permute.xlu0 %2295
    %2297 = vrot.lane.b32.xlu0 %v1723, 112
    %v2298 = vpop.permute.xlu0 %2297
    %v2299 = vsel %vm317, %v2294, 0
    %v2301 = vsel %vm317, %v2296, 0
    %v2303 = vsel %vm317, %v2298, 0
    %2305 = vmatprep.subr.mxu0 0.0
    %2306 = vmatpush1.xpose.msra.mxu0 %v2301
    %2307 = vmatprep.subr.mxu0 0.0
    %2308 = vmatpush1.xpose.msra.mxu0 %v2303
    %2309 = vmatprep.subr.mxu0 0.0
    %2310 = vmatpush1.xpose.msra.mxu0 0.0
    %2311 = vmatprep.subr.mxu0 0.0
    %2312 = vmatpush1.xpose.msra.mxu0 0.0
    %2313 = vmatprep.subr.mxu0 0.0
    %2314 = vmatpush1.xpose.msra.mxu0 0.0
    %2315 = vmatprep.subr.mxu0 0.0
    %2316 = vmatpush1.xpose.msra.mxu0 0.0
    %2317 = vmatprep.subr.mxu0 0.0
    %2318 = vmatpush1.xpose.msra.mxu0 0.0
    %2319 = vmatprep.subr.mxu0 0.0
    %2320 = vmatpush1.xpose.msra.mxu0 0.0
    %2321 = vmatprep.subr.mxu0 0.0
    %2322 = vmatpush1.xpose.msra.mxu0 0.0
    %2323 = vmatprep.subr.mxu0 0.0
    %2324 = vmatpush1.xpose.msra.mxu0 0.0
    %2325 = vmatprep.subr.mxu0 0.0
    %2326 = vmatpush1.xpose.msra.mxu0 0.0
    %2327 = vmatprep.subr.mxu0 0.0
    %2328 = vmatpush1.xpose.msra.mxu0 0.0
    %2329 = vmatprep.subr.mxu0 0.0
    %2330 = vmatpush1.xpose.msra.mxu0 0.0
    %2331 = vmatprep.subr.mxu0 0.0
    %2332 = vmatpush1.xpose.msra.mxu0 0.0
    %2333 = vmatprep.subr.mxu0 0.0
    %2334 = vmatpush1.xpose.msra.mxu0 0.0
    %2335 = vmatprep.subr.mxu0 0.0
    %2336 = vmatpush1.xpose.msra.mxu0 0.0
    %2337 = vmatprep.subr.mxu0 0.0
    %2338 = vmatpush1.xpose.msra.mxu0 0.0
    %2339 = vmatprep.subr.mxu0 0.0
    %2340 = vmatpush1.xpose.msra.mxu0 0.0
    %2341 = vmatprep.subr.mxu0 0.0
    %2342 = vmatpush1.xpose.msra.mxu0 0.0
    %2343 = vmatprep.subr.mxu0 0.0
    %2344 = vmatpush1.xpose.msra.mxu0 0.0
    %2345 = vmatprep.subr.mxu0 0.0
    %2346 = vmatpush1.xpose.msra.mxu0 0.0
    %2347 = vmatprep.subr.mxu0 0.0
    %2348 = vmatpush1.xpose.msra.mxu0 0.0
    %2349 = vmatprep.subr.mxu0 0.0
    %2350 = vmatpush1.xpose.msra.mxu0 0.0
    %2351 = vmatprep.subr.mxu0 0.0
    %2352 = vmatpush1.xpose.msra.mxu0 0.0
    %2353 = vmatprep.subr.mxu0 0.0
    %2354 = vmatpush1.xpose.msra.mxu0 0.0
    %2355 = vmatprep.subr.mxu0 0.0
    %2356 = vmatpush1.xpose.msra.mxu0 0.0
    %2357 = vmatprep.subr.mxu0 0.0
    %2358 = vmatpush1.xpose.msra.mxu0 0.0
    %2359 = vmatprep.subr.mxu0 0.0
    %2360 = vmatpush1.xpose.msra.mxu0 0.0
    %2361 = vmatprep.subr.mxu0 0.0
    %2362 = vmatpush1.xpose.msra.mxu0 0.0
    %2363 = vmatprep.subr.mxu0 0.0
    %2364 = vmatpush1.xpose.msra.mxu0 0.0
    %2365 = vmatprep.subr.mxu0 0.0
    %2366 = vmatpush1.xpose.msra.mxu0 0.0
    %2367 = vmatprep.subr.mxu0 0.0
    %2368 = vmatpush1.xpose.msra.mxu0 0.0
    %2369 = vmatprep.mubr.f32.mxu0 0.0
    %2370 = vmatmul.mubr.f32.gmra.mrb[0].mxu0 %v2299
    %v2371 = vpop.f32.mrb[0].mxu0
    %v2372 = vadd.f32 0.0, %v2371
    %v2373 = vpop.f32.mrb[0].mxu0
    %2374 = vdwg.mxu0
    %v2375 = vmul.f32 %v2372, 0.35355338
    %v2376 = vadd.f32 %v2375, %v401
    %v2377 = vsel %vm403, %v2376, -inf
    %2378 = vmax.xlane.f32.xlu0 %v2377
    %v2379 = vpop.xlane.xlu0 %2378
    %v2380 = vsub.f32 %v2376, %v2379
    %v2381 = vmul.f32 %v2380, 1.442695
    %v2382 = vpow.pop %v2381
    %v2383 = vsel %vm403, %v2382, 0.0
    %2384 = vadd.xlane.f32.xlu0 %v2383
    %v2385 = vpop.xlane.xlu0 %2384
    %v2386 = vrcp.pop %v2385
    %v2387 = vmul.f32 %v2382, %v2386
    %2388 = vrot.lane.b32.xlu0 %v1798, 112
    %v2389 = vpop.permute.xlu0 %2388
    %2390 = vrot.lane.b32.xlu0 %v1803, 112
    %v2391 = vpop.permute.xlu0 %2390
    %v2395 = vsel %vm403, %v2387, 0
    %2397 = vmatprep.subr.mxu0 0.0
    %2398 = vmatpush1.msra.mxu0 %v2389
    %2399 = vmatprep.subr.mxu0 0.0
    %2400 = vmatpush1.msra.mxu0 %v2391
    %2401 = vmatprep.subr.mxu0 0.0
    %2402 = vmatpush1.msra.mxu0 0.0
    %2403 = vmatprep.subr.mxu0 0.0
    %2404 = vmatpush1.msra.mxu0 0.0
    %2405 = vmatprep.subr.mxu0 0.0
    %2406 = vmatpush1.msra.mxu0 0.0
    %2407 = vmatprep.subr.mxu0 0.0
    %2408 = vmatpush1.msra.mxu0 0.0
    %2409 = vmatprep.subr.mxu0 0.0
    %2410 = vmatpush1.msra.mxu0 0.0
    %2411 = vmatprep.subr.mxu0 0.0
    %2412 = vmatpush1.msra.mxu0 0.0
    %2413 = vmatprep.subr.mxu0 0.0
    %2414 = vmatpush1.msra.mxu0 0.0
    %2415 = vmatprep.subr.mxu0 0.0
    %2416 = vmatpush1.msra.mxu0 0.0
    %2417 = vmatprep.subr.mxu0 0.0
    %2418 = vmatpush1.msra.mxu0 0.0
    %2419 = vmatprep.subr.mxu0 0.0
    %2420 = vmatpush1.msra.mxu0 0.0
    %2421 = vmatprep.subr.mxu0 0.0
    %2422 = vmatpush1.msra.mxu0 0.0
    %2423 = vmatprep.subr.mxu0 0.0
    %2424 = vmatpush1.msra.mxu0 0.0
    %2425 = vmatprep.subr.mxu0 0.0
    %2426 = vmatpush1.msra.mxu0 0.0
    %2427 = vmatprep.subr.mxu0 0.0
    %2428 = vmatpush1.msra.mxu0 0.0
    %2429 = vmatprep.subr.mxu0 0.0
    %2430 = vmatpush1.msra.mxu0 0.0
    %2431 = vmatprep.subr.mxu0 0.0
    %2432 = vmatpush1.msra.mxu0 0.0
    %2433 = vmatprep.subr.mxu0 0.0
    %2434 = vmatpush1.msra.mxu0 0.0
    %2435 = vmatprep.subr.mxu0 0.0
    %2436 = vmatpush1.msra.mxu0 0.0
    %2437 = vmatprep.subr.mxu0 0.0
    %2438 = vmatpush1.msra.mxu0 0.0
    %2439 = vmatprep.subr.mxu0 0.0
    %2440 = vmatpush1.msra.mxu0 0.0
    %2441 = vmatprep.subr.mxu0 0.0
    %2442 = vmatpush1.msra.mxu0 0.0
    %2443 = vmatprep.subr.mxu0 0.0
    %2444 = vmatpush1.msra.mxu0 0.0
    %2445 = vmatprep.subr.mxu0 0.0
    %2446 = vmatpush1.msra.mxu0 0.0
    %2447 = vmatprep.subr.mxu0 0.0
    %2448 = vmatpush1.msra.mxu0 0.0
    %2449 = vmatprep.subr.mxu0 0.0
    %2450 = vmatpush1.msra.mxu0 0.0
    %2451 = vmatprep.subr.mxu0 0.0
    %2452 = vmatpush1.msra.mxu0 0.0
    %2453 = vmatprep.subr.mxu0 0.0
    %2454 = vmatpush1.msra.mxu0 0.0
    %2455 = vmatprep.subr.mxu0 0.0
    %2456 = vmatpush1.msra.mxu0 0.0
    %2457 = vmatprep.subr.mxu0 0.0
    %2458 = vmatpush1.msra.mxu0 0.0
    %2459 = vmatprep.subr.mxu0 0.0
    %2460 = vmatpush1.msra.mxu0 0.0
    %2461 = vmatprep.mubr.f32.mxu0 0.0
    %2462 = vmatmul.mubr.f32.gmra.mrb[0].mxu0 %v2395
    %v2463 = vpop.f32.mrb[0].mxu0
    %v2464 = vadd.f32 0.0, %v2463
    %v2465 = vpop.f32.mrb[0].mxu0
    %2466 = vdwg.mxu0
    %v2468 = vsel %vm317, %v2464, 0
    %2470 = vmatprep.subr.mxu0 0.0
    %2471 = vmatpush1.msra.mxu0 %v1565
    %2472 = vmatprep.subr.mxu0 0.0
    %2473 = vmatpush1.msra.mxu0 0.0
    %2474 = vmatprep.subr.mxu0 0.0
    %2475 = vmatpush1.msra.mxu0 0.0
    %2476 = vmatprep.subr.mxu0 0.0
    %2477 = vmatpush1.msra.mxu0 0.0
    %2478 = vmatprep.subr.mxu0 0.0
    %2479 = vmatpush1.msra.mxu0 0.0
    %2480 = vmatprep.subr.mxu0 0.0
    %2481 = vmatpush1.msra.mxu0 0.0
    %2482 = vmatprep.subr.mxu0 0.0
    %2483 = vmatpush1.msra.mxu0 0.0
    %2484 = vmatprep.subr.mxu0 0.0
    %2485 = vmatpush1.msra.mxu0 0.0
    %2486 = vmatprep.subr.mxu0 0.0
    %2487 = vmatpush1.msra.mxu0 0.0
    %2488 = vmatprep.subr.mxu0 0.0
    %2489 = vmatpush1.msra.mxu0 0.0
    %2490 = vmatprep.subr.mxu0 0.0
    %2491 = vmatpush1.msra.mxu0 0.0
    %2492 = vmatprep.subr.mxu0 0.0
    %2493 = vmatpush1.msra.mxu0 0.0
    %2494 = vmatprep.subr.mxu0 0.0
    %2495 = vmatpush1.msra.mxu0 0.0
    %2496 = vmatprep.subr.mxu0 0.0
    %2497 = vmatpush1.msra.mxu0 0.0
    %2498 = vmatprep.subr.mxu0 0.0
    %2499 = vmatpush1.msra.mxu0 0.0
    %2500 = vmatprep.subr.mxu0 0.0
    %2501 = vmatpush1.msra.mxu0 0.0
    %2502 = vmatprep.subr.mxu0 0.0
    %2503 = vmatpush1.msra.mxu0 0.0
    %2504 = vmatprep.subr.mxu0 0.0
    %2505 = vmatpush1.msra.mxu0 0.0
    %2506 = vmatprep.subr.mxu0 0.0
    %2507 = vmatpush1.msra.mxu0 0.0
    %2508 = vmatprep.subr.mxu0 0.0
    %2509 = vmatpush1.msra.mxu0 0.0
    %2510 = vmatprep.subr.mxu0 0.0
    %2511 = vmatpush1.msra.mxu0 0.0
    %2512 = vmatprep.subr.mxu0 0.0
    %2513 = vmatpush1.msra.mxu0 0.0
    %2514 = vmatprep.subr.mxu0 0.0
    %2515 = vmatpush1.msra.mxu0 0.0
    %2516 = vmatprep.subr.mxu0 0.0
    %2517 = vmatpush1.msra.mxu0 0.0
    %2518 = vmatprep.subr.mxu0 0.0
    %2519 = vmatpush1.msra.mxu0 0.0
    %2520 = vmatprep.subr.mxu0 0.0
    %2521 = vmatpush1.msra.mxu0 0.0
    %2522 = vmatprep.subr.mxu0 0.0
    %2523 = vmatpush1.msra.mxu0 0.0
    %2524 = vmatprep.subr.mxu0 0.0
    %2525 = vmatpush1.msra.mxu0 0.0
    %2526 = vmatprep.subr.mxu0 0.0
    %2527 = vmatpush1.msra.mxu0 0.0
    %2528 = vmatprep.subr.mxu0 0.0
    %2529 = vmatpush1.msra.mxu0 0.0
    %2530 = vmatprep.subr.mxu0 0.0
    %2531 = vmatpush1.msra.mxu0 0.0
    %2532 = vmatprep.subr.mxu0 0.0
    %2533 = vmatpush1.msra.mxu0 0.0
    %2534 = vmatprep.mubr.f32.mxu0 0.0
    %2535 = vmatmul.mubr.f32.gmra.mrb[0].mxu0 %v2468
    %v2536 = vpop.f32.mrb[0].mxu0
    %v2537 = vadd.f32 0.0, %v2536
    %v2538 = vpop.f32.mrb[0].mxu0
    %2539 = vdwg.mxu0
    %v2540 = vadd.f32 %v2290, %v2537
    %2541 = vrot.lane.b32.xlu0 %v1643, 104
    %v2542 = vpop.permute.xlu0 %2541
    %2543 = vrot.lane.b32.xlu0 %v1718, 104
    %v2544 = vpop.permute.xlu0 %2543
    %2545 = vrot.lane.b32.xlu0 %v1723, 104
    %v2546 = vpop.permute.xlu0 %2545
    %v2547 = vsel %vm317, %v2542, 0
    %v2549 = vsel %vm317, %v2544, 0
    %v2551 = vsel %vm317, %v2546, 0
    %2553 = vmatprep.subr.mxu0 0.0
    %2554 = vmatpush1.xpose.msra.mxu0 %v2549
    %2555 = vmatprep.subr.mxu0 0.0
    %2556 = vmatpush1.xpose.msra.mxu0 %v2551
    %2557 = vmatprep.subr.mxu0 0.0
    %2558 = vmatpush1.xpose.msra.mxu0 0.0
    %2559 = vmatprep.subr.mxu0 0.0
    %2560 = vmatpush1.xpose.msra.mxu0 0.0
    %2561 = vmatprep.subr.mxu0 0.0
    %2562 = vmatpush1.xpose.msra.mxu0 0.0
    %2563 = vmatprep.subr.mxu0 0.0
    %2564 = vmatpush1.xpose.msra.mxu0 0.0
    %2565 = vmatprep.subr.mxu0 0.0
    %2566 = vmatpush1.xpose.msra.mxu0 0.0
    %2567 = vmatprep.subr.mxu0 0.0
    %2568 = vmatpush1.xpose.msra.mxu0 0.0
    %2569 = vmatprep.subr.mxu0 0.0
    %2570 = vmatpush1.xpose.msra.mxu0 0.0
    %2571 = vmatprep.subr.mxu0 0.0
    %2572 = vmatpush1.xpose.msra.mxu0 0.0
    %2573 = vmatprep.subr.mxu0 0.0
    %2574 = vmatpush1.xpose.msra.mxu0 0.0
    %2575 = vmatprep.subr.mxu0 0.0
    %2576 = vmatpush1.xpose.msra.mxu0 0.0
    %2577 = vmatprep.subr.mxu0 0.0
    %2578 = vmatpush1.xpose.msra.mxu0 0.0
    %2579 = vmatprep.subr.mxu0 0.0
    %2580 = vmatpush1.xpose.msra.mxu0 0.0
    %2581 = vmatprep.subr.mxu0 0.0
    %2582 = vmatpush1.xpose.msra.mxu0 0.0
    %2583 = vmatprep.subr.mxu0 0.0
    %2584 = vmatpush1.xpose.msra.mxu0 0.0
    %2585 = vmatprep.subr.mxu0 0.0
    %2586 = vmatpush1.xpose.msra.mxu0 0.0
    %2587 = vmatprep.subr.mxu0 0.0
    %2588 = vmatpush1.xpose.msra.mxu0 0.0
    %2589 = vmatprep.subr.mxu0 0.0
    %2590 = vmatpush1.xpose.msra.mxu0 0.0
    %2591 = vmatprep.subr.mxu0 0.0
    %2592 = vmatpush1.xpose.msra.mxu0 0.0
    %2593 = vmatprep.subr.mxu0 0.0
    %2594 = vmatpush1.xpose.msra.mxu0 0.0
    %2595 = vmatprep.subr.mxu0 0.0
    %2596 = vmatpush1.xpose.msra.mxu0 0.0
    %2597 = vmatprep.subr.mxu0 0.0
    %2598 = vmatpush1.xpose.msra.mxu0 0.0
    %2599 = vmatprep.subr.mxu0 0.0
    %2600 = vmatpush1.xpose.msra.mxu0 0.0
    %2601 = vmatprep.subr.mxu0 0.0
    %2602 = vmatpush1.xpose.msra.mxu0 0.0
    %2603 = vmatprep.subr.mxu0 0.0
    %2604 = vmatpush1.xpose.msra.mxu0 0.0
    %2605 = vmatprep.subr.mxu0 0.0
    %2606 = vmatpush1.xpose.msra.mxu0 0.0
    %2607 = vmatprep.subr.mxu0 0.0
    %2608 = vmatpush1.xpose.msra.mxu0 0.0
    %2609 = vmatprep.subr.mxu0 0.0
    %2610 = vmatpush1.xpose.msra.mxu0 0.0
    %2611 = vmatprep.subr.mxu0 0.0
    %2612 = vmatpush1.xpose.msra.mxu0 0.0
    %2613 = vmatprep.subr.mxu0 0.0
    %2614 = vmatpush1.xpose.msra.mxu0 0.0
    %2615 = vmatprep.subr.mxu0 0.0
    %2616 = vmatpush1.xpose.msra.mxu0 0.0
    %2617 = vmatprep.mubr.f32.mxu0 0.0
    %2618 = vmatmul.mubr.f32.gmra.mrb[0].mxu0 %v2547
    %v2619 = vpop.f32.mrb[0].mxu0
    %v2620 = vadd.f32 0.0, %v2619
    %v2621 = vpop.f32.mrb[0].mxu0
    %2622 = vdwg.mxu0
    %v2623 = vmul.f32 %v2620, 0.35355338
    %v2624 = vadd.f32 %v2623, %v401
    %v2625 = vsel %vm403, %v2624, -inf
    %2626 = vmax.xlane.f32.xlu0 %v2625
    %v2627 = vpop.xlane.xlu0 %2626
    %v2628 = vsub.f32 %v2624, %v2627
    %v2629 = vmul.f32 %v2628, 1.442695
    %v2630 = vpow.pop %v2629
    %v2631 = vsel %vm403, %v2630, 0.0
    %2632 = vadd.xlane.f32.xlu0 %v2631
    %v2633 = vpop.xlane.xlu0 %2632
    %v2634 = vrcp.pop %v2633
    %v2635 = vmul.f32 %v2630, %v2634
    %2636 = vrot.lane.b32.xlu0 %v1798, 104
    %v2637 = vpop.permute.xlu0 %2636
    %2638 = vrot.lane.b32.xlu0 %v1803, 104
    %v2639 = vpop.permute.xlu0 %2638
    %v2643 = vsel %vm403, %v2635, 0
    %2645 = vmatprep.subr.mxu0 0.0
    %2646 = vmatpush1.msra.mxu0 %v2637
    %2647 = vmatprep.subr.mxu0 0.0
    %2648 = vmatpush1.msra.mxu0 %v2639
    %2649 = vmatprep.subr.mxu0 0.0
    %2650 = vmatpush1.msra.mxu0 0.0
    %2651 = vmatprep.subr.mxu0 0.0
    %2652 = vmatpush1.msra.mxu0 0.0
    %2653 = vmatprep.subr.mxu0 0.0
    %2654 = vmatpush1.msra.mxu0 0.0
    %2655 = vmatprep.subr.mxu0 0.0
    %2656 = vmatpush1.msra.mxu0 0.0
    %2657 = vmatprep.subr.mxu0 0.0
    %2658 = vmatpush1.msra.mxu0 0.0
    %2659 = vmatprep.subr.mxu0 0.0
    %2660 = vmatpush1.msra.mxu0 0.0
    %2661 = vmatprep.subr.mxu0 0.0
    %2662 = vmatpush1.msra.mxu0 0.0
    %2663 = vmatprep.subr.mxu0 0.0
    %2664 = vmatpush1.msra.mxu0 0.0
    %2665 = vmatprep.subr.mxu0 0.0
    %2666 = vmatpush1.msra.mxu0 0.0
    %2667 = vmatprep.subr.mxu0 0.0
    %2668 = vmatpush1.msra.mxu0 0.0
    %2669 = vmatprep.subr.mxu0 0.0
    %2670 = vmatpush1.msra.mxu0 0.0
    %2671 = vmatprep.subr.mxu0 0.0
    %2672 = vmatpush1.msra.mxu0 0.0
    %2673 = vmatprep.subr.mxu0 0.0
    %2674 = vmatpush1.msra.mxu0 0.0
    %2675 = vmatprep.subr.mxu0 0.0
    %2676 = vmatpush1.msra.mxu0 0.0
    %2677 = vmatprep.subr.mxu0 0.0
    %2678 = vmatpush1.msra.mxu0 0.0
    %2679 = vmatprep.subr.mxu0 0.0
    %2680 = vmatpush1.msra.mxu0 0.0
    %2681 = vmatprep.subr.mxu0 0.0
    %2682 = vmatpush1.msra.mxu0 0.0
    %2683 = vmatprep.subr.mxu0 0.0
    %2684 = vmatpush1.msra.mxu0 0.0
    %2685 = vmatprep.subr.mxu0 0.0
    %2686 = vmatpush1.msra.mxu0 0.0
    %2687 = vmatprep.subr.mxu0 0.0
    %2688 = vmatpush1.msra.mxu0 0.0
    %2689 = vmatprep.subr.mxu0 0.0
    %2690 = vmatpush1.msra.mxu0 0.0
    %2691 = vmatprep.subr.mxu0 0.0
    %2692 = vmatpush1.msra.mxu0 0.0
    %2693 = vmatprep.subr.mxu0 0.0
    %2694 = vmatpush1.msra.mxu0 0.0
    %2695 = vmatprep.subr.mxu0 0.0
    %2696 = vmatpush1.msra.mxu0 0.0
    %2697 = vmatprep.subr.mxu0 0.0
    %2698 = vmatpush1.msra.mxu0 0.0
    %2699 = vmatprep.subr.mxu0 0.0
    %2700 = vmatpush1.msra.mxu0 0.0
    %2701 = vmatprep.subr.mxu0 0.0
    %2702 = vmatpush1.msra.mxu0 0.0
    %2703 = vmatprep.subr.mxu0 0.0
    %2704 = vmatpush1.msra.mxu0 0.0
    %2705 = vmatprep.subr.mxu0 0.0
    %2706 = vmatpush1.msra.mxu0 0.0
    %2707 = vmatprep.subr.mxu0 0.0
    %2708 = vmatpush1.msra.mxu0 0.0
    %2709 = vmatprep.mubr.f32.mxu0 0.0
    %2710 = vmatmul.mubr.f32.gmra.mrb[0].mxu0 %v2643
    %v2711 = vpop.f32.mrb[0].mxu0
    %v2712 = vadd.f32 0.0, %v2711
    %v2713 = vpop.f32.mrb[0].mxu0
    %2714 = vdwg.mxu0
    %v2716 = vsel %vm317, %v2712, 0
    %2718 = vmatprep.subr.mxu0 0.0
    %2719 = vmatpush1.msra.mxu0 %v1566
    %2720 = vmatprep.subr.mxu0 0.0
    %2721 = vmatpush1.msra.mxu0 0.0
    %2722 = vmatprep.subr.mxu0 0.0
    %2723 = vmatpush1.msra.mxu0 0.0
    %2724 = vmatprep.subr.mxu0 0.0
    %2725 = vmatpush1.msra.mxu0 0.0
    %2726 = vmatprep.subr.mxu0 0.0
    %2727 = vmatpush1.msra.mxu0 0.0
    %2728 = vmatprep.subr.mxu0 0.0
    %2729 = vmatpush1.msra.mxu0 0.0
    %2730 = vmatprep.subr.mxu0 0.0
    %2731 = vmatpush1.msra.mxu0 0.0
    %2732 = vmatprep.subr.mxu0 0.0
    %2733 = vmatpush1.msra.mxu0 0.0
    %2734 = vmatprep.subr.mxu0 0.0
    %2735 = vmatpush1.msra.mxu0 0.0
    %2736 = vmatprep.subr.mxu0 0.0
    %2737 = vmatpush1.msra.mxu0 0.0
    %2738 = vmatprep.subr.mxu0 0.0
    %2739 = vmatpush1.msra.mxu0 0.0
    %2740 = vmatprep.subr.mxu0 0.0
    %2741 = vmatpush1.msra.mxu0 0.0
    %2742 = vmatprep.subr.mxu0 0.0
    %2743 = vmatpush1.msra.mxu0 0.0
    %2744 = vmatprep.subr.mxu0 0.0
    %2745 = vmatpush1.msra.mxu0 0.0
    %2746 = vmatprep.subr.mxu0 0.0
    %2747 = vmatpush1.msra.mxu0 0.0
    %2748 = vmatprep.subr.mxu0 0.0
    %2749 = vmatpush1.msra.mxu0 0.0
    %2750 = vmatprep.subr.mxu0 0.0
    %2751 = vmatpush1.msra.mxu0 0.0
    %2752 = vmatprep.subr.mxu0 0.0
    %2753 = vmatpush1.msra.mxu0 0.0
    %2754 = vmatprep.subr.mxu0 0.0
    %2755 = vmatpush1.msra.mxu0 0.0
    %2756 = vmatprep.subr.mxu0 0.0
    %2757 = vmatpush1.msra.mxu0 0.0
    %2758 = vmatprep.subr.mxu0 0.0
    %2759 = vmatpush1.msra.mxu0 0.0
    %2760 = vmatprep.subr.mxu0 0.0
    %2761 = vmatpush1.msra.mxu0 0.0
    %2762 = vmatprep.subr.mxu0 0.0
    %2763 = vmatpush1.msra.mxu0 0.0
    %2764 = vmatprep.subr.mxu0 0.0
    %2765 = vmatpush1.msra.mxu0 0.0
    %2766 = vmatprep.subr.mxu0 0.0
    %2767 = vmatpush1.msra.mxu0 0.0
    %2768 = vmatprep.subr.mxu0 0.0
    %2769 = vmatpush1.msra.mxu0 0.0
    %2770 = vmatprep.subr.mxu0 0.0
    %2771 = vmatpush1.msra.mxu0 0.0
    %2772 = vmatprep.subr.mxu0 0.0
    %2773 = vmatpush1.msra.mxu0 0.0
    %2774 = vmatprep.subr.mxu0 0.0
    %2775 = vmatpush1.msra.mxu0 0.0
    %2776 = vmatprep.subr.mxu0 0.0
    %2777 = vmatpush1.msra.mxu0 0.0
    %2778 = vmatprep.subr.mxu0 0.0
    %2779 = vmatpush1.msra.mxu0 0.0
    %2780 = vmatprep.subr.mxu0 0.0
    %2781 = vmatpush1.msra.mxu0 0.0
    %2782 = vmatprep.mubr.f32.mxu0 0.0
    %2783 = vmatmul.mubr.f32.gmra.mrb[0].mxu0 %v2716
    %v2784 = vpop.f32.mrb[0].mxu0
    %v2785 = vadd.f32 0.0, %v2784
    %v2786 = vpop.f32.mrb[0].mxu0
    %2787 = vdwg.mxu0
    %v2788 = vadd.f32 %v2540, %v2785
    %v2789 = vld [vmem:[%s1567 + $0x3] sm:$0x1]
    %v2790 = vlaneseq
    %v2791 = vshrl.u32 %v2790, 7
    %v2792 = vsub.s32 0, %v2791
    %v2793 = vrot.slane %v2789, %v2792
    %v2794 = vadd.f32 %v2788, %v2793
    %v2795 = vadd.f32 %v2794, %v1546
    %s2796 = scalar_lea.vmem %s5, 2
    %v2797 = vld [vmem:[%s2796] sm:$0x1]
    %s2798 = scalar_lea.vmem %s6, 2
    %v2799 = vld [vmem:[%s2798] sm:$0x1]
    %v2800 = vsel %vm80, %v2795, 0.0
    %2801 = vadd.xlane.f32.xlu0 %v2800
    %v2802 = vpop.xlane.xlu0 %2801
    %v2803 = vmul.f32 %v2802, %v1318
    %v2804 = vsub.f32 %v2795, %v2803
    %v2805 = vmul.f32 %v2804, %v2804
    %v2806 = vsel %vm80, %v2805, 0.0
    %2807 = vadd.xlane.f32.xlu0 %v2806
    %v2808 = vpop.xlane.xlu0 %2807
    %v2809 = vmul.f32 %v2808, %v1318
    %v2810 = vadd.f32 %v2809, 1e-06
    %v2811 = vrsqrt.pop %v2810
    %v2812 = vmul.f32 %v2804, %v2811
    %v2813 = vlaneseq
    %v2814 = vshrl.u32 %v2813, 7
    %v2815 = vsub.s32 0, %v2814
    %v2816 = vrot.slane %v2797, %v2815
    %v2817 = vmul.f32 %v2816, %v2812
    %v2818 = vlaneseq
    %v2819 = vshrl.u32 %v2818, 7
    %v2820 = vsub.s32 0, %v2819
    %v2821 = vrot.slane %v2799, %v2820
    %v2822 = vadd.f32 %v2817, %v2821
    %s2823 = scalar_lea.vmem %s7, 32
    %v2824 = vld [vmem:[%s2823] sm:$0xff]
    %v2825 = vld [vmem:[%s2823 + $0x8] sm:$0xff]
    %v2826 = vld [vmem:[%s2823 + $0x10] sm:$0xff]
    %v2827 = vld [vmem:[%s2823 + $0x18] sm:$0xff]
    %s2828 = scalar_lea.vmem %s8, 1
    %v2829 = vld [vmem:[%s2828] sm:$0x1]
    %v2831 = vlaneseq
    %v2832 = vshrl.u32 %v2831, 7
    %v2833 = vsub.s32 0, %v2832
    %v2834 = vrot.slane %v2829, %v2833
    %v2837 = vsel %vm80, %v2822, 0
    %2839 = vmatprep.subr.mxu0 0.0
    %2840 = vmatpush1.msra.mxu0 %v2824
    %2841 = vmatprep.subr.mxu0 0.0
    %2842 = vmatpush1.msra.mxu0 %v2825
    %2843 = vmatprep.subr.mxu0 0.0
    %2844 = vmatpush1.msra.mxu0 %v2826
    %2845 = vmatprep.subr.mxu0 0.0
    %2846 = vmatpush1.msra.mxu0 %v2827
    %2847 = vmatprep.subr.mxu0 0.0
    %2848 = vmatpush1.msra.mxu0 0.0
    %2849 = vmatprep.subr.mxu0 0.0
    %2850 = vmatpush1.msra.mxu0 0.0
    %2851 = vmatprep.subr.mxu0 0.0
    %2852 = vmatpush1.msra.mxu0 0.0
    %2853 = vmatprep.subr.mxu0 0.0
    %2854 = vmatpush1.msra.mxu0 0.0
    %2855 = vmatprep.subr.mxu0 0.0
    %2856 = vmatpush1.msra.mxu0 0.0
    %2857 = vmatprep.subr.mxu0 0.0
    %2858 = vmatpush1.msra.mxu0 0.0
    %2859 = vmatprep.subr.mxu0 0.0
    %2860 = vmatpush1.msra.mxu0 0.0
    %2861 = vmatprep.subr.mxu0 0.0
    %2862 = vmatpush1.msra.mxu0 0.0
    %2863 = vmatprep.subr.mxu0 0.0
    %2864 = vmatpush1.msra.mxu0 0.0
    %2865 = vmatprep.subr.mxu0 0.0
    %2866 = vmatpush1.msra.mxu0 0.0
    %2867 = vmatprep.subr.mxu0 0.0
    %2868 = vmatpush1.msra.mxu0 0.0
    %2869 = vmatprep.subr.mxu0 0.0
    %2870 = vmatpush1.msra.mxu0 0.0
    %2871 = vmatprep.subr.mxu0 0.0
    %2872 = vmatpush1.msra.mxu0 0.0
    %2873 = vmatprep.subr.mxu0 0.0
    %2874 = vmatpush1.msra.mxu0 0.0
    %2875 = vmatprep.subr.mxu0 0.0
    %2876 = vmatpush1.msra.mxu0 0.0
    %2877 = vmatprep.subr.mxu0 0.0
    %2878 = vmatpush1.msra.mxu0 0.0
    %2879 = vmatprep.subr.mxu0 0.0
    %2880 = vmatpush1.msra.mxu0 0.0
    %2881 = vmatprep.subr.mxu0 0.0
    %2882 = vmatpush1.msra.mxu0 0.0
    %2883 = vmatprep.subr.mxu0 0.0
    %2884 = vmatpush1.msra.mxu0 0.0
    %2885 = vmatprep.subr.mxu0 0.0
    %2886 = vmatpush1.msra.mxu0 0.0
    %2887 = vmatprep.subr.mxu0 0.0
    %2888 = vmatpush1.msra.mxu0 0.0
    %2889 = vmatprep.subr.mxu0 0.0
    %2890 = vmatpush1.msra.mxu0 0.0
    %2891 = vmatprep.subr.mxu0 0.0
    %2892 = vmatpush1.msra.mxu0 0.0
    %2893 = vmatprep.subr.mxu0 0.0
    %2894 = vmatpush1.msra.mxu0 0.0
    %2895 = vmatprep.subr.mxu0 0.0
    %2896 = vmatpush1.msra.mxu0 0.0
    %2897 = vmatprep.subr.mxu0 0.0
    %2898 = vmatpush1.msra.mxu0 0.0
    %2899 = vmatprep.subr.mxu0 0.0
    %2900 = vmatpush1.msra.mxu0 0.0
    %2901 = vmatprep.subr.mxu0 0.0
    %2902 = vmatpush1.msra.mxu0 0.0
    %2903 = vmatprep.mubr.f32.mxu0 0.0
    %2904 = vmatmul.mubr.f32.gmra.mrb[0].mxu0 %v2837
    %v2905 = vpop.f32.mrb[0].mxu0
    %v2906 = vadd.f32 %v2834, %v2905
    %v2907 = vpop.f32.mrb[0].mxu0
    %2908 = vdwg.mxu0
    %v2909 = vmul.f32 %v2906, 0.5
    %v2910 = vmul.f32 %v2906, 0.044715
    %v2911 = vmul.f32 %v2910, %v2906
    %v2912 = vmul.f32 %v2911, %v2906
    %v2913 = vadd.f32 %v2906, %v2912
    %v2914 = vmul.f32 %v2913, 0.7978846
    %v2915 = vtanh.pop %v2914
    %v2916 = vadd.f32 %v2915, 1.0
    %v2917 = vmul.f32 %v2909, %v2916
    %s2918 = scalar_lea.vmem %s9, 64
    %v2919 = vld [vmem:[%s2918] sm:$0xff]
    %v2920 = vld [vmem:[%s2918 + $0x8] sm:$0xff]
    %v2921 = vld [vmem:[%s2918 + $0x10] sm:$0xff]
    %v2922 = vld [vmem:[%s2918 + $0x18] sm:$0xff]
    %v2923 = vld [vmem:[%s2918 + $0x20] sm:$0xff]
    %v2924 = vld [vmem:[%s2918 + $0x28] sm:$0xff]
    %v2925 = vld [vmem:[%s2918 + $0x30] sm:$0xff]
    %v2926 = vld [vmem:[%s2918 + $0x38] sm:$0xff]
    %s2927 = scalar_lea.vmem %s10, 1
    %v2928 = vld [vmem:[%s2927] sm:$0x1]
    %v2930 = vlaneseq
    %v2931 = vshrl.u32 %v2930, 7
    %v2932 = vsub.s32 0, %v2931
    %v2933 = vrot.slane %v2928, %v2932
    %v2936 = vsel %vm1447, %v2917, 0
    %2938 = vmatprep.subr.mxu0 0.0
    %2939 = vmatpush1.msra.mxu0 %v2919
    %2940 = vmatprep.subr.mxu0 0.0
    %2941 = vmatpush1.msra.mxu0 %v2920
    %2942 = vmatprep.subr.mxu0 0.0
    %2943 = vmatpush1.msra.mxu0 %v2921
    %2944 = vmatprep.subr.mxu0 0.0
    %2945 = vmatpush1.msra.mxu0 %v2922
    %2946 = vmatprep.subr.mxu0 0.0
    %2947 = vmatpush1.msra.mxu0 %v2923
    %2948 = vmatprep.subr.mxu0 0.0
    %2949 = vmatpush1.msra.mxu0 %v2924
    %2950 = vmatprep.subr.mxu0 0.0
    %2951 = vmatpush1.msra.mxu0 %v2925
    %2952 = vmatprep.subr.mxu0 0.0
    %2953 = vmatpush1.msra.mxu0 %v2926
    %2954 = vmatprep.subr.mxu0 0.0
    %2955 = vmatpush1.msra.mxu0 0.0
    %2956 = vmatprep.subr.mxu0 0.0
    %2957 = vmatpush1.msra.mxu0 0.0
    %2958 = vmatprep.subr.mxu0 0.0
    %2959 = vmatpush1.msra.mxu0 0.0
    %2960 = vmatprep.subr.mxu0 0.0
    %2961 = vmatpush1.msra.mxu0 0.0
    %2962 = vmatprep.subr.mxu0 0.0
    %2963 = vmatpush1.msra.mxu0 0.0
    %2964 = vmatprep.subr.mxu0 0.0
    %2965 = vmatpush1.msra.mxu0 0.0
    %2966 = vmatprep.subr.mxu0 0.0
    %2967 = vmatpush1.msra.mxu0 0.0
    %2968 = vmatprep.subr.mxu0 0.0
    %2969 = vmatpush1.msra.mxu0 0.0
    %2970 = vmatprep.subr.mxu0 0.0
    %2971 = vmatpush1.msra.mxu0 0.0
    %2972 = vmatprep.subr.mxu0 0.0
    %2973 = vmatpush1.msra.mxu0 0.0
    %2974 = vmatprep.subr.mxu0 0.0
    %2975 = vmatpush1.msra.mxu0 0.0
    %2976 = vmatprep.subr.mxu0 0.0
    %2977 = vmatpush1.msra.mxu0 0.0
    %2978 = vmatprep.subr.mxu0 0.0
    %2979 = vmatpush1.msra.mxu0 0.0
    %2980 = vmatprep.subr.mxu0 0.0
    %2981 = vmatpush1.msra.mxu0 0.0
    %2982 = vmatprep.subr.mxu0 0.0
    %2983 = vmatpush1.msra.mxu0 0.0
    %2984 = vmatprep.subr.mxu0 0.0
    %2985 = vmatpush1.msra.mxu0 0.0
    %2986 = vmatprep.subr.mxu0 0.0
    %2987 = vmatpush1.msra.mxu0 0.0
    %2988 = vmatprep.subr.mxu0 0.0
    %2989 = vmatpush1.msra.mxu0 0.0
    %2990 = vmatprep.subr.mxu0 0.0
    %2991 = vmatpush1.msra.mxu0 0.0
    %2992 = vmatprep.subr.mxu0 0.0
    %2993 = vmatpush1.msra.mxu0 0.0
    %2994 = vmatprep.subr.mxu0 0.0
    %2995 = vmatpush1.msra.mxu0 0.0
    %2996 = vmatprep.subr.mxu0 0.0
    %2997 = vmatpush1.msra.mxu0 0.0
    %2998 = vmatprep.subr.mxu0 0.0
    %2999 = vmatpush1.msra.mxu0 0.0
    %3000 = vmatprep.subr.mxu0 0.0
    %3001 = vmatpush1.msra.mxu0 0.0
    %3002 = vmatprep.mubr.f32.mxu0 0.0
    %3003 = vmatmul.mubr.f32.gmra.mrb[0].mxu0 %v2936
    %v3004 = vpop.f32.mrb[0].mxu0
    %v3005 = vadd.f32 %v2933, %v3004
    %v3006 = vpop.f32.mrb[0].mxu0
    %3007 = vdwg.mxu0
    %v3008 = vadd.f32 %v3005, %v2822
    %v3009 = vld [vmem:[%s2796 + $0x1] sm:$0x1]
    %v3010 = vld [vmem:[%s2798 + $0x1] sm:$0x1]
    %v3011 = vsel %vm80, %v3008, 0.0
    %3012 = vadd.xlane.f32.xlu0 %v3011
    %v3013 = vpop.xlane.xlu0 %3012
    %v3014 = vmul.f32 %v3013, %v1318
    %v3015 = vsub.f32 %v3008, %v3014
    %v3016 = vmul.f32 %v3015, %v3015
    %v3017 = vsel %vm80, %v3016, 0.0
    %3018 = vadd.xlane.f32.xlu0 %v3017
    %v3019 = vpop.xlane.xlu0 %3018
    %v3020 = vmul.f32 %v3019, %v1318
    %v3021 = vadd.f32 %v3020, 1e-06
    %v3022 = vrsqrt.pop %v3021
    %v3023 = vmul.f32 %v3015, %v3022
    %v3024 = vlaneseq
    %v3025 = vshrl.u32 %v3024, 7
    %v3026 = vsub.s32 0, %v3025
    %v3027 = vrot.slane %v3009, %v3026
    %v3028 = vmul.f32 %v3027, %v3023
    %v3029 = vlaneseq
    %v3030 = vshrl.u32 %v3029, 7
    %v3031 = vsub.s32 0, %v3030
    %v3032 = vrot.slane %v3010, %v3031
    %v3033 = vadd.f32 %v3028, %v3032
    %3034 = vst.msk [vmem:[#allocation5] sm:$0xff] %vm80, %v3033
    %s3035 = scalar_lea.vmem %s0, 8
    %v3036 = vld [vmem:[%s3035] sm:$0xff]
    %s3037 = scalar_lea.vmem %s1, 8
    %v3038 = vld [vmem:[%s3037] sm:$0xff]
    %v3039 = vld [vmem:[%s2 + $0x1] sm:$0x1]
    %v3040 = vld [vmem:[#allocation2] sm:$0xff]
    %v3041 = vld [vmem:[#allocation2 + $0x8] sm:$0xff]
    %v3042 = vld [vmem:[#allocation2 + $0x10] sm:$0xff]
    %v3043 = vld [vmem:[#allocation2 + $0x18] sm:$0xff]
    %v3044 = vld [vmem:[%s60] sm:$0xff]
    %v3045 = vld [vmem:[%s60 + $0x8] sm:$0xff]
    %v3046 = vld [vmem:[%s60 + $0x10] sm:$0xff]
    %v3047 = vld [vmem:[%s60 + $0x18] sm:$0xff]
    %v3048 = vld [vmem:[%s65] sm:$0xff]
    %v3049 = vld [vmem:[%s65 + $0x8] sm:$0xff]
    %v3050 = vld [vmem:[%s65 + $0x10] sm:$0xff]
    %v3051 = vld [vmem:[%s65 + $0x18] sm:$0xff]
    %v3052 = vld [vmem:[%s70] sm:$0xff]
    %v3053 = vld [vmem:[%s70 + $0x8] sm:$0xff]
    %v3054 = vld [vmem:[%s70 + $0x10] sm:$0xff]
    %v3055 = vld [vmem:[%s70 + $0x18] sm:$0xff]
    %v3056 = vld [vmem:[%s4] sm:$0x1]
    %v3057 = vlaneseq
    %v3058 = vshrl.u32 %v3057, 7
    %v3059 = vsub.s32 0, %v3058
    %v3060 = vrot.slane %v3056, %v3059
    %v3062 = vsel %vm80, %v3038, 0
    %3064 = vmatprep.subr.mxu0 0.0
    %3065 = vmatpush1.msra.mxu0 %v3040
    %3066 = vmatprep.subr.mxu0 0.0
    %3067 = vmatpush1.msra.mxu0 %v3041
    %3068 = vmatprep.subr.mxu0 0.0
    %3069 = vmatpush1.msra.mxu0 %v3042
    %3070 = vmatprep.subr.mxu0 0.0
    %3071 = vmatpush1.msra.mxu0 %v3043
    %3072 = vmatprep.subr.mxu0 0.0
    %3073 = vmatpush1.msra.mxu0 0.0
    %3074 = vmatprep.subr.mxu0 0.0
    %3075 = vmatpush1.msra.mxu0 0.0
    %3076 = vmatprep.subr.mxu0 0.0
    %3077 = vmatpush1.msra.mxu0 0.0
    %3078 = vmatprep.subr.mxu0 0.0
    %3079 = vmatpush1.msra.mxu0 0.0
    %3080 = vmatprep.subr.mxu0 0.0
    %3081 = vmatpush1.msra.mxu0 0.0
    %3082 = vmatprep.subr.mxu0 0.0
    %3083 = vmatpush1.msra.mxu0 0.0
    %3084 = vmatprep.subr.mxu0 0.0
    %3085 = vmatpush1.msra.mxu0 0.0
    %3086 = vmatprep.subr.mxu0 0.0
    %3087 = vmatpush1.msra.mxu0 0.0
    %3088 = vmatprep.subr.mxu0 0.0
    %3089 = vmatpush1.msra.mxu0 0.0
    %3090 = vmatprep.subr.mxu0 0.0
    %3091 = vmatpush1.msra.mxu0 0.0
    %3092 = vmatprep.subr.mxu0 0.0
    %3093 = vmatpush1.msra.mxu0 0.0
    %3094 = vmatprep.subr.mxu0 0.0
    %3095 = vmatpush1.msra.mxu0 0.0
    %3096 = vmatprep.subr.mxu0 0.0
    %3097 = vmatpush1.msra.mxu0 0.0
    %3098 = vmatprep.subr.mxu0 0.0
    %3099 = vmatpush1.msra.mxu0 0.0
    %3100 = vmatprep.subr.mxu0 0.0
    %3101 = vmatpush1.msra.mxu0 0.0
    %3102 = vmatprep.subr.mxu0 0.0
    %3103 = vmatpush1.msra.mxu0 0.0
    %3104 = vmatprep.subr.mxu0 0.0
    %3105 = vmatpush1.msra.mxu0 0.0
    %3106 = vmatprep.subr.mxu0 0.0
    %3107 = vmatpush1.msra.mxu0 0.0
    %3108 = vmatprep.subr.mxu0 0.0
    %3109 = vmatpush1.msra.mxu0 0.0
    %3110 = vmatprep.subr.mxu0 0.0
    %3111 = vmatpush1.msra.mxu0 0.0
    %3112 = vmatprep.subr.mxu0 0.0
    %3113 = vmatpush1.msra.mxu0 0.0
    %3114 = vmatprep.subr.mxu0 0.0
    %3115 = vmatpush1.msra.mxu0 0.0
    %3116 = vmatprep.subr.mxu0 0.0
    %3117 = vmatpush1.msra.mxu0 0.0
    %3118 = vmatprep.subr.mxu0 0.0
    %3119 = vmatpush1.msra.mxu0 0.0
    %3120 = vmatprep.subr.mxu0 0.0
    %3121 = vmatpush1.msra.mxu0 0.0
    %3122 = vmatprep.subr.mxu0 0.0
    %3123 = vmatpush1.msra.mxu0 0.0
    %3124 = vmatprep.subr.mxu0 0.0
    %3125 = vmatpush1.msra.mxu0 0.0
    %3126 = vmatprep.subr.mxu0 0.0
    %3127 = vmatpush1.msra.mxu0 0.0
    %3128 = vmatprep.mubr.f32.mxu0 0.0
    %3129 = vmatmul.mubr.f32.gmra.mrb[0].mxu0 %v3062
    %v3130 = vpop.f32.mrb[0].mxu0
    %v3131 = vadd.f32 %v3060, %v3130
    %v3132 = vpop.f32.mrb[0].mxu0
    %3133 = vdwg.mxu0
    %v3134 = vld [vmem:[%s4 + $0x1] sm:$0x1]
    %v3135 = vlaneseq
    %v3136 = vshrl.u32 %v3135, 7
    %v3137 = vsub.s32 0, %v3136
    %v3138 = vrot.slane %v3134, %v3137
    %v3140 = vsel %vm80, %v3036, 0
    %3142 = vmatprep.subr.mxu0 0.0
    %3143 = vmatpush1.msra.mxu0 %v3044
    %3144 = vmatprep.subr.mxu0 0.0
    %3145 = vmatpush1.msra.mxu0 %v3045
    %3146 = vmatprep.subr.mxu0 0.0
    %3147 = vmatpush1.msra.mxu0 %v3046
    %3148 = vmatprep.subr.mxu0 0.0
    %3149 = vmatpush1.msra.mxu0 %v3047
    %3150 = vmatprep.subr.mxu0 0.0
    %3151 = vmatpush1.msra.mxu0 0.0
    %3152 = vmatprep.subr.mxu0 0.0
    %3153 = vmatpush1.msra.mxu0 0.0
    %3154 = vmatprep.subr.mxu0 0.0
    %3155 = vmatpush1.msra.mxu0 0.0
    %3156 = vmatprep.subr.mxu0 0.0
    %3157 = vmatpush1.msra.mxu0 0.0
    %3158 = vmatprep.subr.mxu0 0.0
    %3159 = vmatpush1.msra.mxu0 0.0
    %3160 = vmatprep.subr.mxu0 0.0
    %3161 = vmatpush1.msra.mxu0 0.0
    %3162 = vmatprep.subr.mxu0 0.0
    %3163 = vmatpush1.msra.mxu0 0.0
    %3164 = vmatprep.subr.mxu0 0.0
    %3165 = vmatpush1.msra.mxu0 0.0
    %3166 = vmatprep.subr.mxu0 0.0
    %3167 = vmatpush1.msra.mxu0 0.0
    %3168 = vmatprep.subr.mxu0 0.0
    %3169 = vmatpush1.msra.mxu0 0.0
    %3170 = vmatprep.subr.mxu0 0.0
    %3171 = vmatpush1.msra.mxu0 0.0
    %3172 = vmatprep.subr.mxu0 0.0
    %3173 = vmatpush1.msra.mxu0 0.0
    %3174 = vmatprep.subr.mxu0 0.0
    %3175 = vmatpush1.msra.mxu0 0.0
    %3176 = vmatprep.subr.mxu0 0.0
    %3177 = vmatpush1.msra.mxu0 0.0
    %3178 = vmatprep.subr.mxu0 0.0
    %3179 = vmatpush1.msra.mxu0 0.0
    %3180 = vmatprep.subr.mxu0 0.0
    %3181 = vmatpush1.msra.mxu0 0.0
    %3182 = vmatprep.subr.mxu0 0.0
    %3183 = vmatpush1.msra.mxu0 0.0
    %3184 = vmatprep.subr.mxu0 0.0
    %3185 = vmatpush1.msra.mxu0 0.0
    %3186 = vmatprep.subr.mxu0 0.0
    %3187 = vmatpush1.msra.mxu0 0.0
    %3188 = vmatprep.subr.mxu0 0.0
    %3189 = vmatpush1.msra.mxu0 0.0
    %3190 = vmatprep.subr.mxu0 0.0
    %3191 = vmatpush1.msra.mxu0 0.0
    %3192 = vmatprep.subr.mxu0 0.0
    %3193 = vmatpush1.msra.mxu0 0.0
    %3194 = vmatprep.subr.mxu0 0.0
    %3195 = vmatpush1.msra.mxu0 0.0
    %3196 = vmatprep.subr.mxu0 0.0
    %3197 = vmatpush1.msra.mxu0 0.0
    %3198 = vmatprep.subr.mxu0 0.0
    %3199 = vmatpush1.msra.mxu0 0.0
    %3200 = vmatprep.subr.mxu0 0.0
    %3201 = vmatpush1.msra.mxu0 0.0
    %3202 = vmatprep.subr.mxu0 0.0
    %3203 = vmatpush1.msra.mxu0 0.0
    %3204 = vmatprep.subr.mxu0 0.0
    %3205 = vmatpush1.msra.mxu0 0.0
    %3206 = vmatprep.mubr.f32.mxu0 0.0
    %3207 = vmatmul.mubr.f32.gmra.mrb[0].mxu0 %v3140
    %v3208 = vpop.f32.mrb[0].mxu0
    %v3209 = vadd.f32 %v3138, %v3208
    %v3210 = vpop.f32.mrb[0].mxu0
    %3211 = vmatprep.mubr.f32.mxu0 0.0
    %3212 = vmatmul.mubr.f32.gmra.mrb[0].mxu0 %v3062
    %v3213 = vpop.f32.mrb[0].mxu0
    %v3214 = vadd.f32 %v3138, %v3213
    %v3215 = vpop.f32.mrb[0].mxu0
    %3216 = vdwg.mxu0
    %v3217 = vld [vmem:[%s4 + $0x2] sm:$0x1]
    %v3218 = vlaneseq
    %v3219 = vshrl.u32 %v3218, 7
    %v3220 = vsub.s32 0, %v3219
    %v3221 = vrot.slane %v3217, %v3220
    %3222 = vmatprep.subr.mxu0 0.0
    %3223 = vmatpush1.msra.mxu0 %v3048
    %3224 = vmatprep.subr.mxu0 0.0
    %3225 = vmatpush1.msra.mxu0 %v3049
    %3226 = vmatprep.subr.mxu0 0.0
    %3227 = vmatpush1.msra.mxu0 %v3050
    %3228 = vmatprep.subr.mxu0 0.0
    %3229 = vmatpush1.msra.mxu0 %v3051
    %3230 = vmatprep.subr.mxu0 0.0
    %3231 = vmatpush1.msra.mxu0 0.0
    %3232 = vmatprep.subr.mxu0 0.0
    %3233 = vmatpush1.msra.mxu0 0.0
    %3234 = vmatprep.subr.mxu0 0.0
    %3235 = vmatpush1.msra.mxu0 0.0
    %3236 = vmatprep.subr.mxu0 0.0
    %3237 = vmatpush1.msra.mxu0 0.0
    %3238 = vmatprep.subr.mxu0 0.0
    %3239 = vmatpush1.msra.mxu0 0.0
    %3240 = vmatprep.subr.mxu0 0.0
    %3241 = vmatpush1.msra.mxu0 0.0
    %3242 = vmatprep.subr.mxu0 0.0
    %3243 = vmatpush1.msra.mxu0 0.0
    %3244 = vmatprep.subr.mxu0 0.0
    %3245 = vmatpush1.msra.mxu0 0.0
    %3246 = vmatprep.subr.mxu0 0.0
    %3247 = vmatpush1.msra.mxu0 0.0
    %3248 = vmatprep.subr.mxu0 0.0
    %3249 = vmatpush1.msra.mxu0 0.0
    %3250 = vmatprep.subr.mxu0 0.0
    %3251 = vmatpush1.msra.mxu0 0.0
    %3252 = vmatprep.subr.mxu0 0.0
    %3253 = vmatpush1.msra.mxu0 0.0
    %3254 = vmatprep.subr.mxu0 0.0
    %3255 = vmatpush1.msra.mxu0 0.0
    %3256 = vmatprep.subr.mxu0 0.0
    %3257 = vmatpush1.msra.mxu0 0.0
    %3258 = vmatprep.subr.mxu0 0.0
    %3259 = vmatpush1.msra.mxu0 0.0
    %3260 = vmatprep.subr.mxu0 0.0
    %3261 = vmatpush1.msra.mxu0 0.0
    %3262 = vmatprep.subr.mxu0 0.0
    %3263 = vmatpush1.msra.mxu0 0.0
    %3264 = vmatprep.subr.mxu0 0.0
    %3265 = vmatpush1.msra.mxu0 0.0
    %3266 = vmatprep.subr.mxu0 0.0
    %3267 = vmatpush1.msra.mxu0 0.0
    %3268 = vmatprep.subr.mxu0 0.0
    %3269 = vmatpush1.msra.mxu0 0.0
    %3270 = vmatprep.subr.mxu0 0.0
    %3271 = vmatpush1.msra.mxu0 0.0
    %3272 = vmatprep.subr.mxu0 0.0
    %3273 = vmatpush1.msra.mxu0 0.0
    %3274 = vmatprep.subr.mxu0 0.0
    %3275 = vmatpush1.msra.mxu0 0.0
    %3276 = vmatprep.subr.mxu0 0.0
    %3277 = vmatpush1.msra.mxu0 0.0
    %3278 = vmatprep.subr.mxu0 0.0
    %3279 = vmatpush1.msra.mxu0 0.0
    %3280 = vmatprep.subr.mxu0 0.0
    %3281 = vmatpush1.msra.mxu0 0.0
    %3282 = vmatprep.subr.mxu0 0.0
    %3283 = vmatpush1.msra.mxu0 0.0
    %3284 = vmatprep.subr.mxu0 0.0
    %3285 = vmatpush1.msra.mxu0 0.0
    %3286 = vmatprep.mubr.f32.mxu0 0.0
    %3287 = vmatmul.mubr.f32.gmra.mrb[0].mxu0 %v3140
    %v3288 = vpop.f32.mrb[0].mxu0
    %v3289 = vadd.f32 %v3221, %v3288
    %v3290 = vpop.f32.mrb[0].mxu0
    %3291 = vmatprep.mubr.f32.mxu0 0.0
    %3292 = vmatmul.mubr.f32.gmra.mrb[0].mxu0 %v3062
    %v3293 = vpop.f32.mrb[0].mxu0
    %v3294 = vadd.f32 %v3221, %v3293
    %v3295 = vpop.f32.mrb[0].mxu0
    %3296 = vdwg.mxu0
    %v3298 = vsel %vm317, %v3131, 0
    %v3301 = vsel %vm317, %v3209, 0
    %v3304 = vsel %vm317, %v3214, 0
    %3306 = vmatprep.subr.mxu0 0.0
    %3307 = vmatpush1.xpose.msra.mxu0 %v3301
    %3308 = vmatprep.subr.mxu0 0.0
    %3309 = vmatpush1.xpose.msra.mxu0 %v3304
    %3310 = vmatprep.subr.mxu0 0.0
    %3311 = vmatpush1.xpose.msra.mxu0 0.0
    %3312 = vmatprep.subr.mxu0 0.0
    %3313 = vmatpush1.xpose.msra.mxu0 0.0
    %3314 = vmatprep.subr.mxu0 0.0
    %3315 = vmatpush1.xpose.msra.mxu0 0.0
    %3316 = vmatprep.subr.mxu0 0.0
    %3317 = vmatpush1.xpose.msra.mxu0 0.0
    %3318 = vmatprep.subr.mxu0 0.0
    %3319 = vmatpush1.xpose.msra.mxu0 0.0
    %3320 = vmatprep.subr.mxu0 0.0
    %3321 = vmatpush1.xpose.msra.mxu0 0.0
    %3322 = vmatprep.subr.mxu0 0.0
    %3323 = vmatpush1.xpose.msra.mxu0 0.0
    %3324 = vmatprep.subr.mxu0 0.0
    %3325 = vmatpush1.xpose.msra.mxu0 0.0
    %3326 = vmatprep.subr.mxu0 0.0
    %3327 = vmatpush1.xpose.msra.mxu0 0.0
    %3328 = vmatprep.subr.mxu0 0.0
    %3329 = vmatpush1.xpose.msra.mxu0 0.0
    %3330 = vmatprep.subr.mxu0 0.0
    %3331 = vmatpush1.xpose.msra.mxu0 0.0
    %3332 = vmatprep.subr.mxu0 0.0
    %3333 = vmatpush1.xpose.msra.mxu0 0.0
    %3334 = vmatprep.subr.mxu0 0.0
    %3335 = vmatpush1.xpose.msra.mxu0 0.0
    %3336 = vmatprep.subr.mxu0 0.0
    %3337 = vmatpush1.xpose.msra.mxu0 0.0
    %3338 = vmatprep.subr.mxu0 0.0
    %3339 = vmatpush1.xpose.msra.mxu0 0.0
    %3340 = vmatprep.subr.mxu0 0.0
    %3341 = vmatpush1.xpose.msra.mxu0 0.0
    %3342 = vmatprep.subr.mxu0 0.0
    %3343 = vmatpush1.xpose.msra.mxu0 0.0
    %3344 = vmatprep.subr.mxu0 0.0
    %3345 = vmatpush1.xpose.msra.mxu0 0.0
    %3346 = vmatprep.subr.mxu0 0.0
    %3347 = vmatpush1.xpose.msra.mxu0 0.0
    %3348 = vmatprep.subr.mxu0 0.0
    %3349 = vmatpush1.xpose.msra.mxu0 0.0
    %3350 = vmatprep.subr.mxu0 0.0
    %3351 = vmatpush1.xpose.msra.mxu0 0.0
    %3352 = vmatprep.subr.mxu0 0.0
    %3353 = vmatpush1.xpose.msra.mxu0 0.0
    %3354 = vmatprep.subr.mxu0 0.0
    %3355 = vmatpush1.xpose.msra.mxu0 0.0
    %3356 = vmatprep.subr.mxu0 0.0
    %3357 = vmatpush1.xpose.msra.mxu0 0.0
    %3358 = vmatprep.subr.mxu0 0.0
    %3359 = vmatpush1.xpose.msra.mxu0 0.0
    %3360 = vmatprep.subr.mxu0 0.0
    %3361 = vmatpush1.xpose.msra.mxu0 0.0
    %3362 = vmatprep.subr.mxu0 0.0
    %3363 = vmatpush1.xpose.msra.mxu0 0.0
    %3364 = vmatprep.subr.mxu0 0.0
    %3365 = vmatpush1.xpose.msra.mxu0 0.0
    %3366 = vmatprep.subr.mxu0 0.0
    %3367 = vmatpush1.xpose.msra.mxu0 0.0
    %3368 = vmatprep.subr.mxu0 0.0
    %3369 = vmatpush1.xpose.msra.mxu0 0.0
    %3370 = vmatprep.mubr.f32.mxu0 0.0
    %3371 = vmatmul.mubr.f32.gmra.mrb[0].mxu0 %v3298
    %v3372 = vpop.f32.mrb[0].mxu0
    %v3373 = vadd.f32 0.0, %v3372
    %v3374 = vpop.f32.mrb[0].mxu0
    %3375 = vdwg.mxu0
    %v3376 = vmul.f32 %v3373, 0.35355338
    %v3377 = vlaneseq
    %v3378 = vshrl.u32 %v3377, 7
    %v3379 = vsub.s32 0, %v3378
    %v3380 = vrot.slane %v3039, %v3379
    %v3381 = vadd.f32 %v3376, %v3380
    %v3382 = vsel %vm403, %v3381, -inf
    %3383 = vmax.xlane.f32.xlu0 %v3382
    %v3384 = vpop.xlane.xlu0 %3383
    %v3385 = vsub.f32 %v3381, %v3384
    %v3386 = vmul.f32 %v3385, 1.442695
    %v3387 = vpow.pop %v3386
    %v3388 = vsel %vm403, %v3387, 0.0
    %3389 = vadd.xlane.f32.xlu0 %v3388
    %v3390 = vpop.xlane.xlu0 %3389
    %v3391 = vrcp.pop %v3390
    %v3392 = vmul.f32 %v3387, %v3391
    %v3394 = vsel %vm403, %v3392, 0
    %3396 = vmatprep.subr.mxu0 0.0
    %3397 = vmatpush1.msra.mxu0 %v3289
    %3398 = vmatprep.subr.mxu0 0.0
    %3399 = vmatpush1.msra.mxu0 %v3294
    %3400 = vmatprep.subr.mxu0 0.0
    %3401 = vmatpush1.msra.mxu0 0.0
    %3402 = vmatprep.subr.mxu0 0.0
    %3403 = vmatpush1.msra.mxu0 0.0
    %3404 = vmatprep.subr.mxu0 0.0
    %3405 = vmatpush1.msra.mxu0 0.0
    %3406 = vmatprep.subr.mxu0 0.0
    %3407 = vmatpush1.msra.mxu0 0.0
    %3408 = vmatprep.subr.mxu0 0.0
    %3409 = vmatpush1.msra.mxu0 0.0
    %3410 = vmatprep.subr.mxu0 0.0
    %3411 = vmatpush1.msra.mxu0 0.0
    %3412 = vmatprep.subr.mxu0 0.0
    %3413 = vmatpush1.msra.mxu0 0.0
    %3414 = vmatprep.subr.mxu0 0.0
    %3415 = vmatpush1.msra.mxu0 0.0
    %3416 = vmatprep.subr.mxu0 0.0
    %3417 = vmatpush1.msra.mxu0 0.0
    %3418 = vmatprep.subr.mxu0 0.0
    %3419 = vmatpush1.msra.mxu0 0.0
    %3420 = vmatprep.subr.mxu0 0.0
    %3421 = vmatpush1.msra.mxu0 0.0
    %3422 = vmatprep.subr.mxu0 0.0
    %3423 = vmatpush1.msra.mxu0 0.0
    %3424 = vmatprep.subr.mxu0 0.0
    %3425 = vmatpush1.msra.mxu0 0.0
    %3426 = vmatprep.subr.mxu0 0.0
    %3427 = vmatpush1.msra.mxu0 0.0
    %3428 = vmatprep.subr.mxu0 0.0
    %3429 = vmatpush1.msra.mxu0 0.0
    %3430 = vmatprep.subr.mxu0 0.0
    %3431 = vmatpush1.msra.mxu0 0.0
    %3432 = vmatprep.subr.mxu0 0.0
    %3433 = vmatpush1.msra.mxu0 0.0
    %3434 = vmatprep.subr.mxu0 0.0
    %3435 = vmatpush1.msra.mxu0 0.0
    %3436 = vmatprep.subr.mxu0 0.0
    %3437 = vmatpush1.msra.mxu0 0.0
    %3438 = vmatprep.subr.mxu0 0.0
    %3439 = vmatpush1.msra.mxu0 0.0
    %3440 = vmatprep.subr.mxu0 0.0
    %3441 = vmatpush1.msra.mxu0 0.0
    %3442 = vmatprep.subr.mxu0 0.0
    %3443 = vmatpush1.msra.mxu0 0.0
    %3444 = vmatprep.subr.mxu0 0.0
    %3445 = vmatpush1.msra.mxu0 0.0
    %3446 = vmatprep.subr.mxu0 0.0
    %3447 = vmatpush1.msra.mxu0 0.0
    %3448 = vmatprep.subr.mxu0 0.0
    %3449 = vmatpush1.msra.mxu0 0.0
    %3450 = vmatprep.subr.mxu0 0.0
    %3451 = vmatpush1.msra.mxu0 0.0
    %3452 = vmatprep.subr.mxu0 0.0
    %3453 = vmatpush1.msra.mxu0 0.0
    %3454 = vmatprep.subr.mxu0 0.0
    %3455 = vmatpush1.msra.mxu0 0.0
    %3456 = vmatprep.subr.mxu0 0.0
    %3457 = vmatpush1.msra.mxu0 0.0
    %3458 = vmatprep.subr.mxu0 0.0
    %3459 = vmatpush1.msra.mxu0 0.0
    %3460 = vmatprep.mubr.f32.mxu0 0.0
    %3461 = vmatmul.mubr.f32.gmra.mrb[0].mxu0 %v3394
    %v3462 = vpop.f32.mrb[0].mxu0
    %v3463 = vadd.f32 0.0, %v3462
    %v3464 = vpop.f32.mrb[0].mxu0
    %3465 = vdwg.mxu0
    %3466 = vrot.lane.b32.xlu0 %v3131, 120
    %v3467 = vpop.permute.xlu0 %3466
    %3468 = vrot.lane.b32.xlu0 %v3209, 120
    %v3469 = vpop.permute.xlu0 %3468
    %3470 = vrot.lane.b32.xlu0 %v3214, 120
    %v3471 = vpop.permute.xlu0 %3470
    %v3472 = vsel %vm317, %v3467, 0
    %v3474 = vsel %vm317, %v3469, 0
    %v3476 = vsel %vm317, %v3471, 0
    %3478 = vmatprep.subr.mxu0 0.0
    %3479 = vmatpush1.xpose.msra.mxu0 %v3474
    %3480 = vmatprep.subr.mxu0 0.0
    %3481 = vmatpush1.xpose.msra.mxu0 %v3476
    %3482 = vmatprep.subr.mxu0 0.0
    %3483 = vmatpush1.xpose.msra.mxu0 0.0
    %3484 = vmatprep.subr.mxu0 0.0
    %3485 = vmatpush1.xpose.msra.mxu0 0.0
    %3486 = vmatprep.subr.mxu0 0.0
    %3487 = vmatpush1.xpose.msra.mxu0 0.0
    %3488 = vmatprep.subr.mxu0 0.0
    %3489 = vmatpush1.xpose.msra.mxu0 0.0
    %3490 = vmatprep.subr.mxu0 0.0
    %3491 = vmatpush1.xpose.msra.mxu0 0.0
    %3492 = vmatprep.subr.mxu0 0.0
    %3493 = vmatpush1.xpose.msra.mxu0 0.0
    %3494 = vmatprep.subr.mxu0 0.0
    %3495 = vmatpush1.xpose.msra.mxu0 0.0
    %3496 = vmatprep.subr.mxu0 0.0
    %3497 = vmatpush1.xpose.msra.mxu0 0.0
    %3498 = vmatprep.subr.mxu0 0.0
    %3499 = vmatpush1.xpose.msra.mxu0 0.0
    %3500 = vmatprep.subr.mxu0 0.0
    %3501 = vmatpush1.xpose.msra.mxu0 0.0
    %3502 = vmatprep.subr.mxu0 0.0
    %3503 = vmatpush1.xpose.msra.mxu0 0.0
    %3504 = vmatprep.subr.mxu0 0.0
    %3505 = vmatpush1.xpose.msra.mxu0 0.0
    %3506 = vmatprep.subr.mxu0 0.0
    %3507 = vmatpush1.xpose.msra.mxu0 0.0
    %3508 = vmatprep.subr.mxu0 0.0
    %3509 = vmatpush1.xpose.msra.mxu0 0.0
    %3510 = vmatprep.subr.mxu0 0.0
    %3511 = vmatpush1.xpose.msra.mxu0 0.0
    %3512 = vmatprep.subr.mxu0 0.0
    %3513 = vmatpush1.xpose.msra.mxu0 0.0
    %3514 = vmatprep.subr.mxu0 0.0
    %3515 = vmatpush1.xpose.msra.mxu0 0.0
    %3516 = vmatprep.subr.mxu0 0.0
    %3517 = vmatpush1.xpose.msra.mxu0 0.0
    %3518 = vmatprep.subr.mxu0 0.0
    %3519 = vmatpush1.xpose.msra.mxu0 0.0
    %3520 = vmatprep.subr.mxu0 0.0
    %3521 = vmatpush1.xpose.msra.mxu0 0.0
    %3522 = vmatprep.subr.mxu0 0.0
    %3523 = vmatpush1.xpose.msra.mxu0 0.0
    %3524 = vmatprep.subr.mxu0 0.0
    %3525 = vmatpush1.xpose.msra.mxu0 0.0
    %3526 = vmatprep.subr.mxu0 0.0
    %3527 = vmatpush1.xpose.msra.mxu0 0.0
    %3528 = vmatprep.subr.mxu0 0.0
    %3529 = vmatpush1.xpose.msra.mxu0 0.0
    %3530 = vmatprep.subr.mxu0 0.0
    %3531 = vmatpush1.xpose.msra.mxu0 0.0
    %3532 = vmatprep.subr.mxu0 0.0
    %3533 = vmatpush1.xpose.msra.mxu0 0.0
    %3534 = vmatprep.subr.mxu0 0.0
    %3535 = vmatpush1.xpose.msra.mxu0 0.0
    %3536 = vmatprep.subr.mxu0 0.0
    %3537 = vmatpush1.xpose.msra.mxu0 0.0
    %3538 = vmatprep.subr.mxu0 0.0
    %3539 = vmatpush1.xpose.msra.mxu0 0.0
    %3540 = vmatprep.subr.mxu0 0.0
    %3541 = vmatpush1.xpose.msra.mxu0 0.0
    %3542 = vmatprep.mubr.f32.mxu0 0.0
    %3543 = vmatmul.mubr.f32.gmra.mrb[0].mxu0 %v3472
    %v3544 = vpop.f32.mrb[0].mxu0
    %v3545 = vadd.f32 0.0, %v3544
    %v3546 = vpop.f32.mrb[0].mxu0
    %3547 = vdwg.mxu0
    %v3548 = vmul.f32 %v3545, 0.35355338
    %v3549 = vadd.f32 %v3548, %v3380
    %v3550 = vsel %vm403, %v3549, -inf
    %3551 = vmax.xlane.f32.xlu0 %v3550
    %v3552 = vpop.xlane.xlu0 %3551
    %v3553 = vsub.f32 %v3549, %v3552
    %v3554 = vmul.f32 %v3553, 1.442695
    %v3555 = vpow.pop %v3554
    %v3556 = vsel %vm403, %v3555, 0.0
    %3557 = vadd.xlane.f32.xlu0 %v3556
    %v3558 = vpop.xlane.xlu0 %3557
    %v3559 = vrcp.pop %v3558
    %v3560 = vmul.f32 %v3555, %v3559
    %3563 = vrot.lane.b32.xlu0 %v3289, 120
    %v3564 = vpop.permute.xlu0 %3563
    %3565 = vrot.lane.b32.xlu0 %v3294, 120
    %v3566 = vpop.permute.xlu0 %3565
    %v3570 = vsel %vm403, %v3560, 0
    %3572 = vmatprep.subr.mxu0 0.0
    %3573 = vmatpush1.msra.mxu0 %v3564
    %3574 = vmatprep.subr.mxu0 0.0
    %3575 = vmatpush1.msra.mxu0 %v3566
    %3576 = vmatprep.subr.mxu0 0.0
    %3577 = vmatpush1.msra.mxu0 0.0
    %3578 = vmatprep.subr.mxu0 0.0
    %3579 = vmatpush1.msra.mxu0 0.0
    %3580 = vmatprep.subr.mxu0 0.0
    %3581 = vmatpush1.msra.mxu0 0.0
    %3582 = vmatprep.subr.mxu0 0.0
    %3583 = vmatpush1.msra.mxu0 0.0
    %3584 = vmatprep.subr.mxu0 0.0
    %3585 = vmatpush1.msra.mxu0 0.0
    %3586 = vmatprep.subr.mxu0 0.0
    %3587 = vmatpush1.msra.mxu0 0.0
    %3588 = vmatprep.subr.mxu0 0.0
    %3589 = vmatpush1.msra.mxu0 0.0
    %3590 = vmatprep.subr.mxu0 0.0
    %3591 = vmatpush1.msra.mxu0 0.0
    %3592 = vmatprep.subr.mxu0 0.0
    %3593 = vmatpush1.msra.mxu0 0.0
    %3594 = vmatprep.subr.mxu0 0.0
    %3595 = vmatpush1.msra.mxu0 0.0
    %3596 = vmatprep.subr.mxu0 0.0
    %3597 = vmatpush1.msra.mxu0 0.0
    %3598 = vmatprep.subr.mxu0 0.0
    %3599 = vmatpush1.msra.mxu0 0.0
    %3600 = vmatprep.subr.mxu0 0.0
    %3601 = vmatpush1.msra.mxu0 0.0
    %3602 = vmatprep.subr.mxu0 0.0
    %3603 = vmatpush1.msra.mxu0 0.0
    %3604 = vmatprep.subr.mxu0 0.0
    %3605 = vmatpush1.msra.mxu0 0.0
    %3606 = vmatprep.subr.mxu0 0.0
    %3607 = vmatpush1.msra.mxu0 0.0
    %3608 = vmatprep.subr.mxu0 0.0
    %3609 = vmatpush1.msra.mxu0 0.0
    %3610 = vmatprep.subr.mxu0 0.0
    %3611 = vmatpush1.msra.mxu0 0.0
    %3612 = vmatprep.subr.mxu0 0.0
    %3613 = vmatpush1.msra.mxu0 0.0
    %3614 = vmatprep.subr.mxu0 0.0
    %3615 = vmatpush1.msra.mxu0 0.0
    %3616 = vmatprep.subr.mxu0 0.0
    %3617 = vmatpush1.msra.mxu0 0.0
    %3618 = vmatprep.subr.mxu0 0.0
    %3619 = vmatpush1.msra.mxu0 0.0
    %3620 = vmatprep.subr.mxu0 0.0
    %3621 = vmatpush1.msra.mxu0 0.0
    %3622 = vmatprep.subr.mxu0 0.0
    %3623 = vmatpush1.msra.mxu0 0.0
    %3624 = vmatprep.subr.mxu0 0.0
    %3625 = vmatpush1.msra.mxu0 0.0
    %3626 = vmatprep.subr.mxu0 0.0
    %3627 = vmatpush1.msra.mxu0 0.0
    %3628 = vmatprep.subr.mxu0 0.0
    %3629 = vmatpush1.msra.mxu0 0.0
    %3630 = vmatprep.subr.mxu0 0.0
    %3631 = vmatpush1.msra.mxu0 0.0
    %3632 = vmatprep.subr.mxu0 0.0
    %3633 = vmatpush1.msra.mxu0 0.0
    %3634 = vmatprep.subr.mxu0 0.0
    %3635 = vmatpush1.msra.mxu0 0.0
    %3636 = vmatprep.mubr.f32.mxu0 0.0
    %3637 = vmatmul.mubr.f32.gmra.mrb[0].mxu0 %v3570
    %v3638 = vpop.f32.mrb[0].mxu0
    %v3639 = vadd.f32 0.0, %v3638
    %v3640 = vpop.f32.mrb[0].mxu0
    %3641 = vdwg.mxu0
    %v3643 = vsel %vm317, %v3639, 0
    %3645 = vmatprep.subr.mxu0 0.0
    %3646 = vmatpush1.msra.mxu0 %v3053
    %3647 = vmatprep.subr.mxu0 0.0
    %3648 = vmatpush1.msra.mxu0 0.0
    %3649 = vmatprep.subr.mxu0 0.0
    %3650 = vmatpush1.msra.mxu0 0.0
    %3651 = vmatprep.subr.mxu0 0.0
    %3652 = vmatpush1.msra.mxu0 0.0
    %3653 = vmatprep.subr.mxu0 0.0
    %3654 = vmatpush1.msra.mxu0 0.0
    %3655 = vmatprep.subr.mxu0 0.0
    %3656 = vmatpush1.msra.mxu0 0.0
    %3657 = vmatprep.subr.mxu0 0.0
    %3658 = vmatpush1.msra.mxu0 0.0
    %3659 = vmatprep.subr.mxu0 0.0
    %3660 = vmatpush1.msra.mxu0 0.0
    %3661 = vmatprep.subr.mxu0 0.0
    %3662 = vmatpush1.msra.mxu0 0.0
    %3663 = vmatprep.subr.mxu0 0.0
    %3664 = vmatpush1.msra.mxu0 0.0
    %3665 = vmatprep.subr.mxu0 0.0
    %3666 = vmatpush1.msra.mxu0 0.0
    %3667 = vmatprep.subr.mxu0 0.0
    %3668 = vmatpush1.msra.mxu0 0.0
    %3669 = vmatprep.subr.mxu0 0.0
    %3670 = vmatpush1.msra.mxu0 0.0
    %3671 = vmatprep.subr.mxu0 0.0
    %3672 = vmatpush1.msra.mxu0 0.0
    %3673 = vmatprep.subr.mxu0 0.0
    %3674 = vmatpush1.msra.mxu0 0.0
    %3675 = vmatprep.subr.mxu0 0.0
    %3676 = vmatpush1.msra.mxu0 0.0
    %3677 = vmatprep.subr.mxu0 0.0
    %3678 = vmatpush1.msra.mxu0 0.0
    %3679 = vmatprep.subr.mxu0 0.0
    %3680 = vmatpush1.msra.mxu0 0.0
    %3681 = vmatprep.subr.mxu0 0.0
    %3682 = vmatpush1.msra.mxu0 0.0
    %3683 = vmatprep.subr.mxu0 0.0
    %3684 = vmatpush1.msra.mxu0 0.0
    %3685 = vmatprep.subr.mxu0 0.0
    %3686 = vmatpush1.msra.mxu0 0.0
    %3687 = vmatprep.subr.mxu0 0.0
    %3688 = vmatpush1.msra.mxu0 0.0
    %3689 = vmatprep.subr.mxu0 0.0
    %3690 = vmatpush1.msra.mxu0 0.0
    %3691 = vmatprep.subr.mxu0 0.0
    %3692 = vmatpush1.msra.mxu0 0.0
    %3693 = vmatprep.subr.mxu0 0.0
    %3694 = vmatpush1.msra.mxu0 0.0
    %3695 = vmatprep.subr.mxu0 0.0
    %3696 = vmatpush1.msra.mxu0 0.0
    %3697 = vmatprep.subr.mxu0 0.0
    %3698 = vmatpush1.msra.mxu0 0.0
    %3699 = vmatprep.subr.mxu0 0.0
    %3700 = vmatpush1.msra.mxu0 0.0
    %3701 = vmatprep.subr.mxu0 0.0
    %3702 = vmatpush1.msra.mxu0 0.0
    %3703 = vmatprep.subr.mxu0 0.0
    %3704 = vmatpush1.msra.mxu0 0.0
    %3705 = vmatprep.subr.mxu0 0.0
    %3706 = vmatpush1.msra.mxu0 0.0
    %3707 = vmatprep.subr.mxu0 0.0
    %3708 = vmatpush1.msra.mxu0 0.0
    %3709 = vmatprep.mubr.f32.mxu0 0.0
    %3710 = vmatmul.mubr.f32.gmra.mrb[0].mxu0 %v3643
    %v3711 = vpop.f32.mrb[0].mxu0
    %v3712 = vadd.f32 0.0, %v3711
    %v3713 = vpop.f32.mrb[0].mxu0
    %3714 = vdwg.mxu0
    %v3716 = vsel %vm317, %v3463, 0
    %3718 = vmatprep.subr.mxu0 0.0
    %3719 = vmatpush1.msra.mxu0 %v3052
    %3720 = vmatprep.subr.mxu0 0.0
    %3721 = vmatpush1.msra.mxu0 0.0
    %3722 = vmatprep.subr.mxu0 0.0
    %3723 = vmatpush1.msra.mxu0 0.0
    %3724 = vmatprep.subr.mxu0 0.0
    %3725 = vmatpush1.msra.mxu0 0.0
    %3726 = vmatprep.subr.mxu0 0.0
    %3727 = vmatpush1.msra.mxu0 0.0
    %3728 = vmatprep.subr.mxu0 0.0
    %3729 = vmatpush1.msra.mxu0 0.0
    %3730 = vmatprep.subr.mxu0 0.0
    %3731 = vmatpush1.msra.mxu0 0.0
    %3732 = vmatprep.subr.mxu0 0.0
    %3733 = vmatpush1.msra.mxu0 0.0
    %3734 = vmatprep.subr.mxu0 0.0
    %3735 = vmatpush1.msra.mxu0 0.0
    %3736 = vmatprep.subr.mxu0 0.0
    %3737 = vmatpush1.msra.mxu0 0.0
    %3738 = vmatprep.subr.mxu0 0.0
    %3739 = vmatpush1.msra.mxu0 0.0
    %3740 = vmatprep.subr.mxu0 0.0
    %3741 = vmatpush1.msra.mxu0 0.0
    %3742 = vmatprep.subr.mxu0 0.0
    %3743 = vmatpush1.msra.mxu0 0.0
    %3744 = vmatprep.subr.mxu0 0.0
    %3745 = vmatpush1.msra.mxu0 0.0
    %3746 = vmatprep.subr.mxu0 0.0
    %3747 = vmatpush1.msra.mxu0 0.0
    %3748 = vmatprep.subr.mxu0 0.0
    %3749 = vmatpush1.msra.mxu0 0.0
    %3750 = vmatprep.subr.mxu0 0.0
    %3751 = vmatpush1.msra.mxu0 0.0
    %3752 = vmatprep.subr.mxu0 0.0
    %3753 = vmatpush1.msra.mxu0 0.0
    %3754 = vmatprep.subr.mxu0 0.0
    %3755 = vmatpush1.msra.mxu0 0.0
    %3756 = vmatprep.subr.mxu0 0.0
    %3757 = vmatpush1.msra.mxu0 0.0
    %3758 = vmatprep.subr.mxu0 0.0
    %3759 = vmatpush1.msra.mxu0 0.0
    %3760 = vmatprep.subr.mxu0 0.0
    %3761 = vmatpush1.msra.mxu0 0.0
    %3762 = vmatprep.subr.mxu0 0.0
    %3763 = vmatpush1.msra.mxu0 0.0
    %3764 = vmatprep.subr.mxu0 0.0
    %3765 = vmatpush1.msra.mxu0 0.0
    %3766 = vmatprep.subr.mxu0 0.0
    %3767 = vmatpush1.msra.mxu0 0.0
    %3768 = vmatprep.subr.mxu0 0.0
    %3769 = vmatpush1.msra.mxu0 0.0
    %3770 = vmatprep.subr.mxu0 0.0
    %3771 = vmatpush1.msra.mxu0 0.0
    %3772 = vmatprep.subr.mxu0 0.0
    %3773 = vmatpush1.msra.mxu0 0.0
    %3774 = vmatprep.subr.mxu0 0.0
    %3775 = vmatpush1.msra.mxu0 0.0
    %3776 = vmatprep.subr.mxu0 0.0
    %3777 = vmatpush1.msra.mxu0 0.0
    %3778 = vmatprep.subr.mxu0 0.0
    %3779 = vmatpush1.msra.mxu0 0.0
    %3780 = vmatprep.subr.mxu0 0.0
    %3781 = vmatpush1.msra.mxu0 0.0
    %3782 = vmatprep.mubr.f32.mxu0 0.0
    %3783 = vmatmul.mubr.f32.gmra.mrb[0].mxu0 %v3716
    %v3784 = vpop.f32.mrb[0].mxu0
    %v3785 = vadd.f32 %v3712, %v3784
    %v3786 = vpop.f32.mrb[0].mxu0
    %3787 = vdwg.mxu0
    %3788 = vrot.lane.b32.xlu0 %v3131, 112
    %v3789 = vpop.permute.xlu0 %3788
    %3790 = vrot.lane.b32.xlu0 %v3209, 112
    %v3791 = vpop.permute.xlu0 %3790
    %3792 = vrot.lane.b32.xlu0 %v3214, 112
    %v3793 = vpop.permute.xlu0 %3792
    %v3794 = vsel %vm317, %v3789, 0
    %v3796 = vsel %vm317, %v3791, 0
    %v3798 = vsel %vm317, %v3793, 0
    %3800 = vmatprep.subr.mxu0 0.0
    %3801 = vmatpush1.xpose.msra.mxu0 %v3796
    %3802 = vmatprep.subr.mxu0 0.0
    %3803 = vmatpush1.xpose.msra.mxu0 %v3798
    %3804 = vmatprep.subr.mxu0 0.0
    %3805 = vmatpush1.xpose.msra.mxu0 0.0
    %3806 = vmatprep.subr.mxu0 0.0
    %3807 = vmatpush1.xpose.msra.mxu0 0.0
    %3808 = vmatprep.subr.mxu0 0.0
    %3809 = vmatpush1.xpose.msra.mxu0 0.0
    %3810 = vmatprep.subr.mxu0 0.0
    %3811 = vmatpush1.xpose.msra.mxu0 0.0
    %3812 = vmatprep.subr.mxu0 0.0
    %3813 = vmatpush1.xpose.msra.mxu0 0.0
    %3814 = vmatprep.subr.mxu0 0.0
    %3815 = vmatpush1.xpose.msra.mxu0 0.0
    %3816 = vmatprep.subr.mxu0 0.0
    %3817 = vmatpush1.xpose.msra.mxu0 0.0
    %3818 = vmatprep.subr.mxu0 0.0
    %3819 = vmatpush1.xpose.msra.mxu0 0.0
    %3820 = vmatprep.subr.mxu0 0.0
    %3821 = vmatpush1.xpose.msra.mxu0 0.0
    %3822 = vmatprep.subr.mxu0 0.0
    %3823 = vmatpush1.xpose.msra.mxu0 0.0
    %3824 = vmatprep.subr.mxu0 0.0
    %3825 = vmatpush1.xpose.msra.mxu0 0.0
    %3826 = vmatprep.subr.mxu0 0.0
    %3827 = vmatpush1.xpose.msra.mxu0 0.0
    %3828 = vmatprep.subr.mxu0 0.0
    %3829 = vmatpush1.xpose.msra.mxu0 0.0
    %3830 = vmatprep.subr.mxu0 0.0
    %3831 = vmatpush1.xpose.msra.mxu0 0.0
    %3832 = vmatprep.subr.mxu0 0.0
    %3833 = vmatpush1.xpose.msra.mxu0 0.0
    %3834 = vmatprep.subr.mxu0 0.0
    %3835 = vmatpush1.xpose.msra.mxu0 0.0
    %3836 = vmatprep.subr.mxu0 0.0
    %3837 = vmatpush1.xpose.msra.mxu0 0.0
    %3838 = vmatprep.subr.mxu0 0.0
    %3839 = vmatpush1.xpose.msra.mxu0 0.0
    %3840 = vmatprep.subr.mxu0 0.0
    %3841 = vmatpush1.xpose.msra.mxu0 0.0
    %3842 = vmatprep.subr.mxu0 0.0
    %3843 = vmatpush1.xpose.msra.mxu0 0.0
    %3844 = vmatprep.subr.mxu0 0.0
    %3845 = vmatpush1.xpose.msra.mxu0 0.0
    %3846 = vmatprep.subr.mxu0 0.0
    %3847 = vmatpush1.xpose.msra.mxu0 0.0
    %3848 = vmatprep.subr.mxu0 0.0
    %3849 = vmatpush1.xpose.msra.mxu0 0.0
    %3850 = vmatprep.subr.mxu0 0.0
    %3851 = vmatpush1.xpose.msra.mxu0 0.0
    %3852 = vmatprep.subr.mxu0 0.0
    %3853 = vmatpush1.xpose.msra.mxu0 0.0
    %3854 = vmatprep.subr.mxu0 0.0
    %3855 = vmatpush1.xpose.msra.mxu0 0.0
    %3856 = vmatprep.subr.mxu0 0.0
    %3857 = vmatpush1.xpose.msra.mxu0 0.0
    %3858 = vmatprep.subr.mxu0 0.0
    %3859 = vmatpush1.xpose.msra.mxu0 0.0
    %3860 = vmatprep.subr.mxu0 0.0
    %3861 = vmatpush1.xpose.msra.mxu0 0.0
    %3862 = vmatprep.subr.mxu0 0.0
    %3863 = vmatpush1.xpose.msra.mxu0 0.0
    %3864 = vmatprep.mubr.f32.mxu0 0.0
    %3865 = vmatmul.mubr.f32.gmra.mrb[0].mxu0 %v3794
    %v3866 = vpop.f32.mrb[0].mxu0
    %v3867 = vadd.f32 0.0, %v3866
    %v3868 = vpop.f32.mrb[0].mxu0
    %3869 = vdwg.mxu0
    %v3870 = vmul.f32 %v3867, 0.35355338
    %v3871 = vadd.f32 %v3870, %v3380
    %v3872 = vsel %vm403, %v3871, -inf
    %3873 = vmax.xlane.f32.xlu0 %v3872
    %v3874 = vpop.xlane.xlu0 %3873
    %v3875 = vsub.f32 %v3871, %v3874
    %v3876 = vmul.f32 %v3875, 1.442695
    %v3877 = vpow.pop %v3876
    %v3878 = vsel %vm403, %v3877, 0.0
    %3879 = vadd.xlane.f32.xlu0 %v3878
    %v3880 = vpop.xlane.xlu0 %3879
    %v3881 = vrcp.pop %v3880
    %v3882 = vmul.f32 %v3877, %v3881
    %3883 = vrot.lane.b32.xlu0 %v3289, 112
    %v3884 = vpop.permute.xlu0 %3883
    %3885 = vrot.lane.b32.xlu0 %v3294, 112
    %v3886 = vpop.permute.xlu0 %3885
    %v3890 = vsel %vm403, %v3882, 0
    %3892 = vmatprep.subr.mxu0 0.0
    %3893 = vmatpush1.msra.mxu0 %v3884
    %3894 = vmatprep.subr.mxu0 0.0
    %3895 = vmatpush1.msra.mxu0 %v3886
    %3896 = vmatprep.subr.mxu0 0.0
    %3897 = vmatpush1.msra.mxu0 0.0
    %3898 = vmatprep.subr.mxu0 0.0
    %3899 = vmatpush1.msra.mxu0 0.0
    %3900 = vmatprep.subr.mxu0 0.0
    %3901 = vmatpush1.msra.mxu0 0.0
    %3902 = vmatprep.subr.mxu0 0.0
    %3903 = vmatpush1.msra.mxu0 0.0
    %3904 = vmatprep.subr.mxu0 0.0
    %3905 = vmatpush1.msra.mxu0 0.0
    %3906 = vmatprep.subr.mxu0 0.0
    %3907 = vmatpush1.msra.mxu0 0.0
    %3908 = vmatprep.subr.mxu0 0.0
    %3909 = vmatpush1.msra.mxu0 0.0
    %3910 = vmatprep.subr.mxu0 0.0
    %3911 = vmatpush1.msra.mxu0 0.0
    %3912 = vmatprep.subr.mxu0 0.0
    %3913 = vmatpush1.msra.mxu0 0.0
    %3914 = vmatprep.subr.mxu0 0.0
    %3915 = vmatpush1.msra.mxu0 0.0
    %3916 = vmatprep.subr.mxu0 0.0
    %3917 = vmatpush1.msra.mxu0 0.0
    %3918 = vmatprep.subr.mxu0 0.0
    %3919 = vmatpush1.msra.mxu0 0.0
    %3920 = vmatprep.subr.mxu0 0.0
    %3921 = vmatpush1.msra.mxu0 0.0
    %3922 = vmatprep.subr.mxu0 0.0
    %3923 = vmatpush1.msra.mxu0 0.0
    %3924 = vmatprep.subr.mxu0 0.0
    %3925 = vmatpush1.msra.mxu0 0.0
    %3926 = vmatprep.subr.mxu0 0.0
    %3927 = vmatpush1.msra.mxu0 0.0
    %3928 = vmatprep.subr.mxu0 0.0
    %3929 = vmatpush1.msra.mxu0 0.0
    %3930 = vmatprep.subr.mxu0 0.0
    %3931 = vmatpush1.msra.mxu0 0.0
    %3932 = vmatprep.subr.mxu0 0.0
    %3933 = vmatpush1.msra.mxu0 0.0
    %3934 = vmatprep.subr.mxu0 0.0
    %3935 = vmatpush1.msra.mxu0 0.0
    %3936 = vmatprep.subr.mxu0 0.0
    %3937 = vmatpush1.msra.mxu0 0.0
    %3938 = vmatprep.subr.mxu0 0.0
    %3939 = vmatpush1.msra.mxu0 0.0
    %3940 = vmatprep.subr.mxu0 0.0
    %3941 = vmatpush1.msra.mxu0 0.0
    %3942 = vmatprep.subr.mxu0 0.0
    %3943 = vmatpush1.msra.mxu0 0.0
    %3944 = vmatprep.subr.mxu0 0.0
    %3945 = vmatpush1.msra.mxu0 0.0
    %3946 = vmatprep.subr.mxu0 0.0
    %3947 = vmatpush1.msra.mxu0 0.0
    %3948 = vmatprep.subr.mxu0 0.0
    %3949 = vmatpush1.msra.mxu0 0.0
    %3950 = vmatprep.subr.mxu0 0.0
    %3951 = vmatpush1.msra.mxu0 0.0
    %3952 = vmatprep.subr.mxu0 0.0
    %3953 = vmatpush1.msra.mxu0 0.0
    %3954 = vmatprep.subr.mxu0 0.0
    %3955 = vmatpush1.msra.mxu0 0.0
    %3956 = vmatprep.mubr.f32.mxu0 0.0
    %3957 = vmatmul.mubr.f32.gmra.mrb[0].mxu0 %v3890
    %v3958 = vpop.f32.mrb[0].mxu0
    %v3959 = vadd.f32 0.0, %v3958
    %v3960 = vpop.f32.mrb[0].mxu0
    %3961 = vdwg.mxu0
    %v3963 = vsel %vm317, %v3959, 0
    %3965 = vmatprep.subr.mxu0 0.0
    %3966 = vmatpush1.msra.mxu0 %v3054
    %3967 = vmatprep.subr.mxu0 0.0
    %3968 = vmatpush1.msra.mxu0 0.0
    %3969 = vmatprep.subr.mxu0 0.0
    %3970 = vmatpush1.msra.mxu0 0.0
    %3971 = vmatprep.subr.mxu0 0.0
    %3972 = vmatpush1.msra.mxu0 0.0
    %3973 = vmatprep.subr.mxu0 0.0
    %3974 = vmatpush1.msra.mxu0 0.0
    %3975 = vmatprep.subr.mxu0 0.0
    %3976 = vmatpush1.msra.mxu0 0.0
    %3977 = vmatprep.subr.mxu0 0.0
    %3978 = vmatpush1.msra.mxu0 0.0
    %3979 = vmatprep.subr.mxu0 0.0
    %3980 = vmatpush1.msra.mxu0 0.0
    %3981 = vmatprep.subr.mxu0 0.0
    %3982 = vmatpush1.msra.mxu0 0.0
    %3983 = vmatprep.subr.mxu0 0.0
    %3984 = vmatpush1.msra.mxu0 0.0
    %3985 = vmatprep.subr.mxu0 0.0
    %3986 = vmatpush1.msra.mxu0 0.0
    %3987 = vmatprep.subr.mxu0 0.0
    %3988 = vmatpush1.msra.mxu0 0.0
    %3989 = vmatprep.subr.mxu0 0.0
    %3990 = vmatpush1.msra.mxu0 0.0
    %3991 = vmatprep.subr.mxu0 0.0
    %3992 = vmatpush1.msra.mxu0 0.0
    %3993 = vmatprep.subr.mxu0 0.0
    %3994 = vmatpush1.msra.mxu0 0.0
    %3995 = vmatprep.subr.mxu0 0.0
    %3996 = vmatpush1.msra.mxu0 0.0
    %3997 = vmatprep.subr.mxu0 0.0
    %3998 = vmatpush1.msra.mxu0 0.0
    %3999 = vmatprep.subr.mxu0 0.0
    %4000 = vmatpush1.msra.mxu0 0.0
    %4001 = vmatprep.subr.mxu0 0.0
    %4002 = vmatpush1.msra.mxu0 0.0
    %4003 = vmatprep.subr.mxu0 0.0
    %4004 = vmatpush1.msra.mxu0 0.0
    %4005 = vmatprep.subr.mxu0 0.0
    %4006 = vmatpush1.msra.mxu0 0.0
    %4007 = vmatprep.subr.mxu0 0.0
    %4008 = vmatpush1.msra.mxu0 0.0
    %4009 = vmatprep.subr.mxu0 0.0
    %4010 = vmatpush1.msra.mxu0 0.0
    %4011 = vmatprep.subr.mxu0 0.0
    %4012 = vmatpush1.msra.mxu0 0.0
    %4013 = vmatprep.subr.mxu0 0.0
    %4014 = vmatpush1.msra.mxu0 0.0
    %4015 = vmatprep.subr.mxu0 0.0
    %4016 = vmatpush1.msra.mxu0 0.0
    %4017 = vmatprep.subr.mxu0 0.0
    %4018 = vmatpush1.msra.mxu0 0.0
    %4019 = vmatprep.subr.mxu0 0.0
    %4020 = vmatpush1.msra.mxu0 0.0
    %4021 = vmatprep.subr.mxu0 0.0
    %4022 = vmatpush1.msra.mxu0 0.0
    %4023 = vmatprep.subr.mxu0 0.0
    %4024 = vmatpush1.msra.mxu0 0.0
    %4025 = vmatprep.subr.mxu0 0.0
    %4026 = vmatpush1.msra.mxu0 0.0
    %4027 = vmatprep.subr.mxu0 0.0
    %4028 = vmatpush1.msra.mxu0 0.0
    %4029 = vmatprep.mubr.f32.mxu0 0.0
    %4030 = vmatmul.mubr.f32.gmra.mrb[0].mxu0 %v3963
    %v4031 = vpop.f32.mrb[0].mxu0
    %v4032 = vadd.f32 0.0, %v4031
    %v4033 = vpop.f32.mrb[0].mxu0
    %4034 = vdwg.mxu0
    %v4035 = vadd.f32 %v3785, %v4032
    %4036 = vrot.lane.b32.xlu0 %v3131, 104
    %v4037 = vpop.permute.xlu0 %4036
    %4038 = vrot.lane.b32.xlu0 %v3209, 104
    %v4039 = vpop.permute.xlu0 %4038
    %4040 = vrot.lane.b32.xlu0 %v3214, 104
    %v4041 = vpop.permute.xlu0 %4040
    %v4042 = vsel %vm317, %v4037, 0
    %v4044 = vsel %vm317, %v4039, 0
    %v4046 = vsel %vm317, %v4041, 0
    %4048 = vmatprep.subr.mxu0 0.0
    %4049 = vmatpush1.xpose.msra.mxu0 %v4044
    %4050 = vmatprep.subr.mxu0 0.0
    %4051 = vmatpush1.xpose.msra.mxu0 %v4046
    %4052 = vmatprep.subr.mxu0 0.0
    %4053 = vmatpush1.xpose.msra.mxu0 0.0
    %4054 = vmatprep.subr.mxu0 0.0
    %4055 = vmatpush1.xpose.msra.mxu0 0.0
    %4056 = vmatprep.subr.mxu0 0.0
    %4057 = vmatpush1.xpose.msra.mxu0 0.0
    %4058 = vmatprep.subr.mxu0 0.0
    %4059 = vmatpush1.xpose.msra.mxu0 0.0
    %4060 = vmatprep.subr.mxu0 0.0
    %4061 = vmatpush1.xpose.msra.mxu0 0.0
    %4062 = vmatprep.subr.mxu0 0.0
    %4063 = vmatpush1.xpose.msra.mxu0 0.0
    %4064 = vmatprep.subr.mxu0 0.0
    %4065 = vmatpush1.xpose.msra.mxu0 0.0
    %4066 = vmatprep.subr.mxu0 0.0
    %4067 = vmatpush1.xpose.msra.mxu0 0.0
    %4068 = vmatprep.subr.mxu0 0.0
    %4069 = vmatpush1.xpose.msra.mxu0 0.0
    %4070 = vmatprep.subr.mxu0 0.0
    %4071 = vmatpush1.xpose.msra.mxu0 0.0
    %4072 = vmatprep.subr.mxu0 0.0
    %4073 = vmatpush1.xpose.msra.mxu0 0.0
    %4074 = vmatprep.subr.mxu0 0.0
    %4075 = vmatpush1.xpose.msra.mxu0 0.0
    %4076 = vmatprep.subr.mxu0 0.0
    %4077 = vmatpush1.xpose.msra.mxu0 0.0
    %4078 = vmatprep.subr.mxu0 0.0
    %4079 = vmatpush1.xpose.msra.mxu0 0.0
    %4080 = vmatprep.subr.mxu0 0.0
    %4081 = vmatpush1.xpose.msra.mxu0 0.0
    %4082 = vmatprep.subr.mxu0 0.0
    %4083 = vmatpush1.xpose.msra.mxu0 0.0
    %4084 = vmatprep.subr.mxu0 0.0
    %4085 = vmatpush1.xpose.msra.mxu0 0.0
    %4086 = vmatprep.subr.mxu0 0.0
    %4087 = vmatpush1.xpose.msra.mxu0 0.0
    %4088 = vmatprep.subr.mxu0 0.0
    %4089 = vmatpush1.xpose.msra.mxu0 0.0
    %4090 = vmatprep.subr.mxu0 0.0
    %4091 = vmatpush1.xpose.msra.mxu0 0.0
    %4092 = vmatprep.subr.mxu0 0.0
    %4093 = vmatpush1.xpose.msra.mxu0 0.0
    %4094 = vmatprep.subr.mxu0 0.0
    %4095 = vmatpush1.xpose.msra.mxu0 0.0
    %4096 = vmatprep.subr.mxu0 0.0
    %4097 = vmatpush1.xpose.msra.mxu0 0.0
    %4098 = vmatprep.subr.mxu0 0.0
    %4099 = vmatpush1.xpose.msra.mxu0 0.0
    %4100 = vmatprep.subr.mxu0 0.0
    %4101 = vmatpush1.xpose.msra.mxu0 0.0
    %4102 = vmatprep.subr.mxu0 0.0
    %4103 = vmatpush1.xpose.msra.mxu0 0.0
    %4104 = vmatprep.subr.mxu0 0.0
    %4105 = vmatpush1.xpose.msra.mxu0 0.0
    %4106 = vmatprep.subr.mxu0 0.0
    %4107 = vmatpush1.xpose.msra.mxu0 0.0
    %4108 = vmatprep.subr.mxu0 0.0
    %4109 = vmatpush1.xpose.msra.mxu0 0.0
    %4110 = vmatprep.subr.mxu0 0.0
    %4111 = vmatpush1.xpose.msra.mxu0 0.0
    %4112 = vmatprep.mubr.f32.mxu0 0.0
    %4113 = vmatmul.mubr.f32.gmra.mrb[0].mxu0 %v4042
    %v4114 = vpop.f32.mrb[0].mxu0
    %v4115 = vadd.f32 0.0, %v4114
    %v4116 = vpop.f32.mrb[0].mxu0
    %4117 = vdwg.mxu0
    %v4118 = vmul.f32 %v4115, 0.35355338
    %v4119 = vadd.f32 %v4118, %v3380
    %v4120 = vsel %vm403, %v4119, -inf
    %4121 = vmax.xlane.f32.xlu0 %v4120
    %v4122 = vpop.xlane.xlu0 %4121
    %v4123 = vsub.f32 %v4119, %v4122
    %v4124 = vmul.f32 %v4123, 1.442695
    %v4125 = vpow.pop %v4124
    %v4126 = vsel %vm403, %v4125, 0.0
    %4127 = vadd.xlane.f32.xlu0 %v4126
    %v4128 = vpop.xlane.xlu0 %4127
    %v4129 = vrcp.pop %v4128
    %v4130 = vmul.f32 %v4125, %v4129
    %4131 = vrot.lane.b32.xlu0 %v3289, 104
    %v4132 = vpop.permute.xlu0 %4131
    %4133 = vrot.lane.b32.xlu0 %v3294, 104
    %v4134 = vpop.permute.xlu0 %4133
    %v4138 = vsel %vm403, %v4130, 0
    %4140 = vmatprep.subr.mxu0 0.0
    %4141 = vmatpush1.msra.mxu0 %v4132
    %4142 = vmatprep.subr.mxu0 0.0
    %4143 = vmatpush1.msra.mxu0 %v4134
    %4144 = vmatprep.subr.mxu0 0.0
    %4145 = vmatpush1.msra.mxu0 0.0
    %4146 = vmatprep.subr.mxu0 0.0
    %4147 = vmatpush1.msra.mxu0 0.0
    %4148 = vmatprep.subr.mxu0 0.0
    %4149 = vmatpush1.msra.mxu0 0.0
    %4150 = vmatprep.subr.mxu0 0.0
    %4151 = vmatpush1.msra.mxu0 0.0
    %4152 = vmatprep.subr.mxu0 0.0
    %4153 = vmatpush1.msra.mxu0 0.0
    %4154 = vmatprep.subr.mxu0 0.0
    %4155 = vmatpush1.msra.mxu0 0.0
    %4156 = vmatprep.subr.mxu0 0.0
    %4157 = vmatpush1.msra.mxu0 0.0
    %4158 = vmatprep.subr.mxu0 0.0
    %4159 = vmatpush1.msra.mxu0 0.0
    %4160 = vmatprep.subr.mxu0 0.0
    %4161 = vmatpush1.msra.mxu0 0.0
    %4162 = vmatprep.subr.mxu0 0.0
    %4163 = vmatpush1.msra.mxu0 0.0
    %4164 = vmatprep.subr.mxu0 0.0
    %4165 = vmatpush1.msra.mxu0 0.0
    %4166 = vmatprep.subr.mxu0 0.0
    %4167 = vmatpush1.msra.mxu0 0.0
    %4168 = vmatprep.subr.mxu0 0.0
    %4169 = vmatpush1.msra.mxu0 0.0
    %4170 = vmatprep.subr.mxu0 0.0
    %4171 = vmatpush1.msra.mxu0 0.0
    %4172 = vmatprep.subr.mxu0 0.0
    %4173 = vmatpush1.msra.mxu0 0.0
    %4174 = vmatprep.subr.mxu0 0.0
    %4175 = vmatpush1.msra.mxu0 0.0
    %4176 = vmatprep.subr.mxu0 0.0
    %4177 = vmatpush1.msra.mxu0 0.0
    %4178 = vmatprep.subr.mxu0 0.0
    %4179 = vmatpush1.msra.mxu0 0.0
    %4180 = vmatprep.subr.mxu0 0.0
    %4181 = vmatpush1.msra.mxu0 0.0
    %4182 = vmatprep.subr.mxu0 0.0
    %4183 = vmatpush1.msra.mxu0 0.0
    %4184 = vmatprep.subr.mxu0 0.0
    %4185 = vmatpush1.msra.mxu0 0.0
    %4186 = vmatprep.subr.mxu0 0.0
    %4187 = vmatpush1.msra.mxu0 0.0
    %4188 = vmatprep.subr.mxu0 0.0
    %4189 = vmatpush1.msra.mxu0 0.0
    %4190 = vmatprep.subr.mxu0 0.0
    %4191 = vmatpush1.msra.mxu0 0.0
    %4192 = vmatprep.subr.mxu0 0.0
    %4193 = vmatpush1.msra.mxu0 0.0
    %4194 = vmatprep.subr.mxu0 0.0
    %4195 = vmatpush1.msra.mxu0 0.0
    %4196 = vmatprep.subr.mxu0 0.0
    %4197 = vmatpush1.msra.mxu0 0.0
    %4198 = vmatprep.subr.mxu0 0.0
    %4199 = vmatpush1.msra.mxu0 0.0
    %4200 = vmatprep.subr.mxu0 0.0
    %4201 = vmatpush1.msra.mxu0 0.0
    %4202 = vmatprep.subr.mxu0 0.0
    %4203 = vmatpush1.msra.mxu0 0.0
    %4204 = vmatprep.mubr.f32.mxu0 0.0
    %4205 = vmatmul.mubr.f32.gmra.mrb[0].mxu0 %v4138
    %v4206 = vpop.f32.mrb[0].mxu0
    %v4207 = vadd.f32 0.0, %v4206
    %v4208 = vpop.f32.mrb[0].mxu0
    %4209 = vdwg.mxu0
    %v4211 = vsel %vm317, %v4207, 0
    %4213 = vmatprep.subr.mxu0 0.0
    %4214 = vmatpush1.msra.mxu0 %v3055
    %4215 = vmatprep.subr.mxu0 0.0
    %4216 = vmatpush1.msra.mxu0 0.0
    %4217 = vmatprep.subr.mxu0 0.0
    %4218 = vmatpush1.msra.mxu0 0.0
    %4219 = vmatprep.subr.mxu0 0.0
    %4220 = vmatpush1.msra.mxu0 0.0
    %4221 = vmatprep.subr.mxu0 0.0
    %4222 = vmatpush1.msra.mxu0 0.0
    %4223 = vmatprep.subr.mxu0 0.0
    %4224 = vmatpush1.msra.mxu0 0.0
    %4225 = vmatprep.subr.mxu0 0.0
    %4226 = vmatpush1.msra.mxu0 0.0
    %4227 = vmatprep.subr.mxu0 0.0
    %4228 = vmatpush1.msra.mxu0 0.0
    %4229 = vmatprep.subr.mxu0 0.0
    %4230 = vmatpush1.msra.mxu0 0.0
    %4231 = vmatprep.subr.mxu0 0.0
    %4232 = vmatpush1.msra.mxu0 0.0
    %4233 = vmatprep.subr.mxu0 0.0
    %4234 = vmatpush1.msra.mxu0 0.0
    %4235 = vmatprep.subr.mxu0 0.0
    %4236 = vmatpush1.msra.mxu0 0.0
    %4237 = vmatprep.subr.mxu0 0.0
    %4238 = vmatpush1.msra.mxu0 0.0
    %4239 = vmatprep.subr.mxu0 0.0
    %4240 = vmatpush1.msra.mxu0 0.0
    %4241 = vmatprep.subr.mxu0 0.0
    %4242 = vmatpush1.msra.mxu0 0.0
    %4243 = vmatprep.subr.mxu0 0.0
    %4244 = vmatpush1.msra.mxu0 0.0
    %4245 = vmatprep.subr.mxu0 0.0
    %4246 = vmatpush1.msra.mxu0 0.0
    %4247 = vmatprep.subr.mxu0 0.0
    %4248 = vmatpush1.msra.mxu0 0.0
    %4249 = vmatprep.subr.mxu0 0.0
    %4250 = vmatpush1.msra.mxu0 0.0
    %4251 = vmatprep.subr.mxu0 0.0
    %4252 = vmatpush1.msra.mxu0 0.0
    %4253 = vmatprep.subr.mxu0 0.0
    %4254 = vmatpush1.msra.mxu0 0.0
    %4255 = vmatprep.subr.mxu0 0.0
    %4256 = vmatpush1.msra.mxu0 0.0
    %4257 = vmatprep.subr.mxu0 0.0
    %4258 = vmatpush1.msra.mxu0 0.0
    %4259 = vmatprep.subr.mxu0 0.0
    %4260 = vmatpush1.msra.mxu0 0.0
    %4261 = vmatprep.subr.mxu0 0.0
    %4262 = vmatpush1.msra.mxu0 0.0
    %4263 = vmatprep.subr.mxu0 0.0
    %4264 = vmatpush1.msra.mxu0 0.0
    %4265 = vmatprep.subr.mxu0 0.0
    %4266 = vmatpush1.msra.mxu0 0.0
    %4267 = vmatprep.subr.mxu0 0.0
    %4268 = vmatpush1.msra.mxu0 0.0
    %4269 = vmatprep.subr.mxu0 0.0
    %4270 = vmatpush1.msra.mxu0 0.0
    %4271 = vmatprep.subr.mxu0 0.0
    %4272 = vmatpush1.msra.mxu0 0.0
    %4273 = vmatprep.subr.mxu0 0.0
    %4274 = vmatpush1.msra.mxu0 0.0
    %4275 = vmatprep.subr.mxu0 0.0
    %4276 = vmatpush1.msra.mxu0 0.0
    %4277 = vmatprep.mubr.f32.mxu0 0.0
    %4278 = vmatmul.mubr.f32.gmra.mrb[0].mxu0 %v4211
    %v4279 = vpop.f32.mrb[0].mxu0
    %v4280 = vadd.f32 0.0, %v4279
    %v4281 = vpop.f32.mrb[0].mxu0
    %4282 = vdwg.mxu0
    %v4283 = vadd.f32 %v4035, %v4280
    %v4284 = vld [vmem:[%s4 + $0x3] sm:$0x1]
    %v4285 = vlaneseq
    %v4286 = vshrl.u32 %v4285, 7
    %v4287 = vsub.s32 0, %v4286
    %v4288 = vrot.slane %v4284, %v4287
    %v4289 = vadd.f32 %v4283, %v4288
    %v4290 = vadd.f32 %v4289, %v3038
    %v4291 = vld [vmem:[%s5] sm:$0x1]
    %v4292 = vld [vmem:[%s6] sm:$0x1]
    %v4293 = vsel %vm80, %v4290, 0.0
    %4294 = vadd.xlane.f32.xlu0 %v4293
    %v4295 = vpop.xlane.xlu0 %4294
    %v4296 = vmul.f32 %v4295, %v1318
    %v4297 = vsub.f32 %v4290, %v4296
    %v4298 = vmul.f32 %v4297, %v4297
    %v4299 = vsel %vm80, %v4298, 0.0
    %4300 = vadd.xlane.f32.xlu0 %v4299
    %v4301 = vpop.xlane.xlu0 %4300
    %v4302 = vmul.f32 %v4301, %v1318
    %v4303 = vadd.f32 %v4302, 1e-06
    %v4304 = vrsqrt.pop %v4303
    %v4305 = vmul.f32 %v4297, %v4304
    %v4306 = vlaneseq
    %v4307 = vshrl.u32 %v4306, 7
    %v4308 = vsub.s32 0, %v4307
    %v4309 = vrot.slane %v4291, %v4308
    %v4310 = vmul.f32 %v4309, %v4305
    %v4311 = vlaneseq
    %v4312 = vshrl.u32 %v4311, 7
    %v4313 = vsub.s32 0, %v4312
    %v4314 = vrot.slane %v4292, %v4313
    %v4315 = vadd.f32 %v4310, %v4314
    %v4316 = vld [vmem:[%s7] sm:$0xff]
    %v4317 = vld [vmem:[%s7 + $0x8] sm:$0xff]
    %v4318 = vld [vmem:[%s7 + $0x10] sm:$0xff]
    %v4319 = vld [vmem:[%s7 + $0x18] sm:$0xff]
    %v4320 = vld [vmem:[%s8] sm:$0x1]
    %v4322 = vlaneseq
    %v4323 = vshrl.u32 %v4322, 7
    %v4324 = vsub.s32 0, %v4323
    %v4325 = vrot.slane %v4320, %v4324
    %v4328 = vsel %vm80, %v4315, 0
    %4330 = vmatprep.subr.mxu0 0.0
    %4331 = vmatpush1.msra.mxu0 %v4316
    %4332 = vmatprep.subr.mxu0 0.0
    %4333 = vmatpush1.msra.mxu0 %v4317
    %4334 = vmatprep.subr.mxu0 0.0
    %4335 = vmatpush1.msra.mxu0 %v4318
    %4336 = vmatprep.subr.mxu0 0.0
    %4337 = vmatpush1.msra.mxu0 %v4319
    %4338 = vmatprep.subr.mxu0 0.0
    %4339 = vmatpush1.msra.mxu0 0.0
    %4340 = vmatprep.subr.mxu0 0.0
    %4341 = vmatpush1.msra.mxu0 0.0
    %4342 = vmatprep.subr.mxu0 0.0
    %4343 = vmatpush1.msra.mxu0 0.0
    %4344 = vmatprep.subr.mxu0 0.0
    %4345 = vmatpush1.msra.mxu0 0.0
    %4346 = vmatprep.subr.mxu0 0.0
    %4347 = vmatpush1.msra.mxu0 0.0
    %4348 = vmatprep.subr.mxu0 0.0
    %4349 = vmatpush1.msra.mxu0 0.0
    %4350 = vmatprep.subr.mxu0 0.0
    %4351 = vmatpush1.msra.mxu0 0.0
    %4352 = vmatprep.subr.mxu0 0.0
    %4353 = vmatpush1.msra.mxu0 0.0
    %4354 = vmatprep.subr.mxu0 0.0
    %4355 = vmatpush1.msra.mxu0 0.0
    %4356 = vmatprep.subr.mxu0 0.0
    %4357 = vmatpush1.msra.mxu0 0.0
    %4358 = vmatprep.subr.mxu0 0.0
    %4359 = vmatpush1.msra.mxu0 0.0
    %4360 = vmatprep.subr.mxu0 0.0
    %4361 = vmatpush1.msra.mxu0 0.0
    %4362 = vmatprep.subr.mxu0 0.0
    %4363 = vmatpush1.msra.mxu0 0.0
    %4364 = vmatprep.subr.mxu0 0.0
    %4365 = vmatpush1.msra.mxu0 0.0
    %4366 = vmatprep.subr.mxu0 0.0
    %4367 = vmatpush1.msra.mxu0 0.0
    %4368 = vmatprep.subr.mxu0 0.0
    %4369 = vmatpush1.msra.mxu0 0.0
    %4370 = vmatprep.subr.mxu0 0.0
    %4371 = vmatpush1.msra.mxu0 0.0
    %4372 = vmatprep.subr.mxu0 0.0
    %4373 = vmatpush1.msra.mxu0 0.0
    %4374 = vmatprep.subr.mxu0 0.0
    %4375 = vmatpush1.msra.mxu0 0.0
    %4376 = vmatprep.subr.mxu0 0.0
    %4377 = vmatpush1.msra.mxu0 0.0
    %4378 = vmatprep.subr.mxu0 0.0
    %4379 = vmatpush1.msra.mxu0 0.0
    %4380 = vmatprep.subr.mxu0 0.0
    %4381 = vmatpush1.msra.mxu0 0.0
    %4382 = vmatprep.subr.mxu0 0.0
    %4383 = vmatpush1.msra.mxu0 0.0
    %4384 = vmatprep.subr.mxu0 0.0
    %4385 = vmatpush1.msra.mxu0 0.0
    %4386 = vmatprep.subr.mxu0 0.0
    %4387 = vmatpush1.msra.mxu0 0.0
    %4388 = vmatprep.subr.mxu0 0.0
    %4389 = vmatpush1.msra.mxu0 0.0
    %4390 = vmatprep.subr.mxu0 0.0
    %4391 = vmatpush1.msra.mxu0 0.0
    %4392 = vmatprep.subr.mxu0 0.0
    %4393 = vmatpush1.msra.mxu0 0.0
    %4394 = vmatprep.mubr.f32.mxu0 0.0
    %4395 = vmatmul.mubr.f32.gmra.mrb[0].mxu0 %v4328
    %v4396 = vpop.f32.mrb[0].mxu0
    %v4397 = vadd.f32 %v4325, %v4396
    %v4398 = vpop.f32.mrb[0].mxu0
    %4399 = vdwg.mxu0
    %v4400 = vmul.f32 %v4397, 0.5
    %v4401 = vmul.f32 %v4397, 0.044715
    %v4402 = vmul.f32 %v4401, %v4397
    %v4403 = vmul.f32 %v4402, %v4397
    %v4404 = vadd.f32 %v4397, %v4403
    %v4405 = vmul.f32 %v4404, 0.7978846
    %v4406 = vtanh.pop %v4405
    %v4407 = vadd.f32 %v4406, 1.0
    %v4408 = vmul.f32 %v4400, %v4407
    %v4409 = vld [vmem:[%s9] sm:$0xff]
    %v4410 = vld [vmem:[%s9 + $0x8] sm:$0xff]
    %v4411 = vld [vmem:[%s9 + $0x10] sm:$0xff]
    %v4412 = vld [vmem:[%s9 + $0x18] sm:$0xff]
    %v4413 = vld [vmem:[%s9 + $0x20] sm:$0xff]
    %v4414 = vld [vmem:[%s9 + $0x28] sm:$0xff]
    %v4415 = vld [vmem:[%s9 + $0x30] sm:$0xff]
    %v4416 = vld [vmem:[%s9 + $0x38] sm:$0xff]
    %v4417 = vld [vmem:[%s10] sm:$0x1]
    %v4419 = vlaneseq
    %v4420 = vshrl.u32 %v4419, 7
    %v4421 = vsub.s32 0, %v4420
    %v4422 = vrot.slane %v4417, %v4421
    %v4425 = vsel %vm1447, %v4408, 0
    %4427 = vmatprep.subr.mxu0 0.0
    %4428 = vmatpush1.msra.mxu0 %v4409
    %4429 = vmatprep.subr.mxu0 0.0
    %4430 = vmatpush1.msra.mxu0 %v4410
    %4431 = vmatprep.subr.mxu0 0.0
    %4432 = vmatpush1.msra.mxu0 %v4411
    %4433 = vmatprep.subr.mxu0 0.0
    %4434 = vmatpush1.msra.mxu0 %v4412
    %4435 = vmatprep.subr.mxu0 0.0
    %4436 = vmatpush1.msra.mxu0 %v4413
    %4437 = vmatprep.subr.mxu0 0.0
    %4438 = vmatpush1.msra.mxu0 %v4414
    %4439 = vmatprep.subr.mxu0 0.0
    %4440 = vmatpush1.msra.mxu0 %v4415
    %4441 = vmatprep.subr.mxu0 0.0
    %4442 = vmatpush1.msra.mxu0 %v4416
    %4443 = vmatprep.subr.mxu0 0.0
    %4444 = vmatpush1.msra.mxu0 0.0
    %4445 = vmatprep.subr.mxu0 0.0
    %4446 = vmatpush1.msra.mxu0 0.0
    %4447 = vmatprep.subr.mxu0 0.0
    %4448 = vmatpush1.msra.mxu0 0.0
    %4449 = vmatprep.subr.mxu0 0.0
    %4450 = vmatpush1.msra.mxu0 0.0
    %4451 = vmatprep.subr.mxu0 0.0
    %4452 = vmatpush1.msra.mxu0 0.0
    %4453 = vmatprep.subr.mxu0 0.0
    %4454 = vmatpush1.msra.mxu0 0.0
    %4455 = vmatprep.subr.mxu0 0.0
    %4456 = vmatpush1.msra.mxu0 0.0
    %4457 = vmatprep.subr.mxu0 0.0
    %4458 = vmatpush1.msra.mxu0 0.0
    %4459 = vmatprep.subr.mxu0 0.0
    %4460 = vmatpush1.msra.mxu0 0.0
    %4461 = vmatprep.subr.mxu0 0.0
    %4462 = vmatpush1.msra.mxu0 0.0
    %4463 = vmatprep.subr.mxu0 0.0
    %4464 = vmatpush1.msra.mxu0 0.0
    %4465 = vmatprep.subr.mxu0 0.0
    %4466 = vmatpush1.msra.mxu0 0.0
    %4467 = vmatprep.subr.mxu0 0.0
    %4468 = vmatpush1.msra.mxu0 0.0
    %4469 = vmatprep.subr.mxu0 0.0
    %4470 = vmatpush1.msra.mxu0 0.0
    %4471 = vmatprep.subr.mxu0 0.0
    %4472 = vmatpush1.msra.mxu0 0.0
    %4473 = vmatprep.subr.mxu0 0.0
    %4474 = vmatpush1.msra.mxu0 0.0
    %4475 = vmatprep.subr.mxu0 0.0
    %4476 = vmatpush1.msra.mxu0 0.0
    %4477 = vmatprep.subr.mxu0 0.0
    %4478 = vmatpush1.msra.mxu0 0.0
    %4479 = vmatprep.subr.mxu0 0.0
    %4480 = vmatpush1.msra.mxu0 0.0
    %4481 = vmatprep.subr.mxu0 0.0
    %4482 = vmatpush1.msra.mxu0 0.0
    %4483 = vmatprep.subr.mxu0 0.0
    %4484 = vmatpush1.msra.mxu0 0.0
    %4485 = vmatprep.subr.mxu0 0.0
    %4486 = vmatpush1.msra.mxu0 0.0
    %4487 = vmatprep.subr.mxu0 0.0
    %4488 = vmatpush1.msra.mxu0 0.0
    %4489 = vmatprep.subr.mxu0 0.0
    %4490 = vmatpush1.msra.mxu0 0.0
    %4491 = vmatprep.mubr.f32.mxu0 0.0
    %4492 = vmatmul.mubr.f32.gmra.mrb[0].mxu0 %v4425
    %v4493 = vpop.f32.mrb[0].mxu0
    %v4494 = vadd.f32 %v4422, %v4493
    %v4495 = vpop.f32.mrb[0].mxu0
    %4496 = vdwg.mxu0
    %v4497 = vadd.f32 %v4494, %v4315
    %v4498 = vld [vmem:[%s5 + $0x1] sm:$0x1]
    %v4499 = vld [vmem:[%s6 + $0x1] sm:$0x1]
    %v4500 = vsel %vm80, %v4497, 0.0
    %4501 = vadd.xlane.f32.xlu0 %v4500
    %v4502 = vpop.xlane.xlu0 %4501
    %v4503 = vmul.f32 %v4502, %v1318
    %v4504 = vsub.f32 %v4497, %v4503
    %v4505 = vmul.f32 %v4504, %v4504
    %v4506 = vsel %vm80, %v4505, 0.0
    %4507 = vadd.xlane.f32.xlu0 %v4506
    %v4508 = vpop.xlane.xlu0 %4507
    %v4509 = vmul.f32 %v4508, %v1318
    %v4510 = vadd.f32 %v4509, 1e-06
    %v4511 = vrsqrt.pop %v4510
    %v4512 = vmul.f32 %v4504, %v4511
    %v4513 = vlaneseq
    %v4514 = vshrl.u32 %v4513, 7
    %v4515 = vsub.s32 0, %v4514
    %v4516 = vrot.slane %v4498, %v4515
    %v4517 = vmul.f32 %v4516, %v4512
    %v4518 = vlaneseq
    %v4519 = vshrl.u32 %v4518, 7
    %v4520 = vsub.s32 0, %v4519
    %v4521 = vrot.slane %v4499, %v4520
    %v4522 = vadd.f32 %v4517, %v4521
    %v4523 = vld [vmem:[%s1547] sm:$0xff]
    %v4524 = vld [vmem:[%s1547 + $0x8] sm:$0xff]
    %v4525 = vld [vmem:[%s1547 + $0x10] sm:$0xff]
    %v4526 = vld [vmem:[%s1547 + $0x18] sm:$0xff]
    %v4527 = vld [vmem:[%s1552] sm:$0xff]
    %v4528 = vld [vmem:[%s1552 + $0x8] sm:$0xff]
    %v4529 = vld [vmem:[%s1552 + $0x10] sm:$0xff]
    %v4530 = vld [vmem:[%s1552 + $0x18] sm:$0xff]
    %v4531 = vld [vmem:[%s1557] sm:$0xff]
    %v4532 = vld [vmem:[%s1557 + $0x8] sm:$0xff]
    %v4533 = vld [vmem:[%s1557 + $0x10] sm:$0xff]
    %v4534 = vld [vmem:[%s1557 + $0x18] sm:$0xff]
    %v4535 = vld [vmem:[%s1562] sm:$0xff]
    %v4536 = vld [vmem:[%s1562 + $0x8] sm:$0xff]
    %v4537 = vld [vmem:[%s1562 + $0x10] sm:$0xff]
    %v4538 = vld [vmem:[%s1562 + $0x18] sm:$0xff]
    %v4539 = vld [vmem:[%s1567] sm:$0x1]
    %v4540 = vlaneseq
    %v4541 = vshrl.u32 %v4540, 7
    %v4542 = vsub.s32 0, %v4541
    %v4543 = vrot.slane %v4539, %v4542
    %v4545 = vsel %vm80, %v4522, 0
    %4547 = vmatprep.subr.mxu0 0.0
    %4548 = vmatpush1.msra.mxu0 %v4523
    %4549 = vmatprep.subr.mxu0 0.0
    %4550 = vmatpush1.msra.mxu0 %v4524
    %4551 = vmatprep.subr.mxu0 0.0
    %4552 = vmatpush1.msra.mxu0 %v4525
    %4553 = vmatprep.subr.mxu0 0.0
    %4554 = vmatpush1.msra.mxu0 %v4526
    %4555 = vmatprep.subr.mxu0 0.0
    %4556 = vmatpush1.msra.mxu0 0.0
    %4557 = vmatprep.subr.mxu0 0.0
    %4558 = vmatpush1.msra.mxu0 0.0
    %4559 = vmatprep.subr.mxu0 0.0
    %4560 = vmatpush1.msra.mxu0 0.0
    %4561 = vmatprep.subr.mxu0 0.0
    %4562 = vmatpush1.msra.mxu0 0.0
    %4563 = vmatprep.subr.mxu0 0.0
    %4564 = vmatpush1.msra.mxu0 0.0
    %4565 = vmatprep.subr.mxu0 0.0
    %4566 = vmatpush1.msra.mxu0 0.0
    %4567 = vmatprep.subr.mxu0 0.0
    %4568 = vmatpush1.msra.mxu0 0.0
    %4569 = vmatprep.subr.mxu0 0.0
    %4570 = vmatpush1.msra.mxu0 0.0
    %4571 = vmatprep.subr.mxu0 0.0
    %4572 = vmatpush1.msra.mxu0 0.0
    %4573 = vmatprep.subr.mxu0 0.0
    %4574 = vmatpush1.msra.mxu0 0.0
    %4575 = vmatprep.subr.mxu0 0.0
    %4576 = vmatpush1.msra.mxu0 0.0
    %4577 = vmatprep.subr.mxu0 0.0
    %4578 = vmatpush1.msra.mxu0 0.0
    %4579 = vmatprep.subr.mxu0 0.0
    %4580 = vmatpush1.msra.mxu0 0.0
    %4581 = vmatprep.subr.mxu0 0.0
    %4582 = vmatpush1.msra.mxu0 0.0
    %4583 = vmatprep.subr.mxu0 0.0
    %4584 = vmatpush1.msra.mxu0 0.0
    %4585 = vmatprep.subr.mxu0 0.0
    %4586 = vmatpush1.msra.mxu0 0.0
    %4587 = vmatprep.subr.mxu0 0.0
    %4588 = vmatpush1.msra.mxu0 0.0
    %4589 = vmatprep.subr.mxu0 0.0
    %4590 = vmatpush1.msra.mxu0 0.0
    %4591 = vmatprep.subr.mxu0 0.0
    %4592 = vmatpush1.msra.mxu0 0.0
    %4593 = vmatprep.subr.mxu0 0.0
    %4594 = vmatpush1.msra.mxu0 0.0
    %4595 = vmatprep.subr.mxu0 0.0
    %4596 = vmatpush1.msra.mxu0 0.0
    %4597 = vmatprep.subr.mxu0 0.0
    %4598 = vmatpush1.msra.mxu0 0.0
    %4599 = vmatprep.subr.mxu0 0.0
    %4600 = vmatpush1.msra.mxu0 0.0
    %4601 = vmatprep.subr.mxu0 0.0
    %4602 = vmatpush1.msra.mxu0 0.0
    %4603 = vmatprep.subr.mxu0 0.0
    %4604 = vmatpush1.msra.mxu0 0.0
    %4605 = vmatprep.subr.mxu0 0.0
    %4606 = vmatpush1.msra.mxu0 0.0
    %4607 = vmatprep.subr.mxu0 0.0
    %4608 = vmatpush1.msra.mxu0 0.0
    %4609 = vmatprep.subr.mxu0 0.0
    %4610 = vmatpush1.msra.mxu0 0.0
    %4611 = vmatprep.mubr.f32.mxu0 0.0
    %4612 = vmatmul.mubr.f32.gmra.mrb[0].mxu0 %v4545
    %v4613 = vpop.f32.mrb[0].mxu0
    %v4614 = vadd.f32 %v4543, %v4613
    %v4615 = vpop.f32.mrb[0].mxu0
    %4616 = vdwg.mxu0
    %v4617 = vld [vmem:[%s1567 + $0x1] sm:$0x1]
    %v4618 = vlaneseq
    %v4619 = vshrl.u32 %v4618, 7
    %v4620 = vsub.s32 0, %v4619
    %v4621 = vrot.slane %v4617, %v4620
    %4622 = vmatprep.subr.mxu0 0.0
    %4623 = vmatpush1.msra.mxu0 %v4527
    %4624 = vmatprep.subr.mxu0 0.0
    %4625 = vmatpush1.msra.mxu0 %v4528
    %4626 = vmatprep.subr.mxu0 0.0
    %4627 = vmatpush1.msra.mxu0 %v4529
    %4628 = vmatprep.subr.mxu0 0.0
    %4629 = vmatpush1.msra.mxu0 %v4530
    %4630 = vmatprep.subr.mxu0 0.0
    %4631 = vmatpush1.msra.mxu0 0.0
    %4632 = vmatprep.subr.mxu0 0.0
    %4633 = vmatpush1.msra.mxu0 0.0
    %4634 = vmatprep.subr.mxu0 0.0
    %4635 = vmatpush1.msra.mxu0 0.0
    %4636 = vmatprep.subr.mxu0 0.0
    %4637 = vmatpush1.msra.mxu0 0.0
    %4638 = vmatprep.subr.mxu0 0.0
    %4639 = vmatpush1.msra.mxu0 0.0
    %4640 = vmatprep.subr.mxu0 0.0
    %4641 = vmatpush1.msra.mxu0 0.0
    %4642 = vmatprep.subr.mxu0 0.0
    %4643 = vmatpush1.msra.mxu0 0.0
    %4644 = vmatprep.subr.mxu0 0.0
    %4645 = vmatpush1.msra.mxu0 0.0
    %4646 = vmatprep.subr.mxu0 0.0
    %4647 = vmatpush1.msra.mxu0 0.0
    %4648 = vmatprep.subr.mxu0 0.0
    %4649 = vmatpush1.msra.mxu0 0.0
    %4650 = vmatprep.subr.mxu0 0.0
    %4651 = vmatpush1.msra.mxu0 0.0
    %4652 = vmatprep.subr.mxu0 0.0
    %4653 = vmatpush1.msra.mxu0 0.0
    %4654 = vmatprep.subr.mxu0 0.0
    %4655 = vmatpush1.msra.mxu0 0.0
    %4656 = vmatprep.subr.mxu0 0.0
    %4657 = vmatpush1.msra.mxu0 0.0
    %4658 = vmatprep.subr.mxu0 0.0
    %4659 = vmatpush1.msra.mxu0 0.0
    %4660 = vmatprep.subr.mxu0 0.0
    %4661 = vmatpush1.msra.mxu0 0.0
    %4662 = vmatprep.subr.mxu0 0.0
    %4663 = vmatpush1.msra.mxu0 0.0
    %4664 = vmatprep.subr.mxu0 0.0
    %4665 = vmatpush1.msra.mxu0 0.0
    %4666 = vmatprep.subr.mxu0 0.0
    %4667 = vmatpush1.msra.mxu0 0.0
    %4668 = vmatprep.subr.mxu0 0.0
    %4669 = vmatpush1.msra.mxu0 0.0
    %4670 = vmatprep.subr.mxu0 0.0
    %4671 = vmatpush1.msra.mxu0 0.0
    %4672 = vmatprep.subr.mxu0 0.0
    %4673 = vmatpush1.msra.mxu0 0.0
    %4674 = vmatprep.subr.mxu0 0.0
    %4675 = vmatpush1.msra.mxu0 0.0
    %4676 = vmatprep.subr.mxu0 0.0
    %4677 = vmatpush1.msra.mxu0 0.0
    %4678 = vmatprep.subr.mxu0 0.0
    %4679 = vmatpush1.msra.mxu0 0.0
    %4680 = vmatprep.subr.mxu0 0.0
    %4681 = vmatpush1.msra.mxu0 0.0
    %4682 = vmatprep.subr.mxu0 0.0
    %4683 = vmatpush1.msra.mxu0 0.0
    %4684 = vmatprep.subr.mxu0 0.0
    %4685 = vmatpush1.msra.mxu0 0.0
    %4686 = vmatprep.mubr.f32.mxu0 0.0
    %4687 = vmatmul.mubr.f32.gmra.mrb[0].mxu0 %v3140
    %v4688 = vpop.f32.mrb[0].mxu0
    %v4689 = vadd.f32 %v4621, %v4688
    %v4690 = vpop.f32.mrb[0].mxu0
    %4691 = vmatprep.mubr.f32.mxu0 0.0
    %4692 = vmatmul.mubr.f32.gmra.mrb[0].mxu0 %v4545
    %v4693 = vpop.f32.mrb[0].mxu0
    %v4694 = vadd.f32 %v4621, %v4693
    %v4695 = vpop.f32.mrb[0].mxu0
    %4696 = vdwg.mxu0
    %v4697 = vld [vmem:[%s1567 + $0x2] sm:$0x1]
    %v4698 = vlaneseq
    %v4699 = vshrl.u32 %v4698, 7
    %v4700 = vsub.s32 0, %v4699
    %v4701 = vrot.slane %v4697, %v4700
    %4702 = vmatprep.subr.mxu0 0.0
    %4703 = vmatpush1.msra.mxu0 %v4531
    %4704 = vmatprep.subr.mxu0 0.0
    %4705 = vmatpush1.msra.mxu0 %v4532
    %4706 = vmatprep.subr.mxu0 0.0
    %4707 = vmatpush1.msra.mxu0 %v4533
    %4708 = vmatprep.subr.mxu0 0.0
    %4709 = vmatpush1.msra.mxu0 %v4534
    %4710 = vmatprep.subr.mxu0 0.0
    %4711 = vmatpush1.msra.mxu0 0.0
    %4712 = vmatprep.subr.mxu0 0.0
    %4713 = vmatpush1.msra.mxu0 0.0
    %4714 = vmatprep.subr.mxu0 0.0
    %4715 = vmatpush1.msra.mxu0 0.0
    %4716 = vmatprep.subr.mxu0 0.0
    %4717 = vmatpush1.msra.mxu0 0.0
    %4718 = vmatprep.subr.mxu0 0.0
    %4719 = vmatpush1.msra.mxu0 0.0
    %4720 = vmatprep.subr.mxu0 0.0
    %4721 = vmatpush1.msra.mxu0 0.0
    %4722 = vmatprep.subr.mxu0 0.0
    %4723 = vmatpush1.msra.mxu0 0.0
    %4724 = vmatprep.subr.mxu0 0.0
    %4725 = vmatpush1.msra.mxu0 0.0
    %4726 = vmatprep.subr.mxu0 0.0
    %4727 = vmatpush1.msra.mxu0 0.0
    %4728 = vmatprep.subr.mxu0 0.0
    %4729 = vmatpush1.msra.mxu0 0.0
    %4730 = vmatprep.subr.mxu0 0.0
    %4731 = vmatpush1.msra.mxu0 0.0
    %4732 = vmatprep.subr.mxu0 0.0
    %4733 = vmatpush1.msra.mxu0 0.0
    %4734 = vmatprep.subr.mxu0 0.0
    %4735 = vmatpush1.msra.mxu0 0.0
    %4736 = vmatprep.subr.mxu0 0.0
    %4737 = vmatpush1.msra.mxu0 0.0
    %4738 = vmatprep.subr.mxu0 0.0
    %4739 = vmatpush1.msra.mxu0 0.0
    %4740 = vmatprep.subr.mxu0 0.0
    %4741 = vmatpush1.msra.mxu0 0.0
    %4742 = vmatprep.subr.mxu0 0.0
    %4743 = vmatpush1.msra.mxu0 0.0
    %4744 = vmatprep.subr.mxu0 0.0
    %4745 = vmatpush1.msra.mxu0 0.0
    %4746 = vmatprep.subr.mxu0 0.0
    %4747 = vmatpush1.msra.mxu0 0.0
    %4748 = vmatprep.subr.mxu0 0.0
    %4749 = vmatpush1.msra.mxu0 0.0
    %4750 = vmatprep.subr.mxu0 0.0
    %4751 = vmatpush1.msra.mxu0 0.0
    %4752 = vmatprep.subr.mxu0 0.0
    %4753 = vmatpush1.msra.mxu0 0.0
    %4754 = vmatprep.subr.mxu0 0.0
    %4755 = vmatpush1.msra.mxu0 0.0
    %4756 = vmatprep.subr.mxu0 0.0
    %4757 = vmatpush1.msra.mxu0 0.0
    %4758 = vmatprep.subr.mxu0 0.0
    %4759 = vmatpush1.msra.mxu0 0.0
    %4760 = vmatprep.subr.mxu0 0.0
    %4761 = vmatpush1.msra.mxu0 0.0
    %4762 = vmatprep.subr.mxu0 0.0
    %4763 = vmatpush1.msra.mxu0 0.0
    %4764 = vmatprep.subr.mxu0 0.0
    %4765 = vmatpush1.msra.mxu0 0.0
    %4766 = vmatprep.mubr.f32.mxu0 0.0
    %4767 = vmatmul.mubr.f32.gmra.mrb[0].mxu0 %v3140
    %v4768 = vpop.f32.mrb[0].mxu0
    %v4769 = vadd.f32 %v4701, %v4768
    %v4770 = vpop.f32.mrb[0].mxu0
    %4771 = vmatprep.mubr.f32.mxu0 0.0
    %4772 = vmatmul.mubr.f32.gmra.mrb[0].mxu0 %v4545
    %v4773 = vpop.f32.mrb[0].mxu0
    %v4774 = vadd.f32 %v4701, %v4773
    %v4775 = vpop.f32.mrb[0].mxu0
    %4776 = vdwg.mxu0
    %v4778 = vsel %vm317, %v4614, 0
    %v4781 = vsel %vm317, %v4689, 0
    %v4784 = vsel %vm317, %v4694, 0
    %4786 = vmatprep.subr.mxu0 0.0
    %4787 = vmatpush1.xpose.msra.mxu0 %v4781
    %4788 = vmatprep.subr.mxu0 0.0
    %4789 = vmatpush1.xpose.msra.mxu0 %v4784
    %4790 = vmatprep.subr.mxu0 0.0
    %4791 = vmatpush1.xpose.msra.mxu0 0.0
    %4792 = vmatprep.subr.mxu0 0.0
    %4793 = vmatpush1.xpose.msra.mxu0 0.0
    %4794 = vmatprep.subr.mxu0 0.0
    %4795 = vmatpush1.xpose.msra.mxu0 0.0
    %4796 = vmatprep.subr.mxu0 0.0
    %4797 = vmatpush1.xpose.msra.mxu0 0.0
    %4798 = vmatprep.subr.mxu0 0.0
    %4799 = vmatpush1.xpose.msra.mxu0 0.0
    %4800 = vmatprep.subr.mxu0 0.0
    %4801 = vmatpush1.xpose.msra.mxu0 0.0
    %4802 = vmatprep.subr.mxu0 0.0
    %4803 = vmatpush1.xpose.msra.mxu0 0.0
    %4804 = vmatprep.subr.mxu0 0.0
    %4805 = vmatpush1.xpose.msra.mxu0 0.0
    %4806 = vmatprep.subr.mxu0 0.0
    %4807 = vmatpush1.xpose.msra.mxu0 0.0
    %4808 = vmatprep.subr.mxu0 0.0
    %4809 = vmatpush1.xpose.msra.mxu0 0.0
    %4810 = vmatprep.subr.mxu0 0.0
    %4811 = vmatpush1.xpose.msra.mxu0 0.0
    %4812 = vmatprep.subr.mxu0 0.0
    %4813 = vmatpush1.xpose.msra.mxu0 0.0
    %4814 = vmatprep.subr.mxu0 0.0
    %4815 = vmatpush1.xpose.msra.mxu0 0.0
    %4816 = vmatprep.subr.mxu0 0.0
    %4817 = vmatpush1.xpose.msra.mxu0 0.0
    %4818 = vmatprep.subr.mxu0 0.0
    %4819 = vmatpush1.xpose.msra.mxu0 0.0
    %4820 = vmatprep.subr.mxu0 0.0
    %4821 = vmatpush1.xpose.msra.mxu0 0.0
    %4822 = vmatprep.subr.mxu0 0.0
    %4823 = vmatpush1.xpose.msra.mxu0 0.0
    %4824 = vmatprep.subr.mxu0 0.0
    %4825 = vmatpush1.xpose.msra.mxu0 0.0
    %4826 = vmatprep.subr.mxu0 0.0
    %4827 = vmatpush1.xpose.msra.mxu0 0.0
    %4828 = vmatprep.subr.mxu0 0.0
    %4829 = vmatpush1.xpose.msra.mxu0 0.0
    %4830 = vmatprep.subr.mxu0 0.0
    %4831 = vmatpush1.xpose.msra.mxu0 0.0
    %4832 = vmatprep.subr.mxu0 0.0
    %4833 = vmatpush1.xpose.msra.mxu0 0.0
    %4834 = vmatprep.subr.mxu0 0.0
    %4835 = vmatpush1.xpose.msra.mxu0 0.0
    %4836 = vmatprep.subr.mxu0 0.0
    %4837 = vmatpush1.xpose.msra.mxu0 0.0
    %4838 = vmatprep.subr.mxu0 0.0
    %4839 = vmatpush1.xpose.msra.mxu0 0.0
    %4840 = vmatprep.subr.mxu0 0.0
    %4841 = vmatpush1.xpose.msra.mxu0 0.0
    %4842 = vmatprep.subr.mxu0 0.0
    %4843 = vmatpush1.xpose.msra.mxu0 0.0
    %4844 = vmatprep.subr.mxu0 0.0
    %4845 = vmatpush1.xpose.msra.mxu0 0.0
    %4846 = vmatprep.subr.mxu0 0.0
    %4847 = vmatpush1.xpose.msra.mxu0 0.0
    %4848 = vmatprep.subr.mxu0 0.0
    %4849 = vmatpush1.xpose.msra.mxu0 0.0
    %4850 = vmatprep.mubr.f32.mxu0 0.0
    %4851 = vmatmul.mubr.f32.gmra.mrb[0].mxu0 %v4778
    %v4852 = vpop.f32.mrb[0].mxu0
    %v4853 = vadd.f32 0.0, %v4852
    %v4854 = vpop.f32.mrb[0].mxu0
    %4855 = vdwg.mxu0
    %v4856 = vmul.f32 %v4853, 0.35355338
    %v4857 = vadd.f32 %v4856, %v3380
    %v4858 = vsel %vm403, %v4857, -inf
    %4859 = vmax.xlane.f32.xlu0 %v4858
    %v4860 = vpop.xlane.xlu0 %4859
    %v4861 = vsub.f32 %v4857, %v4860
    %v4862 = vmul.f32 %v4861, 1.442695
    %v4863 = vpow.pop %v4862
    %v4864 = vsel %vm403, %v4863, 0.0
    %4865 = vadd.xlane.f32.xlu0 %v4864
    %v4866 = vpop.xlane.xlu0 %4865
    %v4867 = vrcp.pop %v4866
    %v4868 = vmul.f32 %v4863, %v4867
    %v4870 = vsel %vm403, %v4868, 0
    %4872 = vmatprep.subr.mxu0 0.0
    %4873 = vmatpush1.msra.mxu0 %v4769
    %4874 = vmatprep.subr.mxu0 0.0
    %4875 = vmatpush1.msra.mxu0 %v4774
    %4876 = vmatprep.subr.mxu0 0.0
    %4877 = vmatpush1.msra.mxu0 0.0
    %4878 = vmatprep.subr.mxu0 0.0
    %4879 = vmatpush1.msra.mxu0 0.0
    %4880 = vmatprep.subr.mxu0 0.0
    %4881 = vmatpush1.msra.mxu0 0.0
    %4882 = vmatprep.subr.mxu0 0.0
    %4883 = vmatpush1.msra.mxu0 0.0
    %4884 = vmatprep.subr.mxu0 0.0
    %4885 = vmatpush1.msra.mxu0 0.0
    %4886 = vmatprep.subr.mxu0 0.0
    %4887 = vmatpush1.msra.mxu0 0.0
    %4888 = vmatprep.subr.mxu0 0.0
    %4889 = vmatpush1.msra.mxu0 0.0
    %4890 = vmatprep.subr.mxu0 0.0
    %4891 = vmatpush1.msra.mxu0 0.0
    %4892 = vmatprep.subr.mxu0 0.0
    %4893 = vmatpush1.msra.mxu0 0.0
    %4894 = vmatprep.subr.mxu0 0.0
    %4895 = vmatpush1.msra.mxu0 0.0
    %4896 = vmatprep.subr.mxu0 0.0
    %4897 = vmatpush1.msra.mxu0 0.0
    %4898 = vmatprep.subr.mxu0 0.0
    %4899 = vmatpush1.msra.mxu0 0.0
    %4900 = vmatprep.subr.mxu0 0.0
    %4901 = vmatpush1.msra.mxu0 0.0
    %4902 = vmatprep.subr.mxu0 0.0
    %4903 = vmatpush1.msra.mxu0 0.0
    %4904 = vmatprep.subr.mxu0 0.0
    %4905 = vmatpush1.msra.mxu0 0.0
    %4906 = vmatprep.subr.mxu0 0.0
    %4907 = vmatpush1.msra.mxu0 0.0
    %4908 = vmatprep.subr.mxu0 0.0
    %4909 = vmatpush1.msra.mxu0 0.0
    %4910 = vmatprep.subr.mxu0 0.0
    %4911 = vmatpush1.msra.mxu0 0.0
    %4912 = vmatprep.subr.mxu0 0.0
    %4913 = vmatpush1.msra.mxu0 0.0
    %4914 = vmatprep.subr.mxu0 0.0
    %4915 = vmatpush1.msra.mxu0 0.0
    %4916 = vmatprep.subr.mxu0 0.0
    %4917 = vmatpush1.msra.mxu0 0.0
    %4918 = vmatprep.subr.mxu0 0.0
    %4919 = vmatpush1.msra.mxu0 0.0
    %4920 = vmatprep.subr.mxu0 0.0
    %4921 = vmatpush1.msra.mxu0 0.0
    %4922 = vmatprep.subr.mxu0 0.0
    %4923 = vmatpush1.msra.mxu0 0.0
    %4924 = vmatprep.subr.mxu0 0.0
    %4925 = vmatpush1.msra.mxu0 0.0
    %4926 = vmatprep.subr.mxu0 0.0
    %4927 = vmatpush1.msra.mxu0 0.0
    %4928 = vmatprep.subr.mxu0 0.0
    %4929 = vmatpush1.msra.mxu0 0.0
    %4930 = vmatprep.subr.mxu0 0.0
    %4931 = vmatpush1.msra.mxu0 0.0
    %4932 = vmatprep.subr.mxu0 0.0
    %4933 = vmatpush1.msra.mxu0 0.0
    %4934 = vmatprep.subr.mxu0 0.0
    %4935 = vmatpush1.msra.mxu0 0.0
    %4936 = vmatprep.mubr.f32.mxu0 0.0
    %4937 = vmatmul.mubr.f32.gmra.mrb[0].mxu0 %v4870
    %v4938 = vpop.f32.mrb[0].mxu0
    %v4939 = vadd.f32 0.0, %v4938
    %v4940 = vpop.f32.mrb[0].mxu0
    %4941 = vdwg.mxu0
    %4942 = vrot.lane.b32.xlu0 %v4614, 120
    %v4943 = vpop.permute.xlu0 %4942
    %4944 = vrot.lane.b32.xlu0 %v4689, 120
    %v4945 = vpop.permute.xlu0 %4944
    %4946 = vrot.lane.b32.xlu0 %v4694, 120
    %v4947 = vpop.permute.xlu0 %4946
    %v4948 = vsel %vm317, %v4943, 0
    %v4950 = vsel %vm317, %v4945, 0
    %v4952 = vsel %vm317, %v4947, 0
    %4954 = vmatprep.subr.mxu0 0.0
    %4955 = vmatpush1.xpose.msra.mxu0 %v4950
    %4956 = vmatprep.subr.mxu0 0.0
    %4957 = vmatpush1.xpose.msra.mxu0 %v4952
    %4958 = vmatprep.subr.mxu0 0.0
    %4959 = vmatpush1.xpose.msra.mxu0 0.0
    %4960 = vmatprep.subr.mxu0 0.0
    %4961 = vmatpush1.xpose.msra.mxu0 0.0
    %4962 = vmatprep.subr.mxu0 0.0
    %4963 = vmatpush1.xpose.msra.mxu0 0.0
    %4964 = vmatprep.subr.mxu0 0.0
    %4965 = vmatpush1.xpose.msra.mxu0 0.0
    %4966 = vmatprep.subr.mxu0 0.0
    %4967 = vmatpush1.xpose.msra.mxu0 0.0
    %4968 = vmatprep.subr.mxu0 0.0
    %4969 = vmatpush1.xpose.msra.mxu0 0.0
    %4970 = vmatprep.subr.mxu0 0.0
    %4971 = vmatpush1.xpose.msra.mxu0 0.0
    %4972 = vmatprep.subr.mxu0 0.0
    %4973 = vmatpush1.xpose.msra.mxu0 0.0
    %4974 = vmatprep.subr.mxu0 0.0
    %4975 = vmatpush1.xpose.msra.mxu0 0.0
    %4976 = vmatprep.subr.mxu0 0.0
    %4977 = vmatpush1.xpose.msra.mxu0 0.0
    %4978 = vmatprep.subr.mxu0 0.0
    %4979 = vmatpush1.xpose.msra.mxu0 0.0
    %4980 = vmatprep.subr.mxu0 0.0
    %4981 = vmatpush1.xpose.msra.mxu0 0.0
    %4982 = vmatprep.subr.mxu0 0.0
    %4983 = vmatpush1.xpose.msra.mxu0 0.0
    %4984 = vmatprep.subr.mxu0 0.0
    %4985 = vmatpush1.xpose.msra.mxu0 0.0
    %4986 = vmatprep.subr.mxu0 0.0
    %4987 = vmatpush1.xpose.msra.mxu0 0.0
    %4988 = vmatprep.subr.mxu0 0.0
    %4989 = vmatpush1.xpose.msra.mxu0 0.0
    %4990 = vmatprep.subr.mxu0 0.0
    %4991 = vmatpush1.xpose.msra.mxu0 0.0
    %4992 = vmatprep.subr.mxu0 0.0
    %4993 = vmatpush1.xpose.msra.mxu0 0.0
    %4994 = vmatprep.subr.mxu0 0.0
    %4995 = vmatpush1.xpose.msra.mxu0 0.0
    %4996 = vmatprep.subr.mxu0 0.0
    %4997 = vmatpush1.xpose.msra.mxu0 0.0
    %4998 = vmatprep.subr.mxu0 0.0
    %4999 = vmatpush1.xpose.msra.mxu0 0.0
    %5000 = vmatprep.subr.mxu0 0.0
    %5001 = vmatpush1.xpose.msra.mxu0 0.0
    %5002 = vmatprep.subr.mxu0 0.0
    %5003 = vmatpush1.xpose.msra.mxu0 0.0
    %5004 = vmatprep.subr.mxu0 0.0
    %5005 = vmatpush1.xpose.msra.mxu0 0.0
    %5006 = vmatprep.subr.mxu0 0.0
    %5007 = vmatpush1.xpose.msra.mxu0 0.0
    %5008 = vmatprep.subr.mxu0 0.0
    %5009 = vmatpush1.xpose.msra.mxu0 0.0
    %5010 = vmatprep.subr.mxu0 0.0
    %5011 = vmatpush1.xpose.msra.mxu0 0.0
    %5012 = vmatprep.subr.mxu0 0.0
    %5013 = vmatpush1.xpose.msra.mxu0 0.0
    %5014 = vmatprep.subr.mxu0 0.0
    %5015 = vmatpush1.xpose.msra.mxu0 0.0
    %5016 = vmatprep.subr.mxu0 0.0
    %5017 = vmatpush1.xpose.msra.mxu0 0.0
    %5018 = vmatprep.mubr.f32.mxu0 0.0
    %5019 = vmatmul.mubr.f32.gmra.mrb[0].mxu0 %v4948
    %v5020 = vpop.f32.mrb[0].mxu0
    %v5021 = vadd.f32 0.0, %v5020
    %v5022 = vpop.f32.mrb[0].mxu0
    %5023 = vdwg.mxu0
    %v5024 = vmul.f32 %v5021, 0.35355338
    %v5025 = vadd.f32 %v5024, %v3380
    %v5026 = vsel %vm403, %v5025, -inf
    %5027 = vmax.xlane.f32.xlu0 %v5026
    %v5028 = vpop.xlane.xlu0 %5027
    %v5029 = vsub.f32 %v5025, %v5028
    %v5030 = vmul.f32 %v5029, 1.442695
    %v5031 = vpow.pop %v5030
    %v5032 = vsel %vm403, %v5031, 0.0
    %5033 = vadd.xlane.f32.xlu0 %v5032
    %v5034 = vpop.xlane.xlu0 %5033
    %v5035 = vrcp.pop %v5034
    %v5036 = vmul.f32 %v5031, %v5035
    %5039 = vrot.lane.b32.xlu0 %v4769, 120
    %v5040 = vpop.permute.xlu0 %5039
    %5041 = vrot.lane.b32.xlu0 %v4774, 120
    %v5042 = vpop.permute.xlu0 %5041
    %v5046 = vsel %vm403, %v5036, 0
    %5048 = vmatprep.subr.mxu0 0.0
    %5049 = vmatpush1.msra.mxu0 %v5040
    %5050 = vmatprep.subr.mxu0 0.0
    %5051 = vmatpush1.msra.mxu0 %v5042
    %5052 = vmatprep.subr.mxu0 0.0
    %5053 = vmatpush1.msra.mxu0 0.0
    %5054 = vmatprep.subr.mxu0 0.0
    %5055 = vmatpush1.msra.mxu0 0.0
    %5056 = vmatprep.subr.mxu0 0.0
    %5057 = vmatpush1.msra.mxu0 0.0
    %5058 = vmatprep.subr.mxu0 0.0
    %5059 = vmatpush1.msra.mxu0 0.0
    %5060 = vmatprep.subr.mxu0 0.0
    %5061 = vmatpush1.msra.mxu0 0.0
    %5062 = vmatprep.subr.mxu0 0.0
    %5063 = vmatpush1.msra.mxu0 0.0
    %5064 = vmatprep.subr.mxu0 0.0
    %5065 = vmatpush1.msra.mxu0 0.0
    %5066 = vmatprep.subr.mxu0 0.0
    %5067 = vmatpush1.msra.mxu0 0.0
    %5068 = vmatprep.subr.mxu0 0.0
    %5069 = vmatpush1.msra.mxu0 0.0
    %5070 = vmatprep.subr.mxu0 0.0
    %5071 = vmatpush1.msra.mxu0 0.0
    %5072 = vmatprep.subr.mxu0 0.0
    %5073 = vmatpush1.msra.mxu0 0.0
    %5074 = vmatprep.subr.mxu0 0.0
    %5075 = vmatpush1.msra.mxu0 0.0
    %5076 = vmatprep.subr.mxu0 0.0
    %5077 = vmatpush1.msra.mxu0 0.0
    %5078 = vmatprep.subr.mxu0 0.0
    %5079 = vmatpush1.msra.mxu0 0.0
    %5080 = vmatprep.subr.mxu0 0.0
    %5081 = vmatpush1.msra.mxu0 0.0
    %5082 = vmatprep.subr.mxu0 0.0
    %5083 = vmatpush1.msra.mxu0 0.0
    %5084 = vmatprep.subr.mxu0 0.0
    %5085 = vmatpush1.msra.mxu0 0.0
    %5086 = vmatprep.subr.mxu0 0.0
    %5087 = vmatpush1.msra.mxu0 0.0
    %5088 = vmatprep.subr.mxu0 0.0
    %5089 = vmatpush1.msra.mxu0 0.0
    %5090 = vmatprep.subr.mxu0 0.0
    %5091 = vmatpush1.msra.mxu0 0.0
    %5092 = vmatprep.subr.mxu0 0.0
    %5093 = vmatpush1.msra.mxu0 0.0
    %5094 = vmatprep.subr.mxu0 0.0
    %5095 = vmatpush1.msra.mxu0 0.0
    %5096 = vmatprep.subr.mxu0 0.0
    %5097 = vmatpush1.msra.mxu0 0.0
    %5098 = vmatprep.subr.mxu0 0.0
    %5099 = vmatpush1.msra.mxu0 0.0
    %5100 = vmatprep.subr.mxu0 0.0
    %5101 = vmatpush1.msra.mxu0 0.0
    %5102 = vmatprep.subr.mxu0 0.0
    %5103 = vmatpush1.msra.mxu0 0.0
    %5104 = vmatprep.subr.mxu0 0.0
    %5105 = vmatpush1.msra.mxu0 0.0
    %5106 = vmatprep.subr.mxu0 0.0
    %5107 = vmatpush1.msra.mxu0 0.0
    %5108 = vmatprep.subr.mxu0 0.0
    %5109 = vmatpush1.msra.mxu0 0.0
    %5110 = vmatprep.subr.mxu0 0.0
    %5111 = vmatpush1.msra.mxu0 0.0
    %5112 = vmatprep.mubr.f32.mxu0 0.0
    %5113 = vmatmul.mubr.f32.gmra.mrb[0].mxu0 %v5046
    %v5114 = vpop.f32.mrb[0].mxu0
    %v5115 = vadd.f32 0.0, %v5114
    %v5116 = vpop.f32.mrb[0].mxu0
    %5117 = vdwg.mxu0
    %v5119 = vsel %vm317, %v5115, 0
    %5121 = vmatprep.subr.mxu0 0.0
    %5122 = vmatpush1.msra.mxu0 %v4536
    %5123 = vmatprep.subr.mxu0 0.0
    %5124 = vmatpush1.msra.mxu0 0.0
    %5125 = vmatprep.subr.mxu0 0.0
    %5126 = vmatpush1.msra.mxu0 0.0
    %5127 = vmatprep.subr.mxu0 0.0
    %5128 = vmatpush1.msra.mxu0 0.0
    %5129 = vmatprep.subr.mxu0 0.0
    %5130 = vmatpush1.msra.mxu0 0.0
    %5131 = vmatprep.subr.mxu0 0.0
    %5132 = vmatpush1.msra.mxu0 0.0
    %5133 = vmatprep.subr.mxu0 0.0
    %5134 = vmatpush1.msra.mxu0 0.0
    %5135 = vmatprep.subr.mxu0 0.0
    %5136 = vmatpush1.msra.mxu0 0.0
    %5137 = vmatprep.subr.mxu0 0.0
    %5138 = vmatpush1.msra.mxu0 0.0
    %5139 = vmatprep.subr.mxu0 0.0
    %5140 = vmatpush1.msra.mxu0 0.0
    %5141 = vmatprep.subr.mxu0 0.0
    %5142 = vmatpush1.msra.mxu0 0.0
    %5143 = vmatprep.subr.mxu0 0.0
    %5144 = vmatpush1.msra.mxu0 0.0
    %5145 = vmatprep.subr.mxu0 0.0
    %5146 = vmatpush1.msra.mxu0 0.0
    %5147 = vmatprep.subr.mxu0 0.0
    %5148 = vmatpush1.msra.mxu0 0.0
    %5149 = vmatprep.subr.mxu0 0.0
    %5150 = vmatpush1.msra.mxu0 0.0
    %5151 = vmatprep.subr.mxu0 0.0
    %5152 = vmatpush1.msra.mxu0 0.0
    %5153 = vmatprep.subr.mxu0 0.0
    %5154 = vmatpush1.msra.mxu0 0.0
    %5155 = vmatprep.subr.mxu0 0.0
    %5156 = vmatpush1.msra.mxu0 0.0
    %5157 = vmatprep.subr.mxu0 0.0
    %5158 = vmatpush1.msra.mxu0 0.0
    %5159 = vmatprep.subr.mxu0 0.0
    %5160 = vmatpush1.msra.mxu0 0.0
    %5161 = vmatprep.subr.mxu0 0.0
    %5162 = vmatpush1.msra.mxu0 0.0
    %5163 = vmatprep.subr.mxu0 0.0
    %5164 = vmatpush1.msra.mxu0 0.0
    %5165 = vmatprep.subr.mxu0 0.0
    %5166 = vmatpush1.msra.mxu0 0.0
    %5167 = vmatprep.subr.mxu0 0.0
    %5168 = vmatpush1.msra.mxu0 0.0
    %5169 = vmatprep.subr.mxu0 0.0
    %5170 = vmatpush1.msra.mxu0 0.0
    %5171 = vmatprep.subr.mxu0 0.0
    %5172 = vmatpush1.msra.mxu0 0.0
    %5173 = vmatprep.subr.mxu0 0.0
    %5174 = vmatpush1.msra.mxu0 0.0
    %5175 = vmatprep.subr.mxu0 0.0
    %5176 = vmatpush1.msra.mxu0 0.0
    %5177 = vmatprep.subr.mxu0 0.0
    %5178 = vmatpush1.msra.mxu0 0.0
    %5179 = vmatprep.subr.mxu0 0.0
    %5180 = vmatpush1.msra.mxu0 0.0
    %5181 = vmatprep.subr.mxu0 0.0
    %5182 = vmatpush1.msra.mxu0 0.0
    %5183 = vmatprep.subr.mxu0 0.0
    %5184 = vmatpush1.msra.mxu0 0.0
    %5185 = vmatprep.mubr.f32.mxu0 0.0
    %5186 = vmatmul.mubr.f32.gmra.mrb[0].mxu0 %v5119
    %v5187 = vpop.f32.mrb[0].mxu0
    %v5188 = vadd.f32 0.0, %v5187
    %v5189 = vpop.f32.mrb[0].mxu0
    %5190 = vdwg.mxu0
    %v5192 = vsel %vm317, %v4939, 0
    %5194 = vmatprep.subr.mxu0 0.0
    %5195 = vmatpush1.msra.mxu0 %v4535
    %5196 = vmatprep.subr.mxu0 0.0
    %5197 = vmatpush1.msra.mxu0 0.0
    %5198 = vmatprep.subr.mxu0 0.0
    %5199 = vmatpush1.msra.mxu0 0.0
    %5200 = vmatprep.subr.mxu0 0.0
    %5201 = vmatpush1.msra.mxu0 0.0
    %5202 = vmatprep.subr.mxu0 0.0
    %5203 = vmatpush1.msra.mxu0 0.0
    %5204 = vmatprep.subr.mxu0 0.0
    %5205 = vmatpush1.msra.mxu0 0.0
    %5206 = vmatprep.subr.mxu0 0.0
    %5207 = vmatpush1.msra.mxu0 0.0
    %5208 = vmatprep.subr.mxu0 0.0
    %5209 = vmatpush1.msra.mxu0 0.0
    %5210 = vmatprep.subr.mxu0 0.0
    %5211 = vmatpush1.msra.mxu0 0.0
    %5212 = vmatprep.subr.mxu0 0.0
    %5213 = vmatpush1.msra.mxu0 0.0
    %5214 = vmatprep.subr.mxu0 0.0
    %5215 = vmatpush1.msra.mxu0 0.0
    %5216 = vmatprep.subr.mxu0 0.0
    %5217 = vmatpush1.msra.mxu0 0.0
    %5218 = vmatprep.subr.mxu0 0.0
    %5219 = vmatpush1.msra.mxu0 0.0
    %5220 = vmatprep.subr.mxu0 0.0
    %5221 = vmatpush1.msra.mxu0 0.0
    %5222 = vmatprep.subr.mxu0 0.0
    %5223 = vmatpush1.msra.mxu0 0.0
    %5224 = vmatprep.subr.mxu0 0.0
    %5225 = vmatpush1.msra.mxu0 0.0
    %5226 = vmatprep.subr.mxu0 0.0
    %5227 = vmatpush1.msra.mxu0 0.0
    %5228 = vmatprep.subr.mxu0 0.0
    %5229 = vmatpush1.msra.mxu0 0.0
    %5230 = vmatprep.subr.mxu0 0.0
    %5231 = vmatpush1.msra.mxu0 0.0
    %5232 = vmatprep.subr.mxu0 0.0
    %5233 = vmatpush1.msra.mxu0 0.0
    %5234 = vmatprep.subr.mxu0 0.0
    %5235 = vmatpush1.msra.mxu0 0.0
    %5236 = vmatprep.subr.mxu0 0.0
    %5237 = vmatpush1.msra.mxu0 0.0
    %5238 = vmatprep.subr.mxu0 0.0
    %5239 = vmatpush1.msra.mxu0 0.0
    %5240 = vmatprep.subr.mxu0 0.0
    %5241 = vmatpush1.msra.mxu0 0.0
    %5242 = vmatprep.subr.mxu0 0.0
    %5243 = vmatpush1.msra.mxu0 0.0
    %5244 = vmatprep.subr.mxu0 0.0
    %5245 = vmatpush1.msra.mxu0 0.0
    %5246 = vmatprep.subr.mxu0 0.0
    %5247 = vmatpush1.msra.mxu0 0.0
    %5248 = vmatprep.subr.mxu0 0.0
    %5249 = vmatpush1.msra.mxu0 0.0
    %5250 = vmatprep.subr.mxu0 0.0
    %5251 = vmatpush1.msra.mxu0 0.0
    %5252 = vmatprep.subr.mxu0 0.0
    %5253 = vmatpush1.msra.mxu0 0.0
    %5254 = vmatprep.subr.mxu0 0.0
    %5255 = vmatpush1.msra.mxu0 0.0
    %5256 = vmatprep.subr.mxu0 0.0
    %5257 = vmatpush1.msra.mxu0 0.0
    %5258 = vmatprep.mubr.f32.mxu0 0.0
    %5259 = vmatmul.mubr.f32.gmra.mrb[0].mxu0 %v5192
    %v5260 = vpop.f32.mrb[0].mxu0
    %v5261 = vadd.f32 %v5188, %v5260
    %v5262 = vpop.f32.mrb[0].mxu0
    %5263 = vdwg.mxu0
    %5264 = vrot.lane.b32.xlu0 %v4614, 112
    %v5265 = vpop.permute.xlu0 %5264
    %5266 = vrot.lane.b32.xlu0 %v4689, 112
    %v5267 = vpop.permute.xlu0 %5266
    %5268 = vrot.lane.b32.xlu0 %v4694, 112
    %v5269 = vpop.permute.xlu0 %5268
    %v5270 = vsel %vm317, %v5265, 0
    %v5272 = vsel %vm317, %v5267, 0
    %v5274 = vsel %vm317, %v5269, 0
    %5276 = vmatprep.subr.mxu0 0.0
    %5277 = vmatpush1.xpose.msra.mxu0 %v5272
    %5278 = vmatprep.subr.mxu0 0.0
    %5279 = vmatpush1.xpose.msra.mxu0 %v5274
    %5280 = vmatprep.subr.mxu0 0.0
    %5281 = vmatpush1.xpose.msra.mxu0 0.0
    %5282 = vmatprep.subr.mxu0 0.0
    %5283 = vmatpush1.xpose.msra.mxu0 0.0
    %5284 = vmatprep.subr.mxu0 0.0
    %5285 = vmatpush1.xpose.msra.mxu0 0.0
    %5286 = vmatprep.subr.mxu0 0.0
    %5287 = vmatpush1.xpose.msra.mxu0 0.0
    %5288 = vmatprep.subr.mxu0 0.0
    %5289 = vmatpush1.xpose.msra.mxu0 0.0
    %5290 = vmatprep.subr.mxu0 0.0
    %5291 = vmatpush1.xpose.msra.mxu0 0.0
    %5292 = vmatprep.subr.mxu0 0.0
    %5293 = vmatpush1.xpose.msra.mxu0 0.0
    %5294 = vmatprep.subr.mxu0 0.0
    %5295 = vmatpush1.xpose.msra.mxu0 0.0
    %5296 = vmatprep.subr.mxu0 0.0
    %5297 = vmatpush1.xpose.msra.mxu0 0.0
    %5298 = vmatprep.subr.mxu0 0.0
    %5299 = vmatpush1.xpose.msra.mxu0 0.0
    %5300 = vmatprep.subr.mxu0 0.0
    %5301 = vmatpush1.xpose.msra.mxu0 0.0
    %5302 = vmatprep.subr.mxu0 0.0
    %5303 = vmatpush1.xpose.msra.mxu0 0.0
    %5304 = vmatprep.subr.mxu0 0.0
    %5305 = vmatpush1.xpose.msra.mxu0 0.0
    %5306 = vmatprep.subr.mxu0 0.0
    %5307 = vmatpush1.xpose.msra.mxu0 0.0
    %5308 = vmatprep.subr.mxu0 0.0
    %5309 = vmatpush1.xpose.msra.mxu0 0.0
    %5310 = vmatprep.subr.mxu0 0.0
    %5311 = vmatpush1.xpose.msra.mxu0 0.0
    %5312 = vmatprep.subr.mxu0 0.0
    %5313 = vmatpush1.xpose.msra.mxu0 0.0
    %5314 = vmatprep.subr.mxu0 0.0
    %5315 = vmatpush1.xpose.msra.mxu0 0.0
    %5316 = vmatprep.subr.mxu0 0.0
    %5317 = vmatpush1.xpose.msra.mxu0 0.0
    %5318 = vmatprep.subr.mxu0 0.0
    %5319 = vmatpush1.xpose.msra.mxu0 0.0
    %5320 = vmatprep.subr.mxu0 0.0
    %5321 = vmatpush1.xpose.msra.mxu0 0.0
    %5322 = vmatprep.subr.mxu0 0.0
    %5323 = vmatpush1.xpose.msra.mxu0 0.0
    %5324 = vmatprep.subr.mxu0 0.0
    %5325 = vmatpush1.xpose.msra.mxu0 0.0
    %5326 = vmatprep.subr.mxu0 0.0
    %5327 = vmatpush1.xpose.msra.mxu0 0.0
    %5328 = vmatprep.subr.mxu0 0.0
    %5329 = vmatpush1.xpose.msra.mxu0 0.0
    %5330 = vmatprep.subr.mxu0 0.0
    %5331 = vmatpush1.xpose.msra.mxu0 0.0
    %5332 = vmatprep.subr.mxu0 0.0
    %5333 = vmatpush1.xpose.msra.mxu0 0.0
    %5334 = vmatprep.subr.mxu0 0.0
    %5335 = vmatpush1.xpose.msra.mxu0 0.0
    %5336 = vmatprep.subr.mxu0 0.0
    %5337 = vmatpush1.xpose.msra.mxu0 0.0
    %5338 = vmatprep.subr.mxu0 0.0
    %5339 = vmatpush1.xpose.msra.mxu0 0.0
    %5340 = vmatprep.mubr.f32.mxu0 0.0
    %5341 = vmatmul.mubr.f32.gmra.mrb[0].mxu0 %v5270
    %v5342 = vpop.f32.mrb[0].mxu0
    %v5343 = vadd.f32 0.0, %v5342
    %v5344 = vpop.f32.mrb[0].mxu0
    %5345 = vdwg.mxu0
    %v5346 = vmul.f32 %v5343, 0.35355338
    %v5347 = vadd.f32 %v5346, %v3380
    %v5348 = vsel %vm403, %v5347, -inf
    %5349 = vmax.xlane.f32.xlu0 %v5348
    %v5350 = vpop.xlane.xlu0 %5349
    %v5351 = vsub.f32 %v5347, %v5350
    %v5352 = vmul.f32 %v5351, 1.442695
    %v5353 = vpow.pop %v5352
    %v5354 = vsel %vm403, %v5353, 0.0
    %5355 = vadd.xlane.f32.xlu0 %v5354
    %v5356 = vpop.xlane.xlu0 %5355
    %v5357 = vrcp.pop %v5356
    %v5358 = vmul.f32 %v5353, %v5357
    %5359 = vrot.lane.b32.xlu0 %v4769, 112
    %v5360 = vpop.permute.xlu0 %5359
    %5361 = vrot.lane.b32.xlu0 %v4774, 112
    %v5362 = vpop.permute.xlu0 %5361
    %v5366 = vsel %vm403, %v5358, 0
    %5368 = vmatprep.subr.mxu0 0.0
    %5369 = vmatpush1.msra.mxu0 %v5360
    %5370 = vmatprep.subr.mxu0 0.0
    %5371 = vmatpush1.msra.mxu0 %v5362
    %5372 = vmatprep.subr.mxu0 0.0
    %5373 = vmatpush1.msra.mxu0 0.0
    %5374 = vmatprep.subr.mxu0 0.0
    %5375 = vmatpush1.msra.mxu0 0.0
    %5376 = vmatprep.subr.mxu0 0.0
    %5377 = vmatpush1.msra.mxu0 0.0
    %5378 = vmatprep.subr.mxu0 0.0
    %5379 = vmatpush1.msra.mxu0 0.0
    %5380 = vmatprep.subr.mxu0 0.0
    %5381 = vmatpush1.msra.mxu0 0.0
    %5382 = vmatprep.subr.mxu0 0.0
    %5383 = vmatpush1.msra.mxu0 0.0
    %5384 = vmatprep.subr.mxu0 0.0
    %5385 = vmatpush1.msra.mxu0 0.0
    %5386 = vmatprep.subr.mxu0 0.0
    %5387 = vmatpush1.msra.mxu0 0.0
    %5388 = vmatprep.subr.mxu0 0.0
    %5389 = vmatpush1.msra.mxu0 0.0
    %5390 = vmatprep.subr.mxu0 0.0
    %5391 = vmatpush1.msra.mxu0 0.0
    %5392 = vmatprep.subr.mxu0 0.0
    %5393 = vmatpush1.msra.mxu0 0.0
    %5394 = vmatprep.subr.mxu0 0.0
    %5395 = vmatpush1.msra.mxu0 0.0
    %5396 = vmatprep.subr.mxu0 0.0
    %5397 = vmatpush1.msra.mxu0 0.0
    %5398 = vmatprep.subr.mxu0 0.0
    %5399 = vmatpush1.msra.mxu0 0.0
    %5400 = vmatprep.subr.mxu0 0.0
    %5401 = vmatpush1.msra.mxu0 0.0
    %5402 = vmatprep.subr.mxu0 0.0
    %5403 = vmatpush1.msra.mxu0 0.0
    %5404 = vmatprep.subr.mxu0 0.0
    %5405 = vmatpush1.msra.mxu0 0.0
    %5406 = vmatprep.subr.mxu0 0.0
    %5407 = vmatpush1.msra.mxu0 0.0
    %5408 = vmatprep.subr.mxu0 0.0
    %5409 = vmatpush1.msra.mxu0 0.0
    %5410 = vmatprep.subr.mxu0 0.0
    %5411 = vmatpush1.msra.mxu0 0.0
    %5412 = vmatprep.subr.mxu0 0.0
    %5413 = vmatpush1.msra.mxu0 0.0
    %5414 = vmatprep.subr.mxu0 0.0
    %5415 = vmatpush1.msra.mxu0 0.0
    %5416 = vmatprep.subr.mxu0 0.0
    %5417 = vmatpush1.msra.mxu0 0.0
    %5418 = vmatprep.subr.mxu0 0.0
    %5419 = vmatpush1.msra.mxu0 0.0
    %5420 = vmatprep.subr.mxu0 0.0
    %5421 = vmatpush1.msra.mxu0 0.0
    %5422 = vmatprep.subr.mxu0 0.0
    %5423 = vmatpush1.msra.mxu0 0.0
    %5424 = vmatprep.subr.mxu0 0.0
    %5425 = vmatpush1.msra.mxu0 0.0
    %5426 = vmatprep.subr.mxu0 0.0
    %5427 = vmatpush1.msra.mxu0 0.0
    %5428 = vmatprep.subr.mxu0 0.0
    %5429 = vmatpush1.msra.mxu0 0.0
    %5430 = vmatprep.subr.mxu0 0.0
    %5431 = vmatpush1.msra.mxu0 0.0
    %5432 = vmatprep.mubr.f32.mxu0 0.0
    %5433 = vmatmul.mubr.f32.gmra.mrb[0].mxu0 %v5366
    %v5434 = vpop.f32.mrb[0].mxu0
    %v5435 = vadd.f32 0.0, %v5434
    %v5436 = vpop.f32.mrb[0].mxu0
    %5437 = vdwg.mxu0
    %v5439 = vsel %vm317, %v5435, 0
    %5441 = vmatprep.subr.mxu0 0.0
    %5442 = vmatpush1.msra.mxu0 %v4537
    %5443 = vmatprep.subr.mxu0 0.0
    %5444 = vmatpush1.msra.mxu0 0.0
    %5445 = vmatprep.subr.mxu0 0.0
    %5446 = vmatpush1.msra.mxu0 0.0
    %5447 = vmatprep.subr.mxu0 0.0
    %5448 = vmatpush1.msra.mxu0 0.0
    %5449 = vmatprep.subr.mxu0 0.0
    %5450 = vmatpush1.msra.mxu0 0.0
    %5451 = vmatprep.subr.mxu0 0.0
    %5452 = vmatpush1.msra.mxu0 0.0
    %5453 = vmatprep.subr.mxu0 0.0
    %5454 = vmatpush1.msra.mxu0 0.0
    %5455 = vmatprep.subr.mxu0 0.0
    %5456 = vmatpush1.msra.mxu0 0.0
    %5457 = vmatprep.subr.mxu0 0.0
    %5458 = vmatpush1.msra.mxu0 0.0
    %5459 = vmatprep.subr.mxu0 0.0
    %5460 = vmatpush1.msra.mxu0 0.0
    %5461 = vmatprep.subr.mxu0 0.0
    %5462 = vmatpush1.msra.mxu0 0.0
    %5463 = vmatprep.subr.mxu0 0.0
    %5464 = vmatpush1.msra.mxu0 0.0
    %5465 = vmatprep.subr.mxu0 0.0
    %5466 = vmatpush1.msra.mxu0 0.0
    %5467 = vmatprep.subr.mxu0 0.0
    %5468 = vmatpush1.msra.mxu0 0.0
    %5469 = vmatprep.subr.mxu0 0.0
    %5470 = vmatpush1.msra.mxu0 0.0
    %5471 = vmatprep.subr.mxu0 0.0
    %5472 = vmatpush1.msra.mxu0 0.0
    %5473 = vmatprep.subr.mxu0 0.0
    %5474 = vmatpush1.msra.mxu0 0.0
    %5475 = vmatprep.subr.mxu0 0.0
    %5476 = vmatpush1.msra.mxu0 0.0
    %5477 = vmatprep.subr.mxu0 0.0
    %5478 = vmatpush1.msra.mxu0 0.0
    %5479 = vmatprep.subr.mxu0 0.0
    %5480 = vmatpush1.msra.mxu0 0.0
    %5481 = vmatprep.subr.mxu0 0.0
    %5482 = vmatpush1.msra.mxu0 0.0
    %5483 = vmatprep.subr.mxu0 0.0
    %5484 = vmatpush1.msra.mxu0 0.0
    %5485 = vmatprep.subr.mxu0 0.0
    %5486 = vmatpush1.msra.mxu0 0.0
    %5487 = vmatprep.subr.mxu0 0.0
    %5488 = vmatpush1.msra.mxu0 0.0
    %5489 = vmatprep.subr.mxu0 0.0
    %5490 = vmatpush1.msra.mxu0 0.0
    %5491 = vmatprep.subr.mxu0 0.0
    %5492 = vmatpush1.msra.mxu0 0.0
    %5493 = vmatprep.subr.mxu0 0.0
    %5494 = vmatpush1.msra.mxu0 0.0
    %5495 = vmatprep.subr.mxu0 0.0
    %5496 = vmatpush1.msra.mxu0 0.0
    %5497 = vmatprep.subr.mxu0 0.0
    %5498 = vmatpush1.msra.mxu0 0.0
    %5499 = vmatprep.subr.mxu0 0.0
    %5500 = vmatpush1.msra.mxu0 0.0
    %5501 = vmatprep.subr.mxu0 0.0
    %5502 = vmatpush1.msra.mxu0 0.0
    %5503 = vmatprep.subr.mxu0 0.0
    %5504 = vmatpush1.msra.mxu0 0.0
    %5505 = vmatprep.mubr.f32.mxu0 0.0
    %5506 = vmatmul.mubr.f32.gmra.mrb[0].mxu0 %v5439
    %v5507 = vpop.f32.mrb[0].mxu0
    %v5508 = vadd.f32 0.0, %v5507
    %v5509 = vpop.f32.mrb[0].mxu0
    %5510 = vdwg.mxu0
    %v5511 = vadd.f32 %v5261, %v5508
    %5512 = vrot.lane.b32.xlu0 %v4614, 104
    %v5513 = vpop.permute.xlu0 %5512
    %5514 = vrot.lane.b32.xlu0 %v4689, 104
    %v5515 = vpop.permute.xlu0 %5514
    %5516 = vrot.lane.b32.xlu0 %v4694, 104
    %v5517 = vpop.permute.xlu0 %5516
    %v5518 = vsel %vm317, %v5513, 0
    %v5520 = vsel %vm317, %v5515, 0
    %v5522 = vsel %vm317, %v5517, 0
    %5524 = vmatprep.subr.mxu0 0.0
    %5525 = vmatpush1.xpose.msra.mxu0 %v5520
    %5526 = vmatprep.subr.mxu0 0.0
    %5527 = vmatpush1.xpose.msra.mxu0 %v5522
    %5528 = vmatprep.subr.mxu0 0.0
    %5529 = vmatpush1.xpose.msra.mxu0 0.0
    %5530 = vmatprep.subr.mxu0 0.0
    %5531 = vmatpush1.xpose.msra.mxu0 0.0
    %5532 = vmatprep.subr.mxu0 0.0
    %5533 = vmatpush1.xpose.msra.mxu0 0.0
    %5534 = vmatprep.subr.mxu0 0.0
    %5535 = vmatpush1.xpose.msra.mxu0 0.0
    %5536 = vmatprep.subr.mxu0 0.0
    %5537 = vmatpush1.xpose.msra.mxu0 0.0
    %5538 = vmatprep.subr.mxu0 0.0
    %5539 = vmatpush1.xpose.msra.mxu0 0.0
    %5540 = vmatprep.subr.mxu0 0.0
    %5541 = vmatpush1.xpose.msra.mxu0 0.0
    %5542 = vmatprep.subr.mxu0 0.0
    %5543 = vmatpush1.xpose.msra.mxu0 0.0
    %5544 = vmatprep.subr.mxu0 0.0
    %5545 = vmatpush1.xpose.msra.mxu0 0.0
    %5546 = vmatprep.subr.mxu0 0.0
    %5547 = vmatpush1.xpose.msra.mxu0 0.0
    %5548 = vmatprep.subr.mxu0 0.0
    %5549 = vmatpush1.xpose.msra.mxu0 0.0
    %5550 = vmatprep.subr.mxu0 0.0
    %5551 = vmatpush1.xpose.msra.mxu0 0.0
    %5552 = vmatprep.subr.mxu0 0.0
    %5553 = vmatpush1.xpose.msra.mxu0 0.0
    %5554 = vmatprep.subr.mxu0 0.0
    %5555 = vmatpush1.xpose.msra.mxu0 0.0
    %5556 = vmatprep.subr.mxu0 0.0
    %5557 = vmatpush1.xpose.msra.mxu0 0.0
    %5558 = vmatprep.subr.mxu0 0.0
    %5559 = vmatpush1.xpose.msra.mxu0 0.0
    %5560 = vmatprep.subr.mxu0 0.0
    %5561 = vmatpush1.xpose.msra.mxu0 0.0
    %5562 = vmatprep.subr.mxu0 0.0
    %5563 = vmatpush1.xpose.msra.mxu0 0.0
    %5564 = vmatprep.subr.mxu0 0.0
    %5565 = vmatpush1.xpose.msra.mxu0 0.0
    %5566 = vmatprep.subr.mxu0 0.0
    %5567 = vmatpush1.xpose.msra.mxu0 0.0
    %5568 = vmatprep.subr.mxu0 0.0
    %5569 = vmatpush1.xpose.msra.mxu0 0.0
    %5570 = vmatprep.subr.mxu0 0.0
    %5571 = vmatpush1.xpose.msra.mxu0 0.0
    %5572 = vmatprep.subr.mxu0 0.0
    %5573 = vmatpush1.xpose.msra.mxu0 0.0
    %5574 = vmatprep.subr.mxu0 0.0
    %5575 = vmatpush1.xpose.msra.mxu0 0.0
    %5576 = vmatprep.subr.mxu0 0.0
    %5577 = vmatpush1.xpose.msra.mxu0 0.0
    %5578 = vmatprep.subr.mxu0 0.0
    %5579 = vmatpush1.xpose.msra.mxu0 0.0
    %5580 = vmatprep.subr.mxu0 0.0
    %5581 = vmatpush1.xpose.msra.mxu0 0.0
    %5582 = vmatprep.subr.mxu0 0.0
    %5583 = vmatpush1.xpose.msra.mxu0 0.0
    %5584 = vmatprep.subr.mxu0 0.0
    %5585 = vmatpush1.xpose.msra.mxu0 0.0
    %5586 = vmatprep.subr.mxu0 0.0
    %5587 = vmatpush1.xpose.msra.mxu0 0.0
    %5588 = vmatprep.mubr.f32.mxu0 0.0
    %5589 = vmatmul.mubr.f32.gmra.mrb[0].mxu0 %v5518
    %v5590 = vpop.f32.mrb[0].mxu0
    %v5591 = vadd.f32 0.0, %v5590
    %v5592 = vpop.f32.mrb[0].mxu0
    %5593 = vdwg.mxu0
    %v5594 = vmul.f32 %v5591, 0.35355338
    %v5595 = vadd.f32 %v5594, %v3380
    %v5596 = vsel %vm403, %v5595, -inf
    %5597 = vmax.xlane.f32.xlu0 %v5596
    %v5598 = vpop.xlane.xlu0 %5597
    %v5599 = vsub.f32 %v5595, %v5598
    %v5600 = vmul.f32 %v5599, 1.442695
    %v5601 = vpow.pop %v5600
    %v5602 = vsel %vm403, %v5601, 0.0
    %5603 = vadd.xlane.f32.xlu0 %v5602
    %v5604 = vpop.xlane.xlu0 %5603
    %v5605 = vrcp.pop %v5604
    %v5606 = vmul.f32 %v5601, %v5605
    %5607 = vrot.lane.b32.xlu0 %v4769, 104
    %v5608 = vpop.permute.xlu0 %5607
    %5609 = vrot.lane.b32.xlu0 %v4774, 104
    %v5610 = vpop.permute.xlu0 %5609
    %v5614 = vsel %vm403, %v5606, 0
    %5616 = vmatprep.subr.mxu0 0.0
    %5617 = vmatpush1.msra.mxu0 %v5608
    %5618 = vmatprep.subr.mxu0 0.0
    %5619 = vmatpush1.msra.mxu0 %v5610
    %5620 = vmatprep.subr.mxu0 0.0
    %5621 = vmatpush1.msra.mxu0 0.0
    %5622 = vmatprep.subr.mxu0 0.0
    %5623 = vmatpush1.msra.mxu0 0.0
    %5624 = vmatprep.subr.mxu0 0.0
    %5625 = vmatpush1.msra.mxu0 0.0
    %5626 = vmatprep.subr.mxu0 0.0
    %5627 = vmatpush1.msra.mxu0 0.0
    %5628 = vmatprep.subr.mxu0 0.0
    %5629 = vmatpush1.msra.mxu0 0.0
    %5630 = vmatprep.subr.mxu0 0.0
    %5631 = vmatpush1.msra.mxu0 0.0
    %5632 = vmatprep.subr.mxu0 0.0
    %5633 = vmatpush1.msra.mxu0 0.0
    %5634 = vmatprep.subr.mxu0 0.0
    %5635 = vmatpush1.msra.mxu0 0.0
    %5636 = vmatprep.subr.mxu0 0.0
    %5637 = vmatpush1.msra.mxu0 0.0
    %5638 = vmatprep.subr.mxu0 0.0
    %5639 = vmatpush1.msra.mxu0 0.0
    %5640 = vmatprep.subr.mxu0 0.0
    %5641 = vmatpush1.msra.mxu0 0.0
    %5642 = vmatprep.subr.mxu0 0.0
    %5643 = vmatpush1.msra.mxu0 0.0
    %5644 = vmatprep.subr.mxu0 0.0
    %5645 = vmatpush1.msra.mxu0 0.0
    %5646 = vmatprep.subr.mxu0 0.0
    %5647 = vmatpush1.msra.mxu0 0.0
    %5648 = vmatprep.subr.mxu0 0.0
    %5649 = vmatpush1.msra.mxu0 0.0
    %5650 = vmatprep.subr.mxu0 0.0
    %5651 = vmatpush1.msra.mxu0 0.0
    %5652 = vmatprep.subr.mxu0 0.0
    %5653 = vmatpush1.msra.mxu0 0.0
    %5654 = vmatprep.subr.mxu0 0.0
    %5655 = vmatpush1.msra.mxu0 0.0
    %5656 = vmatprep.subr.mxu0 0.0
    %5657 = vmatpush1.msra.mxu0 0.0
    %5658 = vmatprep.subr.mxu0 0.0
    %5659 = vmatpush1.msra.mxu0 0.0
    %5660 = vmatprep.subr.mxu0 0.0
    %5661 = vmatpush1.msra.mxu0 0.0
    %5662 = vmatprep.subr.mxu0 0.0
    %5663 = vmatpush1.msra.mxu0 0.0
    %5664 = vmatprep.subr.mxu0 0.0
    %5665 = vmatpush1.msra.mxu0 0.0
    %5666 = vmatprep.subr.mxu0 0.0
    %5667 = vmatpush1.msra.mxu0 0.0
    %5668 = vmatprep.subr.mxu0 0.0
    %5669 = vmatpush1.msra.mxu0 0.0
    %5670 = vmatprep.subr.mxu0 0.0
    %5671 = vmatpush1.msra.mxu0 0.0
    %5672 = vmatprep.subr.mxu0 0.0
    %5673 = vmatpush1.msra.mxu0 0.0
    %5674 = vmatprep.subr.mxu0 0.0
    %5675 = vmatpush1.msra.mxu0 0.0
    %5676 = vmatprep.subr.mxu0 0.0
    %5677 = vmatpush1.msra.mxu0 0.0
    %5678 = vmatprep.subr.mxu0 0.0
    %5679 = vmatpush1.msra.mxu0 0.0
    %5680 = vmatprep.mubr.f32.mxu0 0.0
    %5681 = vmatmul.mubr.f32.gmra.mrb[0].mxu0 %v5614
    %v5682 = vpop.f32.mrb[0].mxu0
    %v5683 = vadd.f32 0.0, %v5682
    %v5684 = vpop.f32.mrb[0].mxu0
    %5685 = vdwg.mxu0
    %v5687 = vsel %vm317, %v5683, 0
    %5689 = vmatprep.subr.mxu0 0.0
    %5690 = vmatpush1.msra.mxu0 %v4538
    %5691 = vmatprep.subr.mxu0 0.0
    %5692 = vmatpush1.msra.mxu0 0.0
    %5693 = vmatprep.subr.mxu0 0.0
    %5694 = vmatpush1.msra.mxu0 0.0
    %5695 = vmatprep.subr.mxu0 0.0
    %5696 = vmatpush1.msra.mxu0 0.0
    %5697 = vmatprep.subr.mxu0 0.0
    %5698 = vmatpush1.msra.mxu0 0.0
    %5699 = vmatprep.subr.mxu0 0.0
    %5700 = vmatpush1.msra.mxu0 0.0
    %5701 = vmatprep.subr.mxu0 0.0
    %5702 = vmatpush1.msra.mxu0 0.0
    %5703 = vmatprep.subr.mxu0 0.0
    %5704 = vmatpush1.msra.mxu0 0.0
    %5705 = vmatprep.subr.mxu0 0.0
    %5706 = vmatpush1.msra.mxu0 0.0
    %5707 = vmatprep.subr.mxu0 0.0
    %5708 = vmatpush1.msra.mxu0 0.0
    %5709 = vmatprep.subr.mxu0 0.0
    %5710 = vmatpush1.msra.mxu0 0.0
    %5711 = vmatprep.subr.mxu0 0.0
    %5712 = vmatpush1.msra.mxu0 0.0
    %5713 = vmatprep.subr.mxu0 0.0
    %5714 = vmatpush1.msra.mxu0 0.0
    %5715 = vmatprep.subr.mxu0 0.0
    %5716 = vmatpush1.msra.mxu0 0.0
    %5717 = vmatprep.subr.mxu0 0.0
    %5718 = vmatpush1.msra.mxu0 0.0
    %5719 = vmatprep.subr.mxu0 0.0
    %5720 = vmatpush1.msra.mxu0 0.0
    %5721 = vmatprep.subr.mxu0 0.0
    %5722 = vmatpush1.msra.mxu0 0.0
    %5723 = vmatprep.subr.mxu0 0.0
    %5724 = vmatpush1.msra.mxu0 0.0
    %5725 = vmatprep.subr.mxu0 0.0
    %5726 = vmatpush1.msra.mxu0 0.0
    %5727 = vmatprep.subr.mxu0 0.0
    %5728 = vmatpush1.msra.mxu0 0.0
    %5729 = vmatprep.subr.mxu0 0.0
    %5730 = vmatpush1.msra.mxu0 0.0
    %5731 = vmatprep.subr.mxu0 0.0
    %5732 = vmatpush1.msra.mxu0 0.0
    %5733 = vmatprep.subr.mxu0 0.0
    %5734 = vmatpush1.msra.mxu0 0.0
    %5735 = vmatprep.subr.mxu0 0.0
    %5736 = vmatpush1.msra.mxu0 0.0
    %5737 = vmatprep.subr.mxu0 0.0
    %5738 = vmatpush1.msra.mxu0 0.0
    %5739 = vmatprep.subr.mxu0 0.0
    %5740 = vmatpush1.msra.mxu0 0.0
    %5741 = vmatprep.subr.mxu0 0.0
    %5742 = vmatpush1.msra.mxu0 0.0
    %5743 = vmatprep.subr.mxu0 0.0
    %5744 = vmatpush1.msra.mxu0 0.0
    %5745 = vmatprep.subr.mxu0 0.0
    %5746 = vmatpush1.msra.mxu0 0.0
    %5747 = vmatprep.subr.mxu0 0.0
    %5748 = vmatpush1.msra.mxu0 0.0
    %5749 = vmatprep.subr.mxu0 0.0
    %5750 = vmatpush1.msra.mxu0 0.0
    %5751 = vmatprep.subr.mxu0 0.0
    %5752 = vmatpush1.msra.mxu0 0.0
    %5753 = vmatprep.mubr.f32.mxu0 0.0
    %5754 = vmatmul.mubr.f32.gmra.mrb[0].mxu0 %v5687
    %v5755 = vpop.f32.mrb[0].mxu0
    %v5756 = vadd.f32 0.0, %v5755
    %v5757 = vpop.f32.mrb[0].mxu0
    %5758 = vdwg.mxu0
    %v5759 = vadd.f32 %v5511, %v5756
    %v5760 = vld [vmem:[%s1567 + $0x3] sm:$0x1]
    %v5761 = vlaneseq
    %v5762 = vshrl.u32 %v5761, 7
    %v5763 = vsub.s32 0, %v5762
    %v5764 = vrot.slane %v5760, %v5763
    %v5765 = vadd.f32 %v5759, %v5764
    %v5766 = vadd.f32 %v5765, %v4522
    %v5767 = vld [vmem:[%s2796] sm:$0x1]
    %v5768 = vld [vmem:[%s2798] sm:$0x1]
    %v5769 = vsel %vm80, %v5766, 0.0
    %5770 = vadd.xlane.f32.xlu0 %v5769
    %v5771 = vpop.xlane.xlu0 %5770
    %v5772 = vmul.f32 %v5771, %v1318
    %v5773 = vsub.f32 %v5766, %v5772
    %v5774 = vmul.f32 %v5773, %v5773
    %v5775 = vsel %vm80, %v5774, 0.0
    %5776 = vadd.xlane.f32.xlu0 %v5775
    %v5777 = vpop.xlane.xlu0 %5776
    %v5778 = vmul.f32 %v5777, %v1318
    %v5779 = vadd.f32 %v5778, 1e-06
    %v5780 = vrsqrt.pop %v5779
    %v5781 = vmul.f32 %v5773, %v5780
    %v5782 = vlaneseq
    %v5783 = vshrl.u32 %v5782, 7
    %v5784 = vsub.s32 0, %v5783
    %v5785 = vrot.slane %v5767, %v5784
    %v5786 = vmul.f32 %v5785, %v5781
    %v5787 = vlaneseq
    %v5788 = vshrl.u32 %v5787, 7
    %v5789 = vsub.s32 0, %v5788
    %v5790 = vrot.slane %v5768, %v5789
    %v5791 = vadd.f32 %v5786, %v5790
    %v5792 = vld [vmem:[%s2823] sm:$0xff]
    %v5793 = vld [vmem:[%s2823 + $0x8] sm:$0xff]
    %v5794 = vld [vmem:[%s2823 + $0x10] sm:$0xff]
    %v5795 = vld [vmem:[%s2823 + $0x18] sm:$0xff]
    %v5796 = vld [vmem:[%s2828] sm:$0x1]
    %v5798 = vlaneseq
    %v5799 = vshrl.u32 %v5798, 7
    %v5800 = vsub.s32 0, %v5799
    %v5801 = vrot.slane %v5796, %v5800
    %v5804 = vsel %vm80, %v5791, 0
    %5806 = vmatprep.subr.mxu0 0.0
    %5807 = vmatpush1.msra.mxu0 %v5792
    %5808 = vmatprep.subr.mxu0 0.0
    %5809 = vmatpush1.msra.mxu0 %v5793
    %5810 = vmatprep.subr.mxu0 0.0
    %5811 = vmatpush1.msra.mxu0 %v5794
    %5812 = vmatprep.subr.mxu0 0.0
    %5813 = vmatpush1.msra.mxu0 %v5795
    %5814 = vmatprep.subr.mxu0 0.0
    %5815 = vmatpush1.msra.mxu0 0.0
    %5816 = vmatprep.subr.mxu0 0.0
    %5817 = vmatpush1.msra.mxu0 0.0
    %5818 = vmatprep.subr.mxu0 0.0
    %5819 = vmatpush1.msra.mxu0 0.0
    %5820 = vmatprep.subr.mxu0 0.0
    %5821 = vmatpush1.msra.mxu0 0.0
    %5822 = vmatprep.subr.mxu0 0.0
    %5823 = vmatpush1.msra.mxu0 0.0
    %5824 = vmatprep.subr.mxu0 0.0
    %5825 = vmatpush1.msra.mxu0 0.0
    %5826 = vmatprep.subr.mxu0 0.0
    %5827 = vmatpush1.msra.mxu0 0.0
    %5828 = vmatprep.subr.mxu0 0.0
    %5829 = vmatpush1.msra.mxu0 0.0
    %5830 = vmatprep.subr.mxu0 0.0
    %5831 = vmatpush1.msra.mxu0 0.0
    %5832 = vmatprep.subr.mxu0 0.0
    %5833 = vmatpush1.msra.mxu0 0.0
    %5834 = vmatprep.subr.mxu0 0.0
    %5835 = vmatpush1.msra.mxu0 0.0
    %5836 = vmatprep.subr.mxu0 0.0
    %5837 = vmatpush1.msra.mxu0 0.0
    %5838 = vmatprep.subr.mxu0 0.0
    %5839 = vmatpush1.msra.mxu0 0.0
    %5840 = vmatprep.subr.mxu0 0.0
    %5841 = vmatpush1.msra.mxu0 0.0
    %5842 = vmatprep.subr.mxu0 0.0
    %5843 = vmatpush1.msra.mxu0 0.0
    %5844 = vmatprep.subr.mxu0 0.0
    %5845 = vmatpush1.msra.mxu0 0.0
    %5846 = vmatprep.subr.mxu0 0.0
    %5847 = vmatpush1.msra.mxu0 0.0
    %5848 = vmatprep.subr.mxu0 0.0
    %5849 = vmatpush1.msra.mxu0 0.0
    %5850 = vmatprep.subr.mxu0 0.0
    %5851 = vmatpush1.msra.mxu0 0.0
    %5852 = vmatprep.subr.mxu0 0.0
    %5853 = vmatpush1.msra.mxu0 0.0
    %5854 = vmatprep.subr.mxu0 0.0
    %5855 = vmatpush1.msra.mxu0 0.0
    %5856 = vmatprep.subr.mxu0 0.0
    %5857 = vmatpush1.msra.mxu0 0.0
    %5858 = vmatprep.subr.mxu0 0.0
    %5859 = vmatpush1.msra.mxu0 0.0
    %5860 = vmatprep.subr.mxu0 0.0
    %5861 = vmatpush1.msra.mxu0 0.0
    %5862 = vmatprep.subr.mxu0 0.0
    %5863 = vmatpush1.msra.mxu0 0.0
    %5864 = vmatprep.subr.mxu0 0.0
    %5865 = vmatpush1.msra.mxu0 0.0
    %5866 = vmatprep.subr.mxu0 0.0
    %5867 = vmatpush1.msra.mxu0 0.0
    %5868 = vmatprep.subr.mxu0 0.0
    %5869 = vmatpush1.msra.mxu0 0.0
    %5870 = vmatprep.mubr.f32.mxu0 0.0
    %5871 = vmatmul.mubr.f32.gmra.mrb[0].mxu0 %v5804
    %v5872 = vpop.f32.mrb[0].mxu0
    %v5873 = vadd.f32 %v5801, %v5872
    %v5874 = vpop.f32.mrb[0].mxu0
    %5875 = vdwg.mxu0
    %v5876 = vmul.f32 %v5873, 0.5
    %v5877 = vmul.f32 %v5873, 0.044715
    %v5878 = vmul.f32 %v5877, %v5873
    %v5879 = vmul.f32 %v5878, %v5873
    %v5880 = vadd.f32 %v5873, %v5879
    %v5881 = vmul.f32 %v5880, 0.7978846
    %v5882 = vtanh.pop %v5881
    %v5883 = vadd.f32 %v5882, 1.0
    %v5884 = vmul.f32 %v5876, %v5883
    %v5885 = vld [vmem:[%s2918] sm:$0xff]
    %v5886 = vld [vmem:[%s2918 + $0x8] sm:$0xff]
    %v5887 = vld [vmem:[%s2918 + $0x10] sm:$0xff]
    %v5888 = vld [vmem:[%s2918 + $0x18] sm:$0xff]
    %v5889 = vld [vmem:[%s2918 + $0x20] sm:$0xff]
    %v5890 = vld [vmem:[%s2918 + $0x28] sm:$0xff]
    %v5891 = vld [vmem:[%s2918 + $0x30] sm:$0xff]
    %v5892 = vld [vmem:[%s2918 + $0x38] sm:$0xff]
    %v5893 = vld [vmem:[%s2927] sm:$0x1]
    %v5895 = vlaneseq
    %v5896 = vshrl.u32 %v5895, 7
    %v5897 = vsub.s32 0, %v5896
    %v5898 = vrot.slane %v5893, %v5897
    %v5901 = vsel %vm1447, %v5884, 0
    %5903 = vmatprep.subr.mxu0 0.0
    %5904 = vmatpush1.msra.mxu0 %v5885
    %5905 = vmatprep.subr.mxu0 0.0
    %5906 = vmatpush1.msra.mxu0 %v5886
    %5907 = vmatprep.subr.mxu0 0.0
    %5908 = vmatpush1.msra.mxu0 %v5887
    %5909 = vmatprep.subr.mxu0 0.0
    %5910 = vmatpush1.msra.mxu0 %v5888
    %5911 = vmatprep.subr.mxu0 0.0
    %5912 = vmatpush1.msra.mxu0 %v5889
    %5913 = vmatprep.subr.mxu0 0.0
    %5914 = vmatpush1.msra.mxu0 %v5890
    %5915 = vmatprep.subr.mxu0 0.0
    %5916 = vmatpush1.msra.mxu0 %v5891
    %5917 = vmatprep.subr.mxu0 0.0
    %5918 = vmatpush1.msra.mxu0 %v5892
    %5919 = vmatprep.subr.mxu0 0.0
    %5920 = vmatpush1.msra.mxu0 0.0
    %5921 = vmatprep.subr.mxu0 0.0
    %5922 = vmatpush1.msra.mxu0 0.0
    %5923 = vmatprep.subr.mxu0 0.0
    %5924 = vmatpush1.msra.mxu0 0.0
    %5925 = vmatprep.subr.mxu0 0.0
    %5926 = vmatpush1.msra.mxu0 0.0
    %5927 = vmatprep.subr.mxu0 0.0
    %5928 = vmatpush1.msra.mxu0 0.0
    %5929 = vmatprep.subr.mxu0 0.0
    %5930 = vmatpush1.msra.mxu0 0.0
    %5931 = vmatprep.subr.mxu0 0.0
    %5932 = vmatpush1.msra.mxu0 0.0
    %5933 = vmatprep.subr.mxu0 0.0
    %5934 = vmatpush1.msra.mxu0 0.0
    %5935 = vmatprep.subr.mxu0 0.0
    %5936 = vmatpush1.msra.mxu0 0.0
    %5937 = vmatprep.subr.mxu0 0.0
    %5938 = vmatpush1.msra.mxu0 0.0
    %5939 = vmatprep.subr.mxu0 0.0
    %5940 = vmatpush1.msra.mxu0 0.0
    %5941 = vmatprep.subr.mxu0 0.0
    %5942 = vmatpush1.msra.mxu0 0.0
    %5943 = vmatprep.subr.mxu0 0.0
    %5944 = vmatpush1.msra.mxu0 0.0
    %5945 = vmatprep.subr.mxu0 0.0
    %5946 = vmatpush1.msra.mxu0 0.0
    %5947 = vmatprep.subr.mxu0 0.0
    %5948 = vmatpush1.msra.mxu0 0.0
    %5949 = vmatprep.subr.mxu0 0.0
    %5950 = vmatpush1.msra.mxu0 0.0
    %5951 = vmatprep.subr.mxu0 0.0
    %5952 = vmatpush1.msra.mxu0 0.0
    %5953 = vmatprep.subr.mxu0 0.0
    %5954 = vmatpush1.msra.mxu0 0.0
    %5955 = vmatprep.subr.mxu0 0.0
    %5956 = vmatpush1.msra.mxu0 0.0
    %5957 = vmatprep.subr.mxu0 0.0
    %5958 = vmatpush1.msra.mxu0 0.0
    %5959 = vmatprep.subr.mxu0 0.0
    %5960 = vmatpush1.msra.mxu0 0.0
    %5961 = vmatprep.subr.mxu0 0.0
    %5962 = vmatpush1.msra.mxu0 0.0
    %5963 = vmatprep.subr.mxu0 0.0
    %5964 = vmatpush1.msra.mxu0 0.0
    %5965 = vmatprep.subr.mxu0 0.0
    %5966 = vmatpush1.msra.mxu0 0.0
    %5967 = vmatprep.mubr.f32.mxu0 0.0
    %5968 = vmatmul.mubr.f32.gmra.mrb[0].mxu0 %v5901
    %v5969 = vpop.f32.mrb[0].mxu0
    %v5970 = vadd.f32 %v5898, %v5969
    %v5971 = vpop.f32.mrb[0].mxu0
    %5972 = vdwg.mxu0
    %v5973 = vadd.f32 %v5970, %v5791
    %v5974 = vld [vmem:[%s2796 + $0x1] sm:$0x1]
    %v5975 = vld [vmem:[%s2798 + $0x1] sm:$0x1]
    %v5976 = vsel %vm80, %v5973, 0.0
    %5977 = vadd.xlane.f32.xlu0 %v5976
    %v5978 = vpop.xlane.xlu0 %5977
    %v5979 = vmul.f32 %v5978, %v1318
    %v5980 = vsub.f32 %v5973, %v5979
    %v5981 = vmul.f32 %v5980, %v5980
    %v5982 = vsel %vm80, %v5981, 0.0
    %5983 = vadd.xlane.f32.xlu0 %v5982
    %v5984 = vpop.xlane.xlu0 %5983
    %v5985 = vmul.f32 %v5984, %v1318
    %v5986 = vadd.f32 %v5985, 1e-06
    %v5987 = vrsqrt.pop %v5986
    %v5988 = vmul.f32 %v5980, %v5987
    %v5989 = vlaneseq
    %v5990 = vshrl.u32 %v5989, 7
    %v5991 = vsub.s32 0, %v5990
    %v5992 = vrot.slane %v5974, %v5991
    %v5993 = vmul.f32 %v5992, %v5988
    %v5994 = vlaneseq
    %v5995 = vshrl.u32 %v5994, 7
    %v5996 = vsub.s32 0, %v5995
    %v5997 = vrot.slane %v5975, %v5996
    %v5998 = vadd.f32 %v5993, %v5997
    %s5999 = scalar_lea.vmem [#allocation5], 8
    %6000 = vst.msk [vmem:[%s5999] sm:$0xff] %vm80, %v5998
    // Predicated region
    $region50: #{tpu_custom_call.1} parent=1 // pred_check
      _
    $region51: #{tpu_custom_call.1} parent=1 // pred_check_branch
      %6002 = sbr.rel (0) target = $region53
    $region52: #{tpu_custom_call.1} parent=1 // pred_region
      %s6004 = ssub.s32 256, 256
      %6005 = vsyncadd [#allocation4], %s6004
      %s6006 = sshll.u32 [#allocation5], 4
      %s6007 = int_to_ptr.vmem [resolvable:$true] %s6006
      %6012 = dma.vmem_to_hbm [thread:$0]  %s6007, 256, %s11, [#allocation4], 128, 128, 8
    $region53: #{tpu_custom_call.1} parent=1 // pred_fallthru
      _
    // Predicated region
    $region54: #{tpu_custom_call.1} parent=1 // pred_check
      _
    $region55: #{tpu_custom_call.1} parent=1 // pred_check_branch
      %6014 = sbr.rel (0) target = $region57
    $region56: #{tpu_custom_call.1} parent=1 // pred_region
      %6015 = dma.done [#allocation4], 256
    $region57: #{tpu_custom_call.1} parent=1 // pred_fallthru
      _
    %6016 = vsyncpa [#allocation3], 1
    %6017 = vsyncpa [#allocation4], 1

</llo_original>
